<compile_context>
chip_gen: v5e
topology: v5e:2x2
jax: 0.10.0
libtpu: 0.0.40
codegen_flags: <defaults>
</compile_context>

<pallas_src>
import jax
import jax.numpy as jnp
import numpy as np
from jax import lax
from jax.experimental import pallas as pl
from jax.experimental.pallas import tpu as pltpu


# --------------------------------------------------------------------------- #
# helpers
# --------------------------------------------------------------------------- #
def _round_up(n, m):
    return ((n + m - 1) // m) * m


def _pick_tile(n, max_tile, align):
    """Largest multiple of `align` dividing n, <= max_tile (n % align == 0)."""
    if n <= max_tile:
        return n
    t = (max_tile // align) * align
    while t > align and n % t != 0:
        t -= align
    return t if n % t == 0 else align


def _pad_rows(wT, rows_pad):
    """wT: (in_dim, 4H) -> (rows_pad, 4H), zero-padded rows."""
    out = jnp.zeros((rows_pad, wT.shape[1]), wT.dtype)
    return out.at[:wT.shape[0], :].set(wT)


def _pad_gate_cols(wT, H, Hp):
    """wT: (in_dim, 4H) -> (in_dim, 4Hp); gate k occupies cols [k*Hp, k*Hp+H)."""
    in_dim = wT.shape[0]
    out = jnp.zeros((in_dim, 4 * Hp), wT.dtype)
    for k in range(4):
        out = out.at[:, k * Hp:k * Hp + H].set(wT[:, k * H:(k + 1) * H])
    return out


def _pad_gate_vec(b, H, Hp):
    """b: (4H,) -> (4Hp,) with gate k at [k*Hp, k*Hp+H)."""
    out = jnp.zeros((4 * Hp,), b.dtype)
    for k in range(4):
        out = out.at[k * Hp:k * Hp + H].set(b[k * H:(k + 1) * H])
    return out


# --------------------------------------------------------------------------- #
# Kernel 1: 2-layer LSTM recurrence
#   time-blocked grid, inner unrolled loop, no concat, f32 state in scratch
# --------------------------------------------------------------------------- #
def lstm_seq_kernel(x_ref, wih0_ref, whh0_ref, b0_ref, wih1_ref, whh1_ref, b1_ref,
                    out_ref, h1, c1, h2, c2):
    tb = pl.program_id(0)

    @pl.when(tb == 0)
    def _():
        h1[...] = jnp.zeros_like(h1)
        c1[...] = jnp.zeros_like(c1)
        h2[...] = jnp.zeros_like(h2)
        c2[...] = jnp.zeros_like(c2)

    Tt = x_ref.shape[0]
    Hp = h1.shape[-1]
    mm_dtype = x_ref.dtype

    def cell(x_in, h_prev_f32, c_prev_f32, wih_ref, whh_ref, b_ref):
        # gates = x @ Wih + h @ Whh + b   (two MXU pushes, f32 accumulation)
        gates = (jnp.dot(x_in, wih_ref[...], preferred_element_type=jnp.float32)
                 + jnp.dot(h_prev_f32.astype(mm_dtype), whh_ref[...],
                           preferred_element_type=jnp.float32)
                 + b_ref[...])
        i = jax.nn.sigmoid(gates[:, 0 * Hp:1 * Hp])
        f = jax.nn.sigmoid(gates[:, 1 * Hp:2 * Hp])
        g = jnp.tanh(gates[:, 2 * Hp:3 * Hp])
        o = jax.nn.sigmoid(gates[:, 3 * Hp:4 * Hp])
        c_new = f * c_prev_f32 + i * g
        h_new = o * jnp.tanh(c_new)
        return h_new, c_new

    def step(i, carry):
        x_t = x_ref[i]                                           # (Bp, Ep) bf16
        # Layer 0
        h1n, c1n = cell(x_t, h1[...], c1[...], wih0_ref, whh0_ref, b0_ref)
        h1[...] = h1n
        c1[...] = c1n
        # Layer 1 (eval mode: no inter-layer dropout)
        h2n, c2n = cell(h1n.astype(mm_dtype), h2[...], c2[...],
                        wih1_ref, whh1_ref, b1_ref)
        h2[...] = h2n
        c2[...] = c2n
        out_ref[i] = h2n.astype(out_ref.dtype)                   # (Bp, Hp) bf16
        return carry

    lax.fori_loop(0, Tt, step, 0, unroll=True)


# --------------------------------------------------------------------------- #
# Kernel 2: hoisted vocab projection, 2-D parallel grid, bf16 logits writeback
# --------------------------------------------------------------------------- #
def proj_kernel(h_ref, w_ref, b_ref, o_ref):
    acc = jnp.dot(h_ref[...], w_ref[...],
                  preferred_element_type=jnp.float32) + b_ref[...]
    o_ref[...] = acc.astype(o_ref.dtype)


# --------------------------------------------------------------------------- #
# Wrapper
# --------------------------------------------------------------------------- #
def decoder_rnn_forward(features, captions, params,
                        compute_dtype=jnp.bfloat16,
                        logits_dtype=jnp.bfloat16):
    """features: (B, E) f32; captions: (B, Tc) int32 -> logits (B, Tc, V)."""
    embed_table = params["embed"]                     # (V, E)
    B, E = features.shape
    V = embed_table.shape[0]
    H = params["whh0"].shape[1]

    # ---- glue: time-major sequence (transpose tiny int ids, not activations) ----
    cap_ids_tm = captions[:, :-1].T                                   # (T-1, B)
    cap_emb_tm = jnp.take(embed_table, cap_ids_tm, axis=0)            # (T-1, B, E)
    seq_tm = jnp.concatenate(
        [features[None, :, :].astype(jnp.float32),
         cap_emb_tm.astype(jnp.float32)], axis=0)                     # (T, B, E)
    T = seq_tm.shape[0]

    # ---- padding to hardware-friendly sizes ----
    Bp = _round_up(B, 16)          # 16 rows: fully packed bf16 sublanes
    Ep = _round_up(E, 128)
    Hp = _round_up(H, 128)
    Vp = _round_up(V, 128)

    # ---- time blocking for the recurrence ----
    Tt = min(T, 32)                # whole caption in one grid step for typical T
    Tp = _round_up(T, Tt)

    x = jnp.zeros((Tp, Bp, Ep), compute_dtype)
    x = x.at[:T, :B, :E].set(seq_tm.astype(compute_dtype))

    # ---- padded / bf16 per-layer weights (padded hidden units stay exactly 0) ----
    wih0 = _pad_gate_cols(_pad_rows(params["wih0"].T, Ep), H, Hp).astype(compute_dtype)  # (Ep, 4Hp)
    whh0 = _pad_gate_cols(_pad_rows(params["whh0"].T, Hp), H, Hp).astype(compute_dtype)  # (Hp, 4Hp)
    b0 = _pad_gate_vec(params["bih0"] + params["bhh0"], H, Hp)[None, :]                  # (1, 4Hp) f32
    wih1 = _pad_gate_cols(_pad_rows(params["wih1"].T, Hp), H, Hp).astype(compute_dtype)  # (Hp, 4Hp)
    whh1 = _pad_gate_cols(_pad_rows(params["whh1"].T, Hp), H, Hp).astype(compute_dtype)  # (Hp, 4Hp)
    b1 = _pad_gate_vec(params["bih1"] + params["bhh1"], H, Hp)[None, :]                  # (1, 4Hp) f32

    woutT = jnp.zeros((Hp, Vp), jnp.float32)
    woutT = woutT.at[:H, :V].set(params["wout"].T).astype(compute_dtype)                 # (Hp, Vp)
    bout = jnp.zeros((1, Vp), jnp.float32).at[0, :V].set(params["bout"])                 # (1, Vp)

    # ---- explicit VMEM budget for kernel 1 (weights single-buffered) ----
    weight_bytes = ((wih0.size + whh0.size + wih1.size + whh1.size) * 2
                    + (b0.size + b1.size) * 4)
    io_bytes = 2 * (Tt * Bp * Ep * 2) + 2 * (Tt * Bp * Hp * 2)   # double-buffered x/out
    scratch_bytes = 4 * Bp * Hp * 4
    est = weight_bytes + io_bytes + scratch_bytes
    vmem_limit = int(max(32 * 2**20, min(est * 3 // 2 + (4 << 20), 64 * 2**20)))

    # grid-invariant operands: single-buffered (no pointless double-buffer of weights)
    def inv_spec(shape):
        return pl.BlockSpec(shape, lambda tb: (0, 0), pipeline_mode=pl.Buffered(1))

    # ---- kernel 1: LSTM recurrence, emits h2 per timestep (time-major, bf16) ----
    h2seq = pl.pallas_call(
        lstm_seq_kernel,
        out_shape=jax.ShapeDtypeStruct((Tp, Bp, Hp), compute_dtype),
        grid_spec=pltpu.PrefetchScalarGridSpec(
            num_scalar_prefetch=0,
            grid=(Tp // Tt,),
            in_specs=[
                pl.BlockSpec((Tt, Bp, Ep), lambda tb: (tb, 0, 0)),   # x time-block
                inv_spec(wih0.shape), inv_spec(whh0.shape), inv_spec(b0.shape),
                inv_spec(wih1.shape), inv_spec(whh1.shape), inv_spec(b1.shape),
            ],
            out_specs=pl.BlockSpec((Tt, Bp, Hp), lambda tb: (tb, 0, 0)),
            scratch_shapes=[
                pltpu.VMEM((Bp, Hp), jnp.float32),   # h1
                pltpu.VMEM((Bp, Hp), jnp.float32),   # c1
                pltpu.VMEM((Bp, Hp), jnp.float32),   # h2
                pltpu.VMEM((Bp, Hp), jnp.float32),   # c2
            ],
        ),
        compiler_params=pltpu.CompilerParams(
            dimension_semantics=("arbitrary",),      # time blocks are sequential
            vmem_limit_bytes=vmem_limit),
    )(x, wih0, whh0, b0, wih1, whh1, b1)

    # Re-layout the SMALL h2 tensor batch-first, flatten to rows (row = b*T + t),
    # and pad the row count so projection tiles always divide evenly.
    h2_rows = jnp.transpose(h2seq[:T], (1, 0, 2)).reshape(Bp * T, Hp)
    R = Bp * T
    rt = 512 if R >= 512 else _round_up(R, 128)      # row tile (mult. of 128, <= 512)
    Rp = _round_up(R, rt)
    if Rp > R:
        h2_rows = jnp.pad(h2_rows, ((0, Rp - R), (0, 0)))
    vt = _pick_tile(Vp, 1024, 128)                   # vocab tile -> lane-dense stores

    out_itemsize = np.dtype(logits_dtype).itemsize
    cost = pl.CostEstimate(
        flops=2 * Rp * Hp * Vp,
        transcendentals=0,
        bytes_accessed=((Vp // vt) * Rp * Hp * 2 + Hp * Vp * 2 + Rp * Vp * out_itemsize))

    # ---- kernel 2: hoisted vocab projection over all padded rows ----
    logits2d = pl.pallas_call(
        proj_kernel,
        out_shape=jax.ShapeDtypeStruct((Rp, Vp), logits_dtype),
        grid=(Vp // vt, Rp // rt),     # weight tile constant over the inner (row) axis
        in_specs=[
            pl.BlockSpec((rt, Hp), lambda vj, ri: (ri, 0)),
            pl.BlockSpec((Hp, vt), lambda vj, ri: (0, vj)),
            pl.BlockSpec((1, vt), lambda vj, ri: (0, vj)),
        ],
        out_specs=pl.BlockSpec((rt, vt), lambda vj, ri: (ri, vj)),
        compiler_params=pltpu.CompilerParams(
            dimension_semantics=("parallel", "parallel")),   # both TCs on v7x
        cost_estimate=cost,
    )(h2_rows, woutT, bout)

    logits = logits2d[:R].reshape(Bp, T, Vp)[:B, :, :V]      # batch-first, no big transpose
    return logits


# --------------------------------------------------------------------------- #
# pure-JAX f32 reference (PyTorch eval-mode semantics) for correctness check
# --------------------------------------------------------------------------- #
def decoder_rnn_reference(features, captions, params):
    embed_table = params["embed"]
    cap_emb = jnp.take(embed_table, captions[:, :-1], axis=0)
    seq = jnp.concatenate([features[:, None, :], cap_emb], axis=1)   # (B, T, E)
    B, T, E = seq.shape
    H = params["whh0"].shape[1]

    def cell(x, h, c, wih, whh, bih, bhh):
        gates = x @ wih.T + bih + h @ whh.T + bhh
        i = jax.nn.sigmoid(gates[:, 0 * H:1 * H])
        f = jax.nn.sigmoid(gates[:, 1 * H:2 * H])
        g = jnp.tanh(gates[:, 2 * H:3 * H])
        o = jax.nn.sigmoid(gates[:, 3 * H:4 * H])
        c_new = f * c + i * g
        return o * jnp.tanh(c_new), c_new

    h1 = c1 = h2 = c2 = jnp.zeros((B, H), jnp.float32)
    outs = []
    for t in range(T):
        x_t = seq[:, t, :]
        h1, c1 = cell(x_t, h1, c1, params["wih0"], params["whh0"],
                      params["bih0"], params["bhh0"])
        h2, c2 = cell(h1, h2, c2, params["wih1"], params["whh1"],
                      params["bih1"], params["bhh1"])
        outs.append(h2 @ params["wout"].T + params["bout"])
    return jnp.stack(outs, axis=1)   # (B, T, V)


def init_params(key, embed_size, hidden_size, vocab_size):
    E, H, V = embed_size, hidden_size, vocab_size
    ks = jax.random.split(key, 12)
    u = lambda k, shape, s: jax.random.uniform(k, shape, jnp.float32, -s, s)
    s = 1.0 / np.sqrt(H)
    return {
        "embed": jax.random.normal(ks[0], (V, E), jnp.float32),
        "wih0": u(ks[1], (4 * H, E), s), "whh0": u(ks[2], (4 * H, H), s),
        "bih0": u(ks[3], (4 * H,), s),   "bhh0": u(ks[4], (4 * H,), s),
        "wih1": u(ks[5], (4 * H, H), s), "whh1": u(ks[6], (4 * H, H), s),
        "bih1": u(ks[7], (4 * H,), s),   "bhh1": u(ks[8], (4 * H,), s),
        "wout": u(ks[9], (V, H), s),     "bout": u(ks[10], (V,), s),
    }


if __name__ == "__main__":
    B, E, H, V, Tc = 2, 32, 32, 64, 8   # batch, embed, hidden, vocab, caption length
    key = jax.random.PRNGKey(0)
    kp, kf, kc = jax.random.split(key, 3)

    params = init_params(kp, E, H, V)
    features = jax.random.normal(kf, (B, E), jnp.float32)
    captions = jax.random.randint(kc, (B, Tc), 0, V, jnp.int32)

    out = decoder_rnn_forward(features, captions, params)
    out = jax.block_until_ready(out)

    ref = decoder_rnn_reference(features, captions, params)
    assert out.shape == (B, Tc, V), out.shape
    # bf16 matmul weights / activations / logits with f32 accumulation -> loose tolerance
    np.testing.assert_allclose(np.asarray(out.astype(jnp.float32)),
                               np.asarray(ref), rtol=5e-2, atol=5e-2)

    print("KERNEL_OK")
</pallas_src>

<mosaic_0001>
module attributes {stable_mosaic.version = 11 : i64} {
  func.func @lstm_seq_kernel(%arg0: i32, %arg1: memref<8x16x128xbf16, #tpu.memory_space<vmem>>, %arg2: memref<128x512xbf16, #tpu.memory_space<vmem>>, %arg3: memref<128x512xbf16, #tpu.memory_space<vmem>>, %arg4: memref<1x512xf32, #tpu.memory_space<vmem>>, %arg5: memref<128x512xbf16, #tpu.memory_space<vmem>>, %arg6: memref<128x512xbf16, #tpu.memory_space<vmem>>, %arg7: memref<1x512xf32, #tpu.memory_space<vmem>>, %arg8: memref<8x16x128xbf16, #tpu.memory_space<vmem>>, %arg9: memref<16x128xf32, #tpu.memory_space<vmem>>, %arg10: memref<16x128xf32, #tpu.memory_space<vmem>>, %arg11: memref<16x128xf32, #tpu.memory_space<vmem>>, %arg12: memref<16x128xf32, #tpu.memory_space<vmem>>) attributes {dimension_semantics = [#tpu.dimension_semantics<arbitrary>], iteration_bounds = array<i64: 1>, scalar_prefetch = 0 : i64, scratch_operands = 4 : i64, tpu.core_type = #tpu.core_type<tc>, window_params = [{transform_indices = @transform_0, window_bounds = array<i64: 8, 16, 128>}, {pipeline_mode = #tpu.pipeline_mode<synchronous>, transform_indices = @transform_1, window_bounds = array<i64: 128, 512>}, {pipeline_mode = #tpu.pipeline_mode<synchronous>, transform_indices = @transform_2, window_bounds = array<i64: 128, 512>}, {pipeline_mode = #tpu.pipeline_mode<synchronous>, transform_indices = @transform_3, window_bounds = array<i64: 1, 512>}, {pipeline_mode = #tpu.pipeline_mode<synchronous>, transform_indices = @transform_4, window_bounds = array<i64: 128, 512>}, {pipeline_mode = #tpu.pipeline_mode<synchronous>, transform_indices = @transform_5, window_bounds = array<i64: 128, 512>}, {pipeline_mode = #tpu.pipeline_mode<synchronous>, transform_indices = @transform_6, window_bounds = array<i64: 1, 512>}, {transform_indices = @transform_7, window_bounds = array<i64: 8, 16, 128>}]} {
    %c0_i32 = arith.constant 0 : i32
    %0 = arith.cmpi eq, %arg0, %c0_i32 : i32
    %1 = arith.extui %0 : i1 to i32
    %c0_i32_0 = arith.constant 0 : i32
    %2 = arith.cmpi ne, %1, %c0_i32_0 : i32
    scf.if %2 {
      %cst_336 = arith.constant 0.000000e+00 : f32
      %683 = vector.broadcast %cst_336 : f32 to vector<16x128xf32>
      %c0_337 = arith.constant 0 : index
      %c0_338 = arith.constant 0 : index
      %684 = vector.load %arg9[%c0_337, %c0_338] : memref<16x128xf32, #tpu.memory_space<vmem>>, vector<16x128xf32>
      tpu.vector_store %arg9[%c0_337, %c0_338], %683 {strides = array<i32>} : memref<16x128xf32, #tpu.memory_space<vmem>>, vector<16x128xf32>,
      %cst_339 = arith.constant 0.000000e+00 : f32
      %685 = vector.broadcast %cst_339 : f32 to vector<16x128xf32>
      %c0_340 = arith.constant 0 : index
      %c0_341 = arith.constant 0 : index
      %686 = vector.load %arg10[%c0_340, %c0_341] : memref<16x128xf32, #tpu.memory_space<vmem>>, vector<16x128xf32>
      tpu.vector_store %arg10[%c0_340, %c0_341], %685 {strides = array<i32>} : memref<16x128xf32, #tpu.memory_space<vmem>>, vector<16x128xf32>,
      %cst_342 = arith.constant 0.000000e+00 : f32
      %687 = vector.broadcast %cst_342 : f32 to vector<16x128xf32>
      %c0_343 = arith.constant 0 : index
      %c0_344 = arith.constant 0 : index
      %688 = vector.load %arg11[%c0_343, %c0_344] : memref<16x128xf32, #tpu.memory_space<vmem>>, vector<16x128xf32>
      tpu.vector_store %arg11[%c0_343, %c0_344], %687 {strides = array<i32>} : memref<16x128xf32, #tpu.memory_space<vmem>>, vector<16x128xf32>,
      %cst_345 = arith.constant 0.000000e+00 : f32
      %689 = vector.broadcast %cst_345 : f32 to vector<16x128xf32>
      %c0_346 = arith.constant 0 : index
      %c0_347 = arith.constant 0 : index
      %690 = vector.load %arg12[%c0_346, %c0_347] : memref<16x128xf32, #tpu.memory_space<vmem>>, vector<16x128xf32>
      tpu.vector_store %arg12[%c0_346, %c0_347], %689 {strides = array<i32>} : memref<16x128xf32, #tpu.memory_space<vmem>>, vector<16x128xf32>,
    } else {
    }
    %c0_i32_1 = arith.constant 0 : i32
    %3 = arith.index_cast %c0_i32_1 : i32 to index
    %c0 = arith.constant 0 : index
    %c0_2 = arith.constant 0 : index
    %4 = vector.load %arg1[%3, %c0, %c0_2] : memref<8x16x128xbf16, #tpu.memory_space<vmem>>, vector<1x16x128xbf16>
    %5 = vector.shape_cast %4 : vector<1x16x128xbf16> to vector<16x128xbf16>
    %c0_3 = arith.constant 0 : index
    %c0_4 = arith.constant 0 : index
    %6 = vector.load %arg9[%c0_3, %c0_4] : memref<16x128xf32, #tpu.memory_space<vmem>>, vector<16x128xf32>
    %c0_5 = arith.constant 0 : index
    %c0_6 = arith.constant 0 : index
    %7 = vector.load %arg10[%c0_5, %c0_6] : memref<16x128xf32, #tpu.memory_space<vmem>>, vector<16x128xf32>
    %c0_7 = arith.constant 0 : index
    %c0_8 = arith.constant 0 : index
    %8 = vector.load %arg2[%c0_7, %c0_8] : memref<128x512xbf16, #tpu.memory_space<vmem>>, vector<128x512xbf16>
    %cst = arith.constant dense<0.000000e+00> : vector<16x512xf32>
    %9 = tpu.matmul %5, %8, %cst {dimension_numbers = #tpu.dot_dimension_numbers<[1], [0], [0], [1], [0, 0, 1, 1], [], []>} : vector<16x128xbf16>, vector<128x512xbf16>, vector<16x512xf32> -> vector<16x512xf32>
    %10 = arith.truncf %6 : vector<16x128xf32> to vector<16x128xbf16>
    %c0_9 = arith.constant 0 : index
    %c0_10 = arith.constant 0 : index
    %11 = vector.load %arg3[%c0_9, %c0_10] : memref<128x512xbf16, #tpu.memory_space<vmem>>, vector<128x512xbf16>
    %cst_11 = arith.constant dense<0.000000e+00> : vector<16x512xf32>
    %12 = tpu.matmul %10, %11, %cst_11 {dimension_numbers = #tpu.dot_dimension_numbers<[1], [0], [0], [1], [0, 0, 1, 1], [], []>} : vector<16x128xbf16>, vector<128x512xbf16>, vector<16x512xf32> -> vector<16x512xf32>
    %13 = arith.addf %9, %12 : vector<16x512xf32>
    %c0_12 = arith.constant 0 : index
    %c0_13 = arith.constant 0 : index
    %14 = vector.load %arg4[%c0_12, %c0_13] : memref<1x512xf32, #tpu.memory_space<vmem>>, vector<1x512xf32>
    %15 = vector.broadcast %14 : vector<1x512xf32> to vector<16x512xf32>
    %16 = arith.addf %13, %15 : vector<16x512xf32>
    %17 = vector.extract_strided_slice %16 {offsets = [0, 0], sizes = [16, 128], strides = [1, 1]} : vector<16x512xf32> to vector<16x128xf32>
    %18 = arith.negf %17 : vector<16x128xf32>
    %19 = math.exp %18 : vector<16x128xf32>
    %cst_14 = arith.constant 1.000000e+00 : f32
    %20 = vector.broadcast %cst_14 : f32 to vector<16x128xf32>
    %21 = arith.addf %20, %19 : vector<16x128xf32>
    %22 = arith.divf %20, %21 : vector<16x128xf32>
    %23 = vector.extract_strided_slice %16 {offsets = [0, 128], sizes = [16, 128], strides = [1, 1]} : vector<16x512xf32> to vector<16x128xf32>
    %24 = arith.negf %23 : vector<16x128xf32>
    %25 = math.exp %24 : vector<16x128xf32>
    %cst_15 = arith.constant 1.000000e+00 : f32
    %26 = vector.broadcast %cst_15 : f32 to vector<16x128xf32>
    %27 = arith.addf %26, %25 : vector<16x128xf32>
    %28 = arith.divf %26, %27 : vector<16x128xf32>
    %29 = vector.extract_strided_slice %16 {offsets = [0, 256], sizes = [16, 128], strides = [1, 1]} : vector<16x512xf32> to vector<16x128xf32>
    %30 = math.tanh %29 : vector<16x128xf32>
    %31 = vector.extract_strided_slice %16 {offsets = [0, 384], sizes = [16, 128], strides = [1, 1]} : vector<16x512xf32> to vector<16x128xf32>
    %32 = arith.negf %31 : vector<16x128xf32>
    %33 = math.exp %32 : vector<16x128xf32>
    %cst_16 = arith.constant 1.000000e+00 : f32
    %34 = vector.broadcast %cst_16 : f32 to vector<16x128xf32>
    %35 = arith.addf %34, %33 : vector<16x128xf32>
    %36 = arith.divf %34, %35 : vector<16x128xf32>
    %37 = arith.mulf %28, %7 : vector<16x128xf32>
    %38 = arith.mulf %22, %30 : vector<16x128xf32>
    %39 = arith.addf %37, %38 : vector<16x128xf32>
    %40 = math.tanh %39 : vector<16x128xf32>
    %41 = arith.mulf %36, %40 : vector<16x128xf32>
    %c0_17 = arith.constant 0 : index
    %c0_18 = arith.constant 0 : index
    %42 = vector.load %arg9[%c0_17, %c0_18] : memref<16x128xf32, #tpu.memory_space<vmem>>, vector<16x128xf32>
    tpu.vector_store %arg9[%c0_17, %c0_18], %41 {strides = array<i32>} : memref<16x128xf32, #tpu.memory_space<vmem>>, vector<16x128xf32>,
    %c0_19 = arith.constant 0 : index
    %c0_20 = arith.constant 0 : index
    %43 = vector.load %arg10[%c0_19, %c0_20] : memref<16x128xf32, #tpu.memory_space<vmem>>, vector<16x128xf32>
    tpu.vector_store %arg10[%c0_19, %c0_20], %39 {strides = array<i32>} : memref<16x128xf32, #tpu.memory_space<vmem>>, vector<16x128xf32>,
    %44 = arith.truncf %41 : vector<16x128xf32> to vector<16x128xbf16>
    %c0_21 = arith.constant 0 : index
    %c0_22 = arith.constant 0 : index
    %45 = vector.load %arg11[%c0_21, %c0_22] : memref<16x128xf32, #tpu.memory_space<vmem>>, vector<16x128xf32>
    %c0_23 = arith.constant 0 : index
    %c0_24 = arith.constant 0 : index
    %46 = vector.load %arg12[%c0_23, %c0_24] : memref<16x128xf32, #tpu.memory_space<vmem>>, vector<16x128xf32>
    %c0_25 = arith.constant 0 : index
    %c0_26 = arith.constant 0 : index
    %47 = vector.load %arg5[%c0_25, %c0_26] : memref<128x512xbf16, #tpu.memory_space<vmem>>, vector<128x512xbf16>
    %cst_27 = arith.constant dense<0.000000e+00> : vector<16x512xf32>
    %48 = tpu.matmul %44, %47, %cst_27 {dimension_numbers = #tpu.dot_dimension_numbers<[1], [0], [0], [1], [0, 0, 1, 1], [], []>} : vector<16x128xbf16>, vector<128x512xbf16>, vector<16x512xf32> -> vector<16x512xf32>
    %49 = arith.truncf %45 : vector<16x128xf32> to vector<16x128xbf16>
    %c0_28 = arith.constant 0 : index
    %c0_29 = arith.constant 0 : index
    %50 = vector.load %arg6[%c0_28, %c0_29] : memref<128x512xbf16, #tpu.memory_space<vmem>>, vector<128x512xbf16>
    %cst_30 = arith.constant dense<0.000000e+00> : vector<16x512xf32>
    %51 = tpu.matmul %49, %50, %cst_30 {dimension_numbers = #tpu.dot_dimension_numbers<[1], [0], [0], [1], [0, 0, 1, 1], [], []>} : vector<16x128xbf16>, vector<128x512xbf16>, vector<16x512xf32> -> vector<16x512xf32>
    %52 = arith.addf %48, %51 : vector<16x512xf32>
    %c0_31 = arith.constant 0 : index
    %c0_32 = arith.constant 0 : index
    %53 = vector.load %arg7[%c0_31, %c0_32] : memref<1x512xf32, #tpu.memory_space<vmem>>, vector<1x512xf32>
    %54 = vector.broadcast %53 : vector<1x512xf32> to vector<16x512xf32>
    %55 = arith.addf %52, %54 : vector<16x512xf32>
    %56 = vector.extract_strided_slice %55 {offsets = [0, 0], sizes = [16, 128], strides = [1, 1]} : vector<16x512xf32> to vector<16x128xf32>
    %57 = arith.negf %56 : vector<16x128xf32>
    %58 = math.exp %57 : vector<16x128xf32>
    %cst_33 = arith.constant 1.000000e+00 : f32
    %59 = vector.broadcast %cst_33 : f32 to vector<16x128xf32>
    %60 = arith.addf %59, %58 : vector<16x128xf32>
    %61 = arith.divf %59, %60 : vector<16x128xf32>
    %62 = vector.extract_strided_slice %55 {offsets = [0, 128], sizes = [16, 128], strides = [1, 1]} : vector<16x512xf32> to vector<16x128xf32>
    %63 = arith.negf %62 : vector<16x128xf32>
    %64 = math.exp %63 : vector<16x128xf32>
    %cst_34 = arith.constant 1.000000e+00 : f32
    %65 = vector.broadcast %cst_34 : f32 to vector<16x128xf32>
    %66 = arith.addf %65, %64 : vector<16x128xf32>
    %67 = arith.divf %65, %66 : vector<16x128xf32>
    %68 = vector.extract_strided_slice %55 {offsets = [0, 256], sizes = [16, 128], strides = [1, 1]} : vector<16x512xf32> to vector<16x128xf32>
    %69 = math.tanh %68 : vector<16x128xf32>
    %70 = vector.extract_strided_slice %55 {offsets = [0, 384], sizes = [16, 128], strides = [1, 1]} : vector<16x512xf32> to vector<16x128xf32>
    %71 = arith.negf %70 : vector<16x128xf32>
    %72 = math.exp %71 : vector<16x128xf32>
    %cst_35 = arith.constant 1.000000e+00 : f32
    %73 = vector.broadcast %cst_35 : f32 to vector<16x128xf32>
    %74 = arith.addf %73, %72 : vector<16x128xf32>
    %75 = arith.divf %73, %74 : vector<16x128xf32>
    %76 = arith.mulf %67, %46 : vector<16x128xf32>
    %77 = arith.mulf %61, %69 : vector<16x128xf32>
    %78 = arith.addf %76, %77 : vector<16x128xf32>
    %79 = math.tanh %78 : vector<16x128xf32>
    %80 = arith.mulf %75, %79 : vector<16x128xf32>
    %c0_36 = arith.constant 0 : index
    %c0_37 = arith.constant 0 : index
    %81 = vector.load %arg11[%c0_36, %c0_37] : memref<16x128xf32, #tpu.memory_space<vmem>>, vector<16x128xf32>
    tpu.vector_store %arg11[%c0_36, %c0_37], %80 {strides = array<i32>} : memref<16x128xf32, #tpu.memory_space<vmem>>, vector<16x128xf32>,
    %c0_38 = arith.constant 0 : index
    %c0_39 = arith.constant 0 : index
    %82 = vector.load %arg12[%c0_38, %c0_39] : memref<16x128xf32, #tpu.memory_space<vmem>>, vector<16x128xf32>
    tpu.vector_store %arg12[%c0_38, %c0_39], %78 {strides = array<i32>} : memref<16x128xf32, #tpu.memory_space<vmem>>, vector<16x128xf32>,
    %83 = arith.truncf %80 : vector<16x128xf32> to vector<16x128xbf16>
    %84 = arith.index_cast %c0_i32_1 : i32 to index
    %c0_40 = arith.constant 0 : index
    %c0_41 = arith.constant 0 : index
    %85 = vector.load %arg8[%84, %c0_40, %c0_41] : memref<8x16x128xbf16, #tpu.memory_space<vmem>>, vector<1x16x128xbf16>
    %86 = vector.shape_cast %85 : vector<1x16x128xbf16> to vector<16x128xbf16>
    %87 = vector.shape_cast %83 : vector<16x128xbf16> to vector<1x16x128xbf16>
    tpu.vector_store %arg8[%84, %c0_40, %c0_41], %87 {strides = array<i32>} : memref<8x16x128xbf16, #tpu.memory_space<vmem>>, vector<1x16x128xbf16>,
    %c1_i32 = arith.constant 1 : i32
    %88 = arith.index_cast %c1_i32 : i32 to index
    %c0_42 = arith.constant 0 : index
    %c0_43 = arith.constant 0 : index
    %89 = vector.load %arg1[%88, %c0_42, %c0_43] : memref<8x16x128xbf16, #tpu.memory_space<vmem>>, vector<1x16x128xbf16>
    %90 = vector.shape_cast %89 : vector<1x16x128xbf16> to vector<16x128xbf16>
    %c0_44 = arith.constant 0 : index
    %c0_45 = arith.constant 0 : index
    %91 = vector.load %arg9[%c0_44, %c0_45] : memref<16x128xf32, #tpu.memory_space<vmem>>, vector<16x128xf32>
    %c0_46 = arith.constant 0 : index
    %c0_47 = arith.constant 0 : index
    %92 = vector.load %arg10[%c0_46, %c0_47] : memref<16x128xf32, #tpu.memory_space<vmem>>, vector<16x128xf32>
    %c0_48 = arith.constant 0 : index
    %c0_49 = arith.constant 0 : index
    %93 = vector.load %arg2[%c0_48, %c0_49] : memref<128x512xbf16, #tpu.memory_space<vmem>>, vector<128x512xbf16>
    %cst_50 = arith.constant dense<0.000000e+00> : vector<16x512xf32>
    %94 = tpu.matmul %90, %93, %cst_50 {dimension_numbers = #tpu.dot_dimension_numbers<[1], [0], [0], [1], [0, 0, 1, 1], [], []>} : vector<16x128xbf16>, vector<128x512xbf16>, vector<16x512xf32> -> vector<16x512xf32>
    %95 = arith.truncf %91 : vector<16x128xf32> to vector<16x128xbf16>
    %c0_51 = arith.constant 0 : index
    %c0_52 = arith.constant 0 : index
    %96 = vector.load %arg3[%c0_51, %c0_52] : memref<128x512xbf16, #tpu.memory_space<vmem>>, vector<128x512xbf16>
    %cst_53 = arith.constant dense<0.000000e+00> : vector<16x512xf32>
    %97 = tpu.matmul %95, %96, %cst_53 {dimension_numbers = #tpu.dot_dimension_numbers<[1], [0], [0], [1], [0, 0, 1, 1], [], []>} : vector<16x128xbf16>, vector<128x512xbf16>, vector<16x512xf32> -> vector<16x512xf32>
    %98 = arith.addf %94, %97 : vector<16x512xf32>
    %c0_54 = arith.constant 0 : index
    %c0_55 = arith.constant 0 : index
    %99 = vector.load %arg4[%c0_54, %c0_55] : memref<1x512xf32, #tpu.memory_space<vmem>>, vector<1x512xf32>
    %100 = vector.broadcast %99 : vector<1x512xf32> to vector<16x512xf32>
    %101 = arith.addf %98, %100 : vector<16x512xf32>
    %102 = vector.extract_strided_slice %101 {offsets = [0, 0], sizes = [16, 128], strides = [1, 1]} : vector<16x512xf32> to vector<16x128xf32>
    %103 = arith.negf %102 : vector<16x128xf32>
    %104 = math.exp %103 : vector<16x128xf32>
    %cst_56 = arith.constant 1.000000e+00 : f32
    %105 = vector.broadcast %cst_56 : f32 to vector<16x128xf32>
    %106 = arith.addf %105, %104 : vector<16x128xf32>
    %107 = arith.divf %105, %106 : vector<16x128xf32>
    %108 = vector.extract_strided_slice %101 {offsets = [0, 128], sizes = [16, 128], strides = [1, 1]} : vector<16x512xf32> to vector<16x128xf32>
    %109 = arith.negf %108 : vector<16x128xf32>
    %110 = math.exp %109 : vector<16x128xf32>
    %cst_57 = arith.constant 1.000000e+00 : f32
    %111 = vector.broadcast %cst_57 : f32 to vector<16x128xf32>
    %112 = arith.addf %111, %110 : vector<16x128xf32>
    %113 = arith.divf %111, %112 : vector<16x128xf32>
    %114 = vector.extract_strided_slice %101 {offsets = [0, 256], sizes = [16, 128], strides = [1, 1]} : vector<16x512xf32> to vector<16x128xf32>
    %115 = math.tanh %114 : vector<16x128xf32>
    %116 = vector.extract_strided_slice %101 {offsets = [0, 384], sizes = [16, 128], strides = [1, 1]} : vector<16x512xf32> to vector<16x128xf32>
    %117 = arith.negf %116 : vector<16x128xf32>
    %118 = math.exp %117 : vector<16x128xf32>
    %cst_58 = arith.constant 1.000000e+00 : f32
    %119 = vector.broadcast %cst_58 : f32 to vector<16x128xf32>
    %120 = arith.addf %119, %118 : vector<16x128xf32>
    %121 = arith.divf %119, %120 : vector<16x128xf32>
    %122 = arith.mulf %113, %92 : vector<16x128xf32>
    %123 = arith.mulf %107, %115 : vector<16x128xf32>
    %124 = arith.addf %122, %123 : vector<16x128xf32>
    %125 = math.tanh %124 : vector<16x128xf32>
    %126 = arith.mulf %121, %125 : vector<16x128xf32>
    %c0_59 = arith.constant 0 : index
    %c0_60 = arith.constant 0 : index
    %127 = vector.load %arg9[%c0_59, %c0_60] : memref<16x128xf32, #tpu.memory_space<vmem>>, vector<16x128xf32>
    tpu.vector_store %arg9[%c0_59, %c0_60], %126 {strides = array<i32>} : memref<16x128xf32, #tpu.memory_space<vmem>>, vector<16x128xf32>,
    %c0_61 = arith.constant 0 : index
    %c0_62 = arith.constant 0 : index
    %128 = vector.load %arg10[%c0_61, %c0_62] : memref<16x128xf32, #tpu.memory_space<vmem>>, vector<16x128xf32>
    tpu.vector_store %arg10[%c0_61, %c0_62], %124 {strides = array<i32>} : memref<16x128xf32, #tpu.memory_space<vmem>>, vector<16x128xf32>,
    %129 = arith.truncf %126 : vector<16x128xf32> to vector<16x128xbf16>
    %c0_63 = arith.constant 0 : index
    %c0_64 = arith.constant 0 : index
    %130 = vector.load %arg11[%c0_63, %c0_64] : memref<16x128xf32, #tpu.memory_space<vmem>>, vector<16x128xf32>
    %c0_65 = arith.constant 0 : index
    %c0_66 = arith.constant 0 : index
    %131 = vector.load %arg12[%c0_65, %c0_66] : memref<16x128xf32, #tpu.memory_space<vmem>>, vector<16x128xf32>
    %c0_67 = arith.constant 0 : index
    %c0_68 = arith.constant 0 : index
    %132 = vector.load %arg5[%c0_67, %c0_68] : memref<128x512xbf16, #tpu.memory_space<vmem>>, vector<128x512xbf16>
    %cst_69 = arith.constant dense<0.000000e+00> : vector<16x512xf32>
    %133 = tpu.matmul %129, %132, %cst_69 {dimension_numbers = #tpu.dot_dimension_numbers<[1], [0], [0], [1], [0, 0, 1, 1], [], []>} : vector<16x128xbf16>, vector<128x512xbf16>, vector<16x512xf32> -> vector<16x512xf32>
    %134 = arith.truncf %130 : vector<16x128xf32> to vector<16x128xbf16>
    %c0_70 = arith.constant 0 : index
    %c0_71 = arith.constant 0 : index
    %135 = vector.load %arg6[%c0_70, %c0_71] : memref<128x512xbf16, #tpu.memory_space<vmem>>, vector<128x512xbf16>
    %cst_72 = arith.constant dense<0.000000e+00> : vector<16x512xf32>
    %136 = tpu.matmul %134, %135, %cst_72 {dimension_numbers = #tpu.dot_dimension_numbers<[1], [0], [0], [1], [0, 0, 1, 1], [], []>} : vector<16x128xbf16>, vector<128x512xbf16>, vector<16x512xf32> -> vector<16x512xf32>
    %137 = arith.addf %133, %136 : vector<16x512xf32>
    %c0_73 = arith.constant 0 : index
    %c0_74 = arith.constant 0 : index
    %138 = vector.load %arg7[%c0_73, %c0_74] : memref<1x512xf32, #tpu.memory_space<vmem>>, vector<1x512xf32>
    %139 = vector.broadcast %138 : vector<1x512xf32> to vector<16x512xf32>
    %140 = arith.addf %137, %139 : vector<16x512xf32>
    %141 = vector.extract_strided_slice %140 {offsets = [0, 0], sizes = [16, 128], strides = [1, 1]} : vector<16x512xf32> to vector<16x128xf32>
    %142 = arith.negf %141 : vector<16x128xf32>
    %143 = math.exp %142 : vector<16x128xf32>
    %cst_75 = arith.constant 1.000000e+00 : f32
    %144 = vector.broadcast %cst_75 : f32 to vector<16x128xf32>
    %145 = arith.addf %144, %143 : vector<16x128xf32>
    %146 = arith.divf %144, %145 : vector<16x128xf32>
    %147 = vector.extract_strided_slice %140 {offsets = [0, 128], sizes = [16, 128], strides = [1, 1]} : vector<16x512xf32> to vector<16x128xf32>
    %148 = arith.negf %147 : vector<16x128xf32>
    %149 = math.exp %148 : vector<16x128xf32>
    %cst_76 = arith.constant 1.000000e+00 : f32
    %150 = vector.broadcast %cst_76 : f32 to vector<16x128xf32>
    %151 = arith.addf %150, %149 : vector<16x128xf32>
    %152 = arith.divf %150, %151 : vector<16x128xf32>
    %153 = vector.extract_strided_slice %140 {offsets = [0, 256], sizes = [16, 128], strides = [1, 1]} : vector<16x512xf32> to vector<16x128xf32>
    %154 = math.tanh %153 : vector<16x128xf32>
    %155 = vector.extract_strided_slice %140 {offsets = [0, 384], sizes = [16, 128], strides = [1, 1]} : vector<16x512xf32> to vector<16x128xf32>
    %156 = arith.negf %155 : vector<16x128xf32>
    %157 = math.exp %156 : vector<16x128xf32>
    %cst_77 = arith.constant 1.000000e+00 : f32
    %158 = vector.broadcast %cst_77 : f32 to vector<16x128xf32>
    %159 = arith.addf %158, %157 : vector<16x128xf32>
    %160 = arith.divf %158, %159 : vector<16x128xf32>
    %161 = arith.mulf %152, %131 : vector<16x128xf32>
    %162 = arith.mulf %146, %154 : vector<16x128xf32>
    %163 = arith.addf %161, %162 : vector<16x128xf32>
    %164 = math.tanh %163 : vector<16x128xf32>
    %165 = arith.mulf %160, %164 : vector<16x128xf32>
    %c0_78 = arith.constant 0 : index
    %c0_79 = arith.constant 0 : index
    %166 = vector.load %arg11[%c0_78, %c0_79] : memref<16x128xf32, #tpu.memory_space<vmem>>, vector<16x128xf32>
    tpu.vector_store %arg11[%c0_78, %c0_79], %165 {strides = array<i32>} : memref<16x128xf32, #tpu.memory_space<vmem>>, vector<16x128xf32>,
    %c0_80 = arith.constant 0 : index
    %c0_81 = arith.constant 0 : index
    %167 = vector.load %arg12[%c0_80, %c0_81] : memref<16x128xf32, #tpu.memory_space<vmem>>, vector<16x128xf32>
    tpu.vector_store %arg12[%c0_80, %c0_81], %163 {strides = array<i32>} : memref<16x128xf32, #tpu.memory_space<vmem>>, vector<16x128xf32>,
    %168 = arith.truncf %165 : vector<16x128xf32> to vector<16x128xbf16>
    %169 = arith.index_cast %c1_i32 : i32 to index
    %c0_82 = arith.constant 0 : index
    %c0_83 = arith.constant 0 : index
    %170 = vector.load %arg8[%169, %c0_82, %c0_83] : memref<8x16x128xbf16, #tpu.memory_space<vmem>>, vector<1x16x128xbf16>
    %171 = vector.shape_cast %170 : vector<1x16x128xbf16> to vector<16x128xbf16>
    %172 = vector.shape_cast %168 : vector<16x128xbf16> to vector<1x16x128xbf16>
    tpu.vector_store %arg8[%169, %c0_82, %c0_83], %172 {strides = array<i32>} : memref<8x16x128xbf16, #tpu.memory_space<vmem>>, vector<1x16x128xbf16>,
    %c2_i32 = arith.constant 2 : i32
    %173 = arith.index_cast %c2_i32 : i32 to index
    %c0_84 = arith.constant 0 : index
    %c0_85 = arith.constant 0 : index
    %174 = vector.load %arg1[%173, %c0_84, %c0_85] : memref<8x16x128xbf16, #tpu.memory_space<vmem>>, vector<1x16x128xbf16>
    %175 = vector.shape_cast %174 : vector<1x16x128xbf16> to vector<16x128xbf16>
    %c0_86 = arith.constant 0 : index
    %c0_87 = arith.constant 0 : index
    %176 = vector.load %arg9[%c0_86, %c0_87] : memref<16x128xf32, #tpu.memory_space<vmem>>, vector<16x128xf32>
    %c0_88 = arith.constant 0 : index
    %c0_89 = arith.constant 0 : index
    %177 = vector.load %arg10[%c0_88, %c0_89] : memref<16x128xf32, #tpu.memory_space<vmem>>, vector<16x128xf32>
    %c0_90 = arith.constant 0 : index
    %c0_91 = arith.constant 0 : index
    %178 = vector.load %arg2[%c0_90, %c0_91] : memref<128x512xbf16, #tpu.memory_space<vmem>>, vector<128x512xbf16>
    %cst_92 = arith.constant dense<0.000000e+00> : vector<16x512xf32>
    %179 = tpu.matmul %175, %178, %cst_92 {dimension_numbers = #tpu.dot_dimension_numbers<[1], [0], [0], [1], [0, 0, 1, 1], [], []>} : vector<16x128xbf16>, vector<128x512xbf16>, vector<16x512xf32> -> vector<16x512xf32>
    %180 = arith.truncf %176 : vector<16x128xf32> to vector<16x128xbf16>
    %c0_93 = arith.constant 0 : index
    %c0_94 = arith.constant 0 : index
    %181 = vector.load %arg3[%c0_93, %c0_94] : memref<128x512xbf16, #tpu.memory_space<vmem>>, vector<128x512xbf16>
    %cst_95 = arith.constant dense<0.000000e+00> : vector<16x512xf32>
    %182 = tpu.matmul %180, %181, %cst_95 {dimension_numbers = #tpu.dot_dimension_numbers<[1], [0], [0], [1], [0, 0, 1, 1], [], []>} : vector<16x128xbf16>, vector<128x512xbf16>, vector<16x512xf32> -> vector<16x512xf32>
    %183 = arith.addf %179, %182 : vector<16x512xf32>
    %c0_96 = arith.constant 0 : index
    %c0_97 = arith.constant 0 : index
    %184 = vector.load %arg4[%c0_96, %c0_97] : memref<1x512xf32, #tpu.memory_space<vmem>>, vector<1x512xf32>
    %185 = vector.broadcast %184 : vector<1x512xf32> to vector<16x512xf32>
    %186 = arith.addf %183, %185 : vector<16x512xf32>
    %187 = vector.extract_strided_slice %186 {offsets = [0, 0], sizes = [16, 128], strides = [1, 1]} : vector<16x512xf32> to vector<16x128xf32>
    %188 = arith.negf %187 : vector<16x128xf32>
    %189 = math.exp %188 : vector<16x128xf32>
    %cst_98 = arith.constant 1.000000e+00 : f32
    %190 = vector.broadcast %cst_98 : f32 to vector<16x128xf32>
    %191 = arith.addf %190, %189 : vector<16x128xf32>
    %192 = arith.divf %190, %191 : vector<16x128xf32>
    %193 = vector.extract_strided_slice %186 {offsets = [0, 128], sizes = [16, 128], strides = [1, 1]} : vector<16x512xf32> to vector<16x128xf32>
    %194 = arith.negf %193 : vector<16x128xf32>
    %195 = math.exp %194 : vector<16x128xf32>
    %cst_99 = arith.constant 1.000000e+00 : f32
    %196 = vector.broadcast %cst_99 : f32 to vector<16x128xf32>
    %197 = arith.addf %196, %195 : vector<16x128xf32>
    %198 = arith.divf %196, %197 : vector<16x128xf32>
    %199 = vector.extract_strided_slice %186 {offsets = [0, 256], sizes = [16, 128], strides = [1, 1]} : vector<16x512xf32> to vector<16x128xf32>
    %200 = math.tanh %199 : vector<16x128xf32>
    %201 = vector.extract_strided_slice %186 {offsets = [0, 384], sizes = [16, 128], strides = [1, 1]} : vector<16x512xf32> to vector<16x128xf32>
    %202 = arith.negf %201 : vector<16x128xf32>
    %203 = math.exp %202 : vector<16x128xf32>
    %cst_100 = arith.constant 1.000000e+00 : f32
    %204 = vector.broadcast %cst_100 : f32 to vector<16x128xf32>
    %205 = arith.addf %204, %203 : vector<16x128xf32>
    %206 = arith.divf %204, %205 : vector<16x128xf32>
    %207 = arith.mulf %198, %177 : vector<16x128xf32>
    %208 = arith.mulf %192, %200 : vector<16x128xf32>
    %209 = arith.addf %207, %208 : vector<16x128xf32>
    %210 = math.tanh %209 : vector<16x128xf32>
    %211 = arith.mulf %206, %210 : vector<16x128xf32>
    %c0_101 = arith.constant 0 : index
    %c0_102 = arith.constant 0 : index
    %212 = vector.load %arg9[%c0_101, %c0_102] : memref<16x128xf32, #tpu.memory_space<vmem>>, vector<16x128xf32>
    tpu.vector_store %arg9[%c0_101, %c0_102], %211 {strides = array<i32>} : memref<16x128xf32, #tpu.memory_space<vmem>>, vector<16x128xf32>,
    %c0_103 = arith.constant 0 : index
    %c0_104 = arith.constant 0 : index
    %213 = vector.load %arg10[%c0_103, %c0_104] : memref<16x128xf32, #tpu.memory_space<vmem>>, vector<16x128xf32>
    tpu.vector_store %arg10[%c0_103, %c0_104], %209 {strides = array<i32>} : memref<16x128xf32, #tpu.memory_space<vmem>>, vector<16x128xf32>,
    %214 = arith.truncf %211 : vector<16x128xf32> to vector<16x128xbf16>
    %c0_105 = arith.constant 0 : index
    %c0_106 = arith.constant 0 : index
    %215 = vector.load %arg11[%c0_105, %c0_106] : memref<16x128xf32, #tpu.memory_space<vmem>>, vector<16x128xf32>
    %c0_107 = arith.constant 0 : index
    %c0_108 = arith.constant 0 : index
    %216 = vector.load %arg12[%c0_107, %c0_108] : memref<16x128xf32, #tpu.memory_space<vmem>>, vector<16x128xf32>
    %c0_109 = arith.constant 0 : index
    %c0_110 = arith.constant 0 : index
    %217 = vector.load %arg5[%c0_109, %c0_110] : memref<128x512xbf16, #tpu.memory_space<vmem>>, vector<128x512xbf16>
    %cst_111 = arith.constant dense<0.000000e+00> : vector<16x512xf32>
    %218 = tpu.matmul %214, %217, %cst_111 {dimension_numbers = #tpu.dot_dimension_numbers<[1], [0], [0], [1], [0, 0, 1, 1], [], []>} : vector<16x128xbf16>, vector<128x512xbf16>, vector<16x512xf32> -> vector<16x512xf32>
    %219 = arith.truncf %215 : vector<16x128xf32> to vector<16x128xbf16>
    %c0_112 = arith.constant 0 : index
    %c0_113 = arith.constant 0 : index
    %220 = vector.load %arg6[%c0_112, %c0_113] : memref<128x512xbf16, #tpu.memory_space<vmem>>, vector<128x512xbf16>
    %cst_114 = arith.constant dense<0.000000e+00> : vector<16x512xf32>
    %221 = tpu.matmul %219, %220, %cst_114 {dimension_numbers = #tpu.dot_dimension_numbers<[1], [0], [0], [1], [0, 0, 1, 1], [], []>} : vector<16x128xbf16>, vector<128x512xbf16>, vector<16x512xf32> -> vector<16x512xf32>
    %222 = arith.addf %218, %221 : vector<16x512xf32>
    %c0_115 = arith.constant 0 : index
    %c0_116 = arith.constant 0 : index
    %223 = vector.load %arg7[%c0_115, %c0_116] : memref<1x512xf32, #tpu.memory_space<vmem>>, vector<1x512xf32>
    %224 = vector.broadcast %223 : vector<1x512xf32> to vector<16x512xf32>
    %225 = arith.addf %222, %224 : vector<16x512xf32>
    %226 = vector.extract_strided_slice %225 {offsets = [0, 0], sizes = [16, 128], strides = [1, 1]} : vector<16x512xf32> to vector<16x128xf32>
    %227 = arith.negf %226 : vector<16x128xf32>
    %228 = math.exp %227 : vector<16x128xf32>
    %cst_117 = arith.constant 1.000000e+00 : f32
    %229 = vector.broadcast %cst_117 : f32 to vector<16x128xf32>
    %230 = arith.addf %229, %228 : vector<16x128xf32>
    %231 = arith.divf %229, %230 : vector<16x128xf32>
    %232 = vector.extract_strided_slice %225 {offsets = [0, 128], sizes = [16, 128], strides = [1, 1]} : vector<16x512xf32> to vector<16x128xf32>
    %233 = arith.negf %232 : vector<16x128xf32>
    %234 = math.exp %233 : vector<16x128xf32>
    %cst_118 = arith.constant 1.000000e+00 : f32
    %235 = vector.broadcast %cst_118 : f32 to vector<16x128xf32>
    %236 = arith.addf %235, %234 : vector<16x128xf32>
    %237 = arith.divf %235, %236 : vector<16x128xf32>
    %238 = vector.extract_strided_slice %225 {offsets = [0, 256], sizes = [16, 128], strides = [1, 1]} : vector<16x512xf32> to vector<16x128xf32>
    %239 = math.tanh %238 : vector<16x128xf32>
    %240 = vector.extract_strided_slice %225 {offsets = [0, 384], sizes = [16, 128], strides = [1, 1]} : vector<16x512xf32> to vector<16x128xf32>
    %241 = arith.negf %240 : vector<16x128xf32>
    %242 = math.exp %241 : vector<16x128xf32>
    %cst_119 = arith.constant 1.000000e+00 : f32
    %243 = vector.broadcast %cst_119 : f32 to vector<16x128xf32>
    %244 = arith.addf %243, %242 : vector<16x128xf32>
    %245 = arith.divf %243, %244 : vector<16x128xf32>
    %246 = arith.mulf %237, %216 : vector<16x128xf32>
    %247 = arith.mulf %231, %239 : vector<16x128xf32>
    %248 = arith.addf %246, %247 : vector<16x128xf32>
    %249 = math.tanh %248 : vector<16x128xf32>
    %250 = arith.mulf %245, %249 : vector<16x128xf32>
    %c0_120 = arith.constant 0 : index
    %c0_121 = arith.constant 0 : index
    %251 = vector.load %arg11[%c0_120, %c0_121] : memref<16x128xf32, #tpu.memory_space<vmem>>, vector<16x128xf32>
    tpu.vector_store %arg11[%c0_120, %c0_121], %250 {strides = array<i32>} : memref<16x128xf32, #tpu.memory_space<vmem>>, vector<16x128xf32>,
    %c0_122 = arith.constant 0 : index
    %c0_123 = arith.constant 0 : index
    %252 = vector.load %arg12[%c0_122, %c0_123] : memref<16x128xf32, #tpu.memory_space<vmem>>, vector<16x128xf32>
    tpu.vector_store %arg12[%c0_122, %c0_123], %248 {strides = array<i32>} : memref<16x128xf32, #tpu.memory_space<vmem>>, vector<16x128xf32>,
    %253 = arith.truncf %250 : vector<16x128xf32> to vector<16x128xbf16>
    %254 = arith.index_cast %c2_i32 : i32 to index
    %c0_124 = arith.constant 0 : index
    %c0_125 = arith.constant 0 : index
    %255 = vector.load %arg8[%254, %c0_124, %c0_125] : memref<8x16x128xbf16, #tpu.memory_space<vmem>>, vector<1x16x128xbf16>
    %256 = vector.shape_cast %255 : vector<1x16x128xbf16> to vector<16x128xbf16>
    %257 = vector.shape_cast %253 : vector<16x128xbf16> to vector<1x16x128xbf16>
    tpu.vector_store %arg8[%254, %c0_124, %c0_125], %257 {strides = array<i32>} : memref<8x16x128xbf16, #tpu.memory_space<vmem>>, vector<1x16x128xbf16>,
    %c3_i32 = arith.constant 3 : i32
    %258 = arith.index_cast %c3_i32 : i32 to index
    %c0_126 = arith.constant 0 : index
    %c0_127 = arith.constant 0 : index
    %259 = vector.load %arg1[%258, %c0_126, %c0_127] : memref<8x16x128xbf16, #tpu.memory_space<vmem>>, vector<1x16x128xbf16>
    %260 = vector.shape_cast %259 : vector<1x16x128xbf16> to vector<16x128xbf16>
    %c0_128 = arith.constant 0 : index
    %c0_129 = arith.constant 0 : index
    %261 = vector.load %arg9[%c0_128, %c0_129] : memref<16x128xf32, #tpu.memory_space<vmem>>, vector<16x128xf32>
    %c0_130 = arith.constant 0 : index
    %c0_131 = arith.constant 0 : index
    %262 = vector.load %arg10[%c0_130, %c0_131] : memref<16x128xf32, #tpu.memory_space<vmem>>, vector<16x128xf32>
    %c0_132 = arith.constant 0 : index
    %c0_133 = arith.constant 0 : index
    %263 = vector.load %arg2[%c0_132, %c0_133] : memref<128x512xbf16, #tpu.memory_space<vmem>>, vector<128x512xbf16>
    %cst_134 = arith.constant dense<0.000000e+00> : vector<16x512xf32>
    %264 = tpu.matmul %260, %263, %cst_134 {dimension_numbers = #tpu.dot_dimension_numbers<[1], [0], [0], [1], [0, 0, 1, 1], [], []>} : vector<16x128xbf16>, vector<128x512xbf16>, vector<16x512xf32> -> vector<16x512xf32>
    %265 = arith.truncf %261 : vector<16x128xf32> to vector<16x128xbf16>
    %c0_135 = arith.constant 0 : index
    %c0_136 = arith.constant 0 : index
    %266 = vector.load %arg3[%c0_135, %c0_136] : memref<128x512xbf16, #tpu.memory_space<vmem>>, vector<128x512xbf16>
    %cst_137 = arith.constant dense<0.000000e+00> : vector<16x512xf32>
    %267 = tpu.matmul %265, %266, %cst_137 {dimension_numbers = #tpu.dot_dimension_numbers<[1], [0], [0], [1], [0, 0, 1, 1], [], []>} : vector<16x128xbf16>, vector<128x512xbf16>, vector<16x512xf32> -> vector<16x512xf32>
    %268 = arith.addf %264, %267 : vector<16x512xf32>
    %c0_138 = arith.constant 0 : index
    %c0_139 = arith.constant 0 : index
    %269 = vector.load %arg4[%c0_138, %c0_139] : memref<1x512xf32, #tpu.memory_space<vmem>>, vector<1x512xf32>
    %270 = vector.broadcast %269 : vector<1x512xf32> to vector<16x512xf32>
    %271 = arith.addf %268, %270 : vector<16x512xf32>
    %272 = vector.extract_strided_slice %271 {offsets = [0, 0], sizes = [16, 128], strides = [1, 1]} : vector<16x512xf32> to vector<16x128xf32>
    %273 = arith.negf %272 : vector<16x128xf32>
    %274 = math.exp %273 : vector<16x128xf32>
    %cst_140 = arith.constant 1.000000e+00 : f32
    %275 = vector.broadcast %cst_140 : f32 to vector<16x128xf32>
    %276 = arith.addf %275, %274 : vector<16x128xf32>
    %277 = arith.divf %275, %276 : vector<16x128xf32>
    %278 = vector.extract_strided_slice %271 {offsets = [0, 128], sizes = [16, 128], strides = [1, 1]} : vector<16x512xf32> to vector<16x128xf32>
    %279 = arith.negf %278 : vector<16x128xf32>
    %280 = math.exp %279 : vector<16x128xf32>
    %cst_141 = arith.constant 1.000000e+00 : f32
    %281 = vector.broadcast %cst_141 : f32 to vector<16x128xf32>
    %282 = arith.addf %281, %280 : vector<16x128xf32>
    %283 = arith.divf %281, %282 : vector<16x128xf32>
    %284 = vector.extract_strided_slice %271 {offsets = [0, 256], sizes = [16, 128], strides = [1, 1]} : vector<16x512xf32> to vector<16x128xf32>
    %285 = math.tanh %284 : vector<16x128xf32>
    %286 = vector.extract_strided_slice %271 {offsets = [0, 384], sizes = [16, 128], strides = [1, 1]} : vector<16x512xf32> to vector<16x128xf32>
    %287 = arith.negf %286 : vector<16x128xf32>
    %288 = math.exp %287 : vector<16x128xf32>
    %cst_142 = arith.constant 1.000000e+00 : f32
    %289 = vector.broadcast %cst_142 : f32 to vector<16x128xf32>
    %290 = arith.addf %289, %288 : vector<16x128xf32>
    %291 = arith.divf %289, %290 : vector<16x128xf32>
    %292 = arith.mulf %283, %262 : vector<16x128xf32>
    %293 = arith.mulf %277, %285 : vector<16x128xf32>
    %294 = arith.addf %292, %293 : vector<16x128xf32>
    %295 = math.tanh %294 : vector<16x128xf32>
    %296 = arith.mulf %291, %295 : vector<16x128xf32>
    %c0_143 = arith.constant 0 : index
    %c0_144 = arith.constant 0 : index
    %297 = vector.load %arg9[%c0_143, %c0_144] : memref<16x128xf32, #tpu.memory_space<vmem>>, vector<16x128xf32>
    tpu.vector_store %arg9[%c0_143, %c0_144], %296 {strides = array<i32>} : memref<16x128xf32, #tpu.memory_space<vmem>>, vector<16x128xf32>,
    %c0_145 = arith.constant 0 : index
    %c0_146 = arith.constant 0 : index
    %298 = vector.load %arg10[%c0_145, %c0_146] : memref<16x128xf32, #tpu.memory_space<vmem>>, vector<16x128xf32>
    tpu.vector_store %arg10[%c0_145, %c0_146], %294 {strides = array<i32>} : memref<16x128xf32, #tpu.memory_space<vmem>>, vector<16x128xf32>,
    %299 = arith.truncf %296 : vector<16x128xf32> to vector<16x128xbf16>
    %c0_147 = arith.constant 0 : index
    %c0_148 = arith.constant 0 : index
    %300 = vector.load %arg11[%c0_147, %c0_148] : memref<16x128xf32, #tpu.memory_space<vmem>>, vector<16x128xf32>
    %c0_149 = arith.constant 0 : index
    %c0_150 = arith.constant 0 : index
    %301 = vector.load %arg12[%c0_149, %c0_150] : memref<16x128xf32, #tpu.memory_space<vmem>>, vector<16x128xf32>
    %c0_151 = arith.constant 0 : index
    %c0_152 = arith.constant 0 : index
    %302 = vector.load %arg5[%c0_151, %c0_152] : memref<128x512xbf16, #tpu.memory_space<vmem>>, vector<128x512xbf16>
    %cst_153 = arith.constant dense<0.000000e+00> : vector<16x512xf32>
    %303 = tpu.matmul %299, %302, %cst_153 {dimension_numbers = #tpu.dot_dimension_numbers<[1], [0], [0], [1], [0, 0, 1, 1], [], []>} : vector<16x128xbf16>, vector<128x512xbf16>, vector<16x512xf32> -> vector<16x512xf32>
    %304 = arith.truncf %300 : vector<16x128xf32> to vector<16x128xbf16>
    %c0_154 = arith.constant 0 : index
    %c0_155 = arith.constant 0 : index
    %305 = vector.load %arg6[%c0_154, %c0_155] : memref<128x512xbf16, #tpu.memory_space<vmem>>, vector<128x512xbf16>
    %cst_156 = arith.constant dense<0.000000e+00> : vector<16x512xf32>
    %306 = tpu.matmul %304, %305, %cst_156 {dimension_numbers = #tpu.dot_dimension_numbers<[1], [0], [0], [1], [0, 0, 1, 1], [], []>} : vector<16x128xbf16>, vector<128x512xbf16>, vector<16x512xf32> -> vector<16x512xf32>
    %307 = arith.addf %303, %306 : vector<16x512xf32>
    %c0_157 = arith.constant 0 : index
    %c0_158 = arith.constant 0 : index
    %308 = vector.load %arg7[%c0_157, %c0_158] : memref<1x512xf32, #tpu.memory_space<vmem>>, vector<1x512xf32>
    %309 = vector.broadcast %308 : vector<1x512xf32> to vector<16x512xf32>
    %310 = arith.addf %307, %309 : vector<16x512xf32>
    %311 = vector.extract_strided_slice %310 {offsets = [0, 0], sizes = [16, 128], strides = [1, 1]} : vector<16x512xf32> to vector<16x128xf32>
    %312 = arith.negf %311 : vector<16x128xf32>
    %313 = math.exp %312 : vector<16x128xf32>
    %cst_159 = arith.constant 1.000000e+00 : f32
    %314 = vector.broadcast %cst_159 : f32 to vector<16x128xf32>
    %315 = arith.addf %314, %313 : vector<16x128xf32>
    %316 = arith.divf %314, %315 : vector<16x128xf32>
    %317 = vector.extract_strided_slice %310 {offsets = [0, 128], sizes = [16, 128], strides = [1, 1]} : vector<16x512xf32> to vector<16x128xf32>
    %318 = arith.negf %317 : vector<16x128xf32>
    %319 = math.exp %318 : vector<16x128xf32>
    %cst_160 = arith.constant 1.000000e+00 : f32
    %320 = vector.broadcast %cst_160 : f32 to vector<16x128xf32>
    %321 = arith.addf %320, %319 : vector<16x128xf32>
    %322 = arith.divf %320, %321 : vector<16x128xf32>
    %323 = vector.extract_strided_slice %310 {offsets = [0, 256], sizes = [16, 128], strides = [1, 1]} : vector<16x512xf32> to vector<16x128xf32>
    %324 = math.tanh %323 : vector<16x128xf32>
    %325 = vector.extract_strided_slice %310 {offsets = [0, 384], sizes = [16, 128], strides = [1, 1]} : vector<16x512xf32> to vector<16x128xf32>
    %326 = arith.negf %325 : vector<16x128xf32>
    %327 = math.exp %326 : vector<16x128xf32>
    %cst_161 = arith.constant 1.000000e+00 : f32
    %328 = vector.broadcast %cst_161 : f32 to vector<16x128xf32>
    %329 = arith.addf %328, %327 : vector<16x128xf32>
    %330 = arith.divf %328, %329 : vector<16x128xf32>
    %331 = arith.mulf %322, %301 : vector<16x128xf32>
    %332 = arith.mulf %316, %324 : vector<16x128xf32>
    %333 = arith.addf %331, %332 : vector<16x128xf32>
    %334 = math.tanh %333 : vector<16x128xf32>
    %335 = arith.mulf %330, %334 : vector<16x128xf32>
    %c0_162 = arith.constant 0 : index
    %c0_163 = arith.constant 0 : index
    %336 = vector.load %arg11[%c0_162, %c0_163] : memref<16x128xf32, #tpu.memory_space<vmem>>, vector<16x128xf32>
    tpu.vector_store %arg11[%c0_162, %c0_163], %335 {strides = array<i32>} : memref<16x128xf32, #tpu.memory_space<vmem>>, vector<16x128xf32>,
    %c0_164 = arith.constant 0 : index
    %c0_165 = arith.constant 0 : index
    %337 = vector.load %arg12[%c0_164, %c0_165] : memref<16x128xf32, #tpu.memory_space<vmem>>, vector<16x128xf32>
    tpu.vector_store %arg12[%c0_164, %c0_165], %333 {strides = array<i32>} : memref<16x128xf32, #tpu.memory_space<vmem>>, vector<16x128xf32>,
    %338 = arith.truncf %335 : vector<16x128xf32> to vector<16x128xbf16>
    %339 = arith.index_cast %c3_i32 : i32 to index
    %c0_166 = arith.constant 0 : index
    %c0_167 = arith.constant 0 : index
    %340 = vector.load %arg8[%339, %c0_166, %c0_167] : memref<8x16x128xbf16, #tpu.memory_space<vmem>>, vector<1x16x128xbf16>
    %341 = vector.shape_cast %340 : vector<1x16x128xbf16> to vector<16x128xbf16>
    %342 = vector.shape_cast %338 : vector<16x128xbf16> to vector<1x16x128xbf16>
    tpu.vector_store %arg8[%339, %c0_166, %c0_167], %342 {strides = array<i32>} : memref<8x16x128xbf16, #tpu.memory_space<vmem>>, vector<1x16x128xbf16>,
    %c4_i32 = arith.constant 4 : i32
    %343 = arith.index_cast %c4_i32 : i32 to index
    %c0_168 = arith.constant 0 : index
    %c0_169 = arith.constant 0 : index
    %344 = vector.load %arg1[%343, %c0_168, %c0_169] : memref<8x16x128xbf16, #tpu.memory_space<vmem>>, vector<1x16x128xbf16>
    %345 = vector.shape_cast %344 : vector<1x16x128xbf16> to vector<16x128xbf16>
    %c0_170 = arith.constant 0 : index
    %c0_171 = arith.constant 0 : index
    %346 = vector.load %arg9[%c0_170, %c0_171] : memref<16x128xf32, #tpu.memory_space<vmem>>, vector<16x128xf32>
    %c0_172 = arith.constant 0 : index
    %c0_173 = arith.constant 0 : index
    %347 = vector.load %arg10[%c0_172, %c0_173] : memref<16x128xf32, #tpu.memory_space<vmem>>, vector<16x128xf32>
    %c0_174 = arith.constant 0 : index
    %c0_175 = arith.constant 0 : index
    %348 = vector.load %arg2[%c0_174, %c0_175] : memref<128x512xbf16, #tpu.memory_space<vmem>>, vector<128x512xbf16>
    %cst_176 = arith.constant dense<0.000000e+00> : vector<16x512xf32>
    %349 = tpu.matmul %345, %348, %cst_176 {dimension_numbers = #tpu.dot_dimension_numbers<[1], [0], [0], [1], [0, 0, 1, 1], [], []>} : vector<16x128xbf16>, vector<128x512xbf16>, vector<16x512xf32> -> vector<16x512xf32>
    %350 = arith.truncf %346 : vector<16x128xf32> to vector<16x128xbf16>
    %c0_177 = arith.constant 0 : index
    %c0_178 = arith.constant 0 : index
    %351 = vector.load %arg3[%c0_177, %c0_178] : memref<128x512xbf16, #tpu.memory_space<vmem>>, vector<128x512xbf16>
    %cst_179 = arith.constant dense<0.000000e+00> : vector<16x512xf32>
    %352 = tpu.matmul %350, %351, %cst_179 {dimension_numbers = #tpu.dot_dimension_numbers<[1], [0], [0], [1], [0, 0, 1, 1], [], []>} : vector<16x128xbf16>, vector<128x512xbf16>, vector<16x512xf32> -> vector<16x512xf32>
    %353 = arith.addf %349, %352 : vector<16x512xf32>
    %c0_180 = arith.constant 0 : index
    %c0_181 = arith.constant 0 : index
    %354 = vector.load %arg4[%c0_180, %c0_181] : memref<1x512xf32, #tpu.memory_space<vmem>>, vector<1x512xf32>
    %355 = vector.broadcast %354 : vector<1x512xf32> to vector<16x512xf32>
    %356 = arith.addf %353, %355 : vector<16x512xf32>
    %357 = vector.extract_strided_slice %356 {offsets = [0, 0], sizes = [16, 128], strides = [1, 1]} : vector<16x512xf32> to vector<16x128xf32>
    %358 = arith.negf %357 : vector<16x128xf32>
    %359 = math.exp %358 : vector<16x128xf32>
    %cst_182 = arith.constant 1.000000e+00 : f32
    %360 = vector.broadcast %cst_182 : f32 to vector<16x128xf32>
    %361 = arith.addf %360, %359 : vector<16x128xf32>
    %362 = arith.divf %360, %361 : vector<16x128xf32>
    %363 = vector.extract_strided_slice %356 {offsets = [0, 128], sizes = [16, 128], strides = [1, 1]} : vector<16x512xf32> to vector<16x128xf32>
    %364 = arith.negf %363 : vector<16x128xf32>
    %365 = math.exp %364 : vector<16x128xf32>
    %cst_183 = arith.constant 1.000000e+00 : f32
    %366 = vector.broadcast %cst_183 : f32 to vector<16x128xf32>
    %367 = arith.addf %366, %365 : vector<16x128xf32>
    %368 = arith.divf %366, %367 : vector<16x128xf32>
    %369 = vector.extract_strided_slice %356 {offsets = [0, 256], sizes = [16, 128], strides = [1, 1]} : vector<16x512xf32> to vector<16x128xf32>
    %370 = math.tanh %369 : vector<16x128xf32>
    %371 = vector.extract_strided_slice %356 {offsets = [0, 384], sizes = [16, 128], strides = [1, 1]} : vector<16x512xf32> to vector<16x128xf32>
    %372 = arith.negf %371 : vector<16x128xf32>
    %373 = math.exp %372 : vector<16x128xf32>
    %cst_184 = arith.constant 1.000000e+00 : f32
    %374 = vector.broadcast %cst_184 : f32 to vector<16x128xf32>
    %375 = arith.addf %374, %373 : vector<16x128xf32>
    %376 = arith.divf %374, %375 : vector<16x128xf32>
    %377 = arith.mulf %368, %347 : vector<16x128xf32>
    %378 = arith.mulf %362, %370 : vector<16x128xf32>
    %379 = arith.addf %377, %378 : vector<16x128xf32>
    %380 = math.tanh %379 : vector<16x128xf32>
    %381 = arith.mulf %376, %380 : vector<16x128xf32>
    %c0_185 = arith.constant 0 : index
    %c0_186 = arith.constant 0 : index
    %382 = vector.load %arg9[%c0_185, %c0_186] : memref<16x128xf32, #tpu.memory_space<vmem>>, vector<16x128xf32>
    tpu.vector_store %arg9[%c0_185, %c0_186], %381 {strides = array<i32>} : memref<16x128xf32, #tpu.memory_space<vmem>>, vector<16x128xf32>,
    %c0_187 = arith.constant 0 : index
    %c0_188 = arith.constant 0 : index
    %383 = vector.load %arg10[%c0_187, %c0_188] : memref<16x128xf32, #tpu.memory_space<vmem>>, vector<16x128xf32>
    tpu.vector_store %arg10[%c0_187, %c0_188], %379 {strides = array<i32>} : memref<16x128xf32, #tpu.memory_space<vmem>>, vector<16x128xf32>,
    %384 = arith.truncf %381 : vector<16x128xf32> to vector<16x128xbf16>
    %c0_189 = arith.constant 0 : index
    %c0_190 = arith.constant 0 : index
    %385 = vector.load %arg11[%c0_189, %c0_190] : memref<16x128xf32, #tpu.memory_space<vmem>>, vector<16x128xf32>
    %c0_191 = arith.constant 0 : index
    %c0_192 = arith.constant 0 : index
    %386 = vector.load %arg12[%c0_191, %c0_192] : memref<16x128xf32, #tpu.memory_space<vmem>>, vector<16x128xf32>
    %c0_193 = arith.constant 0 : index
    %c0_194 = arith.constant 0 : index
    %387 = vector.load %arg5[%c0_193, %c0_194] : memref<128x512xbf16, #tpu.memory_space<vmem>>, vector<128x512xbf16>
    %cst_195 = arith.constant dense<0.000000e+00> : vector<16x512xf32>
    %388 = tpu.matmul %384, %387, %cst_195 {dimension_numbers = #tpu.dot_dimension_numbers<[1], [0], [0], [1], [0, 0, 1, 1], [], []>} : vector<16x128xbf16>, vector<128x512xbf16>, vector<16x512xf32> -> vector<16x512xf32>
    %389 = arith.truncf %385 : vector<16x128xf32> to vector<16x128xbf16>
    %c0_196 = arith.constant 0 : index
    %c0_197 = arith.constant 0 : index
    %390 = vector.load %arg6[%c0_196, %c0_197] : memref<128x512xbf16, #tpu.memory_space<vmem>>, vector<128x512xbf16>
    %cst_198 = arith.constant dense<0.000000e+00> : vector<16x512xf32>
    %391 = tpu.matmul %389, %390, %cst_198 {dimension_numbers = #tpu.dot_dimension_numbers<[1], [0], [0], [1], [0, 0, 1, 1], [], []>} : vector<16x128xbf16>, vector<128x512xbf16>, vector<16x512xf32> -> vector<16x512xf32>
    %392 = arith.addf %388, %391 : vector<16x512xf32>
    %c0_199 = arith.constant 0 : index
    %c0_200 = arith.constant 0 : index
    %393 = vector.load %arg7[%c0_199, %c0_200] : memref<1x512xf32, #tpu.memory_space<vmem>>, vector<1x512xf32>
    %394 = vector.broadcast %393 : vector<1x512xf32> to vector<16x512xf32>
    %395 = arith.addf %392, %394 : vector<16x512xf32>
    %396 = vector.extract_strided_slice %395 {offsets = [0, 0], sizes = [16, 128], strides = [1, 1]} : vector<16x512xf32> to vector<16x128xf32>
    %397 = arith.negf %396 : vector<16x128xf32>
    %398 = math.exp %397 : vector<16x128xf32>
    %cst_201 = arith.constant 1.000000e+00 : f32
    %399 = vector.broadcast %cst_201 : f32 to vector<16x128xf32>
    %400 = arith.addf %399, %398 : vector<16x128xf32>
    %401 = arith.divf %399, %400 : vector<16x128xf32>
    %402 = vector.extract_strided_slice %395 {offsets = [0, 128], sizes = [16, 128], strides = [1, 1]} : vector<16x512xf32> to vector<16x128xf32>
    %403 = arith.negf %402 : vector<16x128xf32>
    %404 = math.exp %403 : vector<16x128xf32>
    %cst_202 = arith.constant 1.000000e+00 : f32
    %405 = vector.broadcast %cst_202 : f32 to vector<16x128xf32>
    %406 = arith.addf %405, %404 : vector<16x128xf32>
    %407 = arith.divf %405, %406 : vector<16x128xf32>
    %408 = vector.extract_strided_slice %395 {offsets = [0, 256], sizes = [16, 128], strides = [1, 1]} : vector<16x512xf32> to vector<16x128xf32>
    %409 = math.tanh %408 : vector<16x128xf32>
    %410 = vector.extract_strided_slice %395 {offsets = [0, 384], sizes = [16, 128], strides = [1, 1]} : vector<16x512xf32> to vector<16x128xf32>
    %411 = arith.negf %410 : vector<16x128xf32>
    %412 = math.exp %411 : vector<16x128xf32>
    %cst_203 = arith.constant 1.000000e+00 : f32
    %413 = vector.broadcast %cst_203 : f32 to vector<16x128xf32>
    %414 = arith.addf %413, %412 : vector<16x128xf32>
    %415 = arith.divf %413, %414 : vector<16x128xf32>
    %416 = arith.mulf %407, %386 : vector<16x128xf32>
    %417 = arith.mulf %401, %409 : vector<16x128xf32>
    %418 = arith.addf %416, %417 : vector<16x128xf32>
    %419 = math.tanh %418 : vector<16x128xf32>
    %420 = arith.mulf %415, %419 : vector<16x128xf32>
    %c0_204 = arith.constant 0 : index
    %c0_205 = arith.constant 0 : index
    %421 = vector.load %arg11[%c0_204, %c0_205] : memref<16x128xf32, #tpu.memory_space<vmem>>, vector<16x128xf32>
    tpu.vector_store %arg11[%c0_204, %c0_205], %420 {strides = array<i32>} : memref<16x128xf32, #tpu.memory_space<vmem>>, vector<16x128xf32>,
    %c0_206 = arith.constant 0 : index
    %c0_207 = arith.constant 0 : index
    %422 = vector.load %arg12[%c0_206, %c0_207] : memref<16x128xf32, #tpu.memory_space<vmem>>, vector<16x128xf32>
    tpu.vector_store %arg12[%c0_206, %c0_207], %418 {strides = array<i32>} : memref<16x128xf32, #tpu.memory_space<vmem>>, vector<16x128xf32>,
    %423 = arith.truncf %420 : vector<16x128xf32> to vector<16x128xbf16>
    %424 = arith.index_cast %c4_i32 : i32 to index
    %c0_208 = arith.constant 0 : index
    %c0_209 = arith.constant 0 : index
    %425 = vector.load %arg8[%424, %c0_208, %c0_209] : memref<8x16x128xbf16, #tpu.memory_space<vmem>>, vector<1x16x128xbf16>
    %426 = vector.shape_cast %425 : vector<1x16x128xbf16> to vector<16x128xbf16>
    %427 = vector.shape_cast %423 : vector<16x128xbf16> to vector<1x16x128xbf16>
    tpu.vector_store %arg8[%424, %c0_208, %c0_209], %427 {strides = array<i32>} : memref<8x16x128xbf16, #tpu.memory_space<vmem>>, vector<1x16x128xbf16>,
    %c5_i32 = arith.constant 5 : i32
    %428 = arith.index_cast %c5_i32 : i32 to index
    %c0_210 = arith.constant 0 : index
    %c0_211 = arith.constant 0 : index
    %429 = vector.load %arg1[%428, %c0_210, %c0_211] : memref<8x16x128xbf16, #tpu.memory_space<vmem>>, vector<1x16x128xbf16>
    %430 = vector.shape_cast %429 : vector<1x16x128xbf16> to vector<16x128xbf16>
    %c0_212 = arith.constant 0 : index
    %c0_213 = arith.constant 0 : index
    %431 = vector.load %arg9[%c0_212, %c0_213] : memref<16x128xf32, #tpu.memory_space<vmem>>, vector<16x128xf32>
    %c0_214 = arith.constant 0 : index
    %c0_215 = arith.constant 0 : index
    %432 = vector.load %arg10[%c0_214, %c0_215] : memref<16x128xf32, #tpu.memory_space<vmem>>, vector<16x128xf32>
    %c0_216 = arith.constant 0 : index
    %c0_217 = arith.constant 0 : index
    %433 = vector.load %arg2[%c0_216, %c0_217] : memref<128x512xbf16, #tpu.memory_space<vmem>>, vector<128x512xbf16>
    %cst_218 = arith.constant dense<0.000000e+00> : vector<16x512xf32>
    %434 = tpu.matmul %430, %433, %cst_218 {dimension_numbers = #tpu.dot_dimension_numbers<[1], [0], [0], [1], [0, 0, 1, 1], [], []>} : vector<16x128xbf16>, vector<128x512xbf16>, vector<16x512xf32> -> vector<16x512xf32>
    %435 = arith.truncf %431 : vector<16x128xf32> to vector<16x128xbf16>
    %c0_219 = arith.constant 0 : index
    %c0_220 = arith.constant 0 : index
    %436 = vector.load %arg3[%c0_219, %c0_220] : memref<128x512xbf16, #tpu.memory_space<vmem>>, vector<128x512xbf16>
    %cst_221 = arith.constant dense<0.000000e+00> : vector<16x512xf32>
    %437 = tpu.matmul %435, %436, %cst_221 {dimension_numbers = #tpu.dot_dimension_numbers<[1], [0], [0], [1], [0, 0, 1, 1], [], []>} : vector<16x128xbf16>, vector<128x512xbf16>, vector<16x512xf32> -> vector<16x512xf32>
    %438 = arith.addf %434, %437 : vector<16x512xf32>
    %c0_222 = arith.constant 0 : index
    %c0_223 = arith.constant 0 : index
    %439 = vector.load %arg4[%c0_222, %c0_223] : memref<1x512xf32, #tpu.memory_space<vmem>>, vector<1x512xf32>
    %440 = vector.broadcast %439 : vector<1x512xf32> to vector<16x512xf32>
    %441 = arith.addf %438, %440 : vector<16x512xf32>
    %442 = vector.extract_strided_slice %441 {offsets = [0, 0], sizes = [16, 128], strides = [1, 1]} : vector<16x512xf32> to vector<16x128xf32>
    %443 = arith.negf %442 : vector<16x128xf32>
    %444 = math.exp %443 : vector<16x128xf32>
    %cst_224 = arith.constant 1.000000e+00 : f32
    %445 = vector.broadcast %cst_224 : f32 to vector<16x128xf32>
    %446 = arith.addf %445, %444 : vector<16x128xf32>
    %447 = arith.divf %445, %446 : vector<16x128xf32>
    %448 = vector.extract_strided_slice %441 {offsets = [0, 128], sizes = [16, 128], strides = [1, 1]} : vector<16x512xf32> to vector<16x128xf32>
    %449 = arith.negf %448 : vector<16x128xf32>
    %450 = math.exp %449 : vector<16x128xf32>
    %cst_225 = arith.constant 1.000000e+00 : f32
    %451 = vector.broadcast %cst_225 : f32 to vector<16x128xf32>
    %452 = arith.addf %451, %450 : vector<16x128xf32>
    %453 = arith.divf %451, %452 : vector<16x128xf32>
    %454 = vector.extract_strided_slice %441 {offsets = [0, 256], sizes = [16, 128], strides = [1, 1]} : vector<16x512xf32> to vector<16x128xf32>
    %455 = math.tanh %454 : vector<16x128xf32>
    %456 = vector.extract_strided_slice %441 {offsets = [0, 384], sizes = [16, 128], strides = [1, 1]} : vector<16x512xf32> to vector<16x128xf32>
    %457 = arith.negf %456 : vector<16x128xf32>
    %458 = math.exp %457 : vector<16x128xf32>
    %cst_226 = arith.constant 1.000000e+00 : f32
    %459 = vector.broadcast %cst_226 : f32 to vector<16x128xf32>
    %460 = arith.addf %459, %458 : vector<16x128xf32>
    %461 = arith.divf %459, %460 : vector<16x128xf32>
    %462 = arith.mulf %453, %432 : vector<16x128xf32>
    %463 = arith.mulf %447, %455 : vector<16x128xf32>
    %464 = arith.addf %462, %463 : vector<16x128xf32>
    %465 = math.tanh %464 : vector<16x128xf32>
    %466 = arith.mulf %461, %465 : vector<16x128xf32>
    %c0_227 = arith.constant 0 : index
    %c0_228 = arith.constant 0 : index
    %467 = vector.load %arg9[%c0_227, %c0_228] : memref<16x128xf32, #tpu.memory_space<vmem>>, vector<16x128xf32>
    tpu.vector_store %arg9[%c0_227, %c0_228], %466 {strides = array<i32>} : memref<16x128xf32, #tpu.memory_space<vmem>>, vector<16x128xf32>,
    %c0_229 = arith.constant 0 : index
    %c0_230 = arith.constant 0 : index
    %468 = vector.load %arg10[%c0_229, %c0_230] : memref<16x128xf32, #tpu.memory_space<vmem>>, vector<16x128xf32>
    tpu.vector_store %arg10[%c0_229, %c0_230], %464 {strides = array<i32>} : memref<16x128xf32, #tpu.memory_space<vmem>>, vector<16x128xf32>,
    %469 = arith.truncf %466 : vector<16x128xf32> to vector<16x128xbf16>
    %c0_231 = arith.constant 0 : index
    %c0_232 = arith.constant 0 : index
    %470 = vector.load %arg11[%c0_231, %c0_232] : memref<16x128xf32, #tpu.memory_space<vmem>>, vector<16x128xf32>
    %c0_233 = arith.constant 0 : index
    %c0_234 = arith.constant 0 : index
    %471 = vector.load %arg12[%c0_233, %c0_234] : memref<16x128xf32, #tpu.memory_space<vmem>>, vector<16x128xf32>
    %c0_235 = arith.constant 0 : index
    %c0_236 = arith.constant 0 : index
    %472 = vector.load %arg5[%c0_235, %c0_236] : memref<128x512xbf16, #tpu.memory_space<vmem>>, vector<128x512xbf16>
    %cst_237 = arith.constant dense<0.000000e+00> : vector<16x512xf32>
    %473 = tpu.matmul %469, %472, %cst_237 {dimension_numbers = #tpu.dot_dimension_numbers<[1], [0], [0], [1], [0, 0, 1, 1], [], []>} : vector<16x128xbf16>, vector<128x512xbf16>, vector<16x512xf32> -> vector<16x512xf32>
    %474 = arith.truncf %470 : vector<16x128xf32> to vector<16x128xbf16>
    %c0_238 = arith.constant 0 : index
    %c0_239 = arith.constant 0 : index
    %475 = vector.load %arg6[%c0_238, %c0_239] : memref<128x512xbf16, #tpu.memory_space<vmem>>, vector<128x512xbf16>
    %cst_240 = arith.constant dense<0.000000e+00> : vector<16x512xf32>
    %476 = tpu.matmul %474, %475, %cst_240 {dimension_numbers = #tpu.dot_dimension_numbers<[1], [0], [0], [1], [0, 0, 1, 1], [], []>} : vector<16x128xbf16>, vector<128x512xbf16>, vector<16x512xf32> -> vector<16x512xf32>
    %477 = arith.addf %473, %476 : vector<16x512xf32>
    %c0_241 = arith.constant 0 : index
    %c0_242 = arith.constant 0 : index
    %478 = vector.load %arg7[%c0_241, %c0_242] : memref<1x512xf32, #tpu.memory_space<vmem>>, vector<1x512xf32>
    %479 = vector.broadcast %478 : vector<1x512xf32> to vector<16x512xf32>
    %480 = arith.addf %477, %479 : vector<16x512xf32>
    %481 = vector.extract_strided_slice %480 {offsets = [0, 0], sizes = [16, 128], strides = [1, 1]} : vector<16x512xf32> to vector<16x128xf32>
    %482 = arith.negf %481 : vector<16x128xf32>
    %483 = math.exp %482 : vector<16x128xf32>
    %cst_243 = arith.constant 1.000000e+00 : f32
    %484 = vector.broadcast %cst_243 : f32 to vector<16x128xf32>
    %485 = arith.addf %484, %483 : vector<16x128xf32>
    %486 = arith.divf %484, %485 : vector<16x128xf32>
    %487 = vector.extract_strided_slice %480 {offsets = [0, 128], sizes = [16, 128], strides = [1, 1]} : vector<16x512xf32> to vector<16x128xf32>
    %488 = arith.negf %487 : vector<16x128xf32>
    %489 = math.exp %488 : vector<16x128xf32>
    %cst_244 = arith.constant 1.000000e+00 : f32
    %490 = vector.broadcast %cst_244 : f32 to vector<16x128xf32>
    %491 = arith.addf %490, %489 : vector<16x128xf32>
    %492 = arith.divf %490, %491 : vector<16x128xf32>
    %493 = vector.extract_strided_slice %480 {offsets = [0, 256], sizes = [16, 128], strides = [1, 1]} : vector<16x512xf32> to vector<16x128xf32>
    %494 = math.tanh %493 : vector<16x128xf32>
    %495 = vector.extract_strided_slice %480 {offsets = [0, 384], sizes = [16, 128], strides = [1, 1]} : vector<16x512xf32> to vector<16x128xf32>
    %496 = arith.negf %495 : vector<16x128xf32>
    %497 = math.exp %496 : vector<16x128xf32>
    %cst_245 = arith.constant 1.000000e+00 : f32
    %498 = vector.broadcast %cst_245 : f32 to vector<16x128xf32>
    %499 = arith.addf %498, %497 : vector<16x128xf32>
    %500 = arith.divf %498, %499 : vector<16x128xf32>
    %501 = arith.mulf %492, %471 : vector<16x128xf32>
    %502 = arith.mulf %486, %494 : vector<16x128xf32>
    %503 = arith.addf %501, %502 : vector<16x128xf32>
    %504 = math.tanh %503 : vector<16x128xf32>
    %505 = arith.mulf %500, %504 : vector<16x128xf32>
    %c0_246 = arith.constant 0 : index
    %c0_247 = arith.constant 0 : index
    %506 = vector.load %arg11[%c0_246, %c0_247] : memref<16x128xf32, #tpu.memory_space<vmem>>, vector<16x128xf32>
    tpu.vector_store %arg11[%c0_246, %c0_247], %505 {strides = array<i32>} : memref<16x128xf32, #tpu.memory_space<vmem>>, vector<16x128xf32>,
    %c0_248 = arith.constant 0 : index
    %c0_249 = arith.constant 0 : index
    %507 = vector.load %arg12[%c0_248, %c0_249] : memref<16x128xf32, #tpu.memory_space<vmem>>, vector<16x128xf32>
    tpu.vector_store %arg12[%c0_248, %c0_249], %503 {strides = array<i32>} : memref<16x128xf32, #tpu.memory_space<vmem>>, vector<16x128xf32>,
    %508 = arith.truncf %505 : vector<16x128xf32> to vector<16x128xbf16>
    %509 = arith.index_cast %c5_i32 : i32 to index
    %c0_250 = arith.constant 0 : index
    %c0_251 = arith.constant 0 : index
    %510 = vector.load %arg8[%509, %c0_250, %c0_251] : memref<8x16x128xbf16, #tpu.memory_space<vmem>>, vector<1x16x128xbf16>
    %511 = vector.shape_cast %510 : vector<1x16x128xbf16> to vector<16x128xbf16>
    %512 = vector.shape_cast %508 : vector<16x128xbf16> to vector<1x16x128xbf16>
    tpu.vector_store %arg8[%509, %c0_250, %c0_251], %512 {strides = array<i32>} : memref<8x16x128xbf16, #tpu.memory_space<vmem>>, vector<1x16x128xbf16>,
    %c6_i32 = arith.constant 6 : i32
    %513 = arith.index_cast %c6_i32 : i32 to index
    %c0_252 = arith.constant 0 : index
    %c0_253 = arith.constant 0 : index
    %514 = vector.load %arg1[%513, %c0_252, %c0_253] : memref<8x16x128xbf16, #tpu.memory_space<vmem>>, vector<1x16x128xbf16>
    %515 = vector.shape_cast %514 : vector<1x16x128xbf16> to vector<16x128xbf16>
    %c0_254 = arith.constant 0 : index
    %c0_255 = arith.constant 0 : index
    %516 = vector.load %arg9[%c0_254, %c0_255] : memref<16x128xf32, #tpu.memory_space<vmem>>, vector<16x128xf32>
    %c0_256 = arith.constant 0 : index
    %c0_257 = arith.constant 0 : index
    %517 = vector.load %arg10[%c0_256, %c0_257] : memref<16x128xf32, #tpu.memory_space<vmem>>, vector<16x128xf32>
    %c0_258 = arith.constant 0 : index
    %c0_259 = arith.constant 0 : index
    %518 = vector.load %arg2[%c0_258, %c0_259] : memref<128x512xbf16, #tpu.memory_space<vmem>>, vector<128x512xbf16>
    %cst_260 = arith.constant dense<0.000000e+00> : vector<16x512xf32>
    %519 = tpu.matmul %515, %518, %cst_260 {dimension_numbers = #tpu.dot_dimension_numbers<[1], [0], [0], [1], [0, 0, 1, 1], [], []>} : vector<16x128xbf16>, vector<128x512xbf16>, vector<16x512xf32> -> vector<16x512xf32>
    %520 = arith.truncf %516 : vector<16x128xf32> to vector<16x128xbf16>
    %c0_261 = arith.constant 0 : index
    %c0_262 = arith.constant 0 : index
    %521 = vector.load %arg3[%c0_261, %c0_262] : memref<128x512xbf16, #tpu.memory_space<vmem>>, vector<128x512xbf16>
    %cst_263 = arith.constant dense<0.000000e+00> : vector<16x512xf32>
    %522 = tpu.matmul %520, %521, %cst_263 {dimension_numbers = #tpu.dot_dimension_numbers<[1], [0], [0], [1], [0, 0, 1, 1], [], []>} : vector<16x128xbf16>, vector<128x512xbf16>, vector<16x512xf32> -> vector<16x512xf32>
    %523 = arith.addf %519, %522 : vector<16x512xf32>
    %c0_264 = arith.constant 0 : index
    %c0_265 = arith.constant 0 : index
    %524 = vector.load %arg4[%c0_264, %c0_265] : memref<1x512xf32, #tpu.memory_space<vmem>>, vector<1x512xf32>
    %525 = vector.broadcast %524 : vector<1x512xf32> to vector<16x512xf32>
    %526 = arith.addf %523, %525 : vector<16x512xf32>
    %527 = vector.extract_strided_slice %526 {offsets = [0, 0], sizes = [16, 128], strides = [1, 1]} : vector<16x512xf32> to vector<16x128xf32>
    %528 = arith.negf %527 : vector<16x128xf32>
    %529 = math.exp %528 : vector<16x128xf32>
    %cst_266 = arith.constant 1.000000e+00 : f32
    %530 = vector.broadcast %cst_266 : f32 to vector<16x128xf32>
    %531 = arith.addf %530, %529 : vector<16x128xf32>
    %532 = arith.divf %530, %531 : vector<16x128xf32>
    %533 = vector.extract_strided_slice %526 {offsets = [0, 128], sizes = [16, 128], strides = [1, 1]} : vector<16x512xf32> to vector<16x128xf32>
    %534 = arith.negf %533 : vector<16x128xf32>
    %535 = math.exp %534 : vector<16x128xf32>
    %cst_267 = arith.constant 1.000000e+00 : f32
    %536 = vector.broadcast %cst_267 : f32 to vector<16x128xf32>
    %537 = arith.addf %536, %535 : vector<16x128xf32>
    %538 = arith.divf %536, %537 : vector<16x128xf32>
    %539 = vector.extract_strided_slice %526 {offsets = [0, 256], sizes = [16, 128], strides = [1, 1]} : vector<16x512xf32> to vector<16x128xf32>
    %540 = math.tanh %539 : vector<16x128xf32>
    %541 = vector.extract_strided_slice %526 {offsets = [0, 384], sizes = [16, 128], strides = [1, 1]} : vector<16x512xf32> to vector<16x128xf32>
    %542 = arith.negf %541 : vector<16x128xf32>
    %543 = math.exp %542 : vector<16x128xf32>
    %cst_268 = arith.constant 1.000000e+00 : f32
    %544 = vector.broadcast %cst_268 : f32 to vector<16x128xf32>
    %545 = arith.addf %544, %543 : vector<16x128xf32>
    %546 = arith.divf %544, %545 : vector<16x128xf32>
    %547 = arith.mulf %538, %517 : vector<16x128xf32>
    %548 = arith.mulf %532, %540 : vector<16x128xf32>
    %549 = arith.addf %547, %548 : vector<16x128xf32>
    %550 = math.tanh %549 : vector<16x128xf32>
    %551 = arith.mulf %546, %550 : vector<16x128xf32>
    %c0_269 = arith.constant 0 : index
    %c0_270 = arith.constant 0 : index
    %552 = vector.load %arg9[%c0_269, %c0_270] : memref<16x128xf32, #tpu.memory_space<vmem>>, vector<16x128xf32>
    tpu.vector_store %arg9[%c0_269, %c0_270], %551 {strides = array<i32>} : memref<16x128xf32, #tpu.memory_space<vmem>>, vector<16x128xf32>,
    %c0_271 = arith.constant 0 : index
    %c0_272 = arith.constant 0 : index
    %553 = vector.load %arg10[%c0_271, %c0_272] : memref<16x128xf32, #tpu.memory_space<vmem>>, vector<16x128xf32>
    tpu.vector_store %arg10[%c0_271, %c0_272], %549 {strides = array<i32>} : memref<16x128xf32, #tpu.memory_space<vmem>>, vector<16x128xf32>,
    %554 = arith.truncf %551 : vector<16x128xf32> to vector<16x128xbf16>
    %c0_273 = arith.constant 0 : index
    %c0_274 = arith.constant 0 : index
    %555 = vector.load %arg11[%c0_273, %c0_274] : memref<16x128xf32, #tpu.memory_space<vmem>>, vector<16x128xf32>
    %c0_275 = arith.constant 0 : index
    %c0_276 = arith.constant 0 : index
    %556 = vector.load %arg12[%c0_275, %c0_276] : memref<16x128xf32, #tpu.memory_space<vmem>>, vector<16x128xf32>
    %c0_277 = arith.constant 0 : index
    %c0_278 = arith.constant 0 : index
    %557 = vector.load %arg5[%c0_277, %c0_278] : memref<128x512xbf16, #tpu.memory_space<vmem>>, vector<128x512xbf16>
    %cst_279 = arith.constant dense<0.000000e+00> : vector<16x512xf32>
    %558 = tpu.matmul %554, %557, %cst_279 {dimension_numbers = #tpu.dot_dimension_numbers<[1], [0], [0], [1], [0, 0, 1, 1], [], []>} : vector<16x128xbf16>, vector<128x512xbf16>, vector<16x512xf32> -> vector<16x512xf32>
    %559 = arith.truncf %555 : vector<16x128xf32> to vector<16x128xbf16>
    %c0_280 = arith.constant 0 : index
    %c0_281 = arith.constant 0 : index
    %560 = vector.load %arg6[%c0_280, %c0_281] : memref<128x512xbf16, #tpu.memory_space<vmem>>, vector<128x512xbf16>
    %cst_282 = arith.constant dense<0.000000e+00> : vector<16x512xf32>
    %561 = tpu.matmul %559, %560, %cst_282 {dimension_numbers = #tpu.dot_dimension_numbers<[1], [0], [0], [1], [0, 0, 1, 1], [], []>} : vector<16x128xbf16>, vector<128x512xbf16>, vector<16x512xf32> -> vector<16x512xf32>
    %562 = arith.addf %558, %561 : vector<16x512xf32>
    %c0_283 = arith.constant 0 : index
    %c0_284 = arith.constant 0 : index
    %563 = vector.load %arg7[%c0_283, %c0_284] : memref<1x512xf32, #tpu.memory_space<vmem>>, vector<1x512xf32>
    %564 = vector.broadcast %563 : vector<1x512xf32> to vector<16x512xf32>
    %565 = arith.addf %562, %564 : vector<16x512xf32>
    %566 = vector.extract_strided_slice %565 {offsets = [0, 0], sizes = [16, 128], strides = [1, 1]} : vector<16x512xf32> to vector<16x128xf32>
    %567 = arith.negf %566 : vector<16x128xf32>
    %568 = math.exp %567 : vector<16x128xf32>
    %cst_285 = arith.constant 1.000000e+00 : f32
    %569 = vector.broadcast %cst_285 : f32 to vector<16x128xf32>
    %570 = arith.addf %569, %568 : vector<16x128xf32>
    %571 = arith.divf %569, %570 : vector<16x128xf32>
    %572 = vector.extract_strided_slice %565 {offsets = [0, 128], sizes = [16, 128], strides = [1, 1]} : vector<16x512xf32> to vector<16x128xf32>
    %573 = arith.negf %572 : vector<16x128xf32>
    %574 = math.exp %573 : vector<16x128xf32>
    %cst_286 = arith.constant 1.000000e+00 : f32
    %575 = vector.broadcast %cst_286 : f32 to vector<16x128xf32>
    %576 = arith.addf %575, %574 : vector<16x128xf32>
    %577 = arith.divf %575, %576 : vector<16x128xf32>
    %578 = vector.extract_strided_slice %565 {offsets = [0, 256], sizes = [16, 128], strides = [1, 1]} : vector<16x512xf32> to vector<16x128xf32>
    %579 = math.tanh %578 : vector<16x128xf32>
    %580 = vector.extract_strided_slice %565 {offsets = [0, 384], sizes = [16, 128], strides = [1, 1]} : vector<16x512xf32> to vector<16x128xf32>
    %581 = arith.negf %580 : vector<16x128xf32>
    %582 = math.exp %581 : vector<16x128xf32>
    %cst_287 = arith.constant 1.000000e+00 : f32
    %583 = vector.broadcast %cst_287 : f32 to vector<16x128xf32>
    %584 = arith.addf %583, %582 : vector<16x128xf32>
    %585 = arith.divf %583, %584 : vector<16x128xf32>
    %586 = arith.mulf %577, %556 : vector<16x128xf32>
    %587 = arith.mulf %571, %579 : vector<16x128xf32>
    %588 = arith.addf %586, %587 : vector<16x128xf32>
    %589 = math.tanh %588 : vector<16x128xf32>
    %590 = arith.mulf %585, %589 : vector<16x128xf32>
    %c0_288 = arith.constant 0 : index
    %c0_289 = arith.constant 0 : index
    %591 = vector.load %arg11[%c0_288, %c0_289] : memref<16x128xf32, #tpu.memory_space<vmem>>, vector<16x128xf32>
    tpu.vector_store %arg11[%c0_288, %c0_289], %590 {strides = array<i32>} : memref<16x128xf32, #tpu.memory_space<vmem>>, vector<16x128xf32>,
    %c0_290 = arith.constant 0 : index
    %c0_291 = arith.constant 0 : index
    %592 = vector.load %arg12[%c0_290, %c0_291] : memref<16x128xf32, #tpu.memory_space<vmem>>, vector<16x128xf32>
    tpu.vector_store %arg12[%c0_290, %c0_291], %588 {strides = array<i32>} : memref<16x128xf32, #tpu.memory_space<vmem>>, vector<16x128xf32>,
    %593 = arith.truncf %590 : vector<16x128xf32> to vector<16x128xbf16>
    %594 = arith.index_cast %c6_i32 : i32 to index
    %c0_292 = arith.constant 0 : index
    %c0_293 = arith.constant 0 : index
    %595 = vector.load %arg8[%594, %c0_292, %c0_293] : memref<8x16x128xbf16, #tpu.memory_space<vmem>>, vector<1x16x128xbf16>
    %596 = vector.shape_cast %595 : vector<1x16x128xbf16> to vector<16x128xbf16>
    %597 = vector.shape_cast %593 : vector<16x128xbf16> to vector<1x16x128xbf16>
    tpu.vector_store %arg8[%594, %c0_292, %c0_293], %597 {strides = array<i32>} : memref<8x16x128xbf16, #tpu.memory_space<vmem>>, vector<1x16x128xbf16>,
    %c7_i32 = arith.constant 7 : i32
    %598 = arith.index_cast %c7_i32 : i32 to index
    %c0_294 = arith.constant 0 : index
    %c0_295 = arith.constant 0 : index
    %599 = vector.load %arg1[%598, %c0_294, %c0_295] : memref<8x16x128xbf16, #tpu.memory_space<vmem>>, vector<1x16x128xbf16>
    %600 = vector.shape_cast %599 : vector<1x16x128xbf16> to vector<16x128xbf16>
    %c0_296 = arith.constant 0 : index
    %c0_297 = arith.constant 0 : index
    %601 = vector.load %arg9[%c0_296, %c0_297] : memref<16x128xf32, #tpu.memory_space<vmem>>, vector<16x128xf32>
    %c0_298 = arith.constant 0 : index
    %c0_299 = arith.constant 0 : index
    %602 = vector.load %arg10[%c0_298, %c0_299] : memref<16x128xf32, #tpu.memory_space<vmem>>, vector<16x128xf32>
    %c0_300 = arith.constant 0 : index
    %c0_301 = arith.constant 0 : index
    %603 = vector.load %arg2[%c0_300, %c0_301] : memref<128x512xbf16, #tpu.memory_space<vmem>>, vector<128x512xbf16>
    %cst_302 = arith.constant dense<0.000000e+00> : vector<16x512xf32>
    %604 = tpu.matmul %600, %603, %cst_302 {dimension_numbers = #tpu.dot_dimension_numbers<[1], [0], [0], [1], [0, 0, 1, 1], [], []>} : vector<16x128xbf16>, vector<128x512xbf16>, vector<16x512xf32> -> vector<16x512xf32>
    %605 = arith.truncf %601 : vector<16x128xf32> to vector<16x128xbf16>
    %c0_303 = arith.constant 0 : index
    %c0_304 = arith.constant 0 : index
    %606 = vector.load %arg3[%c0_303, %c0_304] : memref<128x512xbf16, #tpu.memory_space<vmem>>, vector<128x512xbf16>
    %cst_305 = arith.constant dense<0.000000e+00> : vector<16x512xf32>
    %607 = tpu.matmul %605, %606, %cst_305 {dimension_numbers = #tpu.dot_dimension_numbers<[1], [0], [0], [1], [0, 0, 1, 1], [], []>} : vector<16x128xbf16>, vector<128x512xbf16>, vector<16x512xf32> -> vector<16x512xf32>
    %608 = arith.addf %604, %607 : vector<16x512xf32>
    %c0_306 = arith.constant 0 : index
    %c0_307 = arith.constant 0 : index
    %609 = vector.load %arg4[%c0_306, %c0_307] : memref<1x512xf32, #tpu.memory_space<vmem>>, vector<1x512xf32>
    %610 = vector.broadcast %609 : vector<1x512xf32> to vector<16x512xf32>
    %611 = arith.addf %608, %610 : vector<16x512xf32>
    %612 = vector.extract_strided_slice %611 {offsets = [0, 0], sizes = [16, 128], strides = [1, 1]} : vector<16x512xf32> to vector<16x128xf32>
    %613 = arith.negf %612 : vector<16x128xf32>
    %614 = math.exp %613 : vector<16x128xf32>
    %cst_308 = arith.constant 1.000000e+00 : f32
    %615 = vector.broadcast %cst_308 : f32 to vector<16x128xf32>
    %616 = arith.addf %615, %614 : vector<16x128xf32>
    %617 = arith.divf %615, %616 : vector<16x128xf32>
    %618 = vector.extract_strided_slice %611 {offsets = [0, 128], sizes = [16, 128], strides = [1, 1]} : vector<16x512xf32> to vector<16x128xf32>
    %619 = arith.negf %618 : vector<16x128xf32>
    %620 = math.exp %619 : vector<16x128xf32>
    %cst_309 = arith.constant 1.000000e+00 : f32
    %621 = vector.broadcast %cst_309 : f32 to vector<16x128xf32>
    %622 = arith.addf %621, %620 : vector<16x128xf32>
    %623 = arith.divf %621, %622 : vector<16x128xf32>
    %624 = vector.extract_strided_slice %611 {offsets = [0, 256], sizes = [16, 128], strides = [1, 1]} : vector<16x512xf32> to vector<16x128xf32>
    %625 = math.tanh %624 : vector<16x128xf32>
    %626 = vector.extract_strided_slice %611 {offsets = [0, 384], sizes = [16, 128], strides = [1, 1]} : vector<16x512xf32> to vector<16x128xf32>
    %627 = arith.negf %626 : vector<16x128xf32>
    %628 = math.exp %627 : vector<16x128xf32>
    %cst_310 = arith.constant 1.000000e+00 : f32
    %629 = vector.broadcast %cst_310 : f32 to vector<16x128xf32>
    %630 = arith.addf %629, %628 : vector<16x128xf32>
    %631 = arith.divf %629, %630 : vector<16x128xf32>
    %632 = arith.mulf %623, %602 : vector<16x128xf32>
    %633 = arith.mulf %617, %625 : vector<16x128xf32>
    %634 = arith.addf %632, %633 : vector<16x128xf32>
    %635 = math.tanh %634 : vector<16x128xf32>
    %636 = arith.mulf %631, %635 : vector<16x128xf32>
    %c0_311 = arith.constant 0 : index
    %c0_312 = arith.constant 0 : index
    %637 = vector.load %arg9[%c0_311, %c0_312] : memref<16x128xf32, #tpu.memory_space<vmem>>, vector<16x128xf32>
    tpu.vector_store %arg9[%c0_311, %c0_312], %636 {strides = array<i32>} : memref<16x128xf32, #tpu.memory_space<vmem>>, vector<16x128xf32>,
    %c0_313 = arith.constant 0 : index
    %c0_314 = arith.constant 0 : index
    %638 = vector.load %arg10[%c0_313, %c0_314] : memref<16x128xf32, #tpu.memory_space<vmem>>, vector<16x128xf32>
    tpu.vector_store %arg10[%c0_313, %c0_314], %634 {strides = array<i32>} : memref<16x128xf32, #tpu.memory_space<vmem>>, vector<16x128xf32>,
    %639 = arith.truncf %636 : vector<16x128xf32> to vector<16x128xbf16>
    %c0_315 = arith.constant 0 : index
    %c0_316 = arith.constant 0 : index
    %640 = vector.load %arg11[%c0_315, %c0_316] : memref<16x128xf32, #tpu.memory_space<vmem>>, vector<16x128xf32>
    %c0_317 = arith.constant 0 : index
    %c0_318 = arith.constant 0 : index
    %641 = vector.load %arg12[%c0_317, %c0_318] : memref<16x128xf32, #tpu.memory_space<vmem>>, vector<16x128xf32>
    %c0_319 = arith.constant 0 : index
    %c0_320 = arith.constant 0 : index
    %642 = vector.load %arg5[%c0_319, %c0_320] : memref<128x512xbf16, #tpu.memory_space<vmem>>, vector<128x512xbf16>
    %cst_321 = arith.constant dense<0.000000e+00> : vector<16x512xf32>
    %643 = tpu.matmul %639, %642, %cst_321 {dimension_numbers = #tpu.dot_dimension_numbers<[1], [0], [0], [1], [0, 0, 1, 1], [], []>} : vector<16x128xbf16>, vector<128x512xbf16>, vector<16x512xf32> -> vector<16x512xf32>
    %644 = arith.truncf %640 : vector<16x128xf32> to vector<16x128xbf16>
    %c0_322 = arith.constant 0 : index
    %c0_323 = arith.constant 0 : index
    %645 = vector.load %arg6[%c0_322, %c0_323] : memref<128x512xbf16, #tpu.memory_space<vmem>>, vector<128x512xbf16>
    %cst_324 = arith.constant dense<0.000000e+00> : vector<16x512xf32>
    %646 = tpu.matmul %644, %645, %cst_324 {dimension_numbers = #tpu.dot_dimension_numbers<[1], [0], [0], [1], [0, 0, 1, 1], [], []>} : vector<16x128xbf16>, vector<128x512xbf16>, vector<16x512xf32> -> vector<16x512xf32>
    %647 = arith.addf %643, %646 : vector<16x512xf32>
    %c0_325 = arith.constant 0 : index
    %c0_326 = arith.constant 0 : index
    %648 = vector.load %arg7[%c0_325, %c0_326] : memref<1x512xf32, #tpu.memory_space<vmem>>, vector<1x512xf32>
    %649 = vector.broadcast %648 : vector<1x512xf32> to vector<16x512xf32>
    %650 = arith.addf %647, %649 : vector<16x512xf32>
    %651 = vector.extract_strided_slice %650 {offsets = [0, 0], sizes = [16, 128], strides = [1, 1]} : vector<16x512xf32> to vector<16x128xf32>
    %652 = arith.negf %651 : vector<16x128xf32>
    %653 = math.exp %652 : vector<16x128xf32>
    %cst_327 = arith.constant 1.000000e+00 : f32
    %654 = vector.broadcast %cst_327 : f32 to vector<16x128xf32>
    %655 = arith.addf %654, %653 : vector<16x128xf32>
    %656 = arith.divf %654, %655 : vector<16x128xf32>
    %657 = vector.extract_strided_slice %650 {offsets = [0, 128], sizes = [16, 128], strides = [1, 1]} : vector<16x512xf32> to vector<16x128xf32>
    %658 = arith.negf %657 : vector<16x128xf32>
    %659 = math.exp %658 : vector<16x128xf32>
    %cst_328 = arith.constant 1.000000e+00 : f32
    %660 = vector.broadcast %cst_328 : f32 to vector<16x128xf32>
    %661 = arith.addf %660, %659 : vector<16x128xf32>
    %662 = arith.divf %660, %661 : vector<16x128xf32>
    %663 = vector.extract_strided_slice %650 {offsets = [0, 256], sizes = [16, 128], strides = [1, 1]} : vector<16x512xf32> to vector<16x128xf32>
    %664 = math.tanh %663 : vector<16x128xf32>
    %665 = vector.extract_strided_slice %650 {offsets = [0, 384], sizes = [16, 128], strides = [1, 1]} : vector<16x512xf32> to vector<16x128xf32>
    %666 = arith.negf %665 : vector<16x128xf32>
    %667 = math.exp %666 : vector<16x128xf32>
    %cst_329 = arith.constant 1.000000e+00 : f32
    %668 = vector.broadcast %cst_329 : f32 to vector<16x128xf32>
    %669 = arith.addf %668, %667 : vector<16x128xf32>
    %670 = arith.divf %668, %669 : vector<16x128xf32>
    %671 = arith.mulf %662, %641 : vector<16x128xf32>
    %672 = arith.mulf %656, %664 : vector<16x128xf32>
    %673 = arith.addf %671, %672 : vector<16x128xf32>
    %674 = math.tanh %673 : vector<16x128xf32>
    %675 = arith.mulf %670, %674 : vector<16x128xf32>
    %c0_330 = arith.constant 0 : index
    %c0_331 = arith.constant 0 : index
    %676 = vector.load %arg11[%c0_330, %c0_331] : memref<16x128xf32, #tpu.memory_space<vmem>>, vector<16x128xf32>
    tpu.vector_store %arg11[%c0_330, %c0_331], %675 {strides = array<i32>} : memref<16x128xf32, #tpu.memory_space<vmem>>, vector<16x128xf32>,
    %c0_332 = arith.constant 0 : index
    %c0_333 = arith.constant 0 : index
    %677 = vector.load %arg12[%c0_332, %c0_333] : memref<16x128xf32, #tpu.memory_space<vmem>>, vector<16x128xf32>
    tpu.vector_store %arg12[%c0_332, %c0_333], %673 {strides = array<i32>} : memref<16x128xf32, #tpu.memory_space<vmem>>, vector<16x128xf32>,
    %678 = arith.truncf %675 : vector<16x128xf32> to vector<16x128xbf16>
    %679 = arith.index_cast %c7_i32 : i32 to index
    %c0_334 = arith.constant 0 : index
    %c0_335 = arith.constant 0 : index
    %680 = vector.load %arg8[%679, %c0_334, %c0_335] : memref<8x16x128xbf16, #tpu.memory_space<vmem>>, vector<1x16x128xbf16>
    %681 = vector.shape_cast %680 : vector<1x16x128xbf16> to vector<16x128xbf16>
    %682 = vector.shape_cast %678 : vector<16x128xbf16> to vector<1x16x128xbf16>
    tpu.vector_store %arg8[%679, %c0_334, %c0_335], %682 {strides = array<i32>} : memref<8x16x128xbf16, #tpu.memory_space<vmem>>, vector<1x16x128xbf16>,
    %c8_i32 = arith.constant 8 : i32
    return
  }
  func.func @transform_0(%arg0: i32) -> (i32, i32, i32) {
    %c0_i32 = arith.constant 0 : i32
    %c0_i32_0 = arith.constant 0 : i32
    %c0_i32_1 = arith.constant 0 : i32
    return %arg0, %c0_i32, %c0_i32_0 : i32, i32, i32
  }
  func.func @transform_1(%arg0: i32) -> (i32, i32) {
    %c0_i32 = arith.constant 0 : i32
    %c0_i32_0 = arith.constant 0 : i32
    %c0_i32_1 = arith.constant 0 : i32
    return %c0_i32, %c0_i32_0 : i32, i32
  }
  func.func @transform_2(%arg0: i32) -> (i32, i32) {
    %c0_i32 = arith.constant 0 : i32
    %c0_i32_0 = arith.constant 0 : i32
    %c0_i32_1 = arith.constant 0 : i32
    return %c0_i32, %c0_i32_0 : i32, i32
  }
  func.func @transform_3(%arg0: i32) -> (i32, i32) {
    %c0_i32 = arith.constant 0 : i32
    %c0_i32_0 = arith.constant 0 : i32
    %c0_i32_1 = arith.constant 0 : i32
    return %c0_i32, %c0_i32_0 : i32, i32
  }
  func.func @transform_4(%arg0: i32) -> (i32, i32) {
    %c0_i32 = arith.constant 0 : i32
    %c0_i32_0 = arith.constant 0 : i32
    %c0_i32_1 = arith.constant 0 : i32
    return %c0_i32, %c0_i32_0 : i32, i32
  }
  func.func @transform_5(%arg0: i32) -> (i32, i32) {
    %c0_i32 = arith.constant 0 : i32
    %c0_i32_0 = arith.constant 0 : i32
    %c0_i32_1 = arith.constant 0 : i32
    return %c0_i32, %c0_i32_0 : i32, i32
  }
  func.func @transform_6(%arg0: i32) -> (i32, i32) {
    %c0_i32 = arith.constant 0 : i32
    %c0_i32_0 = arith.constant 0 : i32
    %c0_i32_1 = arith.constant 0 : i32
    return %c0_i32, %c0_i32_0 : i32, i32
  }
  func.func @transform_7(%arg0: i32) -> (i32, i32, i32) {
    %c0_i32 = arith.constant 0 : i32
    %c0_i32_0 = arith.constant 0 : i32
    %c0_i32_1 = arith.constant 0 : i32
    return %arg0, %c0_i32, %c0_i32_0 : i32, i32, i32
  }
}

</mosaic_0001>

<llo_original>
// kernel: tpu_custom_call.1
$region0: #{tpu_custom_call.1}
  #allocation0 [shape = 'u32[]', space=smem, size = 0x4, offset = 0x4, fixed_abs, tag = 'smem constant byte address 0x4 - core index']
  #allocation1 [shape = 'u32[72,128]{1,0:T(1,128)}', space=vmem, size = 0x9000, scoped, tag = 'internal scratch']
  #allocation2 [shape = 'f32[16,128]{1,0:T(8,128)}', space=vmem, size = 0x2000, scoped, tag = 'scratch operand']
  #allocation3 [shape = 'f32[16,128]{1,0:T(8,128)}', space=vmem, size = 0x2000, scoped, tag = 'scratch operand']
  #allocation4 [shape = 'f32[16,128]{1,0:T(8,128)}', space=vmem, size = 0x2000, scoped, tag = 'scratch operand']
  #allocation5 [shape = 'f32[16,128]{1,0:T(8,128)}', space=vmem, size = 0x2000, scoped, tag = 'scratch operand']
  %s0 = inlined_call_operand.hbm [shape: bf16[8,16,128], index: 0, kind: input, shape index: {}]
  %s1 = inlined_call_operand.hbm [shape: bf16[128,512], index: 1, kind: input, shape index: {}]
  %s2 = inlined_call_operand.hbm [shape: bf16[128,512], index: 2, kind: input, shape index: {}]
  %s3 = inlined_call_operand.hbm [shape: f32[1,512], index: 3, kind: input, shape index: {}]
  %s4 = inlined_call_operand.hbm [shape: bf16[128,512], index: 4, kind: input, shape index: {}]
  %s5 = inlined_call_operand.hbm [shape: bf16[128,512], index: 5, kind: input, shape index: {}]
  %s6 = inlined_call_operand.vmem [shape: f32[1,512], index: 6, kind: input, shape index: {}]
  %s7 = inlined_call_operand.hbm [shape: bf16[8,16,128], index: 7, kind: output, shape index: {}]
  %s8 = sld [smem:[#allocation0]]
  $region66: #{tpu_custom_call.1} parent=0
    _
  %s10 = ssub.s32 1, %s8
  %s11 = scalar_select 0, %s10, %s8
  $region1: #{tpu_custom_call.1} parent=0
    #allocation6 [shape = 'u8[32768]{0}', space=vmem, size = 0x8000, scoped, tag = 'input window, operand 0, single buffered']
    #allocation7 [shape = 's32[1]{0}', space=sflag, size = 0x4, scoped, tag = 'scoped memory for tpu_custom_call.1']
    #allocation8 [shape = 's32[1]{0}', space=sflag, size = 0x4, scoped, tag = 'scoped memory for tpu_custom_call.1']
    #allocation9 [shape = 'u8[131072]{0}', space=vmem, size = 0x20000, scoped, tag = 'input window, operand 1, single buffered']
    #allocation10 [shape = 's32[1]{0}', space=sflag, size = 0x4, scoped, tag = 'scoped memory for tpu_custom_call.1']
    #allocation11 [shape = 'u8[131072]{0}', space=vmem, size = 0x20000, scoped, tag = 'input window, operand 2, single buffered']
    #allocation12 [shape = 'u8[2048]{0}', space=vmem, size = 0x800, scoped, tag = 'input window, operand 3, single buffered']
    #allocation13 [shape = 's32[1]{0}', space=sflag, size = 0x4, scoped, tag = 'scoped memory for tpu_custom_call.1']
    #allocation14 [shape = 'u8[131072]{0}', space=vmem, size = 0x20000, scoped, tag = 'input window, operand 4, single buffered']
    #allocation15 [shape = 'u8[131072]{0}', space=vmem, size = 0x20000, scoped, tag = 'input window, operand 5, single buffered']
    #allocation16 [shape = 's32[1]{0}', space=sflag, size = 0x4, scoped, tag = 'scoped memory for tpu_custom_call.1']
    #allocation17 [shape = 'u8[32768]{0}', space=vmem, size = 0x8000, scoped, tag = 'output window, operand 0, single buffered']
    %12 = vsyncpa [#allocation7], 0
    %13 = vsyncpa [#allocation10], 0
    %14 = vsyncpa [#allocation13], 0
    %15 = vsyncpa [#allocation16], 0
    %16 = vsyncpa [#allocation8], 0
    // Predicated region
    $region2: #{tpu_custom_call.1} parent=1 // pred_check
      _
    $region3: #{tpu_custom_call.1} parent=1 // pred_check_branch
      %18 = sbr.rel (0) target = $region5
    $region4: #{tpu_custom_call.1} parent=1 // pred_region
      %20 = vsyncadd [#allocation7], 0
      %s21 = sshll.u32 %s0, 4
      %s22 = int_to_ptr.hbm [resolvable:$true] %s21
      %s23 = sshll.u32 [#allocation6], 4
      %s24 = int_to_ptr.vmem [resolvable:$true] %s23
      %29 = dma.hbm_to_vmem [thread:$0]  %s22, 1024, %s24, [#allocation7], 64, 64, 4
    $region5: #{tpu_custom_call.1} parent=1 // pred_fallthru
      _
    // Predicated region
    $region6: #{tpu_custom_call.1} parent=1 // pred_check
      _
    $region7: #{tpu_custom_call.1} parent=1 // pred_check_branch
      %31 = sbr.rel (0) target = $region9
    $region8: #{tpu_custom_call.1} parent=1 // pred_region
      %33 = vsyncadd [#allocation10], 0
      %s34 = sshll.u32 %s1, 4
      %s35 = int_to_ptr.hbm [resolvable:$true] %s34
      %s36 = sshll.u32 [#allocation9], 4
      %s37 = int_to_ptr.vmem [resolvable:$true] %s36
      %42 = dma.hbm_to_vmem [thread:$0]  %s35, 4096, %s37, [#allocation10], 256, 256, 16
    $region9: #{tpu_custom_call.1} parent=1 // pred_fallthru
      _
    // Predicated region
    $region10: #{tpu_custom_call.1} parent=1 // pred_check
      _
    $region11: #{tpu_custom_call.1} parent=1 // pred_check_branch
      %44 = sbr.rel (0) target = $region13
    $region12: #{tpu_custom_call.1} parent=1 // pred_region
      %46 = vsyncadd [#allocation10], 0
      %s47 = sshll.u32 %s2, 4
      %s48 = int_to_ptr.hbm [resolvable:$true] %s47
      %s49 = sshll.u32 [#allocation11], 4
      %s50 = int_to_ptr.vmem [resolvable:$true] %s49
      %55 = dma.hbm_to_vmem [thread:$0]  %s48, 4096, %s50, [#allocation10], 256, 256, 16
    $region13: #{tpu_custom_call.1} parent=1 // pred_fallthru
      _
    // Predicated region
    $region14: #{tpu_custom_call.1} parent=1 // pred_check
      _
    $region15: #{tpu_custom_call.1} parent=1 // pred_check_branch
      %57 = sbr.rel (0) target = $region17
    $region16: #{tpu_custom_call.1} parent=1 // pred_region
      %59 = vsyncadd [#allocation13], 0
      %s61 = sshll.u32 %s3, 4
      %s62 = int_to_ptr.hbm [resolvable:$true] %s61
      %s63 = sshll.u32 [#allocation12], 4
      %s64 = int_to_ptr.vmem [resolvable:$true] %s63
      %66 = dma.hbm_to_vmem [thread:$0]  %s62, 64, %s64, [#allocation13]
    $region17: #{tpu_custom_call.1} parent=1 // pred_fallthru
      _
    // Predicated region
    $region18: #{tpu_custom_call.1} parent=1 // pred_check
      _
    $region19: #{tpu_custom_call.1} parent=1 // pred_check_branch
      %68 = sbr.rel (0) target = $region21
    $region20: #{tpu_custom_call.1} parent=1 // pred_region
      %70 = vsyncadd [#allocation13], 0
      %s71 = sshll.u32 %s4, 4
      %s72 = int_to_ptr.hbm [resolvable:$true] %s71
      %s73 = sshll.u32 [#allocation14], 4
      %s74 = int_to_ptr.vmem [resolvable:$true] %s73
      %79 = dma.hbm_to_vmem [thread:$0]  %s72, 4096, %s74, [#allocation13], 256, 256, 16
    $region21: #{tpu_custom_call.1} parent=1 // pred_fallthru
      _
    // Predicated region
    $region22: #{tpu_custom_call.1} parent=1 // pred_check
      _
    $region23: #{tpu_custom_call.1} parent=1 // pred_check_branch
      %81 = sbr.rel (0) target = $region25
    $region24: #{tpu_custom_call.1} parent=1 // pred_region
      %83 = vsyncadd [#allocation16], 0
      %s84 = sshll.u32 %s5, 4
      %s85 = int_to_ptr.hbm [resolvable:$true] %s84
      %s86 = sshll.u32 [#allocation15], 4
      %s87 = int_to_ptr.vmem [resolvable:$true] %s86
      %92 = dma.hbm_to_vmem [thread:$0]  %s85, 4096, %s87, [#allocation16], 256, 256, 16
    $region25: #{tpu_custom_call.1} parent=1 // pred_fallthru
      _
    // Predicated region
    $region26: #{tpu_custom_call.1} parent=1 // pred_check
      _
    $region27: #{tpu_custom_call.1} parent=1 // pred_check_branch
      %94 = sbr.rel (0) target = $region29
    $region28: #{tpu_custom_call.1} parent=1 // pred_region
      _
    $region29: #{tpu_custom_call.1} parent=1 // pred_fallthru
      _
    // Predicated region
    $region30: #{tpu_custom_call.1} parent=1 // pred_check
      _
    $region31: #{tpu_custom_call.1} parent=1 // pred_check_branch
      %96 = sbr.rel (0) target = $region33
    $region32: #{tpu_custom_call.1} parent=1 // pred_region
      %98 = dma.done [#allocation7], 1024
    $region33: #{tpu_custom_call.1} parent=1 // pred_fallthru
      _
    // Predicated region
    $region34: #{tpu_custom_call.1} parent=1 // pred_check
      _
    $region35: #{tpu_custom_call.1} parent=1 // pred_check_branch
      %100 = sbr.rel (0) target = $region37
    $region36: #{tpu_custom_call.1} parent=1 // pred_region
      %102 = dma.done [#allocation10], 4096
    $region37: #{tpu_custom_call.1} parent=1 // pred_fallthru
      _
    // Predicated region
    $region38: #{tpu_custom_call.1} parent=1 // pred_check
      _
    $region39: #{tpu_custom_call.1} parent=1 // pred_check_branch
      %104 = sbr.rel (0) target = $region41
    $region40: #{tpu_custom_call.1} parent=1 // pred_region
      %106 = dma.done [#allocation10], 4096
    $region41: #{tpu_custom_call.1} parent=1 // pred_fallthru
      _
    // Predicated region
    $region42: #{tpu_custom_call.1} parent=1 // pred_check
      _
    $region43: #{tpu_custom_call.1} parent=1 // pred_check_branch
      %108 = sbr.rel (0) target = $region45
    $region44: #{tpu_custom_call.1} parent=1 // pred_region
      %110 = dma.done [#allocation13], 64
    $region45: #{tpu_custom_call.1} parent=1 // pred_fallthru
      _
    // Predicated region
    $region46: #{tpu_custom_call.1} parent=1 // pred_check
      _
    $region47: #{tpu_custom_call.1} parent=1 // pred_check_branch
      %112 = sbr.rel (0) target = $region49
    $region48: #{tpu_custom_call.1} parent=1 // pred_region
      %114 = dma.done [#allocation13], 4096
    $region49: #{tpu_custom_call.1} parent=1 // pred_fallthru
      _
    // Predicated region
    $region50: #{tpu_custom_call.1} parent=1 // pred_check
      _
    $region51: #{tpu_custom_call.1} parent=1 // pred_check_branch
      %116 = sbr.rel (0) target = $region53
    $region52: #{tpu_custom_call.1} parent=1 // pred_region
      %118 = dma.done [#allocation16], 4096
    $region53: #{tpu_custom_call.1} parent=1 // pred_fallthru
      _
    %p119 = scmp.eq.s32.totalorder 0, 0
    // Predicated region
    $region54: #{tpu_custom_call.1} parent=1 // pred_check
      %p120 = pneg %p119
    $region55: #{tpu_custom_call.1} parent=1 // pred_check_branch
      %122 = sbr.rel (%p120) target = $region57
    $region56: #{tpu_custom_call.1} parent=1 // pred_region
      %123 = vst [vmem:[#allocation2] sm:$0xff] 0.0
      %124 = vst [vmem:[#allocation2 + $0x8] sm:$0xff] 0.0
      %125 = vst [vmem:[#allocation3] sm:$0xff] 0.0
      %126 = vst [vmem:[#allocation3 + $0x8] sm:$0xff] 0.0
      %127 = vst [vmem:[#allocation4] sm:$0xff] 0.0
      %128 = vst [vmem:[#allocation4 + $0x8] sm:$0xff] 0.0
      %129 = vst [vmem:[#allocation5] sm:$0xff] 0.0
      %130 = vst [vmem:[#allocation5 + $0x8] sm:$0xff] 0.0
    $region57: #{tpu_custom_call.1} parent=1 // pred_fallthru
      _
    %v131 = vld [vmem:[#allocation6] sm:$0xf]
    %v132 = vld [vmem:[#allocation6 + $0x4] sm:$0xf]
    %v133 = vld [vmem:[#allocation2] sm:$0xff]
    %v134 = vld [vmem:[#allocation2 + $0x8] sm:$0xff]
    %v135 = vld [vmem:[#allocation3] sm:$0xff]
    %v136 = vld [vmem:[#allocation3 + $0x8] sm:$0xff]
    %v137 = vld [vmem:[#allocation9] sm:$0xff]
    %v138 = vld [vmem:[#allocation9 + $0x8] sm:$0xff]
    %v139 = vld [vmem:[#allocation9 + $0x10] sm:$0xff]
    %v140 = vld [vmem:[#allocation9 + $0x18] sm:$0xff]
    %v141 = vld [vmem:[#allocation9 + $0x20] sm:$0xff]
    %v142 = vld [vmem:[#allocation9 + $0x28] sm:$0xff]
    %v143 = vld [vmem:[#allocation9 + $0x30] sm:$0xff]
    %v144 = vld [vmem:[#allocation9 + $0x38] sm:$0xff]
    %v145 = vld [vmem:[#allocation9 + $0x40] sm:$0xff]
    %v146 = vld [vmem:[#allocation9 + $0x48] sm:$0xff]
    %v147 = vld [vmem:[#allocation9 + $0x50] sm:$0xff]
    %v148 = vld [vmem:[#allocation9 + $0x58] sm:$0xff]
    %v149 = vld [vmem:[#allocation9 + $0x60] sm:$0xff]
    %v150 = vld [vmem:[#allocation9 + $0x68] sm:$0xff]
    %v151 = vld [vmem:[#allocation9 + $0x70] sm:$0xff]
    %v152 = vld [vmem:[#allocation9 + $0x78] sm:$0xff]
    %v153 = vld [vmem:[#allocation9 + $0x80] sm:$0xff]
    %v154 = vld [vmem:[#allocation9 + $0x88] sm:$0xff]
    %v155 = vld [vmem:[#allocation9 + $0x90] sm:$0xff]
    %v156 = vld [vmem:[#allocation9 + $0x98] sm:$0xff]
    %v157 = vld [vmem:[#allocation9 + $0xa0] sm:$0xff]
    %v158 = vld [vmem:[#allocation9 + $0xa8] sm:$0xff]
    %v159 = vld [vmem:[#allocation9 + $0xb0] sm:$0xff]
    %v160 = vld [vmem:[#allocation9 + $0xb8] sm:$0xff]
    %v161 = vld [vmem:[#allocation9 + $0xc0] sm:$0xff]
    %v162 = vld [vmem:[#allocation9 + $0xc8] sm:$0xff]
    %v163 = vld [vmem:[#allocation9 + $0xd0] sm:$0xff]
    %v164 = vld [vmem:[#allocation9 + $0xd8] sm:$0xff]
    %v165 = vld [vmem:[#allocation9 + $0xe0] sm:$0xff]
    %v166 = vld [vmem:[#allocation9 + $0xe8] sm:$0xff]
    %v167 = vld [vmem:[#allocation9 + $0xf0] sm:$0xff]
    %v168 = vld [vmem:[#allocation9 + $0xf8] sm:$0xff]
    %v169 = vpack.c.bf16 %v134, %v133
    %v170 = vld [vmem:[#allocation11] sm:$0xff]
    %v171 = vld [vmem:[#allocation11 + $0x8] sm:$0xff]
    %v172 = vld [vmem:[#allocation11 + $0x10] sm:$0xff]
    %v173 = vld [vmem:[#allocation11 + $0x18] sm:$0xff]
    %v174 = vld [vmem:[#allocation11 + $0x20] sm:$0xff]
    %v175 = vld [vmem:[#allocation11 + $0x28] sm:$0xff]
    %v176 = vld [vmem:[#allocation11 + $0x30] sm:$0xff]
    %v177 = vld [vmem:[#allocation11 + $0x38] sm:$0xff]
    %v178 = vld [vmem:[#allocation11 + $0x40] sm:$0xff]
    %v179 = vld [vmem:[#allocation11 + $0x48] sm:$0xff]
    %v180 = vld [vmem:[#allocation11 + $0x50] sm:$0xff]
    %v181 = vld [vmem:[#allocation11 + $0x58] sm:$0xff]
    %v182 = vld [vmem:[#allocation11 + $0x60] sm:$0xff]
    %v183 = vld [vmem:[#allocation11 + $0x68] sm:$0xff]
    %v184 = vld [vmem:[#allocation11 + $0x70] sm:$0xff]
    %v185 = vld [vmem:[#allocation11 + $0x78] sm:$0xff]
    %v186 = vld [vmem:[#allocation11 + $0x80] sm:$0xff]
    %v187 = vld [vmem:[#allocation11 + $0x88] sm:$0xff]
    %v188 = vld [vmem:[#allocation11 + $0x90] sm:$0xff]
    %v189 = vld [vmem:[#allocation11 + $0x98] sm:$0xff]
    %v190 = vld [vmem:[#allocation11 + $0xa0] sm:$0xff]
    %v191 = vld [vmem:[#allocation11 + $0xa8] sm:$0xff]
    %v192 = vld [vmem:[#allocation11 + $0xb0] sm:$0xff]
    %v193 = vld [vmem:[#allocation11 + $0xb8] sm:$0xff]
    %v194 = vld [vmem:[#allocation11 + $0xc0] sm:$0xff]
    %v195 = vld [vmem:[#allocation11 + $0xc8] sm:$0xff]
    %v196 = vld [vmem:[#allocation11 + $0xd0] sm:$0xff]
    %v197 = vld [vmem:[#allocation11 + $0xd8] sm:$0xff]
    %v198 = vld [vmem:[#allocation11 + $0xe0] sm:$0xff]
    %v199 = vld [vmem:[#allocation11 + $0xe8] sm:$0xff]
    %v200 = vld [vmem:[#allocation11 + $0xf0] sm:$0xff]
    %v201 = vld [vmem:[#allocation11 + $0xf8] sm:$0xff]
    %v234 = vunpack.c.l.b16 %v170
    %v235 = vunpack.c.h.b16 %v170
    %v236 = vunpack.c.l.b16 %v171
    %v237 = vunpack.c.h.b16 %v171
    %v238 = vunpack.c.l.b16 %v172
    %v239 = vunpack.c.h.b16 %v172
    %v240 = vunpack.c.l.b16 %v173
    %v241 = vunpack.c.h.b16 %v173
    %v242 = vunpack.c.l.b16 %v174
    %v243 = vunpack.c.h.b16 %v174
    %v244 = vunpack.c.l.b16 %v175
    %v245 = vunpack.c.h.b16 %v175
    %v246 = vunpack.c.l.b16 %v176
    %v247 = vunpack.c.h.b16 %v176
    %v248 = vunpack.c.l.b16 %v177
    %v249 = vunpack.c.h.b16 %v177
    %v250 = vunpack.c.l.b16 %v178
    %v251 = vunpack.c.h.b16 %v178
    %v252 = vunpack.c.l.b16 %v179
    %v253 = vunpack.c.h.b16 %v179
    %v254 = vunpack.c.l.b16 %v180
    %v255 = vunpack.c.h.b16 %v180
    %v256 = vunpack.c.l.b16 %v181
    %v257 = vunpack.c.h.b16 %v181
    %v258 = vunpack.c.l.b16 %v182
    %v259 = vunpack.c.h.b16 %v182
    %v260 = vunpack.c.l.b16 %v183
    %v261 = vunpack.c.h.b16 %v183
    %v262 = vunpack.c.l.b16 %v184
    %v263 = vunpack.c.h.b16 %v184
    %v264 = vunpack.c.l.b16 %v185
    %v265 = vunpack.c.h.b16 %v185
    %v266 = vunpack.c.l.b16 %v186
    %v267 = vunpack.c.h.b16 %v186
    %v268 = vunpack.c.l.b16 %v187
    %v269 = vunpack.c.h.b16 %v187
    %v270 = vunpack.c.l.b16 %v188
    %v271 = vunpack.c.h.b16 %v188
    %v272 = vunpack.c.l.b16 %v189
    %v273 = vunpack.c.h.b16 %v189
    %v274 = vunpack.c.l.b16 %v190
    %v275 = vunpack.c.h.b16 %v190
    %v276 = vunpack.c.l.b16 %v191
    %v277 = vunpack.c.h.b16 %v191
    %v278 = vunpack.c.l.b16 %v192
    %v279 = vunpack.c.h.b16 %v192
    %v280 = vunpack.c.l.b16 %v193
    %v281 = vunpack.c.h.b16 %v193
    %v282 = vunpack.c.l.b16 %v194
    %v283 = vunpack.c.h.b16 %v194
    %v284 = vunpack.c.l.b16 %v195
    %v285 = vunpack.c.h.b16 %v195
    %v286 = vunpack.c.l.b16 %v196
    %v287 = vunpack.c.h.b16 %v196
    %v288 = vunpack.c.l.b16 %v197
    %v289 = vunpack.c.h.b16 %v197
    %v290 = vunpack.c.l.b16 %v198
    %v291 = vunpack.c.h.b16 %v198
    %v292 = vunpack.c.l.b16 %v199
    %v293 = vunpack.c.h.b16 %v199
    %v294 = vunpack.c.l.b16 %v200
    %v295 = vunpack.c.h.b16 %v200
    %v296 = vunpack.c.l.b16 %v201
    %v297 = vunpack.c.h.b16 %v201
    %v298 = vpack.c.b16 %v238, %v234
    %v299 = vpack.c.b16 %v239, %v235
    %v300 = vpack.c.b16 %v240, %v236
    %v301 = vpack.c.b16 %v241, %v237
    %v302 = vpack.c.b16 %v246, %v242
    %v303 = vpack.c.b16 %v247, %v243
    %v304 = vpack.c.b16 %v248, %v244
    %v305 = vpack.c.b16 %v249, %v245
    %v306 = vpack.c.b16 %v254, %v250
    %v307 = vpack.c.b16 %v255, %v251
    %v308 = vpack.c.b16 %v256, %v252
    %v309 = vpack.c.b16 %v257, %v253
    %v310 = vpack.c.b16 %v262, %v258
    %v311 = vpack.c.b16 %v263, %v259
    %v312 = vpack.c.b16 %v264, %v260
    %v313 = vpack.c.b16 %v265, %v261
    %v314 = vpack.c.b16 %v270, %v266
    %v315 = vpack.c.b16 %v271, %v267
    %v316 = vpack.c.b16 %v272, %v268
    %v317 = vpack.c.b16 %v273, %v269
    %v318 = vpack.c.b16 %v278, %v274
    %v319 = vpack.c.b16 %v279, %v275
    %v320 = vpack.c.b16 %v280, %v276
    %v321 = vpack.c.b16 %v281, %v277
    %v322 = vpack.c.b16 %v286, %v282
    %v323 = vpack.c.b16 %v287, %v283
    %v324 = vpack.c.b16 %v288, %v284
    %v325 = vpack.c.b16 %v289, %v285
    %v326 = vpack.c.b16 %v294, %v290
    %v327 = vpack.c.b16 %v295, %v291
    %v328 = vpack.c.b16 %v296, %v292
    %v329 = vpack.c.b16 %v297, %v293
    %362 = vmatpush.bf16.msra.mxu0 %v326
    %363 = vmatpush.bf16.msra.mxu0 %v322
    %364 = vmatpush.bf16.msra.mxu0 %v318
    %365 = vmatpush.bf16.msra.mxu0 %v314
    %366 = vmatpush.bf16.msra.mxu0 %v310
    %367 = vmatpush.bf16.msra.mxu0 %v306
    %368 = vmatpush.bf16.msra.mxu0 %v302
    %369 = vmatpush.bf16.msra.mxu0 %v298
    %370 = vmatmul.bf16.gmra.mxu0 %v169
    %v371 = vpop.f32.mrf.mxu0
    %v372 = vadd.f32 0.0, %v371
    %v373 = vpop.f32.mrf.mxu0
    %v374 = vadd.f32 0.0, %v373
    %375 = vdwg.mxu0
    %376 = vmatpush.bf16.msra.mxu0 %v327
    %377 = vmatpush.bf16.msra.mxu0 %v323
    %378 = vmatpush.bf16.msra.mxu0 %v319
    %379 = vmatpush.bf16.msra.mxu0 %v315
    %380 = vmatpush.bf16.msra.mxu0 %v311
    %381 = vmatpush.bf16.msra.mxu0 %v307
    %382 = vmatpush.bf16.msra.mxu0 %v303
    %383 = vmatpush.bf16.msra.mxu0 %v299
    %384 = vmatmul.bf16.gmra.mxu0 %v169
    %v385 = vpop.f32.mrf.mxu0
    %v386 = vadd.f32 0.0, %v385
    %v387 = vpop.f32.mrf.mxu0
    %v388 = vadd.f32 0.0, %v387
    %389 = vdwg.mxu0
    %390 = vmatpush.bf16.msra.mxu0 %v328
    %391 = vmatpush.bf16.msra.mxu0 %v324
    %392 = vmatpush.bf16.msra.mxu0 %v320
    %393 = vmatpush.bf16.msra.mxu0 %v316
    %394 = vmatpush.bf16.msra.mxu0 %v312
    %395 = vmatpush.bf16.msra.mxu0 %v308
    %396 = vmatpush.bf16.msra.mxu0 %v304
    %397 = vmatpush.bf16.msra.mxu0 %v300
    %398 = vmatmul.bf16.gmra.mxu0 %v169
    %v399 = vpop.f32.mrf.mxu0
    %v400 = vadd.f32 0.0, %v399
    %v401 = vpop.f32.mrf.mxu0
    %v402 = vadd.f32 0.0, %v401
    %403 = vdwg.mxu0
    %404 = vmatpush.bf16.msra.mxu0 %v329
    %405 = vmatpush.bf16.msra.mxu0 %v325
    %406 = vmatpush.bf16.msra.mxu0 %v321
    %407 = vmatpush.bf16.msra.mxu0 %v317
    %408 = vmatpush.bf16.msra.mxu0 %v313
    %409 = vmatpush.bf16.msra.mxu0 %v309
    %410 = vmatpush.bf16.msra.mxu0 %v305
    %411 = vmatpush.bf16.msra.mxu0 %v301
    %412 = vmatmul.bf16.gmra.mxu0 %v169
    %v413 = vpop.f32.mrf.mxu0
    %v414 = vadd.f32 0.0, %v413
    %v415 = vpop.f32.mrf.mxu0
    %v416 = vadd.f32 0.0, %v415
    %417 = vdwg.mxu0
    %v420 = vunpack.c.l.b16 %v131
    %v421 = vunpack.c.l.b16 %v132
    %v422 = vpack.c.b16 %v421, %v420
    %v456 = vunpack.c.l.b16 %v137
    %v457 = vunpack.c.h.b16 %v137
    %v458 = vunpack.c.l.b16 %v138
    %v459 = vunpack.c.h.b16 %v138
    %v460 = vunpack.c.l.b16 %v139
    %v461 = vunpack.c.h.b16 %v139
    %v462 = vunpack.c.l.b16 %v140
    %v463 = vunpack.c.h.b16 %v140
    %v464 = vunpack.c.l.b16 %v141
    %v465 = vunpack.c.h.b16 %v141
    %v466 = vunpack.c.l.b16 %v142
    %v467 = vunpack.c.h.b16 %v142
    %v468 = vunpack.c.l.b16 %v143
    %v469 = vunpack.c.h.b16 %v143
    %v470 = vunpack.c.l.b16 %v144
    %v471 = vunpack.c.h.b16 %v144
    %v472 = vunpack.c.l.b16 %v145
    %v473 = vunpack.c.h.b16 %v145
    %v474 = vunpack.c.l.b16 %v146
    %v475 = vunpack.c.h.b16 %v146
    %v476 = vunpack.c.l.b16 %v147
    %v477 = vunpack.c.h.b16 %v147
    %v478 = vunpack.c.l.b16 %v148
    %v479 = vunpack.c.h.b16 %v148
    %v480 = vunpack.c.l.b16 %v149
    %v481 = vunpack.c.h.b16 %v149
    %v482 = vunpack.c.l.b16 %v150
    %v483 = vunpack.c.h.b16 %v150
    %v484 = vunpack.c.l.b16 %v151
    %v485 = vunpack.c.h.b16 %v151
    %v486 = vunpack.c.l.b16 %v152
    %v487 = vunpack.c.h.b16 %v152
    %v488 = vunpack.c.l.b16 %v153
    %v489 = vunpack.c.h.b16 %v153
    %v490 = vunpack.c.l.b16 %v154
    %v491 = vunpack.c.h.b16 %v154
    %v492 = vunpack.c.l.b16 %v155
    %v493 = vunpack.c.h.b16 %v155
    %v494 = vunpack.c.l.b16 %v156
    %v495 = vunpack.c.h.b16 %v156
    %v496 = vunpack.c.l.b16 %v157
    %v497 = vunpack.c.h.b16 %v157
    %v498 = vunpack.c.l.b16 %v158
    %v499 = vunpack.c.h.b16 %v158
    %v500 = vunpack.c.l.b16 %v159
    %v501 = vunpack.c.h.b16 %v159
    %v502 = vunpack.c.l.b16 %v160
    %v503 = vunpack.c.h.b16 %v160
    %v504 = vunpack.c.l.b16 %v161
    %v505 = vunpack.c.h.b16 %v161
    %v506 = vunpack.c.l.b16 %v162
    %v507 = vunpack.c.h.b16 %v162
    %v508 = vunpack.c.l.b16 %v163
    %v509 = vunpack.c.h.b16 %v163
    %v510 = vunpack.c.l.b16 %v164
    %v511 = vunpack.c.h.b16 %v164
    %v512 = vunpack.c.l.b16 %v165
    %v513 = vunpack.c.h.b16 %v165
    %v514 = vunpack.c.l.b16 %v166
    %v515 = vunpack.c.h.b16 %v166
    %v516 = vunpack.c.l.b16 %v167
    %v517 = vunpack.c.h.b16 %v167
    %v518 = vunpack.c.l.b16 %v168
    %v519 = vunpack.c.h.b16 %v168
    %v520 = vpack.c.b16 %v460, %v456
    %v521 = vpack.c.b16 %v461, %v457
    %v522 = vpack.c.b16 %v462, %v458
    %v523 = vpack.c.b16 %v463, %v459
    %v524 = vpack.c.b16 %v468, %v464
    %v525 = vpack.c.b16 %v469, %v465
    %v526 = vpack.c.b16 %v470, %v466
    %v527 = vpack.c.b16 %v471, %v467
    %v528 = vpack.c.b16 %v476, %v472
    %v529 = vpack.c.b16 %v477, %v473
    %v530 = vpack.c.b16 %v478, %v474
    %v531 = vpack.c.b16 %v479, %v475
    %v532 = vpack.c.b16 %v484, %v480
    %v533 = vpack.c.b16 %v485, %v481
    %v534 = vpack.c.b16 %v486, %v482
    %v535 = vpack.c.b16 %v487, %v483
    %v536 = vpack.c.b16 %v492, %v488
    %v537 = vpack.c.b16 %v493, %v489
    %v538 = vpack.c.b16 %v494, %v490
    %v539 = vpack.c.b16 %v495, %v491
    %v540 = vpack.c.b16 %v500, %v496
    %v541 = vpack.c.b16 %v501, %v497
    %v542 = vpack.c.b16 %v502, %v498
    %v543 = vpack.c.b16 %v503, %v499
    %v544 = vpack.c.b16 %v508, %v504
    %v545 = vpack.c.b16 %v509, %v505
    %v546 = vpack.c.b16 %v510, %v506
    %v547 = vpack.c.b16 %v511, %v507
    %v548 = vpack.c.b16 %v516, %v512
    %v549 = vpack.c.b16 %v517, %v513
    %v550 = vpack.c.b16 %v518, %v514
    %v551 = vpack.c.b16 %v519, %v515
    %584 = vmatpush.bf16.msra.mxu0 %v548
    %585 = vmatpush.bf16.msra.mxu0 %v544
    %586 = vmatpush.bf16.msra.mxu0 %v540
    %587 = vmatpush.bf16.msra.mxu0 %v536
    %588 = vmatpush.bf16.msra.mxu0 %v532
    %589 = vmatpush.bf16.msra.mxu0 %v528
    %590 = vmatpush.bf16.msra.mxu0 %v524
    %591 = vmatpush.bf16.msra.mxu0 %v520
    %592 = vmatmul.bf16.gmra.mxu0 %v422
    %v593 = vpop.f32.mrf.mxu0
    %v594 = vadd.f32 %v372, %v593
    %v595 = vpop.f32.mrf.mxu0
    %v596 = vadd.f32 %v374, %v595
    %597 = vdwg.mxu0
    %598 = vmatpush.bf16.msra.mxu0 %v549
    %599 = vmatpush.bf16.msra.mxu0 %v545
    %600 = vmatpush.bf16.msra.mxu0 %v541
    %601 = vmatpush.bf16.msra.mxu0 %v537
    %602 = vmatpush.bf16.msra.mxu0 %v533
    %603 = vmatpush.bf16.msra.mxu0 %v529
    %604 = vmatpush.bf16.msra.mxu0 %v525
    %605 = vmatpush.bf16.msra.mxu0 %v521
    %606 = vmatmul.bf16.gmra.mxu0 %v422
    %v607 = vpop.f32.mrf.mxu0
    %v608 = vadd.f32 %v386, %v607
    %v609 = vpop.f32.mrf.mxu0
    %v610 = vadd.f32 %v388, %v609
    %611 = vdwg.mxu0
    %612 = vmatpush.bf16.msra.mxu0 %v550
    %613 = vmatpush.bf16.msra.mxu0 %v546
    %614 = vmatpush.bf16.msra.mxu0 %v542
    %615 = vmatpush.bf16.msra.mxu0 %v538
    %616 = vmatpush.bf16.msra.mxu0 %v534
    %617 = vmatpush.bf16.msra.mxu0 %v530
    %618 = vmatpush.bf16.msra.mxu0 %v526
    %619 = vmatpush.bf16.msra.mxu0 %v522
    %620 = vmatmul.bf16.gmra.mxu0 %v422
    %v621 = vpop.f32.mrf.mxu0
    %v622 = vadd.f32 %v400, %v621
    %v623 = vpop.f32.mrf.mxu0
    %v624 = vadd.f32 %v402, %v623
    %625 = vdwg.mxu0
    %626 = vmatpush.bf16.msra.mxu0 %v551
    %627 = vmatpush.bf16.msra.mxu0 %v547
    %628 = vmatpush.bf16.msra.mxu0 %v543
    %629 = vmatpush.bf16.msra.mxu0 %v539
    %630 = vmatpush.bf16.msra.mxu0 %v535
    %631 = vmatpush.bf16.msra.mxu0 %v531
    %632 = vmatpush.bf16.msra.mxu0 %v527
    %633 = vmatpush.bf16.msra.mxu0 %v523
    %634 = vmatmul.bf16.gmra.mxu0 %v422
    %v635 = vpop.f32.mrf.mxu0
    %v636 = vadd.f32 %v414, %v635
    %v637 = vpop.f32.mrf.mxu0
    %v638 = vadd.f32 %v416, %v637
    %639 = vdwg.mxu0
    %v640 = vld [vmem:[#allocation12] sm:$0xf]
    %v642 = vperm.slane %v640, 0
    %v643 = vperm.slane %v640, 1
    %v644 = vperm.slane %v640, 2
    %v645 = vperm.slane %v640, 3
    %v650 = vadd.f32 %v594, %v642
    %v651 = vadd.f32 %v608, %v643
    %v652 = vadd.f32 %v622, %v644
    %v653 = vadd.f32 %v636, %v645
    %v654 = vadd.f32 %v596, %v642
    %v655 = vadd.f32 %v610, %v643
    %v656 = vadd.f32 %v624, %v644
    %v657 = vadd.f32 %v638, %v645
    %v658 = vxor.u32 %v650, 2147483648
    %v659 = vxor.u32 %v654, 2147483648
    %v660 = vmul.f32 %v658, 1.442695
    %v661 = vpow.pop %v660
    %v662 = vmul.f32 %v659, 1.442695
    %v663 = vpow.pop %v662
    %v664 = vadd.f32 %v661, 1.0
    %v665 = vadd.f32 %v663, 1.0
    %v666 = vrcp.pop %v664
    %v667 = vmul.f32 %v664, %v666
    %v668 = vsub.f32 1.0, %v667
    %v669 = vmul.f32 %v666, %v668
    %v670 = vadd.f32 %v666, %v669
    %vm671 = vweird.f32 %v664
    %vm672 = vweird.f32 %v666
    %vm673 = vmor %vm671, %vm672
    %v674 = vsel %vm673, %v666, %v670
    %v675 = vand.u32 2147483647, %v664
    %vm676 = vcmp.eq.f32.partialorder %v675, 8.507059e+37
    %v677 = vand.u32 %v664, 2147483648
    %v678 = vor.u32 1.1754944e-38, %v677
    %v679 = vsel %vm676, %v678, %v674
    %v680 = vmul.f32 1.0, %v679
    %v681 = vrcp.pop %v665
    %v682 = vmul.f32 %v665, %v681
    %v683 = vsub.f32 1.0, %v682
    %v684 = vmul.f32 %v681, %v683
    %v685 = vadd.f32 %v681, %v684
    %vm686 = vweird.f32 %v665
    %vm687 = vweird.f32 %v681
    %vm688 = vmor %vm686, %vm687
    %v689 = vsel %vm688, %v681, %v685
    %v690 = vand.u32 2147483647, %v665
    %vm691 = vcmp.eq.f32.partialorder %v690, 8.507059e+37
    %v692 = vand.u32 %v665, 2147483648
    %v693 = vor.u32 1.1754944e-38, %v692
    %v694 = vsel %vm691, %v693, %v689
    %v695 = vmul.f32 1.0, %v694
    %v696 = vxor.u32 %v651, 2147483648
    %v697 = vxor.u32 %v655, 2147483648
    %v698 = vmul.f32 %v696, 1.442695
    %v699 = vpow.pop %v698
    %v700 = vmul.f32 %v697, 1.442695
    %v701 = vpow.pop %v700
    %v702 = vadd.f32 %v699, 1.0
    %v703 = vadd.f32 %v701, 1.0
    %v704 = vrcp.pop %v702
    %v705 = vmul.f32 %v702, %v704
    %v706 = vsub.f32 1.0, %v705
    %v707 = vmul.f32 %v704, %v706
    %v708 = vadd.f32 %v704, %v707
    %vm709 = vweird.f32 %v702
    %vm710 = vweird.f32 %v704
    %vm711 = vmor %vm709, %vm710
    %v712 = vsel %vm711, %v704, %v708
    %v713 = vand.u32 2147483647, %v702
    %vm714 = vcmp.eq.f32.partialorder %v713, 8.507059e+37
    %v715 = vand.u32 %v702, 2147483648
    %v716 = vor.u32 1.1754944e-38, %v715
    %v717 = vsel %vm714, %v716, %v712
    %v718 = vmul.f32 1.0, %v717
    %v719 = vrcp.pop %v703
    %v720 = vmul.f32 %v703, %v719
    %v721 = vsub.f32 1.0, %v720
    %v722 = vmul.f32 %v719, %v721
    %v723 = vadd.f32 %v719, %v722
    %vm724 = vweird.f32 %v703
    %vm725 = vweird.f32 %v719
    %vm726 = vmor %vm724, %vm725
    %v727 = vsel %vm726, %v719, %v723
    %v728 = vand.u32 2147483647, %v703
    %vm729 = vcmp.eq.f32.partialorder %v728, 8.507059e+37
    %v730 = vand.u32 %v703, 2147483648
    %v731 = vor.u32 1.1754944e-38, %v730
    %v732 = vsel %vm729, %v731, %v727
    %v733 = vmul.f32 1.0, %v732
    %v734 = vtanh.pop %v652
    %v735 = vtanh.pop %v656
    %v736 = vxor.u32 %v653, 2147483648
    %v737 = vxor.u32 %v657, 2147483648
    %v738 = vmul.f32 %v736, 1.442695
    %v739 = vpow.pop %v738
    %v740 = vmul.f32 %v737, 1.442695
    %v741 = vpow.pop %v740
    %v742 = vadd.f32 %v739, 1.0
    %v743 = vadd.f32 %v741, 1.0
    %v744 = vrcp.pop %v742
    %v745 = vmul.f32 %v742, %v744
    %v746 = vsub.f32 1.0, %v745
    %v747 = vmul.f32 %v744, %v746
    %v748 = vadd.f32 %v744, %v747
    %vm749 = vweird.f32 %v742
    %vm750 = vweird.f32 %v744
    %vm751 = vmor %vm749, %vm750
    %v752 = vsel %vm751, %v744, %v748
    %v753 = vand.u32 2147483647, %v742
    %vm754 = vcmp.eq.f32.partialorder %v753, 8.507059e+37
    %v755 = vand.u32 %v742, 2147483648
    %v756 = vor.u32 1.1754944e-38, %v755
    %v757 = vsel %vm754, %v756, %v752
    %v758 = vmul.f32 1.0, %v757
    %v759 = vrcp.pop %v743
    %v760 = vmul.f32 %v743, %v759
    %v761 = vsub.f32 1.0, %v760
    %v762 = vmul.f32 %v759, %v761
    %v763 = vadd.f32 %v759, %v762
    %vm764 = vweird.f32 %v743
    %vm765 = vweird.f32 %v759
    %vm766 = vmor %vm764, %vm765
    %v767 = vsel %vm766, %v759, %v763
    %v768 = vand.u32 2147483647, %v743
    %vm769 = vcmp.eq.f32.partialorder %v768, 8.507059e+37
    %v770 = vand.u32 %v743, 2147483648
    %v771 = vor.u32 1.1754944e-38, %v770
    %v772 = vsel %vm769, %v771, %v767
    %v773 = vmul.f32 1.0, %v772
    %v774 = vmul.f32 %v718, %v135
    %v775 = vmul.f32 %v733, %v136
    %v776 = vmul.f32 %v680, %v734
    %v777 = vmul.f32 %v695, %v735
    %v778 = vadd.f32 %v774, %v776
    %v779 = vadd.f32 %v775, %v777
    %v780 = vtanh.pop %v778
    %v781 = vtanh.pop %v779
    %v782 = vmul.f32 %v758, %v780
    %v783 = vmul.f32 %v773, %v781
    %784 = vst [vmem:[#allocation2] sm:$0xff] %v782
    %785 = vst [vmem:[#allocation2 + $0x8] sm:$0xff] %v783
    %786 = vst [vmem:[#allocation3] sm:$0xff] %v778
    %787 = vst [vmem:[#allocation3 + $0x8] sm:$0xff] %v779
    %v788 = vpack.c.bf16 %v783, %v782
    %v789 = vld [vmem:[#allocation4] sm:$0xff]
    %v790 = vld [vmem:[#allocation4 + $0x8] sm:$0xff]
    %v791 = vld [vmem:[#allocation5] sm:$0xff]
    %v792 = vld [vmem:[#allocation5 + $0x8] sm:$0xff]
    %v793 = vld [vmem:[#allocation14] sm:$0xff]
    %v794 = vld [vmem:[#allocation14 + $0x8] sm:$0xff]
    %v795 = vld [vmem:[#allocation14 + $0x10] sm:$0xff]
    %v796 = vld [vmem:[#allocation14 + $0x18] sm:$0xff]
    %v797 = vld [vmem:[#allocation14 + $0x20] sm:$0xff]
    %v798 = vld [vmem:[#allocation14 + $0x28] sm:$0xff]
    %v799 = vld [vmem:[#allocation14 + $0x30] sm:$0xff]
    %v800 = vld [vmem:[#allocation14 + $0x38] sm:$0xff]
    %v801 = vld [vmem:[#allocation14 + $0x40] sm:$0xff]
    %v802 = vld [vmem:[#allocation14 + $0x48] sm:$0xff]
    %v803 = vld [vmem:[#allocation14 + $0x50] sm:$0xff]
    %v804 = vld [vmem:[#allocation14 + $0x58] sm:$0xff]
    %v805 = vld [vmem:[#allocation14 + $0x60] sm:$0xff]
    %v806 = vld [vmem:[#allocation14 + $0x68] sm:$0xff]
    %v807 = vld [vmem:[#allocation14 + $0x70] sm:$0xff]
    %v808 = vld [vmem:[#allocation14 + $0x78] sm:$0xff]
    %v809 = vld [vmem:[#allocation14 + $0x80] sm:$0xff]
    %v810 = vld [vmem:[#allocation14 + $0x88] sm:$0xff]
    %v811 = vld [vmem:[#allocation14 + $0x90] sm:$0xff]
    %v812 = vld [vmem:[#allocation14 + $0x98] sm:$0xff]
    %v813 = vld [vmem:[#allocation14 + $0xa0] sm:$0xff]
    %v814 = vld [vmem:[#allocation14 + $0xa8] sm:$0xff]
    %v815 = vld [vmem:[#allocation14 + $0xb0] sm:$0xff]
    %v816 = vld [vmem:[#allocation14 + $0xb8] sm:$0xff]
    %v817 = vld [vmem:[#allocation14 + $0xc0] sm:$0xff]
    %v818 = vld [vmem:[#allocation14 + $0xc8] sm:$0xff]
    %v819 = vld [vmem:[#allocation14 + $0xd0] sm:$0xff]
    %v820 = vld [vmem:[#allocation14 + $0xd8] sm:$0xff]
    %v821 = vld [vmem:[#allocation14 + $0xe0] sm:$0xff]
    %v822 = vld [vmem:[#allocation14 + $0xe8] sm:$0xff]
    %v823 = vld [vmem:[#allocation14 + $0xf0] sm:$0xff]
    %v824 = vld [vmem:[#allocation14 + $0xf8] sm:$0xff]
    %v825 = vpack.c.bf16 %v790, %v789
    %v826 = vld [vmem:[#allocation15] sm:$0xff]
    %v827 = vld [vmem:[#allocation15 + $0x8] sm:$0xff]
    %v828 = vld [vmem:[#allocation15 + $0x10] sm:$0xff]
    %v829 = vld [vmem:[#allocation15 + $0x18] sm:$0xff]
    %v830 = vld [vmem:[#allocation15 + $0x20] sm:$0xff]
    %v831 = vld [vmem:[#allocation15 + $0x28] sm:$0xff]
    %v832 = vld [vmem:[#allocation15 + $0x30] sm:$0xff]
    %v833 = vld [vmem:[#allocation15 + $0x38] sm:$0xff]
    %v834 = vld [vmem:[#allocation15 + $0x40] sm:$0xff]
    %v835 = vld [vmem:[#allocation15 + $0x48] sm:$0xff]
    %v836 = vld [vmem:[#allocation15 + $0x50] sm:$0xff]
    %v837 = vld [vmem:[#allocation15 + $0x58] sm:$0xff]
    %v838 = vld [vmem:[#allocation15 + $0x60] sm:$0xff]
    %v839 = vld [vmem:[#allocation15 + $0x68] sm:$0xff]
    %v840 = vld [vmem:[#allocation15 + $0x70] sm:$0xff]
    %v841 = vld [vmem:[#allocation15 + $0x78] sm:$0xff]
    %v842 = vld [vmem:[#allocation15 + $0x80] sm:$0xff]
    %v843 = vld [vmem:[#allocation15 + $0x88] sm:$0xff]
    %v844 = vld [vmem:[#allocation15 + $0x90] sm:$0xff]
    %v845 = vld [vmem:[#allocation15 + $0x98] sm:$0xff]
    %v846 = vld [vmem:[#allocation15 + $0xa0] sm:$0xff]
    %v847 = vld [vmem:[#allocation15 + $0xa8] sm:$0xff]
    %v848 = vld [vmem:[#allocation15 + $0xb0] sm:$0xff]
    %v849 = vld [vmem:[#allocation15 + $0xb8] sm:$0xff]
    %v850 = vld [vmem:[#allocation15 + $0xc0] sm:$0xff]
    %v851 = vld [vmem:[#allocation15 + $0xc8] sm:$0xff]
    %v852 = vld [vmem:[#allocation15 + $0xd0] sm:$0xff]
    %v853 = vld [vmem:[#allocation15 + $0xd8] sm:$0xff]
    %v854 = vld [vmem:[#allocation15 + $0xe0] sm:$0xff]
    %v855 = vld [vmem:[#allocation15 + $0xe8] sm:$0xff]
    %v856 = vld [vmem:[#allocation15 + $0xf0] sm:$0xff]
    %v857 = vld [vmem:[#allocation15 + $0xf8] sm:$0xff]
    %v890 = vunpack.c.l.b16 %v826
    %v891 = vunpack.c.h.b16 %v826
    %v892 = vunpack.c.l.b16 %v827
    %v893 = vunpack.c.h.b16 %v827
    %v894 = vunpack.c.l.b16 %v828
    %v895 = vunpack.c.h.b16 %v828
    %v896 = vunpack.c.l.b16 %v829
    %v897 = vunpack.c.h.b16 %v829
    %v898 = vunpack.c.l.b16 %v830
    %v899 = vunpack.c.h.b16 %v830
    %v900 = vunpack.c.l.b16 %v831
    %v901 = vunpack.c.h.b16 %v831
    %v902 = vunpack.c.l.b16 %v832
    %v903 = vunpack.c.h.b16 %v832
    %v904 = vunpack.c.l.b16 %v833
    %v905 = vunpack.c.h.b16 %v833
    %v906 = vunpack.c.l.b16 %v834
    %v907 = vunpack.c.h.b16 %v834
    %v908 = vunpack.c.l.b16 %v835
    %v909 = vunpack.c.h.b16 %v835
    %v910 = vunpack.c.l.b16 %v836
    %v911 = vunpack.c.h.b16 %v836
    %v912 = vunpack.c.l.b16 %v837
    %v913 = vunpack.c.h.b16 %v837
    %v914 = vunpack.c.l.b16 %v838
    %v915 = vunpack.c.h.b16 %v838
    %v916 = vunpack.c.l.b16 %v839
    %v917 = vunpack.c.h.b16 %v839
    %v918 = vunpack.c.l.b16 %v840
    %v919 = vunpack.c.h.b16 %v840
    %v920 = vunpack.c.l.b16 %v841
    %v921 = vunpack.c.h.b16 %v841
    %v922 = vunpack.c.l.b16 %v842
    %v923 = vunpack.c.h.b16 %v842
    %v924 = vunpack.c.l.b16 %v843
    %v925 = vunpack.c.h.b16 %v843
    %v926 = vunpack.c.l.b16 %v844
    %v927 = vunpack.c.h.b16 %v844
    %v928 = vunpack.c.l.b16 %v845
    %v929 = vunpack.c.h.b16 %v845
    %v930 = vunpack.c.l.b16 %v846
    %v931 = vunpack.c.h.b16 %v846
    %v932 = vunpack.c.l.b16 %v847
    %v933 = vunpack.c.h.b16 %v847
    %v934 = vunpack.c.l.b16 %v848
    %v935 = vunpack.c.h.b16 %v848
    %v936 = vunpack.c.l.b16 %v849
    %v937 = vunpack.c.h.b16 %v849
    %v938 = vunpack.c.l.b16 %v850
    %v939 = vunpack.c.h.b16 %v850
    %v940 = vunpack.c.l.b16 %v851
    %v941 = vunpack.c.h.b16 %v851
    %v942 = vunpack.c.l.b16 %v852
    %v943 = vunpack.c.h.b16 %v852
    %v944 = vunpack.c.l.b16 %v853
    %v945 = vunpack.c.h.b16 %v853
    %v946 = vunpack.c.l.b16 %v854
    %v947 = vunpack.c.h.b16 %v854
    %v948 = vunpack.c.l.b16 %v855
    %v949 = vunpack.c.h.b16 %v855
    %v950 = vunpack.c.l.b16 %v856
    %v951 = vunpack.c.h.b16 %v856
    %v952 = vunpack.c.l.b16 %v857
    %v953 = vunpack.c.h.b16 %v857
    %v954 = vpack.c.b16 %v894, %v890
    %v955 = vpack.c.b16 %v895, %v891
    %v956 = vpack.c.b16 %v896, %v892
    %v957 = vpack.c.b16 %v897, %v893
    %v958 = vpack.c.b16 %v902, %v898
    %v959 = vpack.c.b16 %v903, %v899
    %v960 = vpack.c.b16 %v904, %v900
    %v961 = vpack.c.b16 %v905, %v901
    %v962 = vpack.c.b16 %v910, %v906
    %v963 = vpack.c.b16 %v911, %v907
    %v964 = vpack.c.b16 %v912, %v908
    %v965 = vpack.c.b16 %v913, %v909
    %v966 = vpack.c.b16 %v918, %v914
    %v967 = vpack.c.b16 %v919, %v915
    %v968 = vpack.c.b16 %v920, %v916
    %v969 = vpack.c.b16 %v921, %v917
    %v970 = vpack.c.b16 %v926, %v922
    %v971 = vpack.c.b16 %v927, %v923
    %v972 = vpack.c.b16 %v928, %v924
    %v973 = vpack.c.b16 %v929, %v925
    %v974 = vpack.c.b16 %v934, %v930
    %v975 = vpack.c.b16 %v935, %v931
    %v976 = vpack.c.b16 %v936, %v932
    %v977 = vpack.c.b16 %v937, %v933
    %v978 = vpack.c.b16 %v942, %v938
    %v979 = vpack.c.b16 %v943, %v939
    %v980 = vpack.c.b16 %v944, %v940
    %v981 = vpack.c.b16 %v945, %v941
    %v982 = vpack.c.b16 %v950, %v946
    %v983 = vpack.c.b16 %v951, %v947
    %v984 = vpack.c.b16 %v952, %v948
    %v985 = vpack.c.b16 %v953, %v949
    %1018 = vmatpush.bf16.msra.mxu0 %v982
    %1019 = vmatpush.bf16.msra.mxu0 %v978
    %1020 = vmatpush.bf16.msra.mxu0 %v974
    %1021 = vmatpush.bf16.msra.mxu0 %v970
    %1022 = vmatpush.bf16.msra.mxu0 %v966
    %1023 = vmatpush.bf16.msra.mxu0 %v962
    %1024 = vmatpush.bf16.msra.mxu0 %v958
    %1025 = vmatpush.bf16.msra.mxu0 %v954
    %1026 = vmatmul.bf16.gmra.mxu0 %v825
    %v1027 = vpop.f32.mrf.mxu0
    %v1028 = vadd.f32 0.0, %v1027
    %v1029 = vpop.f32.mrf.mxu0
    %v1030 = vadd.f32 0.0, %v1029
    %1031 = vdwg.mxu0
    %1032 = vmatpush.bf16.msra.mxu0 %v983
    %1033 = vmatpush.bf16.msra.mxu0 %v979
    %1034 = vmatpush.bf16.msra.mxu0 %v975
    %1035 = vmatpush.bf16.msra.mxu0 %v971
    %1036 = vmatpush.bf16.msra.mxu0 %v967
    %1037 = vmatpush.bf16.msra.mxu0 %v963
    %1038 = vmatpush.bf16.msra.mxu0 %v959
    %1039 = vmatpush.bf16.msra.mxu0 %v955
    %1040 = vmatmul.bf16.gmra.mxu0 %v825
    %v1041 = vpop.f32.mrf.mxu0
    %v1042 = vadd.f32 0.0, %v1041
    %v1043 = vpop.f32.mrf.mxu0
    %v1044 = vadd.f32 0.0, %v1043
    %1045 = vdwg.mxu0
    %1046 = vmatpush.bf16.msra.mxu0 %v984
    %1047 = vmatpush.bf16.msra.mxu0 %v980
    %1048 = vmatpush.bf16.msra.mxu0 %v976
    %1049 = vmatpush.bf16.msra.mxu0 %v972
    %1050 = vmatpush.bf16.msra.mxu0 %v968
    %1051 = vmatpush.bf16.msra.mxu0 %v964
    %1052 = vmatpush.bf16.msra.mxu0 %v960
    %1053 = vmatpush.bf16.msra.mxu0 %v956
    %1054 = vmatmul.bf16.gmra.mxu0 %v825
    %v1055 = vpop.f32.mrf.mxu0
    %v1056 = vadd.f32 0.0, %v1055
    %v1057 = vpop.f32.mrf.mxu0
    %v1058 = vadd.f32 0.0, %v1057
    %1059 = vdwg.mxu0
    %1060 = vmatpush.bf16.msra.mxu0 %v985
    %1061 = vmatpush.bf16.msra.mxu0 %v981
    %1062 = vmatpush.bf16.msra.mxu0 %v977
    %1063 = vmatpush.bf16.msra.mxu0 %v973
    %1064 = vmatpush.bf16.msra.mxu0 %v969
    %1065 = vmatpush.bf16.msra.mxu0 %v965
    %1066 = vmatpush.bf16.msra.mxu0 %v961
    %1067 = vmatpush.bf16.msra.mxu0 %v957
    %1068 = vmatmul.bf16.gmra.mxu0 %v825
    %v1069 = vpop.f32.mrf.mxu0
    %v1070 = vadd.f32 0.0, %v1069
    %v1071 = vpop.f32.mrf.mxu0
    %v1072 = vadd.f32 0.0, %v1071
    %1073 = vdwg.mxu0
    %v1106 = vunpack.c.l.b16 %v793
    %v1107 = vunpack.c.h.b16 %v793
    %v1108 = vunpack.c.l.b16 %v794
    %v1109 = vunpack.c.h.b16 %v794
    %v1110 = vunpack.c.l.b16 %v795
    %v1111 = vunpack.c.h.b16 %v795
    %v1112 = vunpack.c.l.b16 %v796
    %v1113 = vunpack.c.h.b16 %v796
    %v1114 = vunpack.c.l.b16 %v797
    %v1115 = vunpack.c.h.b16 %v797
    %v1116 = vunpack.c.l.b16 %v798
    %v1117 = vunpack.c.h.b16 %v798
    %v1118 = vunpack.c.l.b16 %v799
    %v1119 = vunpack.c.h.b16 %v799
    %v1120 = vunpack.c.l.b16 %v800
    %v1121 = vunpack.c.h.b16 %v800
    %v1122 = vunpack.c.l.b16 %v801
    %v1123 = vunpack.c.h.b16 %v801
    %v1124 = vunpack.c.l.b16 %v802
    %v1125 = vunpack.c.h.b16 %v802
    %v1126 = vunpack.c.l.b16 %v803
    %v1127 = vunpack.c.h.b16 %v803
    %v1128 = vunpack.c.l.b16 %v804
    %v1129 = vunpack.c.h.b16 %v804
    %v1130 = vunpack.c.l.b16 %v805
    %v1131 = vunpack.c.h.b16 %v805
    %v1132 = vunpack.c.l.b16 %v806
    %v1133 = vunpack.c.h.b16 %v806
    %v1134 = vunpack.c.l.b16 %v807
    %v1135 = vunpack.c.h.b16 %v807
    %v1136 = vunpack.c.l.b16 %v808
    %v1137 = vunpack.c.h.b16 %v808
    %v1138 = vunpack.c.l.b16 %v809
    %v1139 = vunpack.c.h.b16 %v809
    %v1140 = vunpack.c.l.b16 %v810
    %v1141 = vunpack.c.h.b16 %v810
    %v1142 = vunpack.c.l.b16 %v811
    %v1143 = vunpack.c.h.b16 %v811
    %v1144 = vunpack.c.l.b16 %v812
    %v1145 = vunpack.c.h.b16 %v812
    %v1146 = vunpack.c.l.b16 %v813
    %v1147 = vunpack.c.h.b16 %v813
    %v1148 = vunpack.c.l.b16 %v814
    %v1149 = vunpack.c.h.b16 %v814
    %v1150 = vunpack.c.l.b16 %v815
    %v1151 = vunpack.c.h.b16 %v815
    %v1152 = vunpack.c.l.b16 %v816
    %v1153 = vunpack.c.h.b16 %v816
    %v1154 = vunpack.c.l.b16 %v817
    %v1155 = vunpack.c.h.b16 %v817
    %v1156 = vunpack.c.l.b16 %v818
    %v1157 = vunpack.c.h.b16 %v818
    %v1158 = vunpack.c.l.b16 %v819
    %v1159 = vunpack.c.h.b16 %v819
    %v1160 = vunpack.c.l.b16 %v820
    %v1161 = vunpack.c.h.b16 %v820
    %v1162 = vunpack.c.l.b16 %v821
    %v1163 = vunpack.c.h.b16 %v821
    %v1164 = vunpack.c.l.b16 %v822
    %v1165 = vunpack.c.h.b16 %v822
    %v1166 = vunpack.c.l.b16 %v823
    %v1167 = vunpack.c.h.b16 %v823
    %v1168 = vunpack.c.l.b16 %v824
    %v1169 = vunpack.c.h.b16 %v824
    %v1170 = vpack.c.b16 %v1110, %v1106
    %v1171 = vpack.c.b16 %v1111, %v1107
    %v1172 = vpack.c.b16 %v1112, %v1108
    %v1173 = vpack.c.b16 %v1113, %v1109
    %v1174 = vpack.c.b16 %v1118, %v1114
    %v1175 = vpack.c.b16 %v1119, %v1115
    %v1176 = vpack.c.b16 %v1120, %v1116
    %v1177 = vpack.c.b16 %v1121, %v1117
    %v1178 = vpack.c.b16 %v1126, %v1122
    %v1179 = vpack.c.b16 %v1127, %v1123
    %v1180 = vpack.c.b16 %v1128, %v1124
    %v1181 = vpack.c.b16 %v1129, %v1125
    %v1182 = vpack.c.b16 %v1134, %v1130
    %v1183 = vpack.c.b16 %v1135, %v1131
    %v1184 = vpack.c.b16 %v1136, %v1132
    %v1185 = vpack.c.b16 %v1137, %v1133
    %v1186 = vpack.c.b16 %v1142, %v1138
    %v1187 = vpack.c.b16 %v1143, %v1139
    %v1188 = vpack.c.b16 %v1144, %v1140
    %v1189 = vpack.c.b16 %v1145, %v1141
    %v1190 = vpack.c.b16 %v1150, %v1146
    %v1191 = vpack.c.b16 %v1151, %v1147
    %v1192 = vpack.c.b16 %v1152, %v1148
    %v1193 = vpack.c.b16 %v1153, %v1149
    %v1194 = vpack.c.b16 %v1158, %v1154
    %v1195 = vpack.c.b16 %v1159, %v1155
    %v1196 = vpack.c.b16 %v1160, %v1156
    %v1197 = vpack.c.b16 %v1161, %v1157
    %v1198 = vpack.c.b16 %v1166, %v1162
    %v1199 = vpack.c.b16 %v1167, %v1163
    %v1200 = vpack.c.b16 %v1168, %v1164
    %v1201 = vpack.c.b16 %v1169, %v1165
    %1234 = vmatpush.bf16.msra.mxu0 %v1198
    %1235 = vmatpush.bf16.msra.mxu0 %v1194
    %1236 = vmatpush.bf16.msra.mxu0 %v1190
    %1237 = vmatpush.bf16.msra.mxu0 %v1186
    %1238 = vmatpush.bf16.msra.mxu0 %v1182
    %1239 = vmatpush.bf16.msra.mxu0 %v1178
    %1240 = vmatpush.bf16.msra.mxu0 %v1174
    %1241 = vmatpush.bf16.msra.mxu0 %v1170
    %1242 = vmatmul.bf16.gmra.mxu0 %v788
    %v1243 = vpop.f32.mrf.mxu0
    %v1244 = vadd.f32 %v1028, %v1243
    %v1245 = vpop.f32.mrf.mxu0
    %v1246 = vadd.f32 %v1030, %v1245
    %1247 = vdwg.mxu0
    %1248 = vmatpush.bf16.msra.mxu0 %v1199
    %1249 = vmatpush.bf16.msra.mxu0 %v1195
    %1250 = vmatpush.bf16.msra.mxu0 %v1191
    %1251 = vmatpush.bf16.msra.mxu0 %v1187
    %1252 = vmatpush.bf16.msra.mxu0 %v1183
    %1253 = vmatpush.bf16.msra.mxu0 %v1179
    %1254 = vmatpush.bf16.msra.mxu0 %v1175
    %1255 = vmatpush.bf16.msra.mxu0 %v1171
    %1256 = vmatmul.bf16.gmra.mxu0 %v788
    %v1257 = vpop.f32.mrf.mxu0
    %v1258 = vadd.f32 %v1042, %v1257
    %v1259 = vpop.f32.mrf.mxu0
    %v1260 = vadd.f32 %v1044, %v1259
    %1261 = vdwg.mxu0
    %1262 = vmatpush.bf16.msra.mxu0 %v1200
    %1263 = vmatpush.bf16.msra.mxu0 %v1196
    %1264 = vmatpush.bf16.msra.mxu0 %v1192
    %1265 = vmatpush.bf16.msra.mxu0 %v1188
    %1266 = vmatpush.bf16.msra.mxu0 %v1184
    %1267 = vmatpush.bf16.msra.mxu0 %v1180
    %1268 = vmatpush.bf16.msra.mxu0 %v1176
    %1269 = vmatpush.bf16.msra.mxu0 %v1172
    %1270 = vmatmul.bf16.gmra.mxu0 %v788
    %v1271 = vpop.f32.mrf.mxu0
    %v1272 = vadd.f32 %v1056, %v1271
    %v1273 = vpop.f32.mrf.mxu0
    %v1274 = vadd.f32 %v1058, %v1273
    %1275 = vdwg.mxu0
    %1276 = vmatpush.bf16.msra.mxu0 %v1201
    %1277 = vmatpush.bf16.msra.mxu0 %v1197
    %1278 = vmatpush.bf16.msra.mxu0 %v1193
    %1279 = vmatpush.bf16.msra.mxu0 %v1189
    %1280 = vmatpush.bf16.msra.mxu0 %v1185
    %1281 = vmatpush.bf16.msra.mxu0 %v1181
    %1282 = vmatpush.bf16.msra.mxu0 %v1177
    %1283 = vmatpush.bf16.msra.mxu0 %v1173
    %1284 = vmatmul.bf16.gmra.mxu0 %v788
    %v1285 = vpop.f32.mrf.mxu0
    %v1286 = vadd.f32 %v1070, %v1285
    %v1287 = vpop.f32.mrf.mxu0
    %v1288 = vadd.f32 %v1072, %v1287
    %1289 = vdwg.mxu0
    %v1290 = vld [vmem:[%s6] sm:$0xf]
    %v1292 = vperm.slane %v1290, 0
    %v1293 = vperm.slane %v1290, 1
    %v1294 = vperm.slane %v1290, 2
    %v1295 = vperm.slane %v1290, 3
    %v1300 = vadd.f32 %v1244, %v1292
    %v1301 = vadd.f32 %v1258, %v1293
    %v1302 = vadd.f32 %v1272, %v1294
    %v1303 = vadd.f32 %v1286, %v1295
    %v1304 = vadd.f32 %v1246, %v1292
    %v1305 = vadd.f32 %v1260, %v1293
    %v1306 = vadd.f32 %v1274, %v1294
    %v1307 = vadd.f32 %v1288, %v1295
    %v1308 = vxor.u32 %v1300, 2147483648
    %v1309 = vxor.u32 %v1304, 2147483648
    %v1310 = vmul.f32 %v1308, 1.442695
    %v1311 = vpow.pop %v1310
    %v1312 = vmul.f32 %v1309, 1.442695
    %v1313 = vpow.pop %v1312
    %v1314 = vadd.f32 %v1311, 1.0
    %v1315 = vadd.f32 %v1313, 1.0
    %v1316 = vrcp.pop %v1314
    %v1317 = vmul.f32 %v1314, %v1316
    %v1318 = vsub.f32 1.0, %v1317
    %v1319 = vmul.f32 %v1316, %v1318
    %v1320 = vadd.f32 %v1316, %v1319
    %vm1321 = vweird.f32 %v1314
    %vm1322 = vweird.f32 %v1316
    %vm1323 = vmor %vm1321, %vm1322
    %v1324 = vsel %vm1323, %v1316, %v1320
    %v1325 = vand.u32 2147483647, %v1314
    %vm1326 = vcmp.eq.f32.partialorder %v1325, 8.507059e+37
    %v1327 = vand.u32 %v1314, 2147483648
    %v1328 = vor.u32 1.1754944e-38, %v1327
    %v1329 = vsel %vm1326, %v1328, %v1324
    %v1330 = vmul.f32 1.0, %v1329
    %v1331 = vrcp.pop %v1315
    %v1332 = vmul.f32 %v1315, %v1331
    %v1333 = vsub.f32 1.0, %v1332
    %v1334 = vmul.f32 %v1331, %v1333
    %v1335 = vadd.f32 %v1331, %v1334
    %vm1336 = vweird.f32 %v1315
    %vm1337 = vweird.f32 %v1331
    %vm1338 = vmor %vm1336, %vm1337
    %v1339 = vsel %vm1338, %v1331, %v1335
    %v1340 = vand.u32 2147483647, %v1315
    %vm1341 = vcmp.eq.f32.partialorder %v1340, 8.507059e+37
    %v1342 = vand.u32 %v1315, 2147483648
    %v1343 = vor.u32 1.1754944e-38, %v1342
    %v1344 = vsel %vm1341, %v1343, %v1339
    %v1345 = vmul.f32 1.0, %v1344
    %v1346 = vxor.u32 %v1301, 2147483648
    %v1347 = vxor.u32 %v1305, 2147483648
    %v1348 = vmul.f32 %v1346, 1.442695
    %v1349 = vpow.pop %v1348
    %v1350 = vmul.f32 %v1347, 1.442695
    %v1351 = vpow.pop %v1350
    %v1352 = vadd.f32 %v1349, 1.0
    %v1353 = vadd.f32 %v1351, 1.0
    %v1354 = vrcp.pop %v1352
    %v1355 = vmul.f32 %v1352, %v1354
    %v1356 = vsub.f32 1.0, %v1355
    %v1357 = vmul.f32 %v1354, %v1356
    %v1358 = vadd.f32 %v1354, %v1357
    %vm1359 = vweird.f32 %v1352
    %vm1360 = vweird.f32 %v1354
    %vm1361 = vmor %vm1359, %vm1360
    %v1362 = vsel %vm1361, %v1354, %v1358
    %v1363 = vand.u32 2147483647, %v1352
    %vm1364 = vcmp.eq.f32.partialorder %v1363, 8.507059e+37
    %v1365 = vand.u32 %v1352, 2147483648
    %v1366 = vor.u32 1.1754944e-38, %v1365
    %v1367 = vsel %vm1364, %v1366, %v1362
    %v1368 = vmul.f32 1.0, %v1367
    %v1369 = vrcp.pop %v1353
    %v1370 = vmul.f32 %v1353, %v1369
    %v1371 = vsub.f32 1.0, %v1370
    %v1372 = vmul.f32 %v1369, %v1371
    %v1373 = vadd.f32 %v1369, %v1372
    %vm1374 = vweird.f32 %v1353
    %vm1375 = vweird.f32 %v1369
    %vm1376 = vmor %vm1374, %vm1375
    %v1377 = vsel %vm1376, %v1369, %v1373
    %v1378 = vand.u32 2147483647, %v1353
    %vm1379 = vcmp.eq.f32.partialorder %v1378, 8.507059e+37
    %v1380 = vand.u32 %v1353, 2147483648
    %v1381 = vor.u32 1.1754944e-38, %v1380
    %v1382 = vsel %vm1379, %v1381, %v1377
    %v1383 = vmul.f32 1.0, %v1382
    %v1384 = vtanh.pop %v1302
    %v1385 = vtanh.pop %v1306
    %v1386 = vxor.u32 %v1303, 2147483648
    %v1387 = vxor.u32 %v1307, 2147483648
    %v1388 = vmul.f32 %v1386, 1.442695
    %v1389 = vpow.pop %v1388
    %v1390 = vmul.f32 %v1387, 1.442695
    %v1391 = vpow.pop %v1390
    %v1392 = vadd.f32 %v1389, 1.0
    %v1393 = vadd.f32 %v1391, 1.0
    %v1394 = vrcp.pop %v1392
    %v1395 = vmul.f32 %v1392, %v1394
    %v1396 = vsub.f32 1.0, %v1395
    %v1397 = vmul.f32 %v1394, %v1396
    %v1398 = vadd.f32 %v1394, %v1397
    %vm1399 = vweird.f32 %v1392
    %vm1400 = vweird.f32 %v1394
    %vm1401 = vmor %vm1399, %vm1400
    %v1402 = vsel %vm1401, %v1394, %v1398
    %v1403 = vand.u32 2147483647, %v1392
    %vm1404 = vcmp.eq.f32.partialorder %v1403, 8.507059e+37
    %v1405 = vand.u32 %v1392, 2147483648
    %v1406 = vor.u32 1.1754944e-38, %v1405
    %v1407 = vsel %vm1404, %v1406, %v1402
    %v1408 = vmul.f32 1.0, %v1407
    %v1409 = vrcp.pop %v1393
    %v1410 = vmul.f32 %v1393, %v1409
    %v1411 = vsub.f32 1.0, %v1410
    %v1412 = vmul.f32 %v1409, %v1411
    %v1413 = vadd.f32 %v1409, %v1412
    %vm1414 = vweird.f32 %v1393
    %vm1415 = vweird.f32 %v1409
    %vm1416 = vmor %vm1414, %vm1415
    %v1417 = vsel %vm1416, %v1409, %v1413
    %v1418 = vand.u32 2147483647, %v1393
    %vm1419 = vcmp.eq.f32.partialorder %v1418, 8.507059e+37
    %v1420 = vand.u32 %v1393, 2147483648
    %v1421 = vor.u32 1.1754944e-38, %v1420
    %v1422 = vsel %vm1419, %v1421, %v1417
    %v1423 = vmul.f32 1.0, %v1422
    %v1424 = vmul.f32 %v1368, %v791
    %v1425 = vmul.f32 %v1383, %v792
    %v1426 = vmul.f32 %v1330, %v1384
    %v1427 = vmul.f32 %v1345, %v1385
    %v1428 = vadd.f32 %v1424, %v1426
    %v1429 = vadd.f32 %v1425, %v1427
    %v1430 = vtanh.pop %v1428
    %v1431 = vtanh.pop %v1429
    %v1432 = vmul.f32 %v1408, %v1430
    %v1433 = vmul.f32 %v1423, %v1431
    %1434 = vst [vmem:[#allocation4] sm:$0xff] %v1432
    %1435 = vst [vmem:[#allocation4 + $0x8] sm:$0xff] %v1433
    %1436 = vst [vmem:[#allocation5] sm:$0xff] %v1428
    %1437 = vst [vmem:[#allocation5 + $0x8] sm:$0xff] %v1429
    %v1438 = vpack.c.bf16 %v1432, %v1432
    %v1439 = vpack.c.bf16 %v1433, %v1433
    %1440 = vst [vmem:[#allocation17] sm:$0xf] %v1438
    %1441 = vst [vmem:[#allocation17 + $0x4] sm:$0xf] %v1439
    %s1442 = scalar_lea.vmem [#allocation6], 8
    %v1443 = vld [vmem:[%s1442] sm:$0xf]
    %v1444 = vld [vmem:[%s1442 + $0x4] sm:$0xf]
    %v1445 = vld [vmem:[#allocation2] sm:$0xff]
    %v1446 = vld [vmem:[#allocation2 + $0x8] sm:$0xff]
    %v1447 = vld [vmem:[#allocation3] sm:$0xff]
    %v1448 = vld [vmem:[#allocation3 + $0x8] sm:$0xff]
    %v1449 = vld [vmem:[#allocation9] sm:$0xff]
    %v1450 = vld [vmem:[#allocation9 + $0x8] sm:$0xff]
    %v1451 = vld [vmem:[#allocation9 + $0x10] sm:$0xff]
    %v1452 = vld [vmem:[#allocation9 + $0x18] sm:$0xff]
    %v1453 = vld [vmem:[#allocation9 + $0x20] sm:$0xff]
    %v1454 = vld [vmem:[#allocation9 + $0x28] sm:$0xff]
    %v1455 = vld [vmem:[#allocation9 + $0x30] sm:$0xff]
    %v1456 = vld [vmem:[#allocation9 + $0x38] sm:$0xff]
    %v1457 = vld [vmem:[#allocation9 + $0x40] sm:$0xff]
    %v1458 = vld [vmem:[#allocation9 + $0x48] sm:$0xff]
    %v1459 = vld [vmem:[#allocation9 + $0x50] sm:$0xff]
    %v1460 = vld [vmem:[#allocation9 + $0x58] sm:$0xff]
    %v1461 = vld [vmem:[#allocation9 + $0x60] sm:$0xff]
    %v1462 = vld [vmem:[#allocation9 + $0x68] sm:$0xff]
    %v1463 = vld [vmem:[#allocation9 + $0x70] sm:$0xff]
    %v1464 = vld [vmem:[#allocation9 + $0x78] sm:$0xff]
    %v1465 = vld [vmem:[#allocation9 + $0x80] sm:$0xff]
    %v1466 = vld [vmem:[#allocation9 + $0x88] sm:$0xff]
    %v1467 = vld [vmem:[#allocation9 + $0x90] sm:$0xff]
    %v1468 = vld [vmem:[#allocation9 + $0x98] sm:$0xff]
    %v1469 = vld [vmem:[#allocation9 + $0xa0] sm:$0xff]
    %v1470 = vld [vmem:[#allocation9 + $0xa8] sm:$0xff]
    %v1471 = vld [vmem:[#allocation9 + $0xb0] sm:$0xff]
    %v1472 = vld [vmem:[#allocation9 + $0xb8] sm:$0xff]
    %v1473 = vld [vmem:[#allocation9 + $0xc0] sm:$0xff]
    %v1474 = vld [vmem:[#allocation9 + $0xc8] sm:$0xff]
    %v1475 = vld [vmem:[#allocation9 + $0xd0] sm:$0xff]
    %v1476 = vld [vmem:[#allocation9 + $0xd8] sm:$0xff]
    %v1477 = vld [vmem:[#allocation9 + $0xe0] sm:$0xff]
    %v1478 = vld [vmem:[#allocation9 + $0xe8] sm:$0xff]
    %v1479 = vld [vmem:[#allocation9 + $0xf0] sm:$0xff]
    %v1480 = vld [vmem:[#allocation9 + $0xf8] sm:$0xff]
    %v1481 = vpack.c.bf16 %v1446, %v1445
    %v1482 = vld [vmem:[#allocation11] sm:$0xff]
    %v1483 = vld [vmem:[#allocation11 + $0x8] sm:$0xff]
    %v1484 = vld [vmem:[#allocation11 + $0x10] sm:$0xff]
    %v1485 = vld [vmem:[#allocation11 + $0x18] sm:$0xff]
    %v1486 = vld [vmem:[#allocation11 + $0x20] sm:$0xff]
    %v1487 = vld [vmem:[#allocation11 + $0x28] sm:$0xff]
    %v1488 = vld [vmem:[#allocation11 + $0x30] sm:$0xff]
    %v1489 = vld [vmem:[#allocation11 + $0x38] sm:$0xff]
    %v1490 = vld [vmem:[#allocation11 + $0x40] sm:$0xff]
    %v1491 = vld [vmem:[#allocation11 + $0x48] sm:$0xff]
    %v1492 = vld [vmem:[#allocation11 + $0x50] sm:$0xff]
    %v1493 = vld [vmem:[#allocation11 + $0x58] sm:$0xff]
    %v1494 = vld [vmem:[#allocation11 + $0x60] sm:$0xff]
    %v1495 = vld [vmem:[#allocation11 + $0x68] sm:$0xff]
    %v1496 = vld [vmem:[#allocation11 + $0x70] sm:$0xff]
    %v1497 = vld [vmem:[#allocation11 + $0x78] sm:$0xff]
    %v1498 = vld [vmem:[#allocation11 + $0x80] sm:$0xff]
    %v1499 = vld [vmem:[#allocation11 + $0x88] sm:$0xff]
    %v1500 = vld [vmem:[#allocation11 + $0x90] sm:$0xff]
    %v1501 = vld [vmem:[#allocation11 + $0x98] sm:$0xff]
    %v1502 = vld [vmem:[#allocation11 + $0xa0] sm:$0xff]
    %v1503 = vld [vmem:[#allocation11 + $0xa8] sm:$0xff]
    %v1504 = vld [vmem:[#allocation11 + $0xb0] sm:$0xff]
    %v1505 = vld [vmem:[#allocation11 + $0xb8] sm:$0xff]
    %v1506 = vld [vmem:[#allocation11 + $0xc0] sm:$0xff]
    %v1507 = vld [vmem:[#allocation11 + $0xc8] sm:$0xff]
    %v1508 = vld [vmem:[#allocation11 + $0xd0] sm:$0xff]
    %v1509 = vld [vmem:[#allocation11 + $0xd8] sm:$0xff]
    %v1510 = vld [vmem:[#allocation11 + $0xe0] sm:$0xff]
    %v1511 = vld [vmem:[#allocation11 + $0xe8] sm:$0xff]
    %v1512 = vld [vmem:[#allocation11 + $0xf0] sm:$0xff]
    %v1513 = vld [vmem:[#allocation11 + $0xf8] sm:$0xff]
    %v1546 = vunpack.c.l.b16 %v1482
    %v1547 = vunpack.c.h.b16 %v1482
    %v1548 = vunpack.c.l.b16 %v1483
    %v1549 = vunpack.c.h.b16 %v1483
    %v1550 = vunpack.c.l.b16 %v1484
    %v1551 = vunpack.c.h.b16 %v1484
    %v1552 = vunpack.c.l.b16 %v1485
    %v1553 = vunpack.c.h.b16 %v1485
    %v1554 = vunpack.c.l.b16 %v1486
    %v1555 = vunpack.c.h.b16 %v1486
    %v1556 = vunpack.c.l.b16 %v1487
    %v1557 = vunpack.c.h.b16 %v1487
    %v1558 = vunpack.c.l.b16 %v1488
    %v1559 = vunpack.c.h.b16 %v1488
    %v1560 = vunpack.c.l.b16 %v1489
    %v1561 = vunpack.c.h.b16 %v1489
    %v1562 = vunpack.c.l.b16 %v1490
    %v1563 = vunpack.c.h.b16 %v1490
    %v1564 = vunpack.c.l.b16 %v1491
    %v1565 = vunpack.c.h.b16 %v1491
    %v1566 = vunpack.c.l.b16 %v1492
    %v1567 = vunpack.c.h.b16 %v1492
    %v1568 = vunpack.c.l.b16 %v1493
    %v1569 = vunpack.c.h.b16 %v1493
    %v1570 = vunpack.c.l.b16 %v1494
    %v1571 = vunpack.c.h.b16 %v1494
    %v1572 = vunpack.c.l.b16 %v1495
    %v1573 = vunpack.c.h.b16 %v1495
    %v1574 = vunpack.c.l.b16 %v1496
    %v1575 = vunpack.c.h.b16 %v1496
    %v1576 = vunpack.c.l.b16 %v1497
    %v1577 = vunpack.c.h.b16 %v1497
    %v1578 = vunpack.c.l.b16 %v1498
    %v1579 = vunpack.c.h.b16 %v1498
    %v1580 = vunpack.c.l.b16 %v1499
    %v1581 = vunpack.c.h.b16 %v1499
    %v1582 = vunpack.c.l.b16 %v1500
    %v1583 = vunpack.c.h.b16 %v1500
    %v1584 = vunpack.c.l.b16 %v1501
    %v1585 = vunpack.c.h.b16 %v1501
    %v1586 = vunpack.c.l.b16 %v1502
    %v1587 = vunpack.c.h.b16 %v1502
    %v1588 = vunpack.c.l.b16 %v1503
    %v1589 = vunpack.c.h.b16 %v1503
    %v1590 = vunpack.c.l.b16 %v1504
    %v1591 = vunpack.c.h.b16 %v1504
    %v1592 = vunpack.c.l.b16 %v1505
    %v1593 = vunpack.c.h.b16 %v1505
    %v1594 = vunpack.c.l.b16 %v1506
    %v1595 = vunpack.c.h.b16 %v1506
    %v1596 = vunpack.c.l.b16 %v1507
    %v1597 = vunpack.c.h.b16 %v1507
    %v1598 = vunpack.c.l.b16 %v1508
    %v1599 = vunpack.c.h.b16 %v1508
    %v1600 = vunpack.c.l.b16 %v1509
    %v1601 = vunpack.c.h.b16 %v1509
    %v1602 = vunpack.c.l.b16 %v1510
    %v1603 = vunpack.c.h.b16 %v1510
    %v1604 = vunpack.c.l.b16 %v1511
    %v1605 = vunpack.c.h.b16 %v1511
    %v1606 = vunpack.c.l.b16 %v1512
    %v1607 = vunpack.c.h.b16 %v1512
    %v1608 = vunpack.c.l.b16 %v1513
    %v1609 = vunpack.c.h.b16 %v1513
    %v1610 = vpack.c.b16 %v1550, %v1546
    %v1611 = vpack.c.b16 %v1551, %v1547
    %v1612 = vpack.c.b16 %v1552, %v1548
    %v1613 = vpack.c.b16 %v1553, %v1549
    %v1614 = vpack.c.b16 %v1558, %v1554
    %v1615 = vpack.c.b16 %v1559, %v1555
    %v1616 = vpack.c.b16 %v1560, %v1556
    %v1617 = vpack.c.b16 %v1561, %v1557
    %v1618 = vpack.c.b16 %v1566, %v1562
    %v1619 = vpack.c.b16 %v1567, %v1563
    %v1620 = vpack.c.b16 %v1568, %v1564
    %v1621 = vpack.c.b16 %v1569, %v1565
    %v1622 = vpack.c.b16 %v1574, %v1570
    %v1623 = vpack.c.b16 %v1575, %v1571
    %v1624 = vpack.c.b16 %v1576, %v1572
    %v1625 = vpack.c.b16 %v1577, %v1573
    %v1626 = vpack.c.b16 %v1582, %v1578
    %v1627 = vpack.c.b16 %v1583, %v1579
    %v1628 = vpack.c.b16 %v1584, %v1580
    %v1629 = vpack.c.b16 %v1585, %v1581
    %v1630 = vpack.c.b16 %v1590, %v1586
    %v1631 = vpack.c.b16 %v1591, %v1587
    %v1632 = vpack.c.b16 %v1592, %v1588
    %v1633 = vpack.c.b16 %v1593, %v1589
    %v1634 = vpack.c.b16 %v1598, %v1594
    %v1635 = vpack.c.b16 %v1599, %v1595
    %v1636 = vpack.c.b16 %v1600, %v1596
    %v1637 = vpack.c.b16 %v1601, %v1597
    %v1638 = vpack.c.b16 %v1606, %v1602
    %v1639 = vpack.c.b16 %v1607, %v1603
    %v1640 = vpack.c.b16 %v1608, %v1604
    %v1641 = vpack.c.b16 %v1609, %v1605
    %1674 = vmatpush.bf16.msra.mxu0 %v1638
    %1675 = vmatpush.bf16.msra.mxu0 %v1634
    %1676 = vmatpush.bf16.msra.mxu0 %v1630
    %1677 = vmatpush.bf16.msra.mxu0 %v1626
    %1678 = vmatpush.bf16.msra.mxu0 %v1622
    %1679 = vmatpush.bf16.msra.mxu0 %v1618
    %1680 = vmatpush.bf16.msra.mxu0 %v1614
    %1681 = vmatpush.bf16.msra.mxu0 %v1610
    %1682 = vmatmul.bf16.gmra.mxu0 %v1481
    %v1683 = vpop.f32.mrf.mxu0
    %v1684 = vadd.f32 0.0, %v1683
    %v1685 = vpop.f32.mrf.mxu0
    %v1686 = vadd.f32 0.0, %v1685
    %1687 = vdwg.mxu0
    %1688 = vmatpush.bf16.msra.mxu0 %v1639
    %1689 = vmatpush.bf16.msra.mxu0 %v1635
    %1690 = vmatpush.bf16.msra.mxu0 %v1631
    %1691 = vmatpush.bf16.msra.mxu0 %v1627
    %1692 = vmatpush.bf16.msra.mxu0 %v1623
    %1693 = vmatpush.bf16.msra.mxu0 %v1619
    %1694 = vmatpush.bf16.msra.mxu0 %v1615
    %1695 = vmatpush.bf16.msra.mxu0 %v1611
    %1696 = vmatmul.bf16.gmra.mxu0 %v1481
    %v1697 = vpop.f32.mrf.mxu0
    %v1698 = vadd.f32 0.0, %v1697
    %v1699 = vpop.f32.mrf.mxu0
    %v1700 = vadd.f32 0.0, %v1699
    %1701 = vdwg.mxu0
    %1702 = vmatpush.bf16.msra.mxu0 %v1640
    %1703 = vmatpush.bf16.msra.mxu0 %v1636
    %1704 = vmatpush.bf16.msra.mxu0 %v1632
    %1705 = vmatpush.bf16.msra.mxu0 %v1628
    %1706 = vmatpush.bf16.msra.mxu0 %v1624
    %1707 = vmatpush.bf16.msra.mxu0 %v1620
    %1708 = vmatpush.bf16.msra.mxu0 %v1616
    %1709 = vmatpush.bf16.msra.mxu0 %v1612
    %1710 = vmatmul.bf16.gmra.mxu0 %v1481
    %v1711 = vpop.f32.mrf.mxu0
    %v1712 = vadd.f32 0.0, %v1711
    %v1713 = vpop.f32.mrf.mxu0
    %v1714 = vadd.f32 0.0, %v1713
    %1715 = vdwg.mxu0
    %1716 = vmatpush.bf16.msra.mxu0 %v1641
    %1717 = vmatpush.bf16.msra.mxu0 %v1637
    %1718 = vmatpush.bf16.msra.mxu0 %v1633
    %1719 = vmatpush.bf16.msra.mxu0 %v1629
    %1720 = vmatpush.bf16.msra.mxu0 %v1625
    %1721 = vmatpush.bf16.msra.mxu0 %v1621
    %1722 = vmatpush.bf16.msra.mxu0 %v1617
    %1723 = vmatpush.bf16.msra.mxu0 %v1613
    %1724 = vmatmul.bf16.gmra.mxu0 %v1481
    %v1725 = vpop.f32.mrf.mxu0
    %v1726 = vadd.f32 0.0, %v1725
    %v1727 = vpop.f32.mrf.mxu0
    %v1728 = vadd.f32 0.0, %v1727
    %1729 = vdwg.mxu0
    %v1732 = vunpack.c.l.b16 %v1443
    %v1733 = vunpack.c.l.b16 %v1444
    %v1734 = vpack.c.b16 %v1733, %v1732
    %v1768 = vunpack.c.l.b16 %v1449
    %v1769 = vunpack.c.h.b16 %v1449
    %v1770 = vunpack.c.l.b16 %v1450
    %v1771 = vunpack.c.h.b16 %v1450
    %v1772 = vunpack.c.l.b16 %v1451
    %v1773 = vunpack.c.h.b16 %v1451
    %v1774 = vunpack.c.l.b16 %v1452
    %v1775 = vunpack.c.h.b16 %v1452
    %v1776 = vunpack.c.l.b16 %v1453
    %v1777 = vunpack.c.h.b16 %v1453
    %v1778 = vunpack.c.l.b16 %v1454
    %v1779 = vunpack.c.h.b16 %v1454
    %v1780 = vunpack.c.l.b16 %v1455
    %v1781 = vunpack.c.h.b16 %v1455
    %v1782 = vunpack.c.l.b16 %v1456
    %v1783 = vunpack.c.h.b16 %v1456
    %v1784 = vunpack.c.l.b16 %v1457
    %v1785 = vunpack.c.h.b16 %v1457
    %v1786 = vunpack.c.l.b16 %v1458
    %v1787 = vunpack.c.h.b16 %v1458
    %v1788 = vunpack.c.l.b16 %v1459
    %v1789 = vunpack.c.h.b16 %v1459
    %v1790 = vunpack.c.l.b16 %v1460
    %v1791 = vunpack.c.h.b16 %v1460
    %v1792 = vunpack.c.l.b16 %v1461
    %v1793 = vunpack.c.h.b16 %v1461
    %v1794 = vunpack.c.l.b16 %v1462
    %v1795 = vunpack.c.h.b16 %v1462
    %v1796 = vunpack.c.l.b16 %v1463
    %v1797 = vunpack.c.h.b16 %v1463
    %v1798 = vunpack.c.l.b16 %v1464
    %v1799 = vunpack.c.h.b16 %v1464
    %v1800 = vunpack.c.l.b16 %v1465
    %v1801 = vunpack.c.h.b16 %v1465
    %v1802 = vunpack.c.l.b16 %v1466
    %v1803 = vunpack.c.h.b16 %v1466
    %v1804 = vunpack.c.l.b16 %v1467
    %v1805 = vunpack.c.h.b16 %v1467
    %v1806 = vunpack.c.l.b16 %v1468
    %v1807 = vunpack.c.h.b16 %v1468
    %v1808 = vunpack.c.l.b16 %v1469
    %v1809 = vunpack.c.h.b16 %v1469
    %v1810 = vunpack.c.l.b16 %v1470
    %v1811 = vunpack.c.h.b16 %v1470
    %v1812 = vunpack.c.l.b16 %v1471
    %v1813 = vunpack.c.h.b16 %v1471
    %v1814 = vunpack.c.l.b16 %v1472
    %v1815 = vunpack.c.h.b16 %v1472
    %v1816 = vunpack.c.l.b16 %v1473
    %v1817 = vunpack.c.h.b16 %v1473
    %v1818 = vunpack.c.l.b16 %v1474
    %v1819 = vunpack.c.h.b16 %v1474
    %v1820 = vunpack.c.l.b16 %v1475
    %v1821 = vunpack.c.h.b16 %v1475
    %v1822 = vunpack.c.l.b16 %v1476
    %v1823 = vunpack.c.h.b16 %v1476
    %v1824 = vunpack.c.l.b16 %v1477
    %v1825 = vunpack.c.h.b16 %v1477
    %v1826 = vunpack.c.l.b16 %v1478
    %v1827 = vunpack.c.h.b16 %v1478
    %v1828 = vunpack.c.l.b16 %v1479
    %v1829 = vunpack.c.h.b16 %v1479
    %v1830 = vunpack.c.l.b16 %v1480
    %v1831 = vunpack.c.h.b16 %v1480
    %v1832 = vpack.c.b16 %v1772, %v1768
    %v1833 = vpack.c.b16 %v1773, %v1769
    %v1834 = vpack.c.b16 %v1774, %v1770
    %v1835 = vpack.c.b16 %v1775, %v1771
    %v1836 = vpack.c.b16 %v1780, %v1776
    %v1837 = vpack.c.b16 %v1781, %v1777
    %v1838 = vpack.c.b16 %v1782, %v1778
    %v1839 = vpack.c.b16 %v1783, %v1779
    %v1840 = vpack.c.b16 %v1788, %v1784
    %v1841 = vpack.c.b16 %v1789, %v1785
    %v1842 = vpack.c.b16 %v1790, %v1786
    %v1843 = vpack.c.b16 %v1791, %v1787
    %v1844 = vpack.c.b16 %v1796, %v1792
    %v1845 = vpack.c.b16 %v1797, %v1793
    %v1846 = vpack.c.b16 %v1798, %v1794
    %v1847 = vpack.c.b16 %v1799, %v1795
    %v1848 = vpack.c.b16 %v1804, %v1800
    %v1849 = vpack.c.b16 %v1805, %v1801
    %v1850 = vpack.c.b16 %v1806, %v1802
    %v1851 = vpack.c.b16 %v1807, %v1803
    %v1852 = vpack.c.b16 %v1812, %v1808
    %v1853 = vpack.c.b16 %v1813, %v1809
    %v1854 = vpack.c.b16 %v1814, %v1810
    %v1855 = vpack.c.b16 %v1815, %v1811
    %v1856 = vpack.c.b16 %v1820, %v1816
    %v1857 = vpack.c.b16 %v1821, %v1817
    %v1858 = vpack.c.b16 %v1822, %v1818
    %v1859 = vpack.c.b16 %v1823, %v1819
    %v1860 = vpack.c.b16 %v1828, %v1824
    %v1861 = vpack.c.b16 %v1829, %v1825
    %v1862 = vpack.c.b16 %v1830, %v1826
    %v1863 = vpack.c.b16 %v1831, %v1827
    %1896 = vmatpush.bf16.msra.mxu0 %v1860
    %1897 = vmatpush.bf16.msra.mxu0 %v1856
    %1898 = vmatpush.bf16.msra.mxu0 %v1852
    %1899 = vmatpush.bf16.msra.mxu0 %v1848
    %1900 = vmatpush.bf16.msra.mxu0 %v1844
    %1901 = vmatpush.bf16.msra.mxu0 %v1840
    %1902 = vmatpush.bf16.msra.mxu0 %v1836
    %1903 = vmatpush.bf16.msra.mxu0 %v1832
    %1904 = vmatmul.bf16.gmra.mxu0 %v1734
    %v1905 = vpop.f32.mrf.mxu0
    %v1906 = vadd.f32 %v1684, %v1905
    %v1907 = vpop.f32.mrf.mxu0
    %v1908 = vadd.f32 %v1686, %v1907
    %1909 = vdwg.mxu0
    %1910 = vmatpush.bf16.msra.mxu0 %v1861
    %1911 = vmatpush.bf16.msra.mxu0 %v1857
    %1912 = vmatpush.bf16.msra.mxu0 %v1853
    %1913 = vmatpush.bf16.msra.mxu0 %v1849
    %1914 = vmatpush.bf16.msra.mxu0 %v1845
    %1915 = vmatpush.bf16.msra.mxu0 %v1841
    %1916 = vmatpush.bf16.msra.mxu0 %v1837
    %1917 = vmatpush.bf16.msra.mxu0 %v1833
    %1918 = vmatmul.bf16.gmra.mxu0 %v1734
    %v1919 = vpop.f32.mrf.mxu0
    %v1920 = vadd.f32 %v1698, %v1919
    %v1921 = vpop.f32.mrf.mxu0
    %v1922 = vadd.f32 %v1700, %v1921
    %1923 = vdwg.mxu0
    %1924 = vmatpush.bf16.msra.mxu0 %v1862
    %1925 = vmatpush.bf16.msra.mxu0 %v1858
    %1926 = vmatpush.bf16.msra.mxu0 %v1854
    %1927 = vmatpush.bf16.msra.mxu0 %v1850
    %1928 = vmatpush.bf16.msra.mxu0 %v1846
    %1929 = vmatpush.bf16.msra.mxu0 %v1842
    %1930 = vmatpush.bf16.msra.mxu0 %v1838
    %1931 = vmatpush.bf16.msra.mxu0 %v1834
    %1932 = vmatmul.bf16.gmra.mxu0 %v1734
    %v1933 = vpop.f32.mrf.mxu0
    %v1934 = vadd.f32 %v1712, %v1933
    %v1935 = vpop.f32.mrf.mxu0
    %v1936 = vadd.f32 %v1714, %v1935
    %1937 = vdwg.mxu0
    %1938 = vmatpush.bf16.msra.mxu0 %v1863
    %1939 = vmatpush.bf16.msra.mxu0 %v1859
    %1940 = vmatpush.bf16.msra.mxu0 %v1855
    %1941 = vmatpush.bf16.msra.mxu0 %v1851
    %1942 = vmatpush.bf16.msra.mxu0 %v1847
    %1943 = vmatpush.bf16.msra.mxu0 %v1843
    %1944 = vmatpush.bf16.msra.mxu0 %v1839
    %1945 = vmatpush.bf16.msra.mxu0 %v1835
    %1946 = vmatmul.bf16.gmra.mxu0 %v1734
    %v1947 = vpop.f32.mrf.mxu0
    %v1948 = vadd.f32 %v1726, %v1947
    %v1949 = vpop.f32.mrf.mxu0
    %v1950 = vadd.f32 %v1728, %v1949
    %1951 = vdwg.mxu0
    %v1952 = vld [vmem:[#allocation12] sm:$0xf]
    %v1954 = vperm.slane %v1952, 0
    %v1955 = vperm.slane %v1952, 1
    %v1956 = vperm.slane %v1952, 2
    %v1957 = vperm.slane %v1952, 3
    %v1962 = vadd.f32 %v1906, %v1954
    %v1963 = vadd.f32 %v1920, %v1955
    %v1964 = vadd.f32 %v1934, %v1956
    %v1965 = vadd.f32 %v1948, %v1957
    %v1966 = vadd.f32 %v1908, %v1954
    %v1967 = vadd.f32 %v1922, %v1955
    %v1968 = vadd.f32 %v1936, %v1956
    %v1969 = vadd.f32 %v1950, %v1957
    %v1970 = vxor.u32 %v1962, 2147483648
    %v1971 = vxor.u32 %v1966, 2147483648
    %v1972 = vmul.f32 %v1970, 1.442695
    %v1973 = vpow.pop %v1972
    %v1974 = vmul.f32 %v1971, 1.442695
    %v1975 = vpow.pop %v1974
    %v1976 = vadd.f32 %v1973, 1.0
    %v1977 = vadd.f32 %v1975, 1.0
    %v1978 = vrcp.pop %v1976
    %v1979 = vmul.f32 %v1976, %v1978
    %v1980 = vsub.f32 1.0, %v1979
    %v1981 = vmul.f32 %v1978, %v1980
    %v1982 = vadd.f32 %v1978, %v1981
    %vm1983 = vweird.f32 %v1976
    %vm1984 = vweird.f32 %v1978
    %vm1985 = vmor %vm1983, %vm1984
    %v1986 = vsel %vm1985, %v1978, %v1982
    %v1987 = vand.u32 2147483647, %v1976
    %vm1988 = vcmp.eq.f32.partialorder %v1987, 8.507059e+37
    %v1989 = vand.u32 %v1976, 2147483648
    %v1990 = vor.u32 1.1754944e-38, %v1989
    %v1991 = vsel %vm1988, %v1990, %v1986
    %v1992 = vmul.f32 1.0, %v1991
    %v1993 = vrcp.pop %v1977
    %v1994 = vmul.f32 %v1977, %v1993
    %v1995 = vsub.f32 1.0, %v1994
    %v1996 = vmul.f32 %v1993, %v1995
    %v1997 = vadd.f32 %v1993, %v1996
    %vm1998 = vweird.f32 %v1977
    %vm1999 = vweird.f32 %v1993
    %vm2000 = vmor %vm1998, %vm1999
    %v2001 = vsel %vm2000, %v1993, %v1997
    %v2002 = vand.u32 2147483647, %v1977
    %vm2003 = vcmp.eq.f32.partialorder %v2002, 8.507059e+37
    %v2004 = vand.u32 %v1977, 2147483648
    %v2005 = vor.u32 1.1754944e-38, %v2004
    %v2006 = vsel %vm2003, %v2005, %v2001
    %v2007 = vmul.f32 1.0, %v2006
    %v2008 = vxor.u32 %v1963, 2147483648
    %v2009 = vxor.u32 %v1967, 2147483648
    %v2010 = vmul.f32 %v2008, 1.442695
    %v2011 = vpow.pop %v2010
    %v2012 = vmul.f32 %v2009, 1.442695
    %v2013 = vpow.pop %v2012
    %v2014 = vadd.f32 %v2011, 1.0
    %v2015 = vadd.f32 %v2013, 1.0
    %v2016 = vrcp.pop %v2014
    %v2017 = vmul.f32 %v2014, %v2016
    %v2018 = vsub.f32 1.0, %v2017
    %v2019 = vmul.f32 %v2016, %v2018
    %v2020 = vadd.f32 %v2016, %v2019
    %vm2021 = vweird.f32 %v2014
    %vm2022 = vweird.f32 %v2016
    %vm2023 = vmor %vm2021, %vm2022
    %v2024 = vsel %vm2023, %v2016, %v2020
    %v2025 = vand.u32 2147483647, %v2014
    %vm2026 = vcmp.eq.f32.partialorder %v2025, 8.507059e+37
    %v2027 = vand.u32 %v2014, 2147483648
    %v2028 = vor.u32 1.1754944e-38, %v2027
    %v2029 = vsel %vm2026, %v2028, %v2024
    %v2030 = vmul.f32 1.0, %v2029
    %v2031 = vrcp.pop %v2015
    %v2032 = vmul.f32 %v2015, %v2031
    %v2033 = vsub.f32 1.0, %v2032
    %v2034 = vmul.f32 %v2031, %v2033
    %v2035 = vadd.f32 %v2031, %v2034
    %vm2036 = vweird.f32 %v2015
    %vm2037 = vweird.f32 %v2031
    %vm2038 = vmor %vm2036, %vm2037
    %v2039 = vsel %vm2038, %v2031, %v2035
    %v2040 = vand.u32 2147483647, %v2015
    %vm2041 = vcmp.eq.f32.partialorder %v2040, 8.507059e+37
    %v2042 = vand.u32 %v2015, 2147483648
    %v2043 = vor.u32 1.1754944e-38, %v2042
    %v2044 = vsel %vm2041, %v2043, %v2039
    %v2045 = vmul.f32 1.0, %v2044
    %v2046 = vtanh.pop %v1964
    %v2047 = vtanh.pop %v1968
    %v2048 = vxor.u32 %v1965, 2147483648
    %v2049 = vxor.u32 %v1969, 2147483648
    %v2050 = vmul.f32 %v2048, 1.442695
    %v2051 = vpow.pop %v2050
    %v2052 = vmul.f32 %v2049, 1.442695
    %v2053 = vpow.pop %v2052
    %v2054 = vadd.f32 %v2051, 1.0
    %v2055 = vadd.f32 %v2053, 1.0
    %v2056 = vrcp.pop %v2054
    %v2057 = vmul.f32 %v2054, %v2056
    %v2058 = vsub.f32 1.0, %v2057
    %v2059 = vmul.f32 %v2056, %v2058
    %v2060 = vadd.f32 %v2056, %v2059
    %vm2061 = vweird.f32 %v2054
    %vm2062 = vweird.f32 %v2056
    %vm2063 = vmor %vm2061, %vm2062
    %v2064 = vsel %vm2063, %v2056, %v2060
    %v2065 = vand.u32 2147483647, %v2054
    %vm2066 = vcmp.eq.f32.partialorder %v2065, 8.507059e+37
    %v2067 = vand.u32 %v2054, 2147483648
    %v2068 = vor.u32 1.1754944e-38, %v2067
    %v2069 = vsel %vm2066, %v2068, %v2064
    %v2070 = vmul.f32 1.0, %v2069
    %v2071 = vrcp.pop %v2055
    %v2072 = vmul.f32 %v2055, %v2071
    %v2073 = vsub.f32 1.0, %v2072
    %v2074 = vmul.f32 %v2071, %v2073
    %v2075 = vadd.f32 %v2071, %v2074
    %vm2076 = vweird.f32 %v2055
    %vm2077 = vweird.f32 %v2071
    %vm2078 = vmor %vm2076, %vm2077
    %v2079 = vsel %vm2078, %v2071, %v2075
    %v2080 = vand.u32 2147483647, %v2055
    %vm2081 = vcmp.eq.f32.partialorder %v2080, 8.507059e+37
    %v2082 = vand.u32 %v2055, 2147483648
    %v2083 = vor.u32 1.1754944e-38, %v2082
    %v2084 = vsel %vm2081, %v2083, %v2079
    %v2085 = vmul.f32 1.0, %v2084
    %v2086 = vmul.f32 %v2030, %v1447
    %v2087 = vmul.f32 %v2045, %v1448
    %v2088 = vmul.f32 %v1992, %v2046
    %v2089 = vmul.f32 %v2007, %v2047
    %v2090 = vadd.f32 %v2086, %v2088
    %v2091 = vadd.f32 %v2087, %v2089
    %v2092 = vtanh.pop %v2090
    %v2093 = vtanh.pop %v2091
    %v2094 = vmul.f32 %v2070, %v2092
    %v2095 = vmul.f32 %v2085, %v2093
    %2096 = vst [vmem:[#allocation2] sm:$0xff] %v2094
    %2097 = vst [vmem:[#allocation2 + $0x8] sm:$0xff] %v2095
    %2098 = vst [vmem:[#allocation3] sm:$0xff] %v2090
    %2099 = vst [vmem:[#allocation3 + $0x8] sm:$0xff] %v2091
    %v2100 = vpack.c.bf16 %v2095, %v2094
    %v2101 = vld [vmem:[#allocation4] sm:$0xff]
    %v2102 = vld [vmem:[#allocation4 + $0x8] sm:$0xff]
    %v2103 = vld [vmem:[#allocation5] sm:$0xff]
    %v2104 = vld [vmem:[#allocation5 + $0x8] sm:$0xff]
    %v2105 = vld [vmem:[#allocation14] sm:$0xff]
    %v2106 = vld [vmem:[#allocation14 + $0x8] sm:$0xff]
    %v2107 = vld [vmem:[#allocation14 + $0x10] sm:$0xff]
    %v2108 = vld [vmem:[#allocation14 + $0x18] sm:$0xff]
    %v2109 = vld [vmem:[#allocation14 + $0x20] sm:$0xff]
    %v2110 = vld [vmem:[#allocation14 + $0x28] sm:$0xff]
    %v2111 = vld [vmem:[#allocation14 + $0x30] sm:$0xff]
    %v2112 = vld [vmem:[#allocation14 + $0x38] sm:$0xff]
    %v2113 = vld [vmem:[#allocation14 + $0x40] sm:$0xff]
    %v2114 = vld [vmem:[#allocation14 + $0x48] sm:$0xff]
    %v2115 = vld [vmem:[#allocation14 + $0x50] sm:$0xff]
    %v2116 = vld [vmem:[#allocation14 + $0x58] sm:$0xff]
    %v2117 = vld [vmem:[#allocation14 + $0x60] sm:$0xff]
    %v2118 = vld [vmem:[#allocation14 + $0x68] sm:$0xff]
    %v2119 = vld [vmem:[#allocation14 + $0x70] sm:$0xff]
    %v2120 = vld [vmem:[#allocation14 + $0x78] sm:$0xff]
    %v2121 = vld [vmem:[#allocation14 + $0x80] sm:$0xff]
    %v2122 = vld [vmem:[#allocation14 + $0x88] sm:$0xff]
    %v2123 = vld [vmem:[#allocation14 + $0x90] sm:$0xff]
    %v2124 = vld [vmem:[#allocation14 + $0x98] sm:$0xff]
    %v2125 = vld [vmem:[#allocation14 + $0xa0] sm:$0xff]
    %v2126 = vld [vmem:[#allocation14 + $0xa8] sm:$0xff]
    %v2127 = vld [vmem:[#allocation14 + $0xb0] sm:$0xff]
    %v2128 = vld [vmem:[#allocation14 + $0xb8] sm:$0xff]
    %v2129 = vld [vmem:[#allocation14 + $0xc0] sm:$0xff]
    %v2130 = vld [vmem:[#allocation14 + $0xc8] sm:$0xff]
    %v2131 = vld [vmem:[#allocation14 + $0xd0] sm:$0xff]
    %v2132 = vld [vmem:[#allocation14 + $0xd8] sm:$0xff]
    %v2133 = vld [vmem:[#allocation14 + $0xe0] sm:$0xff]
    %v2134 = vld [vmem:[#allocation14 + $0xe8] sm:$0xff]
    %v2135 = vld [vmem:[#allocation14 + $0xf0] sm:$0xff]
    %v2136 = vld [vmem:[#allocation14 + $0xf8] sm:$0xff]
    %v2137 = vpack.c.bf16 %v2102, %v2101
    %v2138 = vld [vmem:[#allocation15] sm:$0xff]
    %v2139 = vld [vmem:[#allocation15 + $0x8] sm:$0xff]
    %v2140 = vld [vmem:[#allocation15 + $0x10] sm:$0xff]
    %v2141 = vld [vmem:[#allocation15 + $0x18] sm:$0xff]
    %v2142 = vld [vmem:[#allocation15 + $0x20] sm:$0xff]
    %v2143 = vld [vmem:[#allocation15 + $0x28] sm:$0xff]
    %v2144 = vld [vmem:[#allocation15 + $0x30] sm:$0xff]
    %v2145 = vld [vmem:[#allocation15 + $0x38] sm:$0xff]
    %v2146 = vld [vmem:[#allocation15 + $0x40] sm:$0xff]
    %v2147 = vld [vmem:[#allocation15 + $0x48] sm:$0xff]
    %v2148 = vld [vmem:[#allocation15 + $0x50] sm:$0xff]
    %v2149 = vld [vmem:[#allocation15 + $0x58] sm:$0xff]
    %v2150 = vld [vmem:[#allocation15 + $0x60] sm:$0xff]
    %v2151 = vld [vmem:[#allocation15 + $0x68] sm:$0xff]
    %v2152 = vld [vmem:[#allocation15 + $0x70] sm:$0xff]
    %v2153 = vld [vmem:[#allocation15 + $0x78] sm:$0xff]
    %v2154 = vld [vmem:[#allocation15 + $0x80] sm:$0xff]
    %v2155 = vld [vmem:[#allocation15 + $0x88] sm:$0xff]
    %v2156 = vld [vmem:[#allocation15 + $0x90] sm:$0xff]
    %v2157 = vld [vmem:[#allocation15 + $0x98] sm:$0xff]
    %v2158 = vld [vmem:[#allocation15 + $0xa0] sm:$0xff]
    %v2159 = vld [vmem:[#allocation15 + $0xa8] sm:$0xff]
    %v2160 = vld [vmem:[#allocation15 + $0xb0] sm:$0xff]
    %v2161 = vld [vmem:[#allocation15 + $0xb8] sm:$0xff]
    %v2162 = vld [vmem:[#allocation15 + $0xc0] sm:$0xff]
    %v2163 = vld [vmem:[#allocation15 + $0xc8] sm:$0xff]
    %v2164 = vld [vmem:[#allocation15 + $0xd0] sm:$0xff]
    %v2165 = vld [vmem:[#allocation15 + $0xd8] sm:$0xff]
    %v2166 = vld [vmem:[#allocation15 + $0xe0] sm:$0xff]
    %v2167 = vld [vmem:[#allocation15 + $0xe8] sm:$0xff]
    %v2168 = vld [vmem:[#allocation15 + $0xf0] sm:$0xff]
    %v2169 = vld [vmem:[#allocation15 + $0xf8] sm:$0xff]
    %v2202 = vunpack.c.l.b16 %v2138
    %v2203 = vunpack.c.h.b16 %v2138
    %v2204 = vunpack.c.l.b16 %v2139
    %v2205 = vunpack.c.h.b16 %v2139
    %v2206 = vunpack.c.l.b16 %v2140
    %v2207 = vunpack.c.h.b16 %v2140
    %v2208 = vunpack.c.l.b16 %v2141
    %v2209 = vunpack.c.h.b16 %v2141
    %v2210 = vunpack.c.l.b16 %v2142
    %v2211 = vunpack.c.h.b16 %v2142
    %v2212 = vunpack.c.l.b16 %v2143
    %v2213 = vunpack.c.h.b16 %v2143
    %v2214 = vunpack.c.l.b16 %v2144
    %v2215 = vunpack.c.h.b16 %v2144
    %v2216 = vunpack.c.l.b16 %v2145
    %v2217 = vunpack.c.h.b16 %v2145
    %v2218 = vunpack.c.l.b16 %v2146
    %v2219 = vunpack.c.h.b16 %v2146
    %v2220 = vunpack.c.l.b16 %v2147
    %v2221 = vunpack.c.h.b16 %v2147
    %v2222 = vunpack.c.l.b16 %v2148
    %v2223 = vunpack.c.h.b16 %v2148
    %v2224 = vunpack.c.l.b16 %v2149
    %v2225 = vunpack.c.h.b16 %v2149
    %v2226 = vunpack.c.l.b16 %v2150
    %v2227 = vunpack.c.h.b16 %v2150
    %v2228 = vunpack.c.l.b16 %v2151
    %v2229 = vunpack.c.h.b16 %v2151
    %v2230 = vunpack.c.l.b16 %v2152
    %v2231 = vunpack.c.h.b16 %v2152
    %v2232 = vunpack.c.l.b16 %v2153
    %v2233 = vunpack.c.h.b16 %v2153
    %v2234 = vunpack.c.l.b16 %v2154
    %v2235 = vunpack.c.h.b16 %v2154
    %v2236 = vunpack.c.l.b16 %v2155
    %v2237 = vunpack.c.h.b16 %v2155
    %v2238 = vunpack.c.l.b16 %v2156
    %v2239 = vunpack.c.h.b16 %v2156
    %v2240 = vunpack.c.l.b16 %v2157
    %v2241 = vunpack.c.h.b16 %v2157
    %v2242 = vunpack.c.l.b16 %v2158
    %v2243 = vunpack.c.h.b16 %v2158
    %v2244 = vunpack.c.l.b16 %v2159
    %v2245 = vunpack.c.h.b16 %v2159
    %v2246 = vunpack.c.l.b16 %v2160
    %v2247 = vunpack.c.h.b16 %v2160
    %v2248 = vunpack.c.l.b16 %v2161
    %v2249 = vunpack.c.h.b16 %v2161
    %v2250 = vunpack.c.l.b16 %v2162
    %v2251 = vunpack.c.h.b16 %v2162
    %v2252 = vunpack.c.l.b16 %v2163
    %v2253 = vunpack.c.h.b16 %v2163
    %v2254 = vunpack.c.l.b16 %v2164
    %v2255 = vunpack.c.h.b16 %v2164
    %v2256 = vunpack.c.l.b16 %v2165
    %v2257 = vunpack.c.h.b16 %v2165
    %v2258 = vunpack.c.l.b16 %v2166
    %v2259 = vunpack.c.h.b16 %v2166
    %v2260 = vunpack.c.l.b16 %v2167
    %v2261 = vunpack.c.h.b16 %v2167
    %v2262 = vunpack.c.l.b16 %v2168
    %v2263 = vunpack.c.h.b16 %v2168
    %v2264 = vunpack.c.l.b16 %v2169
    %v2265 = vunpack.c.h.b16 %v2169
    %v2266 = vpack.c.b16 %v2206, %v2202
    %v2267 = vpack.c.b16 %v2207, %v2203
    %v2268 = vpack.c.b16 %v2208, %v2204
    %v2269 = vpack.c.b16 %v2209, %v2205
    %v2270 = vpack.c.b16 %v2214, %v2210
    %v2271 = vpack.c.b16 %v2215, %v2211
    %v2272 = vpack.c.b16 %v2216, %v2212
    %v2273 = vpack.c.b16 %v2217, %v2213
    %v2274 = vpack.c.b16 %v2222, %v2218
    %v2275 = vpack.c.b16 %v2223, %v2219
    %v2276 = vpack.c.b16 %v2224, %v2220
    %v2277 = vpack.c.b16 %v2225, %v2221
    %v2278 = vpack.c.b16 %v2230, %v2226
    %v2279 = vpack.c.b16 %v2231, %v2227
    %v2280 = vpack.c.b16 %v2232, %v2228
    %v2281 = vpack.c.b16 %v2233, %v2229
    %v2282 = vpack.c.b16 %v2238, %v2234
    %v2283 = vpack.c.b16 %v2239, %v2235
    %v2284 = vpack.c.b16 %v2240, %v2236
    %v2285 = vpack.c.b16 %v2241, %v2237
    %v2286 = vpack.c.b16 %v2246, %v2242
    %v2287 = vpack.c.b16 %v2247, %v2243
    %v2288 = vpack.c.b16 %v2248, %v2244
    %v2289 = vpack.c.b16 %v2249, %v2245
    %v2290 = vpack.c.b16 %v2254, %v2250
    %v2291 = vpack.c.b16 %v2255, %v2251
    %v2292 = vpack.c.b16 %v2256, %v2252
    %v2293 = vpack.c.b16 %v2257, %v2253
    %v2294 = vpack.c.b16 %v2262, %v2258
    %v2295 = vpack.c.b16 %v2263, %v2259
    %v2296 = vpack.c.b16 %v2264, %v2260
    %v2297 = vpack.c.b16 %v2265, %v2261
    %2330 = vmatpush.bf16.msra.mxu0 %v2294
    %2331 = vmatpush.bf16.msra.mxu0 %v2290
    %2332 = vmatpush.bf16.msra.mxu0 %v2286
    %2333 = vmatpush.bf16.msra.mxu0 %v2282
    %2334 = vmatpush.bf16.msra.mxu0 %v2278
    %2335 = vmatpush.bf16.msra.mxu0 %v2274
    %2336 = vmatpush.bf16.msra.mxu0 %v2270
    %2337 = vmatpush.bf16.msra.mxu0 %v2266
    %2338 = vmatmul.bf16.gmra.mxu0 %v2137
    %v2339 = vpop.f32.mrf.mxu0
    %v2340 = vadd.f32 0.0, %v2339
    %v2341 = vpop.f32.mrf.mxu0
    %v2342 = vadd.f32 0.0, %v2341
    %2343 = vdwg.mxu0
    %2344 = vmatpush.bf16.msra.mxu0 %v2295
    %2345 = vmatpush.bf16.msra.mxu0 %v2291
    %2346 = vmatpush.bf16.msra.mxu0 %v2287
    %2347 = vmatpush.bf16.msra.mxu0 %v2283
    %2348 = vmatpush.bf16.msra.mxu0 %v2279
    %2349 = vmatpush.bf16.msra.mxu0 %v2275
    %2350 = vmatpush.bf16.msra.mxu0 %v2271
    %2351 = vmatpush.bf16.msra.mxu0 %v2267
    %2352 = vmatmul.bf16.gmra.mxu0 %v2137
    %v2353 = vpop.f32.mrf.mxu0
    %v2354 = vadd.f32 0.0, %v2353
    %v2355 = vpop.f32.mrf.mxu0
    %v2356 = vadd.f32 0.0, %v2355
    %2357 = vdwg.mxu0
    %2358 = vmatpush.bf16.msra.mxu0 %v2296
    %2359 = vmatpush.bf16.msra.mxu0 %v2292
    %2360 = vmatpush.bf16.msra.mxu0 %v2288
    %2361 = vmatpush.bf16.msra.mxu0 %v2284
    %2362 = vmatpush.bf16.msra.mxu0 %v2280
    %2363 = vmatpush.bf16.msra.mxu0 %v2276
    %2364 = vmatpush.bf16.msra.mxu0 %v2272
    %2365 = vmatpush.bf16.msra.mxu0 %v2268
    %2366 = vmatmul.bf16.gmra.mxu0 %v2137
    %v2367 = vpop.f32.mrf.mxu0
    %v2368 = vadd.f32 0.0, %v2367
    %v2369 = vpop.f32.mrf.mxu0
    %v2370 = vadd.f32 0.0, %v2369
    %2371 = vdwg.mxu0
    %2372 = vmatpush.bf16.msra.mxu0 %v2297
    %2373 = vmatpush.bf16.msra.mxu0 %v2293
    %2374 = vmatpush.bf16.msra.mxu0 %v2289
    %2375 = vmatpush.bf16.msra.mxu0 %v2285
    %2376 = vmatpush.bf16.msra.mxu0 %v2281
    %2377 = vmatpush.bf16.msra.mxu0 %v2277
    %2378 = vmatpush.bf16.msra.mxu0 %v2273
    %2379 = vmatpush.bf16.msra.mxu0 %v2269
    %2380 = vmatmul.bf16.gmra.mxu0 %v2137
    %v2381 = vpop.f32.mrf.mxu0
    %v2382 = vadd.f32 0.0, %v2381
    %v2383 = vpop.f32.mrf.mxu0
    %v2384 = vadd.f32 0.0, %v2383
    %2385 = vdwg.mxu0
    %v2418 = vunpack.c.l.b16 %v2105
    %v2419 = vunpack.c.h.b16 %v2105
    %v2420 = vunpack.c.l.b16 %v2106
    %v2421 = vunpack.c.h.b16 %v2106
    %v2422 = vunpack.c.l.b16 %v2107
    %v2423 = vunpack.c.h.b16 %v2107
    %v2424 = vunpack.c.l.b16 %v2108
    %v2425 = vunpack.c.h.b16 %v2108
    %v2426 = vunpack.c.l.b16 %v2109
    %v2427 = vunpack.c.h.b16 %v2109
    %v2428 = vunpack.c.l.b16 %v2110
    %v2429 = vunpack.c.h.b16 %v2110
    %v2430 = vunpack.c.l.b16 %v2111
    %v2431 = vunpack.c.h.b16 %v2111
    %v2432 = vunpack.c.l.b16 %v2112
    %v2433 = vunpack.c.h.b16 %v2112
    %v2434 = vunpack.c.l.b16 %v2113
    %v2435 = vunpack.c.h.b16 %v2113
    %v2436 = vunpack.c.l.b16 %v2114
    %v2437 = vunpack.c.h.b16 %v2114
    %v2438 = vunpack.c.l.b16 %v2115
    %v2439 = vunpack.c.h.b16 %v2115
    %v2440 = vunpack.c.l.b16 %v2116
    %v2441 = vunpack.c.h.b16 %v2116
    %v2442 = vunpack.c.l.b16 %v2117
    %v2443 = vunpack.c.h.b16 %v2117
    %v2444 = vunpack.c.l.b16 %v2118
    %v2445 = vunpack.c.h.b16 %v2118
    %v2446 = vunpack.c.l.b16 %v2119
    %v2447 = vunpack.c.h.b16 %v2119
    %v2448 = vunpack.c.l.b16 %v2120
    %v2449 = vunpack.c.h.b16 %v2120
    %v2450 = vunpack.c.l.b16 %v2121
    %v2451 = vunpack.c.h.b16 %v2121
    %v2452 = vunpack.c.l.b16 %v2122
    %v2453 = vunpack.c.h.b16 %v2122
    %v2454 = vunpack.c.l.b16 %v2123
    %v2455 = vunpack.c.h.b16 %v2123
    %v2456 = vunpack.c.l.b16 %v2124
    %v2457 = vunpack.c.h.b16 %v2124
    %v2458 = vunpack.c.l.b16 %v2125
    %v2459 = vunpack.c.h.b16 %v2125
    %v2460 = vunpack.c.l.b16 %v2126
    %v2461 = vunpack.c.h.b16 %v2126
    %v2462 = vunpack.c.l.b16 %v2127
    %v2463 = vunpack.c.h.b16 %v2127
    %v2464 = vunpack.c.l.b16 %v2128
    %v2465 = vunpack.c.h.b16 %v2128
    %v2466 = vunpack.c.l.b16 %v2129
    %v2467 = vunpack.c.h.b16 %v2129
    %v2468 = vunpack.c.l.b16 %v2130
    %v2469 = vunpack.c.h.b16 %v2130
    %v2470 = vunpack.c.l.b16 %v2131
    %v2471 = vunpack.c.h.b16 %v2131
    %v2472 = vunpack.c.l.b16 %v2132
    %v2473 = vunpack.c.h.b16 %v2132
    %v2474 = vunpack.c.l.b16 %v2133
    %v2475 = vunpack.c.h.b16 %v2133
    %v2476 = vunpack.c.l.b16 %v2134
    %v2477 = vunpack.c.h.b16 %v2134
    %v2478 = vunpack.c.l.b16 %v2135
    %v2479 = vunpack.c.h.b16 %v2135
    %v2480 = vunpack.c.l.b16 %v2136
    %v2481 = vunpack.c.h.b16 %v2136
    %v2482 = vpack.c.b16 %v2422, %v2418
    %v2483 = vpack.c.b16 %v2423, %v2419
    %v2484 = vpack.c.b16 %v2424, %v2420
    %v2485 = vpack.c.b16 %v2425, %v2421
    %v2486 = vpack.c.b16 %v2430, %v2426
    %v2487 = vpack.c.b16 %v2431, %v2427
    %v2488 = vpack.c.b16 %v2432, %v2428
    %v2489 = vpack.c.b16 %v2433, %v2429
    %v2490 = vpack.c.b16 %v2438, %v2434
    %v2491 = vpack.c.b16 %v2439, %v2435
    %v2492 = vpack.c.b16 %v2440, %v2436
    %v2493 = vpack.c.b16 %v2441, %v2437
    %v2494 = vpack.c.b16 %v2446, %v2442
    %v2495 = vpack.c.b16 %v2447, %v2443
    %v2496 = vpack.c.b16 %v2448, %v2444
    %v2497 = vpack.c.b16 %v2449, %v2445
    %v2498 = vpack.c.b16 %v2454, %v2450
    %v2499 = vpack.c.b16 %v2455, %v2451
    %v2500 = vpack.c.b16 %v2456, %v2452
    %v2501 = vpack.c.b16 %v2457, %v2453
    %v2502 = vpack.c.b16 %v2462, %v2458
    %v2503 = vpack.c.b16 %v2463, %v2459
    %v2504 = vpack.c.b16 %v2464, %v2460
    %v2505 = vpack.c.b16 %v2465, %v2461
    %v2506 = vpack.c.b16 %v2470, %v2466
    %v2507 = vpack.c.b16 %v2471, %v2467
    %v2508 = vpack.c.b16 %v2472, %v2468
    %v2509 = vpack.c.b16 %v2473, %v2469
    %v2510 = vpack.c.b16 %v2478, %v2474
    %v2511 = vpack.c.b16 %v2479, %v2475
    %v2512 = vpack.c.b16 %v2480, %v2476
    %v2513 = vpack.c.b16 %v2481, %v2477
    %2546 = vmatpush.bf16.msra.mxu0 %v2510
    %2547 = vmatpush.bf16.msra.mxu0 %v2506
    %2548 = vmatpush.bf16.msra.mxu0 %v2502
    %2549 = vmatpush.bf16.msra.mxu0 %v2498
    %2550 = vmatpush.bf16.msra.mxu0 %v2494
    %2551 = vmatpush.bf16.msra.mxu0 %v2490
    %2552 = vmatpush.bf16.msra.mxu0 %v2486
    %2553 = vmatpush.bf16.msra.mxu0 %v2482
    %2554 = vmatmul.bf16.gmra.mxu0 %v2100
    %v2555 = vpop.f32.mrf.mxu0
    %v2556 = vadd.f32 %v2340, %v2555
    %v2557 = vpop.f32.mrf.mxu0
    %v2558 = vadd.f32 %v2342, %v2557
    %2559 = vdwg.mxu0
    %2560 = vmatpush.bf16.msra.mxu0 %v2511
    %2561 = vmatpush.bf16.msra.mxu0 %v2507
    %2562 = vmatpush.bf16.msra.mxu0 %v2503
    %2563 = vmatpush.bf16.msra.mxu0 %v2499
    %2564 = vmatpush.bf16.msra.mxu0 %v2495
    %2565 = vmatpush.bf16.msra.mxu0 %v2491
    %2566 = vmatpush.bf16.msra.mxu0 %v2487
    %2567 = vmatpush.bf16.msra.mxu0 %v2483
    %2568 = vmatmul.bf16.gmra.mxu0 %v2100
    %v2569 = vpop.f32.mrf.mxu0
    %v2570 = vadd.f32 %v2354, %v2569
    %v2571 = vpop.f32.mrf.mxu0
    %v2572 = vadd.f32 %v2356, %v2571
    %2573 = vdwg.mxu0
    %2574 = vmatpush.bf16.msra.mxu0 %v2512
    %2575 = vmatpush.bf16.msra.mxu0 %v2508
    %2576 = vmatpush.bf16.msra.mxu0 %v2504
    %2577 = vmatpush.bf16.msra.mxu0 %v2500
    %2578 = vmatpush.bf16.msra.mxu0 %v2496
    %2579 = vmatpush.bf16.msra.mxu0 %v2492
    %2580 = vmatpush.bf16.msra.mxu0 %v2488
    %2581 = vmatpush.bf16.msra.mxu0 %v2484
    %2582 = vmatmul.bf16.gmra.mxu0 %v2100
    %v2583 = vpop.f32.mrf.mxu0
    %v2584 = vadd.f32 %v2368, %v2583
    %v2585 = vpop.f32.mrf.mxu0
    %v2586 = vadd.f32 %v2370, %v2585
    %2587 = vdwg.mxu0
    %2588 = vmatpush.bf16.msra.mxu0 %v2513
    %2589 = vmatpush.bf16.msra.mxu0 %v2509
    %2590 = vmatpush.bf16.msra.mxu0 %v2505
    %2591 = vmatpush.bf16.msra.mxu0 %v2501
    %2592 = vmatpush.bf16.msra.mxu0 %v2497
    %2593 = vmatpush.bf16.msra.mxu0 %v2493
    %2594 = vmatpush.bf16.msra.mxu0 %v2489
    %2595 = vmatpush.bf16.msra.mxu0 %v2485
    %2596 = vmatmul.bf16.gmra.mxu0 %v2100
    %v2597 = vpop.f32.mrf.mxu0
    %v2598 = vadd.f32 %v2382, %v2597
    %v2599 = vpop.f32.mrf.mxu0
    %v2600 = vadd.f32 %v2384, %v2599
    %2601 = vdwg.mxu0
    %v2602 = vld [vmem:[%s6] sm:$0xf]
    %v2604 = vperm.slane %v2602, 0
    %v2605 = vperm.slane %v2602, 1
    %v2606 = vperm.slane %v2602, 2
    %v2607 = vperm.slane %v2602, 3
    %v2612 = vadd.f32 %v2556, %v2604
    %v2613 = vadd.f32 %v2570, %v2605
    %v2614 = vadd.f32 %v2584, %v2606
    %v2615 = vadd.f32 %v2598, %v2607
    %v2616 = vadd.f32 %v2558, %v2604
    %v2617 = vadd.f32 %v2572, %v2605
    %v2618 = vadd.f32 %v2586, %v2606
    %v2619 = vadd.f32 %v2600, %v2607
    %v2620 = vxor.u32 %v2612, 2147483648
    %v2621 = vxor.u32 %v2616, 2147483648
    %v2622 = vmul.f32 %v2620, 1.442695
    %v2623 = vpow.pop %v2622
    %v2624 = vmul.f32 %v2621, 1.442695
    %v2625 = vpow.pop %v2624
    %v2626 = vadd.f32 %v2623, 1.0
    %v2627 = vadd.f32 %v2625, 1.0
    %v2628 = vrcp.pop %v2626
    %v2629 = vmul.f32 %v2626, %v2628
    %v2630 = vsub.f32 1.0, %v2629
    %v2631 = vmul.f32 %v2628, %v2630
    %v2632 = vadd.f32 %v2628, %v2631
    %vm2633 = vweird.f32 %v2626
    %vm2634 = vweird.f32 %v2628
    %vm2635 = vmor %vm2633, %vm2634
    %v2636 = vsel %vm2635, %v2628, %v2632
    %v2637 = vand.u32 2147483647, %v2626
    %vm2638 = vcmp.eq.f32.partialorder %v2637, 8.507059e+37
    %v2639 = vand.u32 %v2626, 2147483648
    %v2640 = vor.u32 1.1754944e-38, %v2639
    %v2641 = vsel %vm2638, %v2640, %v2636
    %v2642 = vmul.f32 1.0, %v2641
    %v2643 = vrcp.pop %v2627
    %v2644 = vmul.f32 %v2627, %v2643
    %v2645 = vsub.f32 1.0, %v2644
    %v2646 = vmul.f32 %v2643, %v2645
    %v2647 = vadd.f32 %v2643, %v2646
    %vm2648 = vweird.f32 %v2627
    %vm2649 = vweird.f32 %v2643
    %vm2650 = vmor %vm2648, %vm2649
    %v2651 = vsel %vm2650, %v2643, %v2647
    %v2652 = vand.u32 2147483647, %v2627
    %vm2653 = vcmp.eq.f32.partialorder %v2652, 8.507059e+37
    %v2654 = vand.u32 %v2627, 2147483648
    %v2655 = vor.u32 1.1754944e-38, %v2654
    %v2656 = vsel %vm2653, %v2655, %v2651
    %v2657 = vmul.f32 1.0, %v2656
    %v2658 = vxor.u32 %v2613, 2147483648
    %v2659 = vxor.u32 %v2617, 2147483648
    %v2660 = vmul.f32 %v2658, 1.442695
    %v2661 = vpow.pop %v2660
    %v2662 = vmul.f32 %v2659, 1.442695
    %v2663 = vpow.pop %v2662
    %v2664 = vadd.f32 %v2661, 1.0
    %v2665 = vadd.f32 %v2663, 1.0
    %v2666 = vrcp.pop %v2664
    %v2667 = vmul.f32 %v2664, %v2666
    %v2668 = vsub.f32 1.0, %v2667
    %v2669 = vmul.f32 %v2666, %v2668
    %v2670 = vadd.f32 %v2666, %v2669
    %vm2671 = vweird.f32 %v2664
    %vm2672 = vweird.f32 %v2666
    %vm2673 = vmor %vm2671, %vm2672
    %v2674 = vsel %vm2673, %v2666, %v2670
    %v2675 = vand.u32 2147483647, %v2664
    %vm2676 = vcmp.eq.f32.partialorder %v2675, 8.507059e+37
    %v2677 = vand.u32 %v2664, 2147483648
    %v2678 = vor.u32 1.1754944e-38, %v2677
    %v2679 = vsel %vm2676, %v2678, %v2674
    %v2680 = vmul.f32 1.0, %v2679
    %v2681 = vrcp.pop %v2665
    %v2682 = vmul.f32 %v2665, %v2681
    %v2683 = vsub.f32 1.0, %v2682
    %v2684 = vmul.f32 %v2681, %v2683
    %v2685 = vadd.f32 %v2681, %v2684
    %vm2686 = vweird.f32 %v2665
    %vm2687 = vweird.f32 %v2681
    %vm2688 = vmor %vm2686, %vm2687
    %v2689 = vsel %vm2688, %v2681, %v2685
    %v2690 = vand.u32 2147483647, %v2665
    %vm2691 = vcmp.eq.f32.partialorder %v2690, 8.507059e+37
    %v2692 = vand.u32 %v2665, 2147483648
    %v2693 = vor.u32 1.1754944e-38, %v2692
    %v2694 = vsel %vm2691, %v2693, %v2689
    %v2695 = vmul.f32 1.0, %v2694
    %v2696 = vtanh.pop %v2614
    %v2697 = vtanh.pop %v2618
    %v2698 = vxor.u32 %v2615, 2147483648
    %v2699 = vxor.u32 %v2619, 2147483648
    %v2700 = vmul.f32 %v2698, 1.442695
    %v2701 = vpow.pop %v2700
    %v2702 = vmul.f32 %v2699, 1.442695
    %v2703 = vpow.pop %v2702
    %v2704 = vadd.f32 %v2701, 1.0
    %v2705 = vadd.f32 %v2703, 1.0
    %v2706 = vrcp.pop %v2704
    %v2707 = vmul.f32 %v2704, %v2706
    %v2708 = vsub.f32 1.0, %v2707
    %v2709 = vmul.f32 %v2706, %v2708
    %v2710 = vadd.f32 %v2706, %v2709
    %vm2711 = vweird.f32 %v2704
    %vm2712 = vweird.f32 %v2706
    %vm2713 = vmor %vm2711, %vm2712
    %v2714 = vsel %vm2713, %v2706, %v2710
    %v2715 = vand.u32 2147483647, %v2704
    %vm2716 = vcmp.eq.f32.partialorder %v2715, 8.507059e+37
    %v2717 = vand.u32 %v2704, 2147483648
    %v2718 = vor.u32 1.1754944e-38, %v2717
    %v2719 = vsel %vm2716, %v2718, %v2714
    %v2720 = vmul.f32 1.0, %v2719
    %v2721 = vrcp.pop %v2705
    %v2722 = vmul.f32 %v2705, %v2721
    %v2723 = vsub.f32 1.0, %v2722
    %v2724 = vmul.f32 %v2721, %v2723
    %v2725 = vadd.f32 %v2721, %v2724
    %vm2726 = vweird.f32 %v2705
    %vm2727 = vweird.f32 %v2721
    %vm2728 = vmor %vm2726, %vm2727
    %v2729 = vsel %vm2728, %v2721, %v2725
    %v2730 = vand.u32 2147483647, %v2705
    %vm2731 = vcmp.eq.f32.partialorder %v2730, 8.507059e+37
    %v2732 = vand.u32 %v2705, 2147483648
    %v2733 = vor.u32 1.1754944e-38, %v2732
    %v2734 = vsel %vm2731, %v2733, %v2729
    %v2735 = vmul.f32 1.0, %v2734
    %v2736 = vmul.f32 %v2680, %v2103
    %v2737 = vmul.f32 %v2695, %v2104
    %v2738 = vmul.f32 %v2642, %v2696
    %v2739 = vmul.f32 %v2657, %v2697
    %v2740 = vadd.f32 %v2736, %v2738
    %v2741 = vadd.f32 %v2737, %v2739
    %v2742 = vtanh.pop %v2740
    %v2743 = vtanh.pop %v2741
    %v2744 = vmul.f32 %v2720, %v2742
    %v2745 = vmul.f32 %v2735, %v2743
    %2746 = vst [vmem:[#allocation4] sm:$0xff] %v2744
    %2747 = vst [vmem:[#allocation4 + $0x8] sm:$0xff] %v2745
    %2748 = vst [vmem:[#allocation5] sm:$0xff] %v2740
    %2749 = vst [vmem:[#allocation5 + $0x8] sm:$0xff] %v2741
    %v2750 = vpack.c.bf16 %v2744, %v2744
    %v2751 = vpack.c.bf16 %v2745, %v2745
    %s2752 = scalar_lea.vmem [#allocation17], 8
    %2753 = vst [vmem:[%s2752] sm:$0xf] %v2750
    %2754 = vst [vmem:[%s2752 + $0x4] sm:$0xf] %v2751
    %s2755 = scalar_lea.vmem [#allocation6], 16
    %v2756 = vld [vmem:[%s2755] sm:$0xf]
    %v2757 = vld [vmem:[%s2755 + $0x4] sm:$0xf]
    %v2758 = vld [vmem:[#allocation2] sm:$0xff]
    %v2759 = vld [vmem:[#allocation2 + $0x8] sm:$0xff]
    %v2760 = vld [vmem:[#allocation3] sm:$0xff]
    %v2761 = vld [vmem:[#allocation3 + $0x8] sm:$0xff]
    %v2762 = vld [vmem:[#allocation9] sm:$0xff]
    %v2763 = vld [vmem:[#allocation9 + $0x8] sm:$0xff]
    %v2764 = vld [vmem:[#allocation9 + $0x10] sm:$0xff]
    %v2765 = vld [vmem:[#allocation9 + $0x18] sm:$0xff]
    %v2766 = vld [vmem:[#allocation9 + $0x20] sm:$0xff]
    %v2767 = vld [vmem:[#allocation9 + $0x28] sm:$0xff]
    %v2768 = vld [vmem:[#allocation9 + $0x30] sm:$0xff]
    %v2769 = vld [vmem:[#allocation9 + $0x38] sm:$0xff]
    %v2770 = vld [vmem:[#allocation9 + $0x40] sm:$0xff]
    %v2771 = vld [vmem:[#allocation9 + $0x48] sm:$0xff]
    %v2772 = vld [vmem:[#allocation9 + $0x50] sm:$0xff]
    %v2773 = vld [vmem:[#allocation9 + $0x58] sm:$0xff]
    %v2774 = vld [vmem:[#allocation9 + $0x60] sm:$0xff]
    %v2775 = vld [vmem:[#allocation9 + $0x68] sm:$0xff]
    %v2776 = vld [vmem:[#allocation9 + $0x70] sm:$0xff]
    %v2777 = vld [vmem:[#allocation9 + $0x78] sm:$0xff]
    %v2778 = vld [vmem:[#allocation9 + $0x80] sm:$0xff]
    %v2779 = vld [vmem:[#allocation9 + $0x88] sm:$0xff]
    %v2780 = vld [vmem:[#allocation9 + $0x90] sm:$0xff]
    %v2781 = vld [vmem:[#allocation9 + $0x98] sm:$0xff]
    %v2782 = vld [vmem:[#allocation9 + $0xa0] sm:$0xff]
    %v2783 = vld [vmem:[#allocation9 + $0xa8] sm:$0xff]
    %v2784 = vld [vmem:[#allocation9 + $0xb0] sm:$0xff]
    %v2785 = vld [vmem:[#allocation9 + $0xb8] sm:$0xff]
    %v2786 = vld [vmem:[#allocation9 + $0xc0] sm:$0xff]
    %v2787 = vld [vmem:[#allocation9 + $0xc8] sm:$0xff]
    %v2788 = vld [vmem:[#allocation9 + $0xd0] sm:$0xff]
    %v2789 = vld [vmem:[#allocation9 + $0xd8] sm:$0xff]
    %v2790 = vld [vmem:[#allocation9 + $0xe0] sm:$0xff]
    %v2791 = vld [vmem:[#allocation9 + $0xe8] sm:$0xff]
    %v2792 = vld [vmem:[#allocation9 + $0xf0] sm:$0xff]
    %v2793 = vld [vmem:[#allocation9 + $0xf8] sm:$0xff]
    %v2794 = vpack.c.bf16 %v2759, %v2758
    %v2795 = vld [vmem:[#allocation11] sm:$0xff]
    %v2796 = vld [vmem:[#allocation11 + $0x8] sm:$0xff]
    %v2797 = vld [vmem:[#allocation11 + $0x10] sm:$0xff]
    %v2798 = vld [vmem:[#allocation11 + $0x18] sm:$0xff]
    %v2799 = vld [vmem:[#allocation11 + $0x20] sm:$0xff]
    %v2800 = vld [vmem:[#allocation11 + $0x28] sm:$0xff]
    %v2801 = vld [vmem:[#allocation11 + $0x30] sm:$0xff]
    %v2802 = vld [vmem:[#allocation11 + $0x38] sm:$0xff]
    %v2803 = vld [vmem:[#allocation11 + $0x40] sm:$0xff]
    %v2804 = vld [vmem:[#allocation11 + $0x48] sm:$0xff]
    %v2805 = vld [vmem:[#allocation11 + $0x50] sm:$0xff]
    %v2806 = vld [vmem:[#allocation11 + $0x58] sm:$0xff]
    %v2807 = vld [vmem:[#allocation11 + $0x60] sm:$0xff]
    %v2808 = vld [vmem:[#allocation11 + $0x68] sm:$0xff]
    %v2809 = vld [vmem:[#allocation11 + $0x70] sm:$0xff]
    %v2810 = vld [vmem:[#allocation11 + $0x78] sm:$0xff]
    %v2811 = vld [vmem:[#allocation11 + $0x80] sm:$0xff]
    %v2812 = vld [vmem:[#allocation11 + $0x88] sm:$0xff]
    %v2813 = vld [vmem:[#allocation11 + $0x90] sm:$0xff]
    %v2814 = vld [vmem:[#allocation11 + $0x98] sm:$0xff]
    %v2815 = vld [vmem:[#allocation11 + $0xa0] sm:$0xff]
    %v2816 = vld [vmem:[#allocation11 + $0xa8] sm:$0xff]
    %v2817 = vld [vmem:[#allocation11 + $0xb0] sm:$0xff]
    %v2818 = vld [vmem:[#allocation11 + $0xb8] sm:$0xff]
    %v2819 = vld [vmem:[#allocation11 + $0xc0] sm:$0xff]
    %v2820 = vld [vmem:[#allocation11 + $0xc8] sm:$0xff]
    %v2821 = vld [vmem:[#allocation11 + $0xd0] sm:$0xff]
    %v2822 = vld [vmem:[#allocation11 + $0xd8] sm:$0xff]
    %v2823 = vld [vmem:[#allocation11 + $0xe0] sm:$0xff]
    %v2824 = vld [vmem:[#allocation11 + $0xe8] sm:$0xff]
    %v2825 = vld [vmem:[#allocation11 + $0xf0] sm:$0xff]
    %v2826 = vld [vmem:[#allocation11 + $0xf8] sm:$0xff]
    %v2859 = vunpack.c.l.b16 %v2795
    %v2860 = vunpack.c.h.b16 %v2795
    %v2861 = vunpack.c.l.b16 %v2796
    %v2862 = vunpack.c.h.b16 %v2796
    %v2863 = vunpack.c.l.b16 %v2797
    %v2864 = vunpack.c.h.b16 %v2797
    %v2865 = vunpack.c.l.b16 %v2798
    %v2866 = vunpack.c.h.b16 %v2798
    %v2867 = vunpack.c.l.b16 %v2799
    %v2868 = vunpack.c.h.b16 %v2799
    %v2869 = vunpack.c.l.b16 %v2800
    %v2870 = vunpack.c.h.b16 %v2800
    %v2871 = vunpack.c.l.b16 %v2801
    %v2872 = vunpack.c.h.b16 %v2801
    %v2873 = vunpack.c.l.b16 %v2802
    %v2874 = vunpack.c.h.b16 %v2802
    %v2875 = vunpack.c.l.b16 %v2803
    %v2876 = vunpack.c.h.b16 %v2803
    %v2877 = vunpack.c.l.b16 %v2804
    %v2878 = vunpack.c.h.b16 %v2804
    %v2879 = vunpack.c.l.b16 %v2805
    %v2880 = vunpack.c.h.b16 %v2805
    %v2881 = vunpack.c.l.b16 %v2806
    %v2882 = vunpack.c.h.b16 %v2806
    %v2883 = vunpack.c.l.b16 %v2807
    %v2884 = vunpack.c.h.b16 %v2807
    %v2885 = vunpack.c.l.b16 %v2808
    %v2886 = vunpack.c.h.b16 %v2808
    %v2887 = vunpack.c.l.b16 %v2809
    %v2888 = vunpack.c.h.b16 %v2809
    %v2889 = vunpack.c.l.b16 %v2810
    %v2890 = vunpack.c.h.b16 %v2810
    %v2891 = vunpack.c.l.b16 %v2811
    %v2892 = vunpack.c.h.b16 %v2811
    %v2893 = vunpack.c.l.b16 %v2812
    %v2894 = vunpack.c.h.b16 %v2812
    %v2895 = vunpack.c.l.b16 %v2813
    %v2896 = vunpack.c.h.b16 %v2813
    %v2897 = vunpack.c.l.b16 %v2814
    %v2898 = vunpack.c.h.b16 %v2814
    %v2899 = vunpack.c.l.b16 %v2815
    %v2900 = vunpack.c.h.b16 %v2815
    %v2901 = vunpack.c.l.b16 %v2816
    %v2902 = vunpack.c.h.b16 %v2816
    %v2903 = vunpack.c.l.b16 %v2817
    %v2904 = vunpack.c.h.b16 %v2817
    %v2905 = vunpack.c.l.b16 %v2818
    %v2906 = vunpack.c.h.b16 %v2818
    %v2907 = vunpack.c.l.b16 %v2819
    %v2908 = vunpack.c.h.b16 %v2819
    %v2909 = vunpack.c.l.b16 %v2820
    %v2910 = vunpack.c.h.b16 %v2820
    %v2911 = vunpack.c.l.b16 %v2821
    %v2912 = vunpack.c.h.b16 %v2821
    %v2913 = vunpack.c.l.b16 %v2822
    %v2914 = vunpack.c.h.b16 %v2822
    %v2915 = vunpack.c.l.b16 %v2823
    %v2916 = vunpack.c.h.b16 %v2823
    %v2917 = vunpack.c.l.b16 %v2824
    %v2918 = vunpack.c.h.b16 %v2824
    %v2919 = vunpack.c.l.b16 %v2825
    %v2920 = vunpack.c.h.b16 %v2825
    %v2921 = vunpack.c.l.b16 %v2826
    %v2922 = vunpack.c.h.b16 %v2826
    %v2923 = vpack.c.b16 %v2863, %v2859
    %v2924 = vpack.c.b16 %v2864, %v2860
    %v2925 = vpack.c.b16 %v2865, %v2861
    %v2926 = vpack.c.b16 %v2866, %v2862
    %v2927 = vpack.c.b16 %v2871, %v2867
    %v2928 = vpack.c.b16 %v2872, %v2868
    %v2929 = vpack.c.b16 %v2873, %v2869
    %v2930 = vpack.c.b16 %v2874, %v2870
    %v2931 = vpack.c.b16 %v2879, %v2875
    %v2932 = vpack.c.b16 %v2880, %v2876
    %v2933 = vpack.c.b16 %v2881, %v2877
    %v2934 = vpack.c.b16 %v2882, %v2878
    %v2935 = vpack.c.b16 %v2887, %v2883
    %v2936 = vpack.c.b16 %v2888, %v2884
    %v2937 = vpack.c.b16 %v2889, %v2885
    %v2938 = vpack.c.b16 %v2890, %v2886
    %v2939 = vpack.c.b16 %v2895, %v2891
    %v2940 = vpack.c.b16 %v2896, %v2892
    %v2941 = vpack.c.b16 %v2897, %v2893
    %v2942 = vpack.c.b16 %v2898, %v2894
    %v2943 = vpack.c.b16 %v2903, %v2899
    %v2944 = vpack.c.b16 %v2904, %v2900
    %v2945 = vpack.c.b16 %v2905, %v2901
    %v2946 = vpack.c.b16 %v2906, %v2902
    %v2947 = vpack.c.b16 %v2911, %v2907
    %v2948 = vpack.c.b16 %v2912, %v2908
    %v2949 = vpack.c.b16 %v2913, %v2909
    %v2950 = vpack.c.b16 %v2914, %v2910
    %v2951 = vpack.c.b16 %v2919, %v2915
    %v2952 = vpack.c.b16 %v2920, %v2916
    %v2953 = vpack.c.b16 %v2921, %v2917
    %v2954 = vpack.c.b16 %v2922, %v2918
    %2987 = vmatpush.bf16.msra.mxu0 %v2951
    %2988 = vmatpush.bf16.msra.mxu0 %v2947
    %2989 = vmatpush.bf16.msra.mxu0 %v2943
    %2990 = vmatpush.bf16.msra.mxu0 %v2939
    %2991 = vmatpush.bf16.msra.mxu0 %v2935
    %2992 = vmatpush.bf16.msra.mxu0 %v2931
    %2993 = vmatpush.bf16.msra.mxu0 %v2927
    %2994 = vmatpush.bf16.msra.mxu0 %v2923
    %2995 = vmatmul.bf16.gmra.mxu0 %v2794
    %v2996 = vpop.f32.mrf.mxu0
    %v2997 = vadd.f32 0.0, %v2996
    %v2998 = vpop.f32.mrf.mxu0
    %v2999 = vadd.f32 0.0, %v2998
    %3000 = vdwg.mxu0
    %3001 = vmatpush.bf16.msra.mxu0 %v2952
    %3002 = vmatpush.bf16.msra.mxu0 %v2948
    %3003 = vmatpush.bf16.msra.mxu0 %v2944
    %3004 = vmatpush.bf16.msra.mxu0 %v2940
    %3005 = vmatpush.bf16.msra.mxu0 %v2936
    %3006 = vmatpush.bf16.msra.mxu0 %v2932
    %3007 = vmatpush.bf16.msra.mxu0 %v2928
    %3008 = vmatpush.bf16.msra.mxu0 %v2924
    %3009 = vmatmul.bf16.gmra.mxu0 %v2794
    %v3010 = vpop.f32.mrf.mxu0
    %v3011 = vadd.f32 0.0, %v3010
    %v3012 = vpop.f32.mrf.mxu0
    %v3013 = vadd.f32 0.0, %v3012
    %3014 = vdwg.mxu0
    %3015 = vmatpush.bf16.msra.mxu0 %v2953
    %3016 = vmatpush.bf16.msra.mxu0 %v2949
    %3017 = vmatpush.bf16.msra.mxu0 %v2945
    %3018 = vmatpush.bf16.msra.mxu0 %v2941
    %3019 = vmatpush.bf16.msra.mxu0 %v2937
    %3020 = vmatpush.bf16.msra.mxu0 %v2933
    %3021 = vmatpush.bf16.msra.mxu0 %v2929
    %3022 = vmatpush.bf16.msra.mxu0 %v2925
    %3023 = vmatmul.bf16.gmra.mxu0 %v2794
    %v3024 = vpop.f32.mrf.mxu0
    %v3025 = vadd.f32 0.0, %v3024
    %v3026 = vpop.f32.mrf.mxu0
    %v3027 = vadd.f32 0.0, %v3026
    %3028 = vdwg.mxu0
    %3029 = vmatpush.bf16.msra.mxu0 %v2954
    %3030 = vmatpush.bf16.msra.mxu0 %v2950
    %3031 = vmatpush.bf16.msra.mxu0 %v2946
    %3032 = vmatpush.bf16.msra.mxu0 %v2942
    %3033 = vmatpush.bf16.msra.mxu0 %v2938
    %3034 = vmatpush.bf16.msra.mxu0 %v2934
    %3035 = vmatpush.bf16.msra.mxu0 %v2930
    %3036 = vmatpush.bf16.msra.mxu0 %v2926
    %3037 = vmatmul.bf16.gmra.mxu0 %v2794
    %v3038 = vpop.f32.mrf.mxu0
    %v3039 = vadd.f32 0.0, %v3038
    %v3040 = vpop.f32.mrf.mxu0
    %v3041 = vadd.f32 0.0, %v3040
    %3042 = vdwg.mxu0
    %v3045 = vunpack.c.l.b16 %v2756
    %v3046 = vunpack.c.l.b16 %v2757
    %v3047 = vpack.c.b16 %v3046, %v3045
    %v3081 = vunpack.c.l.b16 %v2762
    %v3082 = vunpack.c.h.b16 %v2762
    %v3083 = vunpack.c.l.b16 %v2763
    %v3084 = vunpack.c.h.b16 %v2763
    %v3085 = vunpack.c.l.b16 %v2764
    %v3086 = vunpack.c.h.b16 %v2764
    %v3087 = vunpack.c.l.b16 %v2765
    %v3088 = vunpack.c.h.b16 %v2765
    %v3089 = vunpack.c.l.b16 %v2766
    %v3090 = vunpack.c.h.b16 %v2766
    %v3091 = vunpack.c.l.b16 %v2767
    %v3092 = vunpack.c.h.b16 %v2767
    %v3093 = vunpack.c.l.b16 %v2768
    %v3094 = vunpack.c.h.b16 %v2768
    %v3095 = vunpack.c.l.b16 %v2769
    %v3096 = vunpack.c.h.b16 %v2769
    %v3097 = vunpack.c.l.b16 %v2770
    %v3098 = vunpack.c.h.b16 %v2770
    %v3099 = vunpack.c.l.b16 %v2771
    %v3100 = vunpack.c.h.b16 %v2771
    %v3101 = vunpack.c.l.b16 %v2772
    %v3102 = vunpack.c.h.b16 %v2772
    %v3103 = vunpack.c.l.b16 %v2773
    %v3104 = vunpack.c.h.b16 %v2773
    %v3105 = vunpack.c.l.b16 %v2774
    %v3106 = vunpack.c.h.b16 %v2774
    %v3107 = vunpack.c.l.b16 %v2775
    %v3108 = vunpack.c.h.b16 %v2775
    %v3109 = vunpack.c.l.b16 %v2776
    %v3110 = vunpack.c.h.b16 %v2776
    %v3111 = vunpack.c.l.b16 %v2777
    %v3112 = vunpack.c.h.b16 %v2777
    %v3113 = vunpack.c.l.b16 %v2778
    %v3114 = vunpack.c.h.b16 %v2778
    %v3115 = vunpack.c.l.b16 %v2779
    %v3116 = vunpack.c.h.b16 %v2779
    %v3117 = vunpack.c.l.b16 %v2780
    %v3118 = vunpack.c.h.b16 %v2780
    %v3119 = vunpack.c.l.b16 %v2781
    %v3120 = vunpack.c.h.b16 %v2781
    %v3121 = vunpack.c.l.b16 %v2782
    %v3122 = vunpack.c.h.b16 %v2782
    %v3123 = vunpack.c.l.b16 %v2783
    %v3124 = vunpack.c.h.b16 %v2783
    %v3125 = vunpack.c.l.b16 %v2784
    %v3126 = vunpack.c.h.b16 %v2784
    %v3127 = vunpack.c.l.b16 %v2785
    %v3128 = vunpack.c.h.b16 %v2785
    %v3129 = vunpack.c.l.b16 %v2786
    %v3130 = vunpack.c.h.b16 %v2786
    %v3131 = vunpack.c.l.b16 %v2787
    %v3132 = vunpack.c.h.b16 %v2787
    %v3133 = vunpack.c.l.b16 %v2788
    %v3134 = vunpack.c.h.b16 %v2788
    %v3135 = vunpack.c.l.b16 %v2789
    %v3136 = vunpack.c.h.b16 %v2789
    %v3137 = vunpack.c.l.b16 %v2790
    %v3138 = vunpack.c.h.b16 %v2790
    %v3139 = vunpack.c.l.b16 %v2791
    %v3140 = vunpack.c.h.b16 %v2791
    %v3141 = vunpack.c.l.b16 %v2792
    %v3142 = vunpack.c.h.b16 %v2792
    %v3143 = vunpack.c.l.b16 %v2793
    %v3144 = vunpack.c.h.b16 %v2793
    %v3145 = vpack.c.b16 %v3085, %v3081
    %v3146 = vpack.c.b16 %v3086, %v3082
    %v3147 = vpack.c.b16 %v3087, %v3083
    %v3148 = vpack.c.b16 %v3088, %v3084
    %v3149 = vpack.c.b16 %v3093, %v3089
    %v3150 = vpack.c.b16 %v3094, %v3090
    %v3151 = vpack.c.b16 %v3095, %v3091
    %v3152 = vpack.c.b16 %v3096, %v3092
    %v3153 = vpack.c.b16 %v3101, %v3097
    %v3154 = vpack.c.b16 %v3102, %v3098
    %v3155 = vpack.c.b16 %v3103, %v3099
    %v3156 = vpack.c.b16 %v3104, %v3100
    %v3157 = vpack.c.b16 %v3109, %v3105
    %v3158 = vpack.c.b16 %v3110, %v3106
    %v3159 = vpack.c.b16 %v3111, %v3107
    %v3160 = vpack.c.b16 %v3112, %v3108
    %v3161 = vpack.c.b16 %v3117, %v3113
    %v3162 = vpack.c.b16 %v3118, %v3114
    %v3163 = vpack.c.b16 %v3119, %v3115
    %v3164 = vpack.c.b16 %v3120, %v3116
    %v3165 = vpack.c.b16 %v3125, %v3121
    %v3166 = vpack.c.b16 %v3126, %v3122
    %v3167 = vpack.c.b16 %v3127, %v3123
    %v3168 = vpack.c.b16 %v3128, %v3124
    %v3169 = vpack.c.b16 %v3133, %v3129
    %v3170 = vpack.c.b16 %v3134, %v3130
    %v3171 = vpack.c.b16 %v3135, %v3131
    %v3172 = vpack.c.b16 %v3136, %v3132
    %v3173 = vpack.c.b16 %v3141, %v3137
    %v3174 = vpack.c.b16 %v3142, %v3138
    %v3175 = vpack.c.b16 %v3143, %v3139
    %v3176 = vpack.c.b16 %v3144, %v3140
    %3209 = vmatpush.bf16.msra.mxu0 %v3173
    %3210 = vmatpush.bf16.msra.mxu0 %v3169
    %3211 = vmatpush.bf16.msra.mxu0 %v3165
    %3212 = vmatpush.bf16.msra.mxu0 %v3161
    %3213 = vmatpush.bf16.msra.mxu0 %v3157
    %3214 = vmatpush.bf16.msra.mxu0 %v3153
    %3215 = vmatpush.bf16.msra.mxu0 %v3149
    %3216 = vmatpush.bf16.msra.mxu0 %v3145
    %3217 = vmatmul.bf16.gmra.mxu0 %v3047
    %v3218 = vpop.f32.mrf.mxu0
    %v3219 = vadd.f32 %v2997, %v3218
    %v3220 = vpop.f32.mrf.mxu0
    %v3221 = vadd.f32 %v2999, %v3220
    %3222 = vdwg.mxu0
    %3223 = vmatpush.bf16.msra.mxu0 %v3174
    %3224 = vmatpush.bf16.msra.mxu0 %v3170
    %3225 = vmatpush.bf16.msra.mxu0 %v3166
    %3226 = vmatpush.bf16.msra.mxu0 %v3162
    %3227 = vmatpush.bf16.msra.mxu0 %v3158
    %3228 = vmatpush.bf16.msra.mxu0 %v3154
    %3229 = vmatpush.bf16.msra.mxu0 %v3150
    %3230 = vmatpush.bf16.msra.mxu0 %v3146
    %3231 = vmatmul.bf16.gmra.mxu0 %v3047
    %v3232 = vpop.f32.mrf.mxu0
    %v3233 = vadd.f32 %v3011, %v3232
    %v3234 = vpop.f32.mrf.mxu0
    %v3235 = vadd.f32 %v3013, %v3234
    %3236 = vdwg.mxu0
    %3237 = vmatpush.bf16.msra.mxu0 %v3175
    %3238 = vmatpush.bf16.msra.mxu0 %v3171
    %3239 = vmatpush.bf16.msra.mxu0 %v3167
    %3240 = vmatpush.bf16.msra.mxu0 %v3163
    %3241 = vmatpush.bf16.msra.mxu0 %v3159
    %3242 = vmatpush.bf16.msra.mxu0 %v3155
    %3243 = vmatpush.bf16.msra.mxu0 %v3151
    %3244 = vmatpush.bf16.msra.mxu0 %v3147
    %3245 = vmatmul.bf16.gmra.mxu0 %v3047
    %v3246 = vpop.f32.mrf.mxu0
    %v3247 = vadd.f32 %v3025, %v3246
    %v3248 = vpop.f32.mrf.mxu0
    %v3249 = vadd.f32 %v3027, %v3248
    %3250 = vdwg.mxu0
    %3251 = vmatpush.bf16.msra.mxu0 %v3176
    %3252 = vmatpush.bf16.msra.mxu0 %v3172
    %3253 = vmatpush.bf16.msra.mxu0 %v3168
    %3254 = vmatpush.bf16.msra.mxu0 %v3164
    %3255 = vmatpush.bf16.msra.mxu0 %v3160
    %3256 = vmatpush.bf16.msra.mxu0 %v3156
    %3257 = vmatpush.bf16.msra.mxu0 %v3152
    %3258 = vmatpush.bf16.msra.mxu0 %v3148
    %3259 = vmatmul.bf16.gmra.mxu0 %v3047
    %v3260 = vpop.f32.mrf.mxu0
    %v3261 = vadd.f32 %v3039, %v3260
    %v3262 = vpop.f32.mrf.mxu0
    %v3263 = vadd.f32 %v3041, %v3262
    %3264 = vdwg.mxu0
    %v3265 = vld [vmem:[#allocation12] sm:$0xf]
    %v3267 = vperm.slane %v3265, 0
    %v3268 = vperm.slane %v3265, 1
    %v3269 = vperm.slane %v3265, 2
    %v3270 = vperm.slane %v3265, 3
    %v3275 = vadd.f32 %v3219, %v3267
    %v3276 = vadd.f32 %v3233, %v3268
    %v3277 = vadd.f32 %v3247, %v3269
    %v3278 = vadd.f32 %v3261, %v3270
    %v3279 = vadd.f32 %v3221, %v3267
    %v3280 = vadd.f32 %v3235, %v3268
    %v3281 = vadd.f32 %v3249, %v3269
    %v3282 = vadd.f32 %v3263, %v3270
    %v3283 = vxor.u32 %v3275, 2147483648
    %v3284 = vxor.u32 %v3279, 2147483648
    %v3285 = vmul.f32 %v3283, 1.442695
    %v3286 = vpow.pop %v3285
    %v3287 = vmul.f32 %v3284, 1.442695
    %v3288 = vpow.pop %v3287
    %v3289 = vadd.f32 %v3286, 1.0
    %v3290 = vadd.f32 %v3288, 1.0
    %v3291 = vrcp.pop %v3289
    %v3292 = vmul.f32 %v3289, %v3291
    %v3293 = vsub.f32 1.0, %v3292
    %v3294 = vmul.f32 %v3291, %v3293
    %v3295 = vadd.f32 %v3291, %v3294
    %vm3296 = vweird.f32 %v3289
    %vm3297 = vweird.f32 %v3291
    %vm3298 = vmor %vm3296, %vm3297
    %v3299 = vsel %vm3298, %v3291, %v3295
    %v3300 = vand.u32 2147483647, %v3289
    %vm3301 = vcmp.eq.f32.partialorder %v3300, 8.507059e+37
    %v3302 = vand.u32 %v3289, 2147483648
    %v3303 = vor.u32 1.1754944e-38, %v3302
    %v3304 = vsel %vm3301, %v3303, %v3299
    %v3305 = vmul.f32 1.0, %v3304
    %v3306 = vrcp.pop %v3290
    %v3307 = vmul.f32 %v3290, %v3306
    %v3308 = vsub.f32 1.0, %v3307
    %v3309 = vmul.f32 %v3306, %v3308
    %v3310 = vadd.f32 %v3306, %v3309
    %vm3311 = vweird.f32 %v3290
    %vm3312 = vweird.f32 %v3306
    %vm3313 = vmor %vm3311, %vm3312
    %v3314 = vsel %vm3313, %v3306, %v3310
    %v3315 = vand.u32 2147483647, %v3290
    %vm3316 = vcmp.eq.f32.partialorder %v3315, 8.507059e+37
    %v3317 = vand.u32 %v3290, 2147483648
    %v3318 = vor.u32 1.1754944e-38, %v3317
    %v3319 = vsel %vm3316, %v3318, %v3314
    %v3320 = vmul.f32 1.0, %v3319
    %v3321 = vxor.u32 %v3276, 2147483648
    %v3322 = vxor.u32 %v3280, 2147483648
    %v3323 = vmul.f32 %v3321, 1.442695
    %v3324 = vpow.pop %v3323
    %v3325 = vmul.f32 %v3322, 1.442695
    %v3326 = vpow.pop %v3325
    %v3327 = vadd.f32 %v3324, 1.0
    %v3328 = vadd.f32 %v3326, 1.0
    %v3329 = vrcp.pop %v3327
    %v3330 = vmul.f32 %v3327, %v3329
    %v3331 = vsub.f32 1.0, %v3330
    %v3332 = vmul.f32 %v3329, %v3331
    %v3333 = vadd.f32 %v3329, %v3332
    %vm3334 = vweird.f32 %v3327
    %vm3335 = vweird.f32 %v3329
    %vm3336 = vmor %vm3334, %vm3335
    %v3337 = vsel %vm3336, %v3329, %v3333
    %v3338 = vand.u32 2147483647, %v3327
    %vm3339 = vcmp.eq.f32.partialorder %v3338, 8.507059e+37
    %v3340 = vand.u32 %v3327, 2147483648
    %v3341 = vor.u32 1.1754944e-38, %v3340
    %v3342 = vsel %vm3339, %v3341, %v3337
    %v3343 = vmul.f32 1.0, %v3342
    %v3344 = vrcp.pop %v3328
    %v3345 = vmul.f32 %v3328, %v3344
    %v3346 = vsub.f32 1.0, %v3345
    %v3347 = vmul.f32 %v3344, %v3346
    %v3348 = vadd.f32 %v3344, %v3347
    %vm3349 = vweird.f32 %v3328
    %vm3350 = vweird.f32 %v3344
    %vm3351 = vmor %vm3349, %vm3350
    %v3352 = vsel %vm3351, %v3344, %v3348
    %v3353 = vand.u32 2147483647, %v3328
    %vm3354 = vcmp.eq.f32.partialorder %v3353, 8.507059e+37
    %v3355 = vand.u32 %v3328, 2147483648
    %v3356 = vor.u32 1.1754944e-38, %v3355
    %v3357 = vsel %vm3354, %v3356, %v3352
    %v3358 = vmul.f32 1.0, %v3357
    %v3359 = vtanh.pop %v3277
    %v3360 = vtanh.pop %v3281
    %v3361 = vxor.u32 %v3278, 2147483648
    %v3362 = vxor.u32 %v3282, 2147483648
    %v3363 = vmul.f32 %v3361, 1.442695
    %v3364 = vpow.pop %v3363
    %v3365 = vmul.f32 %v3362, 1.442695
    %v3366 = vpow.pop %v3365
    %v3367 = vadd.f32 %v3364, 1.0
    %v3368 = vadd.f32 %v3366, 1.0
    %v3369 = vrcp.pop %v3367
    %v3370 = vmul.f32 %v3367, %v3369
    %v3371 = vsub.f32 1.0, %v3370
    %v3372 = vmul.f32 %v3369, %v3371
    %v3373 = vadd.f32 %v3369, %v3372
    %vm3374 = vweird.f32 %v3367
    %vm3375 = vweird.f32 %v3369
    %vm3376 = vmor %vm3374, %vm3375
    %v3377 = vsel %vm3376, %v3369, %v3373
    %v3378 = vand.u32 2147483647, %v3367
    %vm3379 = vcmp.eq.f32.partialorder %v3378, 8.507059e+37
    %v3380 = vand.u32 %v3367, 2147483648
    %v3381 = vor.u32 1.1754944e-38, %v3380
    %v3382 = vsel %vm3379, %v3381, %v3377
    %v3383 = vmul.f32 1.0, %v3382
    %v3384 = vrcp.pop %v3368
    %v3385 = vmul.f32 %v3368, %v3384
    %v3386 = vsub.f32 1.0, %v3385
    %v3387 = vmul.f32 %v3384, %v3386
    %v3388 = vadd.f32 %v3384, %v3387
    %vm3389 = vweird.f32 %v3368
    %vm3390 = vweird.f32 %v3384
    %vm3391 = vmor %vm3389, %vm3390
    %v3392 = vsel %vm3391, %v3384, %v3388
    %v3393 = vand.u32 2147483647, %v3368
    %vm3394 = vcmp.eq.f32.partialorder %v3393, 8.507059e+37
    %v3395 = vand.u32 %v3368, 2147483648
    %v3396 = vor.u32 1.1754944e-38, %v3395
    %v3397 = vsel %vm3394, %v3396, %v3392
    %v3398 = vmul.f32 1.0, %v3397
    %v3399 = vmul.f32 %v3343, %v2760
    %v3400 = vmul.f32 %v3358, %v2761
    %v3401 = vmul.f32 %v3305, %v3359
    %v3402 = vmul.f32 %v3320, %v3360
    %v3403 = vadd.f32 %v3399, %v3401
    %v3404 = vadd.f32 %v3400, %v3402
    %v3405 = vtanh.pop %v3403
    %v3406 = vtanh.pop %v3404
    %v3407 = vmul.f32 %v3383, %v3405
    %v3408 = vmul.f32 %v3398, %v3406
    %3409 = vst [vmem:[#allocation2] sm:$0xff] %v3407
    %3410 = vst [vmem:[#allocation2 + $0x8] sm:$0xff] %v3408
    %3411 = vst [vmem:[#allocation3] sm:$0xff] %v3403
    %3412 = vst [vmem:[#allocation3 + $0x8] sm:$0xff] %v3404
    %v3413 = vpack.c.bf16 %v3408, %v3407
    %v3414 = vld [vmem:[#allocation4] sm:$0xff]
    %v3415 = vld [vmem:[#allocation4 + $0x8] sm:$0xff]
    %v3416 = vld [vmem:[#allocation5] sm:$0xff]
    %v3417 = vld [vmem:[#allocation5 + $0x8] sm:$0xff]
    %v3418 = vld [vmem:[#allocation14] sm:$0xff]
    %v3419 = vld [vmem:[#allocation14 + $0x8] sm:$0xff]
    %v3420 = vld [vmem:[#allocation14 + $0x10] sm:$0xff]
    %v3421 = vld [vmem:[#allocation14 + $0x18] sm:$0xff]
    %v3422 = vld [vmem:[#allocation14 + $0x20] sm:$0xff]
    %v3423 = vld [vmem:[#allocation14 + $0x28] sm:$0xff]
    %v3424 = vld [vmem:[#allocation14 + $0x30] sm:$0xff]
    %v3425 = vld [vmem:[#allocation14 + $0x38] sm:$0xff]
    %v3426 = vld [vmem:[#allocation14 + $0x40] sm:$0xff]
    %v3427 = vld [vmem:[#allocation14 + $0x48] sm:$0xff]
    %v3428 = vld [vmem:[#allocation14 + $0x50] sm:$0xff]
    %v3429 = vld [vmem:[#allocation14 + $0x58] sm:$0xff]
    %v3430 = vld [vmem:[#allocation14 + $0x60] sm:$0xff]
    %v3431 = vld [vmem:[#allocation14 + $0x68] sm:$0xff]
    %v3432 = vld [vmem:[#allocation14 + $0x70] sm:$0xff]
    %v3433 = vld [vmem:[#allocation14 + $0x78] sm:$0xff]
    %v3434 = vld [vmem:[#allocation14 + $0x80] sm:$0xff]
    %v3435 = vld [vmem:[#allocation14 + $0x88] sm:$0xff]
    %v3436 = vld [vmem:[#allocation14 + $0x90] sm:$0xff]
    %v3437 = vld [vmem:[#allocation14 + $0x98] sm:$0xff]
    %v3438 = vld [vmem:[#allocation14 + $0xa0] sm:$0xff]
    %v3439 = vld [vmem:[#allocation14 + $0xa8] sm:$0xff]
    %v3440 = vld [vmem:[#allocation14 + $0xb0] sm:$0xff]
    %v3441 = vld [vmem:[#allocation14 + $0xb8] sm:$0xff]
    %v3442 = vld [vmem:[#allocation14 + $0xc0] sm:$0xff]
    %v3443 = vld [vmem:[#allocation14 + $0xc8] sm:$0xff]
    %v3444 = vld [vmem:[#allocation14 + $0xd0] sm:$0xff]
    %v3445 = vld [vmem:[#allocation14 + $0xd8] sm:$0xff]
    %v3446 = vld [vmem:[#allocation14 + $0xe0] sm:$0xff]
    %v3447 = vld [vmem:[#allocation14 + $0xe8] sm:$0xff]
    %v3448 = vld [vmem:[#allocation14 + $0xf0] sm:$0xff]
    %v3449 = vld [vmem:[#allocation14 + $0xf8] sm:$0xff]
    %v3450 = vpack.c.bf16 %v3415, %v3414
    %v3451 = vld [vmem:[#allocation15] sm:$0xff]
    %v3452 = vld [vmem:[#allocation15 + $0x8] sm:$0xff]
    %v3453 = vld [vmem:[#allocation15 + $0x10] sm:$0xff]
    %v3454 = vld [vmem:[#allocation15 + $0x18] sm:$0xff]
    %v3455 = vld [vmem:[#allocation15 + $0x20] sm:$0xff]
    %v3456 = vld [vmem:[#allocation15 + $0x28] sm:$0xff]
    %v3457 = vld [vmem:[#allocation15 + $0x30] sm:$0xff]
    %v3458 = vld [vmem:[#allocation15 + $0x38] sm:$0xff]
    %v3459 = vld [vmem:[#allocation15 + $0x40] sm:$0xff]
    %v3460 = vld [vmem:[#allocation15 + $0x48] sm:$0xff]
    %v3461 = vld [vmem:[#allocation15 + $0x50] sm:$0xff]
    %v3462 = vld [vmem:[#allocation15 + $0x58] sm:$0xff]
    %v3463 = vld [vmem:[#allocation15 + $0x60] sm:$0xff]
    %v3464 = vld [vmem:[#allocation15 + $0x68] sm:$0xff]
    %v3465 = vld [vmem:[#allocation15 + $0x70] sm:$0xff]
    %v3466 = vld [vmem:[#allocation15 + $0x78] sm:$0xff]
    %v3467 = vld [vmem:[#allocation15 + $0x80] sm:$0xff]
    %v3468 = vld [vmem:[#allocation15 + $0x88] sm:$0xff]
    %v3469 = vld [vmem:[#allocation15 + $0x90] sm:$0xff]
    %v3470 = vld [vmem:[#allocation15 + $0x98] sm:$0xff]
    %v3471 = vld [vmem:[#allocation15 + $0xa0] sm:$0xff]
    %v3472 = vld [vmem:[#allocation15 + $0xa8] sm:$0xff]
    %v3473 = vld [vmem:[#allocation15 + $0xb0] sm:$0xff]
    %v3474 = vld [vmem:[#allocation15 + $0xb8] sm:$0xff]
    %v3475 = vld [vmem:[#allocation15 + $0xc0] sm:$0xff]
    %v3476 = vld [vmem:[#allocation15 + $0xc8] sm:$0xff]
    %v3477 = vld [vmem:[#allocation15 + $0xd0] sm:$0xff]
    %v3478 = vld [vmem:[#allocation15 + $0xd8] sm:$0xff]
    %v3479 = vld [vmem:[#allocation15 + $0xe0] sm:$0xff]
    %v3480 = vld [vmem:[#allocation15 + $0xe8] sm:$0xff]
    %v3481 = vld [vmem:[#allocation15 + $0xf0] sm:$0xff]
    %v3482 = vld [vmem:[#allocation15 + $0xf8] sm:$0xff]
    %v3515 = vunpack.c.l.b16 %v3451
    %v3516 = vunpack.c.h.b16 %v3451
    %v3517 = vunpack.c.l.b16 %v3452
    %v3518 = vunpack.c.h.b16 %v3452
    %v3519 = vunpack.c.l.b16 %v3453
    %v3520 = vunpack.c.h.b16 %v3453
    %v3521 = vunpack.c.l.b16 %v3454
    %v3522 = vunpack.c.h.b16 %v3454
    %v3523 = vunpack.c.l.b16 %v3455
    %v3524 = vunpack.c.h.b16 %v3455
    %v3525 = vunpack.c.l.b16 %v3456
    %v3526 = vunpack.c.h.b16 %v3456
    %v3527 = vunpack.c.l.b16 %v3457
    %v3528 = vunpack.c.h.b16 %v3457
    %v3529 = vunpack.c.l.b16 %v3458
    %v3530 = vunpack.c.h.b16 %v3458
    %v3531 = vunpack.c.l.b16 %v3459
    %v3532 = vunpack.c.h.b16 %v3459
    %v3533 = vunpack.c.l.b16 %v3460
    %v3534 = vunpack.c.h.b16 %v3460
    %v3535 = vunpack.c.l.b16 %v3461
    %v3536 = vunpack.c.h.b16 %v3461
    %v3537 = vunpack.c.l.b16 %v3462
    %v3538 = vunpack.c.h.b16 %v3462
    %v3539 = vunpack.c.l.b16 %v3463
    %v3540 = vunpack.c.h.b16 %v3463
    %v3541 = vunpack.c.l.b16 %v3464
    %v3542 = vunpack.c.h.b16 %v3464
    %v3543 = vunpack.c.l.b16 %v3465
    %v3544 = vunpack.c.h.b16 %v3465
    %v3545 = vunpack.c.l.b16 %v3466
    %v3546 = vunpack.c.h.b16 %v3466
    %v3547 = vunpack.c.l.b16 %v3467
    %v3548 = vunpack.c.h.b16 %v3467
    %v3549 = vunpack.c.l.b16 %v3468
    %v3550 = vunpack.c.h.b16 %v3468
    %v3551 = vunpack.c.l.b16 %v3469
    %v3552 = vunpack.c.h.b16 %v3469
    %v3553 = vunpack.c.l.b16 %v3470
    %v3554 = vunpack.c.h.b16 %v3470
    %v3555 = vunpack.c.l.b16 %v3471
    %v3556 = vunpack.c.h.b16 %v3471
    %v3557 = vunpack.c.l.b16 %v3472
    %v3558 = vunpack.c.h.b16 %v3472
    %v3559 = vunpack.c.l.b16 %v3473
    %v3560 = vunpack.c.h.b16 %v3473
    %v3561 = vunpack.c.l.b16 %v3474
    %v3562 = vunpack.c.h.b16 %v3474
    %v3563 = vunpack.c.l.b16 %v3475
    %v3564 = vunpack.c.h.b16 %v3475
    %v3565 = vunpack.c.l.b16 %v3476
    %v3566 = vunpack.c.h.b16 %v3476
    %v3567 = vunpack.c.l.b16 %v3477
    %v3568 = vunpack.c.h.b16 %v3477
    %v3569 = vunpack.c.l.b16 %v3478
    %v3570 = vunpack.c.h.b16 %v3478
    %v3571 = vunpack.c.l.b16 %v3479
    %v3572 = vunpack.c.h.b16 %v3479
    %v3573 = vunpack.c.l.b16 %v3480
    %v3574 = vunpack.c.h.b16 %v3480
    %v3575 = vunpack.c.l.b16 %v3481
    %v3576 = vunpack.c.h.b16 %v3481
    %v3577 = vunpack.c.l.b16 %v3482
    %v3578 = vunpack.c.h.b16 %v3482
    %v3579 = vpack.c.b16 %v3519, %v3515
    %v3580 = vpack.c.b16 %v3520, %v3516
    %v3581 = vpack.c.b16 %v3521, %v3517
    %v3582 = vpack.c.b16 %v3522, %v3518
    %v3583 = vpack.c.b16 %v3527, %v3523
    %v3584 = vpack.c.b16 %v3528, %v3524
    %v3585 = vpack.c.b16 %v3529, %v3525
    %v3586 = vpack.c.b16 %v3530, %v3526
    %v3587 = vpack.c.b16 %v3535, %v3531
    %v3588 = vpack.c.b16 %v3536, %v3532
    %v3589 = vpack.c.b16 %v3537, %v3533
    %v3590 = vpack.c.b16 %v3538, %v3534
    %v3591 = vpack.c.b16 %v3543, %v3539
    %v3592 = vpack.c.b16 %v3544, %v3540
    %v3593 = vpack.c.b16 %v3545, %v3541
    %v3594 = vpack.c.b16 %v3546, %v3542
    %v3595 = vpack.c.b16 %v3551, %v3547
    %v3596 = vpack.c.b16 %v3552, %v3548
    %v3597 = vpack.c.b16 %v3553, %v3549
    %v3598 = vpack.c.b16 %v3554, %v3550
    %v3599 = vpack.c.b16 %v3559, %v3555
    %v3600 = vpack.c.b16 %v3560, %v3556
    %v3601 = vpack.c.b16 %v3561, %v3557
    %v3602 = vpack.c.b16 %v3562, %v3558
    %v3603 = vpack.c.b16 %v3567, %v3563
    %v3604 = vpack.c.b16 %v3568, %v3564
    %v3605 = vpack.c.b16 %v3569, %v3565
    %v3606 = vpack.c.b16 %v3570, %v3566
    %v3607 = vpack.c.b16 %v3575, %v3571
    %v3608 = vpack.c.b16 %v3576, %v3572
    %v3609 = vpack.c.b16 %v3577, %v3573
    %v3610 = vpack.c.b16 %v3578, %v3574
    %3643 = vmatpush.bf16.msra.mxu0 %v3607
    %3644 = vmatpush.bf16.msra.mxu0 %v3603
    %3645 = vmatpush.bf16.msra.mxu0 %v3599
    %3646 = vmatpush.bf16.msra.mxu0 %v3595
    %3647 = vmatpush.bf16.msra.mxu0 %v3591
    %3648 = vmatpush.bf16.msra.mxu0 %v3587
    %3649 = vmatpush.bf16.msra.mxu0 %v3583
    %3650 = vmatpush.bf16.msra.mxu0 %v3579
    %3651 = vmatmul.bf16.gmra.mxu0 %v3450
    %v3652 = vpop.f32.mrf.mxu0
    %v3653 = vadd.f32 0.0, %v3652
    %v3654 = vpop.f32.mrf.mxu0
    %v3655 = vadd.f32 0.0, %v3654
    %3656 = vdwg.mxu0
    %3657 = vmatpush.bf16.msra.mxu0 %v3608
    %3658 = vmatpush.bf16.msra.mxu0 %v3604
    %3659 = vmatpush.bf16.msra.mxu0 %v3600
    %3660 = vmatpush.bf16.msra.mxu0 %v3596
    %3661 = vmatpush.bf16.msra.mxu0 %v3592
    %3662 = vmatpush.bf16.msra.mxu0 %v3588
    %3663 = vmatpush.bf16.msra.mxu0 %v3584
    %3664 = vmatpush.bf16.msra.mxu0 %v3580
    %3665 = vmatmul.bf16.gmra.mxu0 %v3450
    %v3666 = vpop.f32.mrf.mxu0
    %v3667 = vadd.f32 0.0, %v3666
    %v3668 = vpop.f32.mrf.mxu0
    %v3669 = vadd.f32 0.0, %v3668
    %3670 = vdwg.mxu0
    %3671 = vmatpush.bf16.msra.mxu0 %v3609
    %3672 = vmatpush.bf16.msra.mxu0 %v3605
    %3673 = vmatpush.bf16.msra.mxu0 %v3601
    %3674 = vmatpush.bf16.msra.mxu0 %v3597
    %3675 = vmatpush.bf16.msra.mxu0 %v3593
    %3676 = vmatpush.bf16.msra.mxu0 %v3589
    %3677 = vmatpush.bf16.msra.mxu0 %v3585
    %3678 = vmatpush.bf16.msra.mxu0 %v3581
    %3679 = vmatmul.bf16.gmra.mxu0 %v3450
    %v3680 = vpop.f32.mrf.mxu0
    %v3681 = vadd.f32 0.0, %v3680
    %v3682 = vpop.f32.mrf.mxu0
    %v3683 = vadd.f32 0.0, %v3682
    %3684 = vdwg.mxu0
    %3685 = vmatpush.bf16.msra.mxu0 %v3610
    %3686 = vmatpush.bf16.msra.mxu0 %v3606
    %3687 = vmatpush.bf16.msra.mxu0 %v3602
    %3688 = vmatpush.bf16.msra.mxu0 %v3598
    %3689 = vmatpush.bf16.msra.mxu0 %v3594
    %3690 = vmatpush.bf16.msra.mxu0 %v3590
    %3691 = vmatpush.bf16.msra.mxu0 %v3586
    %3692 = vmatpush.bf16.msra.mxu0 %v3582
    %3693 = vmatmul.bf16.gmra.mxu0 %v3450
    %v3694 = vpop.f32.mrf.mxu0
    %v3695 = vadd.f32 0.0, %v3694
    %v3696 = vpop.f32.mrf.mxu0
    %v3697 = vadd.f32 0.0, %v3696
    %3698 = vdwg.mxu0
    %v3731 = vunpack.c.l.b16 %v3418
    %v3732 = vunpack.c.h.b16 %v3418
    %v3733 = vunpack.c.l.b16 %v3419
    %v3734 = vunpack.c.h.b16 %v3419
    %v3735 = vunpack.c.l.b16 %v3420
    %v3736 = vunpack.c.h.b16 %v3420
    %v3737 = vunpack.c.l.b16 %v3421
    %v3738 = vunpack.c.h.b16 %v3421
    %v3739 = vunpack.c.l.b16 %v3422
    %v3740 = vunpack.c.h.b16 %v3422
    %v3741 = vunpack.c.l.b16 %v3423
    %v3742 = vunpack.c.h.b16 %v3423
    %v3743 = vunpack.c.l.b16 %v3424
    %v3744 = vunpack.c.h.b16 %v3424
    %v3745 = vunpack.c.l.b16 %v3425
    %v3746 = vunpack.c.h.b16 %v3425
    %v3747 = vunpack.c.l.b16 %v3426
    %v3748 = vunpack.c.h.b16 %v3426
    %v3749 = vunpack.c.l.b16 %v3427
    %v3750 = vunpack.c.h.b16 %v3427
    %v3751 = vunpack.c.l.b16 %v3428
    %v3752 = vunpack.c.h.b16 %v3428
    %v3753 = vunpack.c.l.b16 %v3429
    %v3754 = vunpack.c.h.b16 %v3429
    %v3755 = vunpack.c.l.b16 %v3430
    %v3756 = vunpack.c.h.b16 %v3430
    %v3757 = vunpack.c.l.b16 %v3431
    %v3758 = vunpack.c.h.b16 %v3431
    %v3759 = vunpack.c.l.b16 %v3432
    %v3760 = vunpack.c.h.b16 %v3432
    %v3761 = vunpack.c.l.b16 %v3433
    %v3762 = vunpack.c.h.b16 %v3433
    %v3763 = vunpack.c.l.b16 %v3434
    %v3764 = vunpack.c.h.b16 %v3434
    %v3765 = vunpack.c.l.b16 %v3435
    %v3766 = vunpack.c.h.b16 %v3435
    %v3767 = vunpack.c.l.b16 %v3436
    %v3768 = vunpack.c.h.b16 %v3436
    %v3769 = vunpack.c.l.b16 %v3437
    %v3770 = vunpack.c.h.b16 %v3437
    %v3771 = vunpack.c.l.b16 %v3438
    %v3772 = vunpack.c.h.b16 %v3438
    %v3773 = vunpack.c.l.b16 %v3439
    %v3774 = vunpack.c.h.b16 %v3439
    %v3775 = vunpack.c.l.b16 %v3440
    %v3776 = vunpack.c.h.b16 %v3440
    %v3777 = vunpack.c.l.b16 %v3441
    %v3778 = vunpack.c.h.b16 %v3441
    %v3779 = vunpack.c.l.b16 %v3442
    %v3780 = vunpack.c.h.b16 %v3442
    %v3781 = vunpack.c.l.b16 %v3443
    %v3782 = vunpack.c.h.b16 %v3443
    %v3783 = vunpack.c.l.b16 %v3444
    %v3784 = vunpack.c.h.b16 %v3444
    %v3785 = vunpack.c.l.b16 %v3445
    %v3786 = vunpack.c.h.b16 %v3445
    %v3787 = vunpack.c.l.b16 %v3446
    %v3788 = vunpack.c.h.b16 %v3446
    %v3789 = vunpack.c.l.b16 %v3447
    %v3790 = vunpack.c.h.b16 %v3447
    %v3791 = vunpack.c.l.b16 %v3448
    %v3792 = vunpack.c.h.b16 %v3448
    %v3793 = vunpack.c.l.b16 %v3449
    %v3794 = vunpack.c.h.b16 %v3449
    %v3795 = vpack.c.b16 %v3735, %v3731
    %v3796 = vpack.c.b16 %v3736, %v3732
    %v3797 = vpack.c.b16 %v3737, %v3733
    %v3798 = vpack.c.b16 %v3738, %v3734
    %v3799 = vpack.c.b16 %v3743, %v3739
    %v3800 = vpack.c.b16 %v3744, %v3740
    %v3801 = vpack.c.b16 %v3745, %v3741
    %v3802 = vpack.c.b16 %v3746, %v3742
    %v3803 = vpack.c.b16 %v3751, %v3747
    %v3804 = vpack.c.b16 %v3752, %v3748
    %v3805 = vpack.c.b16 %v3753, %v3749
    %v3806 = vpack.c.b16 %v3754, %v3750
    %v3807 = vpack.c.b16 %v3759, %v3755
    %v3808 = vpack.c.b16 %v3760, %v3756
    %v3809 = vpack.c.b16 %v3761, %v3757
    %v3810 = vpack.c.b16 %v3762, %v3758
    %v3811 = vpack.c.b16 %v3767, %v3763
    %v3812 = vpack.c.b16 %v3768, %v3764
    %v3813 = vpack.c.b16 %v3769, %v3765
    %v3814 = vpack.c.b16 %v3770, %v3766
    %v3815 = vpack.c.b16 %v3775, %v3771
    %v3816 = vpack.c.b16 %v3776, %v3772
    %v3817 = vpack.c.b16 %v3777, %v3773
    %v3818 = vpack.c.b16 %v3778, %v3774
    %v3819 = vpack.c.b16 %v3783, %v3779
    %v3820 = vpack.c.b16 %v3784, %v3780
    %v3821 = vpack.c.b16 %v3785, %v3781
    %v3822 = vpack.c.b16 %v3786, %v3782
    %v3823 = vpack.c.b16 %v3791, %v3787
    %v3824 = vpack.c.b16 %v3792, %v3788
    %v3825 = vpack.c.b16 %v3793, %v3789
    %v3826 = vpack.c.b16 %v3794, %v3790
    %3859 = vmatpush.bf16.msra.mxu0 %v3823
    %3860 = vmatpush.bf16.msra.mxu0 %v3819
    %3861 = vmatpush.bf16.msra.mxu0 %v3815
    %3862 = vmatpush.bf16.msra.mxu0 %v3811
    %3863 = vmatpush.bf16.msra.mxu0 %v3807
    %3864 = vmatpush.bf16.msra.mxu0 %v3803
    %3865 = vmatpush.bf16.msra.mxu0 %v3799
    %3866 = vmatpush.bf16.msra.mxu0 %v3795
    %3867 = vmatmul.bf16.gmra.mxu0 %v3413
    %v3868 = vpop.f32.mrf.mxu0
    %v3869 = vadd.f32 %v3653, %v3868
    %v3870 = vpop.f32.mrf.mxu0
    %v3871 = vadd.f32 %v3655, %v3870
    %3872 = vdwg.mxu0
    %3873 = vmatpush.bf16.msra.mxu0 %v3824
    %3874 = vmatpush.bf16.msra.mxu0 %v3820
    %3875 = vmatpush.bf16.msra.mxu0 %v3816
    %3876 = vmatpush.bf16.msra.mxu0 %v3812
    %3877 = vmatpush.bf16.msra.mxu0 %v3808
    %3878 = vmatpush.bf16.msra.mxu0 %v3804
    %3879 = vmatpush.bf16.msra.mxu0 %v3800
    %3880 = vmatpush.bf16.msra.mxu0 %v3796
    %3881 = vmatmul.bf16.gmra.mxu0 %v3413
    %v3882 = vpop.f32.mrf.mxu0
    %v3883 = vadd.f32 %v3667, %v3882
    %v3884 = vpop.f32.mrf.mxu0
    %v3885 = vadd.f32 %v3669, %v3884
    %3886 = vdwg.mxu0
    %3887 = vmatpush.bf16.msra.mxu0 %v3825
    %3888 = vmatpush.bf16.msra.mxu0 %v3821
    %3889 = vmatpush.bf16.msra.mxu0 %v3817
    %3890 = vmatpush.bf16.msra.mxu0 %v3813
    %3891 = vmatpush.bf16.msra.mxu0 %v3809
    %3892 = vmatpush.bf16.msra.mxu0 %v3805
    %3893 = vmatpush.bf16.msra.mxu0 %v3801
    %3894 = vmatpush.bf16.msra.mxu0 %v3797
    %3895 = vmatmul.bf16.gmra.mxu0 %v3413
    %v3896 = vpop.f32.mrf.mxu0
    %v3897 = vadd.f32 %v3681, %v3896
    %v3898 = vpop.f32.mrf.mxu0
    %v3899 = vadd.f32 %v3683, %v3898
    %3900 = vdwg.mxu0
    %3901 = vmatpush.bf16.msra.mxu0 %v3826
    %3902 = vmatpush.bf16.msra.mxu0 %v3822
    %3903 = vmatpush.bf16.msra.mxu0 %v3818
    %3904 = vmatpush.bf16.msra.mxu0 %v3814
    %3905 = vmatpush.bf16.msra.mxu0 %v3810
    %3906 = vmatpush.bf16.msra.mxu0 %v3806
    %3907 = vmatpush.bf16.msra.mxu0 %v3802
    %3908 = vmatpush.bf16.msra.mxu0 %v3798
    %3909 = vmatmul.bf16.gmra.mxu0 %v3413
    %v3910 = vpop.f32.mrf.mxu0
    %v3911 = vadd.f32 %v3695, %v3910
    %v3912 = vpop.f32.mrf.mxu0
    %v3913 = vadd.f32 %v3697, %v3912
    %3914 = vdwg.mxu0
    %v3915 = vld [vmem:[%s6] sm:$0xf]
    %v3917 = vperm.slane %v3915, 0
    %v3918 = vperm.slane %v3915, 1
    %v3919 = vperm.slane %v3915, 2
    %v3920 = vperm.slane %v3915, 3
    %v3925 = vadd.f32 %v3869, %v3917
    %v3926 = vadd.f32 %v3883, %v3918
    %v3927 = vadd.f32 %v3897, %v3919
    %v3928 = vadd.f32 %v3911, %v3920
    %v3929 = vadd.f32 %v3871, %v3917
    %v3930 = vadd.f32 %v3885, %v3918
    %v3931 = vadd.f32 %v3899, %v3919
    %v3932 = vadd.f32 %v3913, %v3920
    %v3933 = vxor.u32 %v3925, 2147483648
    %v3934 = vxor.u32 %v3929, 2147483648
    %v3935 = vmul.f32 %v3933, 1.442695
    %v3936 = vpow.pop %v3935
    %v3937 = vmul.f32 %v3934, 1.442695
    %v3938 = vpow.pop %v3937
    %v3939 = vadd.f32 %v3936, 1.0
    %v3940 = vadd.f32 %v3938, 1.0
    %v3941 = vrcp.pop %v3939
    %v3942 = vmul.f32 %v3939, %v3941
    %v3943 = vsub.f32 1.0, %v3942
    %v3944 = vmul.f32 %v3941, %v3943
    %v3945 = vadd.f32 %v3941, %v3944
    %vm3946 = vweird.f32 %v3939
    %vm3947 = vweird.f32 %v3941
    %vm3948 = vmor %vm3946, %vm3947
    %v3949 = vsel %vm3948, %v3941, %v3945
    %v3950 = vand.u32 2147483647, %v3939
    %vm3951 = vcmp.eq.f32.partialorder %v3950, 8.507059e+37
    %v3952 = vand.u32 %v3939, 2147483648
    %v3953 = vor.u32 1.1754944e-38, %v3952
    %v3954 = vsel %vm3951, %v3953, %v3949
    %v3955 = vmul.f32 1.0, %v3954
    %v3956 = vrcp.pop %v3940
    %v3957 = vmul.f32 %v3940, %v3956
    %v3958 = vsub.f32 1.0, %v3957
    %v3959 = vmul.f32 %v3956, %v3958
    %v3960 = vadd.f32 %v3956, %v3959
    %vm3961 = vweird.f32 %v3940
    %vm3962 = vweird.f32 %v3956
    %vm3963 = vmor %vm3961, %vm3962
    %v3964 = vsel %vm3963, %v3956, %v3960
    %v3965 = vand.u32 2147483647, %v3940
    %vm3966 = vcmp.eq.f32.partialorder %v3965, 8.507059e+37
    %v3967 = vand.u32 %v3940, 2147483648
    %v3968 = vor.u32 1.1754944e-38, %v3967
    %v3969 = vsel %vm3966, %v3968, %v3964
    %v3970 = vmul.f32 1.0, %v3969
    %v3971 = vxor.u32 %v3926, 2147483648
    %v3972 = vxor.u32 %v3930, 2147483648
    %v3973 = vmul.f32 %v3971, 1.442695
    %v3974 = vpow.pop %v3973
    %v3975 = vmul.f32 %v3972, 1.442695
    %v3976 = vpow.pop %v3975
    %v3977 = vadd.f32 %v3974, 1.0
    %v3978 = vadd.f32 %v3976, 1.0
    %v3979 = vrcp.pop %v3977
    %v3980 = vmul.f32 %v3977, %v3979
    %v3981 = vsub.f32 1.0, %v3980
    %v3982 = vmul.f32 %v3979, %v3981
    %v3983 = vadd.f32 %v3979, %v3982
    %vm3984 = vweird.f32 %v3977
    %vm3985 = vweird.f32 %v3979
    %vm3986 = vmor %vm3984, %vm3985
    %v3987 = vsel %vm3986, %v3979, %v3983
    %v3988 = vand.u32 2147483647, %v3977
    %vm3989 = vcmp.eq.f32.partialorder %v3988, 8.507059e+37
    %v3990 = vand.u32 %v3977, 2147483648
    %v3991 = vor.u32 1.1754944e-38, %v3990
    %v3992 = vsel %vm3989, %v3991, %v3987
    %v3993 = vmul.f32 1.0, %v3992
    %v3994 = vrcp.pop %v3978
    %v3995 = vmul.f32 %v3978, %v3994
    %v3996 = vsub.f32 1.0, %v3995
    %v3997 = vmul.f32 %v3994, %v3996
    %v3998 = vadd.f32 %v3994, %v3997
    %vm3999 = vweird.f32 %v3978
    %vm4000 = vweird.f32 %v3994
    %vm4001 = vmor %vm3999, %vm4000
    %v4002 = vsel %vm4001, %v3994, %v3998
    %v4003 = vand.u32 2147483647, %v3978
    %vm4004 = vcmp.eq.f32.partialorder %v4003, 8.507059e+37
    %v4005 = vand.u32 %v3978, 2147483648
    %v4006 = vor.u32 1.1754944e-38, %v4005
    %v4007 = vsel %vm4004, %v4006, %v4002
    %v4008 = vmul.f32 1.0, %v4007
    %v4009 = vtanh.pop %v3927
    %v4010 = vtanh.pop %v3931
    %v4011 = vxor.u32 %v3928, 2147483648
    %v4012 = vxor.u32 %v3932, 2147483648
    %v4013 = vmul.f32 %v4011, 1.442695
    %v4014 = vpow.pop %v4013
    %v4015 = vmul.f32 %v4012, 1.442695
    %v4016 = vpow.pop %v4015
    %v4017 = vadd.f32 %v4014, 1.0
    %v4018 = vadd.f32 %v4016, 1.0
    %v4019 = vrcp.pop %v4017
    %v4020 = vmul.f32 %v4017, %v4019
    %v4021 = vsub.f32 1.0, %v4020
    %v4022 = vmul.f32 %v4019, %v4021
    %v4023 = vadd.f32 %v4019, %v4022
    %vm4024 = vweird.f32 %v4017
    %vm4025 = vweird.f32 %v4019
    %vm4026 = vmor %vm4024, %vm4025
    %v4027 = vsel %vm4026, %v4019, %v4023
    %v4028 = vand.u32 2147483647, %v4017
    %vm4029 = vcmp.eq.f32.partialorder %v4028, 8.507059e+37
    %v4030 = vand.u32 %v4017, 2147483648
    %v4031 = vor.u32 1.1754944e-38, %v4030
    %v4032 = vsel %vm4029, %v4031, %v4027
    %v4033 = vmul.f32 1.0, %v4032
    %v4034 = vrcp.pop %v4018
    %v4035 = vmul.f32 %v4018, %v4034
    %v4036 = vsub.f32 1.0, %v4035
    %v4037 = vmul.f32 %v4034, %v4036
    %v4038 = vadd.f32 %v4034, %v4037
    %vm4039 = vweird.f32 %v4018
    %vm4040 = vweird.f32 %v4034
    %vm4041 = vmor %vm4039, %vm4040
    %v4042 = vsel %vm4041, %v4034, %v4038
    %v4043 = vand.u32 2147483647, %v4018
    %vm4044 = vcmp.eq.f32.partialorder %v4043, 8.507059e+37
    %v4045 = vand.u32 %v4018, 2147483648
    %v4046 = vor.u32 1.1754944e-38, %v4045
    %v4047 = vsel %vm4044, %v4046, %v4042
    %v4048 = vmul.f32 1.0, %v4047
    %v4049 = vmul.f32 %v3993, %v3416
    %v4050 = vmul.f32 %v4008, %v3417
    %v4051 = vmul.f32 %v3955, %v4009
    %v4052 = vmul.f32 %v3970, %v4010
    %v4053 = vadd.f32 %v4049, %v4051
    %v4054 = vadd.f32 %v4050, %v4052
    %v4055 = vtanh.pop %v4053
    %v4056 = vtanh.pop %v4054
    %v4057 = vmul.f32 %v4033, %v4055
    %v4058 = vmul.f32 %v4048, %v4056
    %4059 = vst [vmem:[#allocation4] sm:$0xff] %v4057
    %4060 = vst [vmem:[#allocation4 + $0x8] sm:$0xff] %v4058
    %4061 = vst [vmem:[#allocation5] sm:$0xff] %v4053
    %4062 = vst [vmem:[#allocation5 + $0x8] sm:$0xff] %v4054
    %v4063 = vpack.c.bf16 %v4057, %v4057
    %v4064 = vpack.c.bf16 %v4058, %v4058
    %s4065 = scalar_lea.vmem [#allocation17], 16
    %4066 = vst [vmem:[%s4065] sm:$0xf] %v4063
    %4067 = vst [vmem:[%s4065 + $0x4] sm:$0xf] %v4064
    %s4068 = scalar_lea.vmem [#allocation6], 24
    %v4069 = vld [vmem:[%s4068] sm:$0xf]
    %v4070 = vld [vmem:[%s4068 + $0x4] sm:$0xf]
    %v4071 = vld [vmem:[#allocation2] sm:$0xff]
    %v4072 = vld [vmem:[#allocation2 + $0x8] sm:$0xff]
    %v4073 = vld [vmem:[#allocation3] sm:$0xff]
    %v4074 = vld [vmem:[#allocation3 + $0x8] sm:$0xff]
    %v4075 = vld [vmem:[#allocation9] sm:$0xff]
    %v4076 = vld [vmem:[#allocation9 + $0x8] sm:$0xff]
    %v4077 = vld [vmem:[#allocation9 + $0x10] sm:$0xff]
    %v4078 = vld [vmem:[#allocation9 + $0x18] sm:$0xff]
    %v4079 = vld [vmem:[#allocation9 + $0x20] sm:$0xff]
    %v4080 = vld [vmem:[#allocation9 + $0x28] sm:$0xff]
    %v4081 = vld [vmem:[#allocation9 + $0x30] sm:$0xff]
    %v4082 = vld [vmem:[#allocation9 + $0x38] sm:$0xff]
    %v4083 = vld [vmem:[#allocation9 + $0x40] sm:$0xff]
    %v4084 = vld [vmem:[#allocation9 + $0x48] sm:$0xff]
    %v4085 = vld [vmem:[#allocation9 + $0x50] sm:$0xff]
    %v4086 = vld [vmem:[#allocation9 + $0x58] sm:$0xff]
    %v4087 = vld [vmem:[#allocation9 + $0x60] sm:$0xff]
    %v4088 = vld [vmem:[#allocation9 + $0x68] sm:$0xff]
    %v4089 = vld [vmem:[#allocation9 + $0x70] sm:$0xff]
    %v4090 = vld [vmem:[#allocation9 + $0x78] sm:$0xff]
    %v4091 = vld [vmem:[#allocation9 + $0x80] sm:$0xff]
    %v4092 = vld [vmem:[#allocation9 + $0x88] sm:$0xff]
    %v4093 = vld [vmem:[#allocation9 + $0x90] sm:$0xff]
    %v4094 = vld [vmem:[#allocation9 + $0x98] sm:$0xff]
    %v4095 = vld [vmem:[#allocation9 + $0xa0] sm:$0xff]
    %v4096 = vld [vmem:[#allocation9 + $0xa8] sm:$0xff]
    %v4097 = vld [vmem:[#allocation9 + $0xb0] sm:$0xff]
    %v4098 = vld [vmem:[#allocation9 + $0xb8] sm:$0xff]
    %v4099 = vld [vmem:[#allocation9 + $0xc0] sm:$0xff]
    %v4100 = vld [vmem:[#allocation9 + $0xc8] sm:$0xff]
    %v4101 = vld [vmem:[#allocation9 + $0xd0] sm:$0xff]
    %v4102 = vld [vmem:[#allocation9 + $0xd8] sm:$0xff]
    %v4103 = vld [vmem:[#allocation9 + $0xe0] sm:$0xff]
    %v4104 = vld [vmem:[#allocation9 + $0xe8] sm:$0xff]
    %v4105 = vld [vmem:[#allocation9 + $0xf0] sm:$0xff]
    %v4106 = vld [vmem:[#allocation9 + $0xf8] sm:$0xff]
    %v4107 = vpack.c.bf16 %v4072, %v4071
    %v4108 = vld [vmem:[#allocation11] sm:$0xff]
    %v4109 = vld [vmem:[#allocation11 + $0x8] sm:$0xff]
    %v4110 = vld [vmem:[#allocation11 + $0x10] sm:$0xff]
    %v4111 = vld [vmem:[#allocation11 + $0x18] sm:$0xff]
    %v4112 = vld [vmem:[#allocation11 + $0x20] sm:$0xff]
    %v4113 = vld [vmem:[#allocation11 + $0x28] sm:$0xff]
    %v4114 = vld [vmem:[#allocation11 + $0x30] sm:$0xff]
    %v4115 = vld [vmem:[#allocation11 + $0x38] sm:$0xff]
    %v4116 = vld [vmem:[#allocation11 + $0x40] sm:$0xff]
    %v4117 = vld [vmem:[#allocation11 + $0x48] sm:$0xff]
    %v4118 = vld [vmem:[#allocation11 + $0x50] sm:$0xff]
    %v4119 = vld [vmem:[#allocation11 + $0x58] sm:$0xff]
    %v4120 = vld [vmem:[#allocation11 + $0x60] sm:$0xff]
    %v4121 = vld [vmem:[#allocation11 + $0x68] sm:$0xff]
    %v4122 = vld [vmem:[#allocation11 + $0x70] sm:$0xff]
    %v4123 = vld [vmem:[#allocation11 + $0x78] sm:$0xff]
    %v4124 = vld [vmem:[#allocation11 + $0x80] sm:$0xff]
    %v4125 = vld [vmem:[#allocation11 + $0x88] sm:$0xff]
    %v4126 = vld [vmem:[#allocation11 + $0x90] sm:$0xff]
    %v4127 = vld [vmem:[#allocation11 + $0x98] sm:$0xff]
    %v4128 = vld [vmem:[#allocation11 + $0xa0] sm:$0xff]
    %v4129 = vld [vmem:[#allocation11 + $0xa8] sm:$0xff]
    %v4130 = vld [vmem:[#allocation11 + $0xb0] sm:$0xff]
    %v4131 = vld [vmem:[#allocation11 + $0xb8] sm:$0xff]
    %v4132 = vld [vmem:[#allocation11 + $0xc0] sm:$0xff]
    %v4133 = vld [vmem:[#allocation11 + $0xc8] sm:$0xff]
    %v4134 = vld [vmem:[#allocation11 + $0xd0] sm:$0xff]
    %v4135 = vld [vmem:[#allocation11 + $0xd8] sm:$0xff]
    %v4136 = vld [vmem:[#allocation11 + $0xe0] sm:$0xff]
    %v4137 = vld [vmem:[#allocation11 + $0xe8] sm:$0xff]
    %v4138 = vld [vmem:[#allocation11 + $0xf0] sm:$0xff]
    %v4139 = vld [vmem:[#allocation11 + $0xf8] sm:$0xff]
    %v4172 = vunpack.c.l.b16 %v4108
    %v4173 = vunpack.c.h.b16 %v4108
    %v4174 = vunpack.c.l.b16 %v4109
    %v4175 = vunpack.c.h.b16 %v4109
    %v4176 = vunpack.c.l.b16 %v4110
    %v4177 = vunpack.c.h.b16 %v4110
    %v4178 = vunpack.c.l.b16 %v4111
    %v4179 = vunpack.c.h.b16 %v4111
    %v4180 = vunpack.c.l.b16 %v4112
    %v4181 = vunpack.c.h.b16 %v4112
    %v4182 = vunpack.c.l.b16 %v4113
    %v4183 = vunpack.c.h.b16 %v4113
    %v4184 = vunpack.c.l.b16 %v4114
    %v4185 = vunpack.c.h.b16 %v4114
    %v4186 = vunpack.c.l.b16 %v4115
    %v4187 = vunpack.c.h.b16 %v4115
    %v4188 = vunpack.c.l.b16 %v4116
    %v4189 = vunpack.c.h.b16 %v4116
    %v4190 = vunpack.c.l.b16 %v4117
    %v4191 = vunpack.c.h.b16 %v4117
    %v4192 = vunpack.c.l.b16 %v4118
    %v4193 = vunpack.c.h.b16 %v4118
    %v4194 = vunpack.c.l.b16 %v4119
    %v4195 = vunpack.c.h.b16 %v4119
    %v4196 = vunpack.c.l.b16 %v4120
    %v4197 = vunpack.c.h.b16 %v4120
    %v4198 = vunpack.c.l.b16 %v4121
    %v4199 = vunpack.c.h.b16 %v4121
    %v4200 = vunpack.c.l.b16 %v4122
    %v4201 = vunpack.c.h.b16 %v4122
    %v4202 = vunpack.c.l.b16 %v4123
    %v4203 = vunpack.c.h.b16 %v4123
    %v4204 = vunpack.c.l.b16 %v4124
    %v4205 = vunpack.c.h.b16 %v4124
    %v4206 = vunpack.c.l.b16 %v4125
    %v4207 = vunpack.c.h.b16 %v4125
    %v4208 = vunpack.c.l.b16 %v4126
    %v4209 = vunpack.c.h.b16 %v4126
    %v4210 = vunpack.c.l.b16 %v4127
    %v4211 = vunpack.c.h.b16 %v4127
    %v4212 = vunpack.c.l.b16 %v4128
    %v4213 = vunpack.c.h.b16 %v4128
    %v4214 = vunpack.c.l.b16 %v4129
    %v4215 = vunpack.c.h.b16 %v4129
    %v4216 = vunpack.c.l.b16 %v4130
    %v4217 = vunpack.c.h.b16 %v4130
    %v4218 = vunpack.c.l.b16 %v4131
    %v4219 = vunpack.c.h.b16 %v4131
    %v4220 = vunpack.c.l.b16 %v4132
    %v4221 = vunpack.c.h.b16 %v4132
    %v4222 = vunpack.c.l.b16 %v4133
    %v4223 = vunpack.c.h.b16 %v4133
    %v4224 = vunpack.c.l.b16 %v4134
    %v4225 = vunpack.c.h.b16 %v4134
    %v4226 = vunpack.c.l.b16 %v4135
    %v4227 = vunpack.c.h.b16 %v4135
    %v4228 = vunpack.c.l.b16 %v4136
    %v4229 = vunpack.c.h.b16 %v4136
    %v4230 = vunpack.c.l.b16 %v4137
    %v4231 = vunpack.c.h.b16 %v4137
    %v4232 = vunpack.c.l.b16 %v4138
    %v4233 = vunpack.c.h.b16 %v4138
    %v4234 = vunpack.c.l.b16 %v4139
    %v4235 = vunpack.c.h.b16 %v4139
    %v4236 = vpack.c.b16 %v4176, %v4172
    %v4237 = vpack.c.b16 %v4177, %v4173
    %v4238 = vpack.c.b16 %v4178, %v4174
    %v4239 = vpack.c.b16 %v4179, %v4175
    %v4240 = vpack.c.b16 %v4184, %v4180
    %v4241 = vpack.c.b16 %v4185, %v4181
    %v4242 = vpack.c.b16 %v4186, %v4182
    %v4243 = vpack.c.b16 %v4187, %v4183
    %v4244 = vpack.c.b16 %v4192, %v4188
    %v4245 = vpack.c.b16 %v4193, %v4189
    %v4246 = vpack.c.b16 %v4194, %v4190
    %v4247 = vpack.c.b16 %v4195, %v4191
    %v4248 = vpack.c.b16 %v4200, %v4196
    %v4249 = vpack.c.b16 %v4201, %v4197
    %v4250 = vpack.c.b16 %v4202, %v4198
    %v4251 = vpack.c.b16 %v4203, %v4199
    %v4252 = vpack.c.b16 %v4208, %v4204
    %v4253 = vpack.c.b16 %v4209, %v4205
    %v4254 = vpack.c.b16 %v4210, %v4206
    %v4255 = vpack.c.b16 %v4211, %v4207
    %v4256 = vpack.c.b16 %v4216, %v4212
    %v4257 = vpack.c.b16 %v4217, %v4213
    %v4258 = vpack.c.b16 %v4218, %v4214
    %v4259 = vpack.c.b16 %v4219, %v4215
    %v4260 = vpack.c.b16 %v4224, %v4220
    %v4261 = vpack.c.b16 %v4225, %v4221
    %v4262 = vpack.c.b16 %v4226, %v4222
    %v4263 = vpack.c.b16 %v4227, %v4223
    %v4264 = vpack.c.b16 %v4232, %v4228
    %v4265 = vpack.c.b16 %v4233, %v4229
    %v4266 = vpack.c.b16 %v4234, %v4230
    %v4267 = vpack.c.b16 %v4235, %v4231
    %4300 = vmatpush.bf16.msra.mxu0 %v4264
    %4301 = vmatpush.bf16.msra.mxu0 %v4260
    %4302 = vmatpush.bf16.msra.mxu0 %v4256
    %4303 = vmatpush.bf16.msra.mxu0 %v4252
    %4304 = vmatpush.bf16.msra.mxu0 %v4248
    %4305 = vmatpush.bf16.msra.mxu0 %v4244
    %4306 = vmatpush.bf16.msra.mxu0 %v4240
    %4307 = vmatpush.bf16.msra.mxu0 %v4236
    %4308 = vmatmul.bf16.gmra.mxu0 %v4107
    %v4309 = vpop.f32.mrf.mxu0
    %v4310 = vadd.f32 0.0, %v4309
    %v4311 = vpop.f32.mrf.mxu0
    %v4312 = vadd.f32 0.0, %v4311
    %4313 = vdwg.mxu0
    %4314 = vmatpush.bf16.msra.mxu0 %v4265
    %4315 = vmatpush.bf16.msra.mxu0 %v4261
    %4316 = vmatpush.bf16.msra.mxu0 %v4257
    %4317 = vmatpush.bf16.msra.mxu0 %v4253
    %4318 = vmatpush.bf16.msra.mxu0 %v4249
    %4319 = vmatpush.bf16.msra.mxu0 %v4245
    %4320 = vmatpush.bf16.msra.mxu0 %v4241
    %4321 = vmatpush.bf16.msra.mxu0 %v4237
    %4322 = vmatmul.bf16.gmra.mxu0 %v4107
    %v4323 = vpop.f32.mrf.mxu0
    %v4324 = vadd.f32 0.0, %v4323
    %v4325 = vpop.f32.mrf.mxu0
    %v4326 = vadd.f32 0.0, %v4325
    %4327 = vdwg.mxu0
    %4328 = vmatpush.bf16.msra.mxu0 %v4266
    %4329 = vmatpush.bf16.msra.mxu0 %v4262
    %4330 = vmatpush.bf16.msra.mxu0 %v4258
    %4331 = vmatpush.bf16.msra.mxu0 %v4254
    %4332 = vmatpush.bf16.msra.mxu0 %v4250
    %4333 = vmatpush.bf16.msra.mxu0 %v4246
    %4334 = vmatpush.bf16.msra.mxu0 %v4242
    %4335 = vmatpush.bf16.msra.mxu0 %v4238
    %4336 = vmatmul.bf16.gmra.mxu0 %v4107
    %v4337 = vpop.f32.mrf.mxu0
    %v4338 = vadd.f32 0.0, %v4337
    %v4339 = vpop.f32.mrf.mxu0
    %v4340 = vadd.f32 0.0, %v4339
    %4341 = vdwg.mxu0
    %4342 = vmatpush.bf16.msra.mxu0 %v4267
    %4343 = vmatpush.bf16.msra.mxu0 %v4263
    %4344 = vmatpush.bf16.msra.mxu0 %v4259
    %4345 = vmatpush.bf16.msra.mxu0 %v4255
    %4346 = vmatpush.bf16.msra.mxu0 %v4251
    %4347 = vmatpush.bf16.msra.mxu0 %v4247
    %4348 = vmatpush.bf16.msra.mxu0 %v4243
    %4349 = vmatpush.bf16.msra.mxu0 %v4239
    %4350 = vmatmul.bf16.gmra.mxu0 %v4107
    %v4351 = vpop.f32.mrf.mxu0
    %v4352 = vadd.f32 0.0, %v4351
    %v4353 = vpop.f32.mrf.mxu0
    %v4354 = vadd.f32 0.0, %v4353
    %4355 = vdwg.mxu0
    %v4358 = vunpack.c.l.b16 %v4069
    %v4359 = vunpack.c.l.b16 %v4070
    %v4360 = vpack.c.b16 %v4359, %v4358
    %v4394 = vunpack.c.l.b16 %v4075
    %v4395 = vunpack.c.h.b16 %v4075
    %v4396 = vunpack.c.l.b16 %v4076
    %v4397 = vunpack.c.h.b16 %v4076
    %v4398 = vunpack.c.l.b16 %v4077
    %v4399 = vunpack.c.h.b16 %v4077
    %v4400 = vunpack.c.l.b16 %v4078
    %v4401 = vunpack.c.h.b16 %v4078
    %v4402 = vunpack.c.l.b16 %v4079
    %v4403 = vunpack.c.h.b16 %v4079
    %v4404 = vunpack.c.l.b16 %v4080
    %v4405 = vunpack.c.h.b16 %v4080
    %v4406 = vunpack.c.l.b16 %v4081
    %v4407 = vunpack.c.h.b16 %v4081
    %v4408 = vunpack.c.l.b16 %v4082
    %v4409 = vunpack.c.h.b16 %v4082
    %v4410 = vunpack.c.l.b16 %v4083
    %v4411 = vunpack.c.h.b16 %v4083
    %v4412 = vunpack.c.l.b16 %v4084
    %v4413 = vunpack.c.h.b16 %v4084
    %v4414 = vunpack.c.l.b16 %v4085
    %v4415 = vunpack.c.h.b16 %v4085
    %v4416 = vunpack.c.l.b16 %v4086
    %v4417 = vunpack.c.h.b16 %v4086
    %v4418 = vunpack.c.l.b16 %v4087
    %v4419 = vunpack.c.h.b16 %v4087
    %v4420 = vunpack.c.l.b16 %v4088
    %v4421 = vunpack.c.h.b16 %v4088
    %v4422 = vunpack.c.l.b16 %v4089
    %v4423 = vunpack.c.h.b16 %v4089
    %v4424 = vunpack.c.l.b16 %v4090
    %v4425 = vunpack.c.h.b16 %v4090
    %v4426 = vunpack.c.l.b16 %v4091
    %v4427 = vunpack.c.h.b16 %v4091
    %v4428 = vunpack.c.l.b16 %v4092
    %v4429 = vunpack.c.h.b16 %v4092
    %v4430 = vunpack.c.l.b16 %v4093
    %v4431 = vunpack.c.h.b16 %v4093
    %v4432 = vunpack.c.l.b16 %v4094
    %v4433 = vunpack.c.h.b16 %v4094
    %v4434 = vunpack.c.l.b16 %v4095
    %v4435 = vunpack.c.h.b16 %v4095
    %v4436 = vunpack.c.l.b16 %v4096
    %v4437 = vunpack.c.h.b16 %v4096
    %v4438 = vunpack.c.l.b16 %v4097
    %v4439 = vunpack.c.h.b16 %v4097
    %v4440 = vunpack.c.l.b16 %v4098
    %v4441 = vunpack.c.h.b16 %v4098
    %v4442 = vunpack.c.l.b16 %v4099
    %v4443 = vunpack.c.h.b16 %v4099
    %v4444 = vunpack.c.l.b16 %v4100
    %v4445 = vunpack.c.h.b16 %v4100
    %v4446 = vunpack.c.l.b16 %v4101
    %v4447 = vunpack.c.h.b16 %v4101
    %v4448 = vunpack.c.l.b16 %v4102
    %v4449 = vunpack.c.h.b16 %v4102
    %v4450 = vunpack.c.l.b16 %v4103
    %v4451 = vunpack.c.h.b16 %v4103
    %v4452 = vunpack.c.l.b16 %v4104
    %v4453 = vunpack.c.h.b16 %v4104
    %v4454 = vunpack.c.l.b16 %v4105
    %v4455 = vunpack.c.h.b16 %v4105
    %v4456 = vunpack.c.l.b16 %v4106
    %v4457 = vunpack.c.h.b16 %v4106
    %v4458 = vpack.c.b16 %v4398, %v4394
    %v4459 = vpack.c.b16 %v4399, %v4395
    %v4460 = vpack.c.b16 %v4400, %v4396
    %v4461 = vpack.c.b16 %v4401, %v4397
    %v4462 = vpack.c.b16 %v4406, %v4402
    %v4463 = vpack.c.b16 %v4407, %v4403
    %v4464 = vpack.c.b16 %v4408, %v4404
    %v4465 = vpack.c.b16 %v4409, %v4405
    %v4466 = vpack.c.b16 %v4414, %v4410
    %v4467 = vpack.c.b16 %v4415, %v4411
    %v4468 = vpack.c.b16 %v4416, %v4412
    %v4469 = vpack.c.b16 %v4417, %v4413
    %v4470 = vpack.c.b16 %v4422, %v4418
    %v4471 = vpack.c.b16 %v4423, %v4419
    %v4472 = vpack.c.b16 %v4424, %v4420
    %v4473 = vpack.c.b16 %v4425, %v4421
    %v4474 = vpack.c.b16 %v4430, %v4426
    %v4475 = vpack.c.b16 %v4431, %v4427
    %v4476 = vpack.c.b16 %v4432, %v4428
    %v4477 = vpack.c.b16 %v4433, %v4429
    %v4478 = vpack.c.b16 %v4438, %v4434
    %v4479 = vpack.c.b16 %v4439, %v4435
    %v4480 = vpack.c.b16 %v4440, %v4436
    %v4481 = vpack.c.b16 %v4441, %v4437
    %v4482 = vpack.c.b16 %v4446, %v4442
    %v4483 = vpack.c.b16 %v4447, %v4443
    %v4484 = vpack.c.b16 %v4448, %v4444
    %v4485 = vpack.c.b16 %v4449, %v4445
    %v4486 = vpack.c.b16 %v4454, %v4450
    %v4487 = vpack.c.b16 %v4455, %v4451
    %v4488 = vpack.c.b16 %v4456, %v4452
    %v4489 = vpack.c.b16 %v4457, %v4453
    %4522 = vmatpush.bf16.msra.mxu0 %v4486
    %4523 = vmatpush.bf16.msra.mxu0 %v4482
    %4524 = vmatpush.bf16.msra.mxu0 %v4478
    %4525 = vmatpush.bf16.msra.mxu0 %v4474
    %4526 = vmatpush.bf16.msra.mxu0 %v4470
    %4527 = vmatpush.bf16.msra.mxu0 %v4466
    %4528 = vmatpush.bf16.msra.mxu0 %v4462
    %4529 = vmatpush.bf16.msra.mxu0 %v4458
    %4530 = vmatmul.bf16.gmra.mxu0 %v4360
    %v4531 = vpop.f32.mrf.mxu0
    %v4532 = vadd.f32 %v4310, %v4531
    %v4533 = vpop.f32.mrf.mxu0
    %v4534 = vadd.f32 %v4312, %v4533
    %4535 = vdwg.mxu0
    %4536 = vmatpush.bf16.msra.mxu0 %v4487
    %4537 = vmatpush.bf16.msra.mxu0 %v4483
    %4538 = vmatpush.bf16.msra.mxu0 %v4479
    %4539 = vmatpush.bf16.msra.mxu0 %v4475
    %4540 = vmatpush.bf16.msra.mxu0 %v4471
    %4541 = vmatpush.bf16.msra.mxu0 %v4467
    %4542 = vmatpush.bf16.msra.mxu0 %v4463
    %4543 = vmatpush.bf16.msra.mxu0 %v4459
    %4544 = vmatmul.bf16.gmra.mxu0 %v4360
    %v4545 = vpop.f32.mrf.mxu0
    %v4546 = vadd.f32 %v4324, %v4545
    %v4547 = vpop.f32.mrf.mxu0
    %v4548 = vadd.f32 %v4326, %v4547
    %4549 = vdwg.mxu0
    %4550 = vmatpush.bf16.msra.mxu0 %v4488
    %4551 = vmatpush.bf16.msra.mxu0 %v4484
    %4552 = vmatpush.bf16.msra.mxu0 %v4480
    %4553 = vmatpush.bf16.msra.mxu0 %v4476
    %4554 = vmatpush.bf16.msra.mxu0 %v4472
    %4555 = vmatpush.bf16.msra.mxu0 %v4468
    %4556 = vmatpush.bf16.msra.mxu0 %v4464
    %4557 = vmatpush.bf16.msra.mxu0 %v4460
    %4558 = vmatmul.bf16.gmra.mxu0 %v4360
    %v4559 = vpop.f32.mrf.mxu0
    %v4560 = vadd.f32 %v4338, %v4559
    %v4561 = vpop.f32.mrf.mxu0
    %v4562 = vadd.f32 %v4340, %v4561
    %4563 = vdwg.mxu0
    %4564 = vmatpush.bf16.msra.mxu0 %v4489
    %4565 = vmatpush.bf16.msra.mxu0 %v4485
    %4566 = vmatpush.bf16.msra.mxu0 %v4481
    %4567 = vmatpush.bf16.msra.mxu0 %v4477
    %4568 = vmatpush.bf16.msra.mxu0 %v4473
    %4569 = vmatpush.bf16.msra.mxu0 %v4469
    %4570 = vmatpush.bf16.msra.mxu0 %v4465
    %4571 = vmatpush.bf16.msra.mxu0 %v4461
    %4572 = vmatmul.bf16.gmra.mxu0 %v4360
    %v4573 = vpop.f32.mrf.mxu0
    %v4574 = vadd.f32 %v4352, %v4573
    %v4575 = vpop.f32.mrf.mxu0
    %v4576 = vadd.f32 %v4354, %v4575
    %4577 = vdwg.mxu0
    %v4578 = vld [vmem:[#allocation12] sm:$0xf]
    %v4580 = vperm.slane %v4578, 0
    %v4581 = vperm.slane %v4578, 1
    %v4582 = vperm.slane %v4578, 2
    %v4583 = vperm.slane %v4578, 3
    %v4588 = vadd.f32 %v4532, %v4580
    %v4589 = vadd.f32 %v4546, %v4581
    %v4590 = vadd.f32 %v4560, %v4582
    %v4591 = vadd.f32 %v4574, %v4583
    %v4592 = vadd.f32 %v4534, %v4580
    %v4593 = vadd.f32 %v4548, %v4581
    %v4594 = vadd.f32 %v4562, %v4582
    %v4595 = vadd.f32 %v4576, %v4583
    %v4596 = vxor.u32 %v4588, 2147483648
    %v4597 = vxor.u32 %v4592, 2147483648
    %v4598 = vmul.f32 %v4596, 1.442695
    %v4599 = vpow.pop %v4598
    %v4600 = vmul.f32 %v4597, 1.442695
    %v4601 = vpow.pop %v4600
    %v4602 = vadd.f32 %v4599, 1.0
    %v4603 = vadd.f32 %v4601, 1.0
    %v4604 = vrcp.pop %v4602
    %v4605 = vmul.f32 %v4602, %v4604
    %v4606 = vsub.f32 1.0, %v4605
    %v4607 = vmul.f32 %v4604, %v4606
    %v4608 = vadd.f32 %v4604, %v4607
    %vm4609 = vweird.f32 %v4602
    %vm4610 = vweird.f32 %v4604
    %vm4611 = vmor %vm4609, %vm4610
    %v4612 = vsel %vm4611, %v4604, %v4608
    %v4613 = vand.u32 2147483647, %v4602
    %vm4614 = vcmp.eq.f32.partialorder %v4613, 8.507059e+37
    %v4615 = vand.u32 %v4602, 2147483648
    %v4616 = vor.u32 1.1754944e-38, %v4615
    %v4617 = vsel %vm4614, %v4616, %v4612
    %v4618 = vmul.f32 1.0, %v4617
    %v4619 = vrcp.pop %v4603
    %v4620 = vmul.f32 %v4603, %v4619
    %v4621 = vsub.f32 1.0, %v4620
    %v4622 = vmul.f32 %v4619, %v4621
    %v4623 = vadd.f32 %v4619, %v4622
    %vm4624 = vweird.f32 %v4603
    %vm4625 = vweird.f32 %v4619
    %vm4626 = vmor %vm4624, %vm4625
    %v4627 = vsel %vm4626, %v4619, %v4623
    %v4628 = vand.u32 2147483647, %v4603
    %vm4629 = vcmp.eq.f32.partialorder %v4628, 8.507059e+37
    %v4630 = vand.u32 %v4603, 2147483648
    %v4631 = vor.u32 1.1754944e-38, %v4630
    %v4632 = vsel %vm4629, %v4631, %v4627
    %v4633 = vmul.f32 1.0, %v4632
    %v4634 = vxor.u32 %v4589, 2147483648
    %v4635 = vxor.u32 %v4593, 2147483648
    %v4636 = vmul.f32 %v4634, 1.442695
    %v4637 = vpow.pop %v4636
    %v4638 = vmul.f32 %v4635, 1.442695
    %v4639 = vpow.pop %v4638
    %v4640 = vadd.f32 %v4637, 1.0
    %v4641 = vadd.f32 %v4639, 1.0
    %v4642 = vrcp.pop %v4640
    %v4643 = vmul.f32 %v4640, %v4642
    %v4644 = vsub.f32 1.0, %v4643
    %v4645 = vmul.f32 %v4642, %v4644
    %v4646 = vadd.f32 %v4642, %v4645
    %vm4647 = vweird.f32 %v4640
    %vm4648 = vweird.f32 %v4642
    %vm4649 = vmor %vm4647, %vm4648
    %v4650 = vsel %vm4649, %v4642, %v4646
    %v4651 = vand.u32 2147483647, %v4640
    %vm4652 = vcmp.eq.f32.partialorder %v4651, 8.507059e+37
    %v4653 = vand.u32 %v4640, 2147483648
    %v4654 = vor.u32 1.1754944e-38, %v4653
    %v4655 = vsel %vm4652, %v4654, %v4650
    %v4656 = vmul.f32 1.0, %v4655
    %v4657 = vrcp.pop %v4641
    %v4658 = vmul.f32 %v4641, %v4657
    %v4659 = vsub.f32 1.0, %v4658
    %v4660 = vmul.f32 %v4657, %v4659
    %v4661 = vadd.f32 %v4657, %v4660
    %vm4662 = vweird.f32 %v4641
    %vm4663 = vweird.f32 %v4657
    %vm4664 = vmor %vm4662, %vm4663
    %v4665 = vsel %vm4664, %v4657, %v4661
    %v4666 = vand.u32 2147483647, %v4641
    %vm4667 = vcmp.eq.f32.partialorder %v4666, 8.507059e+37
    %v4668 = vand.u32 %v4641, 2147483648
    %v4669 = vor.u32 1.1754944e-38, %v4668
    %v4670 = vsel %vm4667, %v4669, %v4665
    %v4671 = vmul.f32 1.0, %v4670
    %v4672 = vtanh.pop %v4590
    %v4673 = vtanh.pop %v4594
    %v4674 = vxor.u32 %v4591, 2147483648
    %v4675 = vxor.u32 %v4595, 2147483648
    %v4676 = vmul.f32 %v4674, 1.442695
    %v4677 = vpow.pop %v4676
    %v4678 = vmul.f32 %v4675, 1.442695
    %v4679 = vpow.pop %v4678
    %v4680 = vadd.f32 %v4677, 1.0
    %v4681 = vadd.f32 %v4679, 1.0
    %v4682 = vrcp.pop %v4680
    %v4683 = vmul.f32 %v4680, %v4682
    %v4684 = vsub.f32 1.0, %v4683
    %v4685 = vmul.f32 %v4682, %v4684
    %v4686 = vadd.f32 %v4682, %v4685
    %vm4687 = vweird.f32 %v4680
    %vm4688 = vweird.f32 %v4682
    %vm4689 = vmor %vm4687, %vm4688
    %v4690 = vsel %vm4689, %v4682, %v4686
    %v4691 = vand.u32 2147483647, %v4680
    %vm4692 = vcmp.eq.f32.partialorder %v4691, 8.507059e+37
    %v4693 = vand.u32 %v4680, 2147483648
    %v4694 = vor.u32 1.1754944e-38, %v4693
    %v4695 = vsel %vm4692, %v4694, %v4690
    %v4696 = vmul.f32 1.0, %v4695
    %v4697 = vrcp.pop %v4681
    %v4698 = vmul.f32 %v4681, %v4697
    %v4699 = vsub.f32 1.0, %v4698
    %v4700 = vmul.f32 %v4697, %v4699
    %v4701 = vadd.f32 %v4697, %v4700
    %vm4702 = vweird.f32 %v4681
    %vm4703 = vweird.f32 %v4697
    %vm4704 = vmor %vm4702, %vm4703
    %v4705 = vsel %vm4704, %v4697, %v4701
    %v4706 = vand.u32 2147483647, %v4681
    %vm4707 = vcmp.eq.f32.partialorder %v4706, 8.507059e+37
    %v4708 = vand.u32 %v4681, 2147483648
    %v4709 = vor.u32 1.1754944e-38, %v4708
    %v4710 = vsel %vm4707, %v4709, %v4705
    %v4711 = vmul.f32 1.0, %v4710
    %v4712 = vmul.f32 %v4656, %v4073
    %v4713 = vmul.f32 %v4671, %v4074
    %v4714 = vmul.f32 %v4618, %v4672
    %v4715 = vmul.f32 %v4633, %v4673
    %v4716 = vadd.f32 %v4712, %v4714
    %v4717 = vadd.f32 %v4713, %v4715
    %v4718 = vtanh.pop %v4716
    %v4719 = vtanh.pop %v4717
    %v4720 = vmul.f32 %v4696, %v4718
    %v4721 = vmul.f32 %v4711, %v4719
    %4722 = vst [vmem:[#allocation2] sm:$0xff] %v4720
    %4723 = vst [vmem:[#allocation2 + $0x8] sm:$0xff] %v4721
    %4724 = vst [vmem:[#allocation3] sm:$0xff] %v4716
    %4725 = vst [vmem:[#allocation3 + $0x8] sm:$0xff] %v4717
    %v4726 = vpack.c.bf16 %v4721, %v4720
    %v4727 = vld [vmem:[#allocation4] sm:$0xff]
    %v4728 = vld [vmem:[#allocation4 + $0x8] sm:$0xff]
    %v4729 = vld [vmem:[#allocation5] sm:$0xff]
    %v4730 = vld [vmem:[#allocation5 + $0x8] sm:$0xff]
    %v4731 = vld [vmem:[#allocation14] sm:$0xff]
    %v4732 = vld [vmem:[#allocation14 + $0x8] sm:$0xff]
    %v4733 = vld [vmem:[#allocation14 + $0x10] sm:$0xff]
    %v4734 = vld [vmem:[#allocation14 + $0x18] sm:$0xff]
    %v4735 = vld [vmem:[#allocation14 + $0x20] sm:$0xff]
    %v4736 = vld [vmem:[#allocation14 + $0x28] sm:$0xff]
    %v4737 = vld [vmem:[#allocation14 + $0x30] sm:$0xff]
    %v4738 = vld [vmem:[#allocation14 + $0x38] sm:$0xff]
    %v4739 = vld [vmem:[#allocation14 + $0x40] sm:$0xff]
    %v4740 = vld [vmem:[#allocation14 + $0x48] sm:$0xff]
    %v4741 = vld [vmem:[#allocation14 + $0x50] sm:$0xff]
    %v4742 = vld [vmem:[#allocation14 + $0x58] sm:$0xff]
    %v4743 = vld [vmem:[#allocation14 + $0x60] sm:$0xff]
    %v4744 = vld [vmem:[#allocation14 + $0x68] sm:$0xff]
    %v4745 = vld [vmem:[#allocation14 + $0x70] sm:$0xff]
    %v4746 = vld [vmem:[#allocation14 + $0x78] sm:$0xff]
    %v4747 = vld [vmem:[#allocation14 + $0x80] sm:$0xff]
    %v4748 = vld [vmem:[#allocation14 + $0x88] sm:$0xff]
    %v4749 = vld [vmem:[#allocation14 + $0x90] sm:$0xff]
    %v4750 = vld [vmem:[#allocation14 + $0x98] sm:$0xff]
    %v4751 = vld [vmem:[#allocation14 + $0xa0] sm:$0xff]
    %v4752 = vld [vmem:[#allocation14 + $0xa8] sm:$0xff]
    %v4753 = vld [vmem:[#allocation14 + $0xb0] sm:$0xff]
    %v4754 = vld [vmem:[#allocation14 + $0xb8] sm:$0xff]
    %v4755 = vld [vmem:[#allocation14 + $0xc0] sm:$0xff]
    %v4756 = vld [vmem:[#allocation14 + $0xc8] sm:$0xff]
    %v4757 = vld [vmem:[#allocation14 + $0xd0] sm:$0xff]
    %v4758 = vld [vmem:[#allocation14 + $0xd8] sm:$0xff]
    %v4759 = vld [vmem:[#allocation14 + $0xe0] sm:$0xff]
    %v4760 = vld [vmem:[#allocation14 + $0xe8] sm:$0xff]
    %v4761 = vld [vmem:[#allocation14 + $0xf0] sm:$0xff]
    %v4762 = vld [vmem:[#allocation14 + $0xf8] sm:$0xff]
    %v4763 = vpack.c.bf16 %v4728, %v4727
    %v4764 = vld [vmem:[#allocation15] sm:$0xff]
    %v4765 = vld [vmem:[#allocation15 + $0x8] sm:$0xff]
    %v4766 = vld [vmem:[#allocation15 + $0x10] sm:$0xff]
    %v4767 = vld [vmem:[#allocation15 + $0x18] sm:$0xff]
    %v4768 = vld [vmem:[#allocation15 + $0x20] sm:$0xff]
    %v4769 = vld [vmem:[#allocation15 + $0x28] sm:$0xff]
    %v4770 = vld [vmem:[#allocation15 + $0x30] sm:$0xff]
    %v4771 = vld [vmem:[#allocation15 + $0x38] sm:$0xff]
    %v4772 = vld [vmem:[#allocation15 + $0x40] sm:$0xff]
    %v4773 = vld [vmem:[#allocation15 + $0x48] sm:$0xff]
    %v4774 = vld [vmem:[#allocation15 + $0x50] sm:$0xff]
    %v4775 = vld [vmem:[#allocation15 + $0x58] sm:$0xff]
    %v4776 = vld [vmem:[#allocation15 + $0x60] sm:$0xff]
    %v4777 = vld [vmem:[#allocation15 + $0x68] sm:$0xff]
    %v4778 = vld [vmem:[#allocation15 + $0x70] sm:$0xff]
    %v4779 = vld [vmem:[#allocation15 + $0x78] sm:$0xff]
    %v4780 = vld [vmem:[#allocation15 + $0x80] sm:$0xff]
    %v4781 = vld [vmem:[#allocation15 + $0x88] sm:$0xff]
    %v4782 = vld [vmem:[#allocation15 + $0x90] sm:$0xff]
    %v4783 = vld [vmem:[#allocation15 + $0x98] sm:$0xff]
    %v4784 = vld [vmem:[#allocation15 + $0xa0] sm:$0xff]
    %v4785 = vld [vmem:[#allocation15 + $0xa8] sm:$0xff]
    %v4786 = vld [vmem:[#allocation15 + $0xb0] sm:$0xff]
    %v4787 = vld [vmem:[#allocation15 + $0xb8] sm:$0xff]
    %v4788 = vld [vmem:[#allocation15 + $0xc0] sm:$0xff]
    %v4789 = vld [vmem:[#allocation15 + $0xc8] sm:$0xff]
    %v4790 = vld [vmem:[#allocation15 + $0xd0] sm:$0xff]
    %v4791 = vld [vmem:[#allocation15 + $0xd8] sm:$0xff]
    %v4792 = vld [vmem:[#allocation15 + $0xe0] sm:$0xff]
    %v4793 = vld [vmem:[#allocation15 + $0xe8] sm:$0xff]
    %v4794 = vld [vmem:[#allocation15 + $0xf0] sm:$0xff]
    %v4795 = vld [vmem:[#allocation15 + $0xf8] sm:$0xff]
    %v4828 = vunpack.c.l.b16 %v4764
    %v4829 = vunpack.c.h.b16 %v4764
    %v4830 = vunpack.c.l.b16 %v4765
    %v4831 = vunpack.c.h.b16 %v4765
    %v4832 = vunpack.c.l.b16 %v4766
    %v4833 = vunpack.c.h.b16 %v4766
    %v4834 = vunpack.c.l.b16 %v4767
    %v4835 = vunpack.c.h.b16 %v4767
    %v4836 = vunpack.c.l.b16 %v4768
    %v4837 = vunpack.c.h.b16 %v4768
    %v4838 = vunpack.c.l.b16 %v4769
    %v4839 = vunpack.c.h.b16 %v4769
    %v4840 = vunpack.c.l.b16 %v4770
    %v4841 = vunpack.c.h.b16 %v4770
    %v4842 = vunpack.c.l.b16 %v4771
    %v4843 = vunpack.c.h.b16 %v4771
    %v4844 = vunpack.c.l.b16 %v4772
    %v4845 = vunpack.c.h.b16 %v4772
    %v4846 = vunpack.c.l.b16 %v4773
    %v4847 = vunpack.c.h.b16 %v4773
    %v4848 = vunpack.c.l.b16 %v4774
    %v4849 = vunpack.c.h.b16 %v4774
    %v4850 = vunpack.c.l.b16 %v4775
    %v4851 = vunpack.c.h.b16 %v4775
    %v4852 = vunpack.c.l.b16 %v4776
    %v4853 = vunpack.c.h.b16 %v4776
    %v4854 = vunpack.c.l.b16 %v4777
    %v4855 = vunpack.c.h.b16 %v4777
    %v4856 = vunpack.c.l.b16 %v4778
    %v4857 = vunpack.c.h.b16 %v4778
    %v4858 = vunpack.c.l.b16 %v4779
    %v4859 = vunpack.c.h.b16 %v4779
    %v4860 = vunpack.c.l.b16 %v4780
    %v4861 = vunpack.c.h.b16 %v4780
    %v4862 = vunpack.c.l.b16 %v4781
    %v4863 = vunpack.c.h.b16 %v4781
    %v4864 = vunpack.c.l.b16 %v4782
    %v4865 = vunpack.c.h.b16 %v4782
    %v4866 = vunpack.c.l.b16 %v4783
    %v4867 = vunpack.c.h.b16 %v4783
    %v4868 = vunpack.c.l.b16 %v4784
    %v4869 = vunpack.c.h.b16 %v4784
    %v4870 = vunpack.c.l.b16 %v4785
    %v4871 = vunpack.c.h.b16 %v4785
    %v4872 = vunpack.c.l.b16 %v4786
    %v4873 = vunpack.c.h.b16 %v4786
    %v4874 = vunpack.c.l.b16 %v4787
    %v4875 = vunpack.c.h.b16 %v4787
    %v4876 = vunpack.c.l.b16 %v4788
    %v4877 = vunpack.c.h.b16 %v4788
    %v4878 = vunpack.c.l.b16 %v4789
    %v4879 = vunpack.c.h.b16 %v4789
    %v4880 = vunpack.c.l.b16 %v4790
    %v4881 = vunpack.c.h.b16 %v4790
    %v4882 = vunpack.c.l.b16 %v4791
    %v4883 = vunpack.c.h.b16 %v4791
    %v4884 = vunpack.c.l.b16 %v4792
    %v4885 = vunpack.c.h.b16 %v4792
    %v4886 = vunpack.c.l.b16 %v4793
    %v4887 = vunpack.c.h.b16 %v4793
    %v4888 = vunpack.c.l.b16 %v4794
    %v4889 = vunpack.c.h.b16 %v4794
    %v4890 = vunpack.c.l.b16 %v4795
    %v4891 = vunpack.c.h.b16 %v4795
    %v4892 = vpack.c.b16 %v4832, %v4828
    %v4893 = vpack.c.b16 %v4833, %v4829
    %v4894 = vpack.c.b16 %v4834, %v4830
    %v4895 = vpack.c.b16 %v4835, %v4831
    %v4896 = vpack.c.b16 %v4840, %v4836
    %v4897 = vpack.c.b16 %v4841, %v4837
    %v4898 = vpack.c.b16 %v4842, %v4838
    %v4899 = vpack.c.b16 %v4843, %v4839
    %v4900 = vpack.c.b16 %v4848, %v4844
    %v4901 = vpack.c.b16 %v4849, %v4845
    %v4902 = vpack.c.b16 %v4850, %v4846
    %v4903 = vpack.c.b16 %v4851, %v4847
    %v4904 = vpack.c.b16 %v4856, %v4852
    %v4905 = vpack.c.b16 %v4857, %v4853
    %v4906 = vpack.c.b16 %v4858, %v4854
    %v4907 = vpack.c.b16 %v4859, %v4855
    %v4908 = vpack.c.b16 %v4864, %v4860
    %v4909 = vpack.c.b16 %v4865, %v4861
    %v4910 = vpack.c.b16 %v4866, %v4862
    %v4911 = vpack.c.b16 %v4867, %v4863
    %v4912 = vpack.c.b16 %v4872, %v4868
    %v4913 = vpack.c.b16 %v4873, %v4869
    %v4914 = vpack.c.b16 %v4874, %v4870
    %v4915 = vpack.c.b16 %v4875, %v4871
    %v4916 = vpack.c.b16 %v4880, %v4876
    %v4917 = vpack.c.b16 %v4881, %v4877
    %v4918 = vpack.c.b16 %v4882, %v4878
    %v4919 = vpack.c.b16 %v4883, %v4879
    %v4920 = vpack.c.b16 %v4888, %v4884
    %v4921 = vpack.c.b16 %v4889, %v4885
    %v4922 = vpack.c.b16 %v4890, %v4886
    %v4923 = vpack.c.b16 %v4891, %v4887
    %4956 = vmatpush.bf16.msra.mxu0 %v4920
    %4957 = vmatpush.bf16.msra.mxu0 %v4916
    %4958 = vmatpush.bf16.msra.mxu0 %v4912
    %4959 = vmatpush.bf16.msra.mxu0 %v4908
    %4960 = vmatpush.bf16.msra.mxu0 %v4904
    %4961 = vmatpush.bf16.msra.mxu0 %v4900
    %4962 = vmatpush.bf16.msra.mxu0 %v4896
    %4963 = vmatpush.bf16.msra.mxu0 %v4892
    %4964 = vmatmul.bf16.gmra.mxu0 %v4763
    %v4965 = vpop.f32.mrf.mxu0
    %v4966 = vadd.f32 0.0, %v4965
    %v4967 = vpop.f32.mrf.mxu0
    %v4968 = vadd.f32 0.0, %v4967
    %4969 = vdwg.mxu0
    %4970 = vmatpush.bf16.msra.mxu0 %v4921
    %4971 = vmatpush.bf16.msra.mxu0 %v4917
    %4972 = vmatpush.bf16.msra.mxu0 %v4913
    %4973 = vmatpush.bf16.msra.mxu0 %v4909
    %4974 = vmatpush.bf16.msra.mxu0 %v4905
    %4975 = vmatpush.bf16.msra.mxu0 %v4901
    %4976 = vmatpush.bf16.msra.mxu0 %v4897
    %4977 = vmatpush.bf16.msra.mxu0 %v4893
    %4978 = vmatmul.bf16.gmra.mxu0 %v4763
    %v4979 = vpop.f32.mrf.mxu0
    %v4980 = vadd.f32 0.0, %v4979
    %v4981 = vpop.f32.mrf.mxu0
    %v4982 = vadd.f32 0.0, %v4981
    %4983 = vdwg.mxu0
    %4984 = vmatpush.bf16.msra.mxu0 %v4922
    %4985 = vmatpush.bf16.msra.mxu0 %v4918
    %4986 = vmatpush.bf16.msra.mxu0 %v4914
    %4987 = vmatpush.bf16.msra.mxu0 %v4910
    %4988 = vmatpush.bf16.msra.mxu0 %v4906
    %4989 = vmatpush.bf16.msra.mxu0 %v4902
    %4990 = vmatpush.bf16.msra.mxu0 %v4898
    %4991 = vmatpush.bf16.msra.mxu0 %v4894
    %4992 = vmatmul.bf16.gmra.mxu0 %v4763
    %v4993 = vpop.f32.mrf.mxu0
    %v4994 = vadd.f32 0.0, %v4993
    %v4995 = vpop.f32.mrf.mxu0
    %v4996 = vadd.f32 0.0, %v4995
    %4997 = vdwg.mxu0
    %4998 = vmatpush.bf16.msra.mxu0 %v4923
    %4999 = vmatpush.bf16.msra.mxu0 %v4919
    %5000 = vmatpush.bf16.msra.mxu0 %v4915
    %5001 = vmatpush.bf16.msra.mxu0 %v4911
    %5002 = vmatpush.bf16.msra.mxu0 %v4907
    %5003 = vmatpush.bf16.msra.mxu0 %v4903
    %5004 = vmatpush.bf16.msra.mxu0 %v4899
    %5005 = vmatpush.bf16.msra.mxu0 %v4895
    %5006 = vmatmul.bf16.gmra.mxu0 %v4763
    %v5007 = vpop.f32.mrf.mxu0
    %v5008 = vadd.f32 0.0, %v5007
    %v5009 = vpop.f32.mrf.mxu0
    %v5010 = vadd.f32 0.0, %v5009
    %5011 = vdwg.mxu0
    %v5044 = vunpack.c.l.b16 %v4731
    %v5045 = vunpack.c.h.b16 %v4731
    %v5046 = vunpack.c.l.b16 %v4732
    %v5047 = vunpack.c.h.b16 %v4732
    %v5048 = vunpack.c.l.b16 %v4733
    %v5049 = vunpack.c.h.b16 %v4733
    %v5050 = vunpack.c.l.b16 %v4734
    %v5051 = vunpack.c.h.b16 %v4734
    %v5052 = vunpack.c.l.b16 %v4735
    %v5053 = vunpack.c.h.b16 %v4735
    %v5054 = vunpack.c.l.b16 %v4736
    %v5055 = vunpack.c.h.b16 %v4736
    %v5056 = vunpack.c.l.b16 %v4737
    %v5057 = vunpack.c.h.b16 %v4737
    %v5058 = vunpack.c.l.b16 %v4738
    %v5059 = vunpack.c.h.b16 %v4738
    %v5060 = vunpack.c.l.b16 %v4739
    %v5061 = vunpack.c.h.b16 %v4739
    %v5062 = vunpack.c.l.b16 %v4740
    %v5063 = vunpack.c.h.b16 %v4740
    %v5064 = vunpack.c.l.b16 %v4741
    %v5065 = vunpack.c.h.b16 %v4741
    %v5066 = vunpack.c.l.b16 %v4742
    %v5067 = vunpack.c.h.b16 %v4742
    %v5068 = vunpack.c.l.b16 %v4743
    %v5069 = vunpack.c.h.b16 %v4743
    %v5070 = vunpack.c.l.b16 %v4744
    %v5071 = vunpack.c.h.b16 %v4744
    %v5072 = vunpack.c.l.b16 %v4745
    %v5073 = vunpack.c.h.b16 %v4745
    %v5074 = vunpack.c.l.b16 %v4746
    %v5075 = vunpack.c.h.b16 %v4746
    %v5076 = vunpack.c.l.b16 %v4747
    %v5077 = vunpack.c.h.b16 %v4747
    %v5078 = vunpack.c.l.b16 %v4748
    %v5079 = vunpack.c.h.b16 %v4748
    %v5080 = vunpack.c.l.b16 %v4749
    %v5081 = vunpack.c.h.b16 %v4749
    %v5082 = vunpack.c.l.b16 %v4750
    %v5083 = vunpack.c.h.b16 %v4750
    %v5084 = vunpack.c.l.b16 %v4751
    %v5085 = vunpack.c.h.b16 %v4751
    %v5086 = vunpack.c.l.b16 %v4752
    %v5087 = vunpack.c.h.b16 %v4752
    %v5088 = vunpack.c.l.b16 %v4753
    %v5089 = vunpack.c.h.b16 %v4753
    %v5090 = vunpack.c.l.b16 %v4754
    %v5091 = vunpack.c.h.b16 %v4754
    %v5092 = vunpack.c.l.b16 %v4755
    %v5093 = vunpack.c.h.b16 %v4755
    %v5094 = vunpack.c.l.b16 %v4756
    %v5095 = vunpack.c.h.b16 %v4756
    %v5096 = vunpack.c.l.b16 %v4757
    %v5097 = vunpack.c.h.b16 %v4757
    %v5098 = vunpack.c.l.b16 %v4758
    %v5099 = vunpack.c.h.b16 %v4758
    %v5100 = vunpack.c.l.b16 %v4759
    %v5101 = vunpack.c.h.b16 %v4759
    %v5102 = vunpack.c.l.b16 %v4760
    %v5103 = vunpack.c.h.b16 %v4760
    %v5104 = vunpack.c.l.b16 %v4761
    %v5105 = vunpack.c.h.b16 %v4761
    %v5106 = vunpack.c.l.b16 %v4762
    %v5107 = vunpack.c.h.b16 %v4762
    %v5108 = vpack.c.b16 %v5048, %v5044
    %v5109 = vpack.c.b16 %v5049, %v5045
    %v5110 = vpack.c.b16 %v5050, %v5046
    %v5111 = vpack.c.b16 %v5051, %v5047
    %v5112 = vpack.c.b16 %v5056, %v5052
    %v5113 = vpack.c.b16 %v5057, %v5053
    %v5114 = vpack.c.b16 %v5058, %v5054
    %v5115 = vpack.c.b16 %v5059, %v5055
    %v5116 = vpack.c.b16 %v5064, %v5060
    %v5117 = vpack.c.b16 %v5065, %v5061
    %v5118 = vpack.c.b16 %v5066, %v5062
    %v5119 = vpack.c.b16 %v5067, %v5063
    %v5120 = vpack.c.b16 %v5072, %v5068
    %v5121 = vpack.c.b16 %v5073, %v5069
    %v5122 = vpack.c.b16 %v5074, %v5070
    %v5123 = vpack.c.b16 %v5075, %v5071
    %v5124 = vpack.c.b16 %v5080, %v5076
    %v5125 = vpack.c.b16 %v5081, %v5077
    %v5126 = vpack.c.b16 %v5082, %v5078
    %v5127 = vpack.c.b16 %v5083, %v5079
    %v5128 = vpack.c.b16 %v5088, %v5084
    %v5129 = vpack.c.b16 %v5089, %v5085
    %v5130 = vpack.c.b16 %v5090, %v5086
    %v5131 = vpack.c.b16 %v5091, %v5087
    %v5132 = vpack.c.b16 %v5096, %v5092
    %v5133 = vpack.c.b16 %v5097, %v5093
    %v5134 = vpack.c.b16 %v5098, %v5094
    %v5135 = vpack.c.b16 %v5099, %v5095
    %v5136 = vpack.c.b16 %v5104, %v5100
    %v5137 = vpack.c.b16 %v5105, %v5101
    %v5138 = vpack.c.b16 %v5106, %v5102
    %v5139 = vpack.c.b16 %v5107, %v5103
    %5172 = vmatpush.bf16.msra.mxu0 %v5136
    %5173 = vmatpush.bf16.msra.mxu0 %v5132
    %5174 = vmatpush.bf16.msra.mxu0 %v5128
    %5175 = vmatpush.bf16.msra.mxu0 %v5124
    %5176 = vmatpush.bf16.msra.mxu0 %v5120
    %5177 = vmatpush.bf16.msra.mxu0 %v5116
    %5178 = vmatpush.bf16.msra.mxu0 %v5112
    %5179 = vmatpush.bf16.msra.mxu0 %v5108
    %5180 = vmatmul.bf16.gmra.mxu0 %v4726
    %v5181 = vpop.f32.mrf.mxu0
    %v5182 = vadd.f32 %v4966, %v5181
    %v5183 = vpop.f32.mrf.mxu0
    %v5184 = vadd.f32 %v4968, %v5183
    %5185 = vdwg.mxu0
    %5186 = vmatpush.bf16.msra.mxu0 %v5137
    %5187 = vmatpush.bf16.msra.mxu0 %v5133
    %5188 = vmatpush.bf16.msra.mxu0 %v5129
    %5189 = vmatpush.bf16.msra.mxu0 %v5125
    %5190 = vmatpush.bf16.msra.mxu0 %v5121
    %5191 = vmatpush.bf16.msra.mxu0 %v5117
    %5192 = vmatpush.bf16.msra.mxu0 %v5113
    %5193 = vmatpush.bf16.msra.mxu0 %v5109
    %5194 = vmatmul.bf16.gmra.mxu0 %v4726
    %v5195 = vpop.f32.mrf.mxu0
    %v5196 = vadd.f32 %v4980, %v5195
    %v5197 = vpop.f32.mrf.mxu0
    %v5198 = vadd.f32 %v4982, %v5197
    %5199 = vdwg.mxu0
    %5200 = vmatpush.bf16.msra.mxu0 %v5138
    %5201 = vmatpush.bf16.msra.mxu0 %v5134
    %5202 = vmatpush.bf16.msra.mxu0 %v5130
    %5203 = vmatpush.bf16.msra.mxu0 %v5126
    %5204 = vmatpush.bf16.msra.mxu0 %v5122
    %5205 = vmatpush.bf16.msra.mxu0 %v5118
    %5206 = vmatpush.bf16.msra.mxu0 %v5114
    %5207 = vmatpush.bf16.msra.mxu0 %v5110
    %5208 = vmatmul.bf16.gmra.mxu0 %v4726
    %v5209 = vpop.f32.mrf.mxu0
    %v5210 = vadd.f32 %v4994, %v5209
    %v5211 = vpop.f32.mrf.mxu0
    %v5212 = vadd.f32 %v4996, %v5211
    %5213 = vdwg.mxu0
    %5214 = vmatpush.bf16.msra.mxu0 %v5139
    %5215 = vmatpush.bf16.msra.mxu0 %v5135
    %5216 = vmatpush.bf16.msra.mxu0 %v5131
    %5217 = vmatpush.bf16.msra.mxu0 %v5127
    %5218 = vmatpush.bf16.msra.mxu0 %v5123
    %5219 = vmatpush.bf16.msra.mxu0 %v5119
    %5220 = vmatpush.bf16.msra.mxu0 %v5115
    %5221 = vmatpush.bf16.msra.mxu0 %v5111
    %5222 = vmatmul.bf16.gmra.mxu0 %v4726
    %v5223 = vpop.f32.mrf.mxu0
    %v5224 = vadd.f32 %v5008, %v5223
    %v5225 = vpop.f32.mrf.mxu0
    %v5226 = vadd.f32 %v5010, %v5225
    %5227 = vdwg.mxu0
    %v5228 = vld [vmem:[%s6] sm:$0xf]
    %v5230 = vperm.slane %v5228, 0
    %v5231 = vperm.slane %v5228, 1
    %v5232 = vperm.slane %v5228, 2
    %v5233 = vperm.slane %v5228, 3
    %v5238 = vadd.f32 %v5182, %v5230
    %v5239 = vadd.f32 %v5196, %v5231
    %v5240 = vadd.f32 %v5210, %v5232
    %v5241 = vadd.f32 %v5224, %v5233
    %v5242 = vadd.f32 %v5184, %v5230
    %v5243 = vadd.f32 %v5198, %v5231
    %v5244 = vadd.f32 %v5212, %v5232
    %v5245 = vadd.f32 %v5226, %v5233
    %v5246 = vxor.u32 %v5238, 2147483648
    %v5247 = vxor.u32 %v5242, 2147483648
    %v5248 = vmul.f32 %v5246, 1.442695
    %v5249 = vpow.pop %v5248
    %v5250 = vmul.f32 %v5247, 1.442695
    %v5251 = vpow.pop %v5250
    %v5252 = vadd.f32 %v5249, 1.0
    %v5253 = vadd.f32 %v5251, 1.0
    %v5254 = vrcp.pop %v5252
    %v5255 = vmul.f32 %v5252, %v5254
    %v5256 = vsub.f32 1.0, %v5255
    %v5257 = vmul.f32 %v5254, %v5256
    %v5258 = vadd.f32 %v5254, %v5257
    %vm5259 = vweird.f32 %v5252
    %vm5260 = vweird.f32 %v5254
    %vm5261 = vmor %vm5259, %vm5260
    %v5262 = vsel %vm5261, %v5254, %v5258
    %v5263 = vand.u32 2147483647, %v5252
    %vm5264 = vcmp.eq.f32.partialorder %v5263, 8.507059e+37
    %v5265 = vand.u32 %v5252, 2147483648
    %v5266 = vor.u32 1.1754944e-38, %v5265
    %v5267 = vsel %vm5264, %v5266, %v5262
    %v5268 = vmul.f32 1.0, %v5267
    %v5269 = vrcp.pop %v5253
    %v5270 = vmul.f32 %v5253, %v5269
    %v5271 = vsub.f32 1.0, %v5270
    %v5272 = vmul.f32 %v5269, %v5271
    %v5273 = vadd.f32 %v5269, %v5272
    %vm5274 = vweird.f32 %v5253
    %vm5275 = vweird.f32 %v5269
    %vm5276 = vmor %vm5274, %vm5275
    %v5277 = vsel %vm5276, %v5269, %v5273
    %v5278 = vand.u32 2147483647, %v5253
    %vm5279 = vcmp.eq.f32.partialorder %v5278, 8.507059e+37
    %v5280 = vand.u32 %v5253, 2147483648
    %v5281 = vor.u32 1.1754944e-38, %v5280
    %v5282 = vsel %vm5279, %v5281, %v5277
    %v5283 = vmul.f32 1.0, %v5282
    %v5284 = vxor.u32 %v5239, 2147483648
    %v5285 = vxor.u32 %v5243, 2147483648
    %v5286 = vmul.f32 %v5284, 1.442695
    %v5287 = vpow.pop %v5286
    %v5288 = vmul.f32 %v5285, 1.442695
    %v5289 = vpow.pop %v5288
    %v5290 = vadd.f32 %v5287, 1.0
    %v5291 = vadd.f32 %v5289, 1.0
    %v5292 = vrcp.pop %v5290
    %v5293 = vmul.f32 %v5290, %v5292
    %v5294 = vsub.f32 1.0, %v5293
    %v5295 = vmul.f32 %v5292, %v5294
    %v5296 = vadd.f32 %v5292, %v5295
    %vm5297 = vweird.f32 %v5290
    %vm5298 = vweird.f32 %v5292
    %vm5299 = vmor %vm5297, %vm5298
    %v5300 = vsel %vm5299, %v5292, %v5296
    %v5301 = vand.u32 2147483647, %v5290
    %vm5302 = vcmp.eq.f32.partialorder %v5301, 8.507059e+37
    %v5303 = vand.u32 %v5290, 2147483648
    %v5304 = vor.u32 1.1754944e-38, %v5303
    %v5305 = vsel %vm5302, %v5304, %v5300
    %v5306 = vmul.f32 1.0, %v5305
    %v5307 = vrcp.pop %v5291
    %v5308 = vmul.f32 %v5291, %v5307
    %v5309 = vsub.f32 1.0, %v5308
    %v5310 = vmul.f32 %v5307, %v5309
    %v5311 = vadd.f32 %v5307, %v5310
    %vm5312 = vweird.f32 %v5291
    %vm5313 = vweird.f32 %v5307
    %vm5314 = vmor %vm5312, %vm5313
    %v5315 = vsel %vm5314, %v5307, %v5311
    %v5316 = vand.u32 2147483647, %v5291
    %vm5317 = vcmp.eq.f32.partialorder %v5316, 8.507059e+37
    %v5318 = vand.u32 %v5291, 2147483648
    %v5319 = vor.u32 1.1754944e-38, %v5318
    %v5320 = vsel %vm5317, %v5319, %v5315
    %v5321 = vmul.f32 1.0, %v5320
    %v5322 = vtanh.pop %v5240
    %v5323 = vtanh.pop %v5244
    %v5324 = vxor.u32 %v5241, 2147483648
    %v5325 = vxor.u32 %v5245, 2147483648
    %v5326 = vmul.f32 %v5324, 1.442695
    %v5327 = vpow.pop %v5326
    %v5328 = vmul.f32 %v5325, 1.442695
    %v5329 = vpow.pop %v5328
    %v5330 = vadd.f32 %v5327, 1.0
    %v5331 = vadd.f32 %v5329, 1.0
    %v5332 = vrcp.pop %v5330
    %v5333 = vmul.f32 %v5330, %v5332
    %v5334 = vsub.f32 1.0, %v5333
    %v5335 = vmul.f32 %v5332, %v5334
    %v5336 = vadd.f32 %v5332, %v5335
    %vm5337 = vweird.f32 %v5330
    %vm5338 = vweird.f32 %v5332
    %vm5339 = vmor %vm5337, %vm5338
    %v5340 = vsel %vm5339, %v5332, %v5336
    %v5341 = vand.u32 2147483647, %v5330
    %vm5342 = vcmp.eq.f32.partialorder %v5341, 8.507059e+37
    %v5343 = vand.u32 %v5330, 2147483648
    %v5344 = vor.u32 1.1754944e-38, %v5343
    %v5345 = vsel %vm5342, %v5344, %v5340
    %v5346 = vmul.f32 1.0, %v5345
    %v5347 = vrcp.pop %v5331
    %v5348 = vmul.f32 %v5331, %v5347
    %v5349 = vsub.f32 1.0, %v5348
    %v5350 = vmul.f32 %v5347, %v5349
    %v5351 = vadd.f32 %v5347, %v5350
    %vm5352 = vweird.f32 %v5331
    %vm5353 = vweird.f32 %v5347
    %vm5354 = vmor %vm5352, %vm5353
    %v5355 = vsel %vm5354, %v5347, %v5351
    %v5356 = vand.u32 2147483647, %v5331
    %vm5357 = vcmp.eq.f32.partialorder %v5356, 8.507059e+37
    %v5358 = vand.u32 %v5331, 2147483648
    %v5359 = vor.u32 1.1754944e-38, %v5358
    %v5360 = vsel %vm5357, %v5359, %v5355
    %v5361 = vmul.f32 1.0, %v5360
    %v5362 = vmul.f32 %v5306, %v4729
    %v5363 = vmul.f32 %v5321, %v4730
    %v5364 = vmul.f32 %v5268, %v5322
    %v5365 = vmul.f32 %v5283, %v5323
    %v5366 = vadd.f32 %v5362, %v5364
    %v5367 = vadd.f32 %v5363, %v5365
    %v5368 = vtanh.pop %v5366
    %v5369 = vtanh.pop %v5367
    %v5370 = vmul.f32 %v5346, %v5368
    %v5371 = vmul.f32 %v5361, %v5369
    %5372 = vst [vmem:[#allocation4] sm:$0xff] %v5370
    %5373 = vst [vmem:[#allocation4 + $0x8] sm:$0xff] %v5371
    %5374 = vst [vmem:[#allocation5] sm:$0xff] %v5366
    %5375 = vst [vmem:[#allocation5 + $0x8] sm:$0xff] %v5367
    %v5376 = vpack.c.bf16 %v5370, %v5370
    %v5377 = vpack.c.bf16 %v5371, %v5371
    %s5378 = scalar_lea.vmem [#allocation17], 24
    %5379 = vst [vmem:[%s5378] sm:$0xf] %v5376
    %5380 = vst [vmem:[%s5378 + $0x4] sm:$0xf] %v5377
    %s5381 = scalar_lea.vmem [#allocation6], 32
    %v5382 = vld [vmem:[%s5381] sm:$0xf]
    %v5383 = vld [vmem:[%s5381 + $0x4] sm:$0xf]
    %v5384 = vld [vmem:[#allocation2] sm:$0xff]
    %v5385 = vld [vmem:[#allocation2 + $0x8] sm:$0xff]
    %v5386 = vld [vmem:[#allocation3] sm:$0xff]
    %v5387 = vld [vmem:[#allocation3 + $0x8] sm:$0xff]
    %v5388 = vld [vmem:[#allocation9] sm:$0xff]
    %v5389 = vld [vmem:[#allocation9 + $0x8] sm:$0xff]
    %v5390 = vld [vmem:[#allocation9 + $0x10] sm:$0xff]
    %v5391 = vld [vmem:[#allocation9 + $0x18] sm:$0xff]
    %v5392 = vld [vmem:[#allocation9 + $0x20] sm:$0xff]
    %v5393 = vld [vmem:[#allocation9 + $0x28] sm:$0xff]
    %v5394 = vld [vmem:[#allocation9 + $0x30] sm:$0xff]
    %v5395 = vld [vmem:[#allocation9 + $0x38] sm:$0xff]
    %v5396 = vld [vmem:[#allocation9 + $0x40] sm:$0xff]
    %v5397 = vld [vmem:[#allocation9 + $0x48] sm:$0xff]
    %v5398 = vld [vmem:[#allocation9 + $0x50] sm:$0xff]
    %v5399 = vld [vmem:[#allocation9 + $0x58] sm:$0xff]
    %v5400 = vld [vmem:[#allocation9 + $0x60] sm:$0xff]
    %v5401 = vld [vmem:[#allocation9 + $0x68] sm:$0xff]
    %v5402 = vld [vmem:[#allocation9 + $0x70] sm:$0xff]
    %v5403 = vld [vmem:[#allocation9 + $0x78] sm:$0xff]
    %v5404 = vld [vmem:[#allocation9 + $0x80] sm:$0xff]
    %v5405 = vld [vmem:[#allocation9 + $0x88] sm:$0xff]
    %v5406 = vld [vmem:[#allocation9 + $0x90] sm:$0xff]
    %v5407 = vld [vmem:[#allocation9 + $0x98] sm:$0xff]
    %v5408 = vld [vmem:[#allocation9 + $0xa0] sm:$0xff]
    %v5409 = vld [vmem:[#allocation9 + $0xa8] sm:$0xff]
    %v5410 = vld [vmem:[#allocation9 + $0xb0] sm:$0xff]
    %v5411 = vld [vmem:[#allocation9 + $0xb8] sm:$0xff]
    %v5412 = vld [vmem:[#allocation9 + $0xc0] sm:$0xff]
    %v5413 = vld [vmem:[#allocation9 + $0xc8] sm:$0xff]
    %v5414 = vld [vmem:[#allocation9 + $0xd0] sm:$0xff]
    %v5415 = vld [vmem:[#allocation9 + $0xd8] sm:$0xff]
    %v5416 = vld [vmem:[#allocation9 + $0xe0] sm:$0xff]
    %v5417 = vld [vmem:[#allocation9 + $0xe8] sm:$0xff]
    %v5418 = vld [vmem:[#allocation9 + $0xf0] sm:$0xff]
    %v5419 = vld [vmem:[#allocation9 + $0xf8] sm:$0xff]
    %v5420 = vpack.c.bf16 %v5385, %v5384
    %v5421 = vld [vmem:[#allocation11] sm:$0xff]
    %v5422 = vld [vmem:[#allocation11 + $0x8] sm:$0xff]
    %v5423 = vld [vmem:[#allocation11 + $0x10] sm:$0xff]
    %v5424 = vld [vmem:[#allocation11 + $0x18] sm:$0xff]
    %v5425 = vld [vmem:[#allocation11 + $0x20] sm:$0xff]
    %v5426 = vld [vmem:[#allocation11 + $0x28] sm:$0xff]
    %v5427 = vld [vmem:[#allocation11 + $0x30] sm:$0xff]
    %v5428 = vld [vmem:[#allocation11 + $0x38] sm:$0xff]
    %v5429 = vld [vmem:[#allocation11 + $0x40] sm:$0xff]
    %v5430 = vld [vmem:[#allocation11 + $0x48] sm:$0xff]
    %v5431 = vld [vmem:[#allocation11 + $0x50] sm:$0xff]
    %v5432 = vld [vmem:[#allocation11 + $0x58] sm:$0xff]
    %v5433 = vld [vmem:[#allocation11 + $0x60] sm:$0xff]
    %v5434 = vld [vmem:[#allocation11 + $0x68] sm:$0xff]
    %v5435 = vld [vmem:[#allocation11 + $0x70] sm:$0xff]
    %v5436 = vld [vmem:[#allocation11 + $0x78] sm:$0xff]
    %v5437 = vld [vmem:[#allocation11 + $0x80] sm:$0xff]
    %v5438 = vld [vmem:[#allocation11 + $0x88] sm:$0xff]
    %v5439 = vld [vmem:[#allocation11 + $0x90] sm:$0xff]
    %v5440 = vld [vmem:[#allocation11 + $0x98] sm:$0xff]
    %v5441 = vld [vmem:[#allocation11 + $0xa0] sm:$0xff]
    %v5442 = vld [vmem:[#allocation11 + $0xa8] sm:$0xff]
    %v5443 = vld [vmem:[#allocation11 + $0xb0] sm:$0xff]
    %v5444 = vld [vmem:[#allocation11 + $0xb8] sm:$0xff]
    %v5445 = vld [vmem:[#allocation11 + $0xc0] sm:$0xff]
    %v5446 = vld [vmem:[#allocation11 + $0xc8] sm:$0xff]
    %v5447 = vld [vmem:[#allocation11 + $0xd0] sm:$0xff]
    %v5448 = vld [vmem:[#allocation11 + $0xd8] sm:$0xff]
    %v5449 = vld [vmem:[#allocation11 + $0xe0] sm:$0xff]
    %v5450 = vld [vmem:[#allocation11 + $0xe8] sm:$0xff]
    %v5451 = vld [vmem:[#allocation11 + $0xf0] sm:$0xff]
    %v5452 = vld [vmem:[#allocation11 + $0xf8] sm:$0xff]
    %v5485 = vunpack.c.l.b16 %v5421
    %v5486 = vunpack.c.h.b16 %v5421
    %v5487 = vunpack.c.l.b16 %v5422
    %v5488 = vunpack.c.h.b16 %v5422
    %v5489 = vunpack.c.l.b16 %v5423
    %v5490 = vunpack.c.h.b16 %v5423
    %v5491 = vunpack.c.l.b16 %v5424
    %v5492 = vunpack.c.h.b16 %v5424
    %v5493 = vunpack.c.l.b16 %v5425
    %v5494 = vunpack.c.h.b16 %v5425
    %v5495 = vunpack.c.l.b16 %v5426
    %v5496 = vunpack.c.h.b16 %v5426
    %v5497 = vunpack.c.l.b16 %v5427
    %v5498 = vunpack.c.h.b16 %v5427
    %v5499 = vunpack.c.l.b16 %v5428
    %v5500 = vunpack.c.h.b16 %v5428
    %v5501 = vunpack.c.l.b16 %v5429
    %v5502 = vunpack.c.h.b16 %v5429
    %v5503 = vunpack.c.l.b16 %v5430
    %v5504 = vunpack.c.h.b16 %v5430
    %v5505 = vunpack.c.l.b16 %v5431
    %v5506 = vunpack.c.h.b16 %v5431
    %v5507 = vunpack.c.l.b16 %v5432
    %v5508 = vunpack.c.h.b16 %v5432
    %v5509 = vunpack.c.l.b16 %v5433
    %v5510 = vunpack.c.h.b16 %v5433
    %v5511 = vunpack.c.l.b16 %v5434
    %v5512 = vunpack.c.h.b16 %v5434
    %v5513 = vunpack.c.l.b16 %v5435
    %v5514 = vunpack.c.h.b16 %v5435
    %v5515 = vunpack.c.l.b16 %v5436
    %v5516 = vunpack.c.h.b16 %v5436
    %v5517 = vunpack.c.l.b16 %v5437
    %v5518 = vunpack.c.h.b16 %v5437
    %v5519 = vunpack.c.l.b16 %v5438
    %v5520 = vunpack.c.h.b16 %v5438
    %v5521 = vunpack.c.l.b16 %v5439
    %v5522 = vunpack.c.h.b16 %v5439
    %v5523 = vunpack.c.l.b16 %v5440
    %v5524 = vunpack.c.h.b16 %v5440
    %v5525 = vunpack.c.l.b16 %v5441
    %v5526 = vunpack.c.h.b16 %v5441
    %v5527 = vunpack.c.l.b16 %v5442
    %v5528 = vunpack.c.h.b16 %v5442
    %v5529 = vunpack.c.l.b16 %v5443
    %v5530 = vunpack.c.h.b16 %v5443
    %v5531 = vunpack.c.l.b16 %v5444
    %v5532 = vunpack.c.h.b16 %v5444
    %v5533 = vunpack.c.l.b16 %v5445
    %v5534 = vunpack.c.h.b16 %v5445
    %v5535 = vunpack.c.l.b16 %v5446
    %v5536 = vunpack.c.h.b16 %v5446
    %v5537 = vunpack.c.l.b16 %v5447
    %v5538 = vunpack.c.h.b16 %v5447
    %v5539 = vunpack.c.l.b16 %v5448
    %v5540 = vunpack.c.h.b16 %v5448
    %v5541 = vunpack.c.l.b16 %v5449
    %v5542 = vunpack.c.h.b16 %v5449
    %v5543 = vunpack.c.l.b16 %v5450
    %v5544 = vunpack.c.h.b16 %v5450
    %v5545 = vunpack.c.l.b16 %v5451
    %v5546 = vunpack.c.h.b16 %v5451
    %v5547 = vunpack.c.l.b16 %v5452
    %v5548 = vunpack.c.h.b16 %v5452
    %v5549 = vpack.c.b16 %v5489, %v5485
    %v5550 = vpack.c.b16 %v5490, %v5486
    %v5551 = vpack.c.b16 %v5491, %v5487
    %v5552 = vpack.c.b16 %v5492, %v5488
    %v5553 = vpack.c.b16 %v5497, %v5493
    %v5554 = vpack.c.b16 %v5498, %v5494
    %v5555 = vpack.c.b16 %v5499, %v5495
    %v5556 = vpack.c.b16 %v5500, %v5496
    %v5557 = vpack.c.b16 %v5505, %v5501
    %v5558 = vpack.c.b16 %v5506, %v5502
    %v5559 = vpack.c.b16 %v5507, %v5503
    %v5560 = vpack.c.b16 %v5508, %v5504
    %v5561 = vpack.c.b16 %v5513, %v5509
    %v5562 = vpack.c.b16 %v5514, %v5510
    %v5563 = vpack.c.b16 %v5515, %v5511
    %v5564 = vpack.c.b16 %v5516, %v5512
    %v5565 = vpack.c.b16 %v5521, %v5517
    %v5566 = vpack.c.b16 %v5522, %v5518
    %v5567 = vpack.c.b16 %v5523, %v5519
    %v5568 = vpack.c.b16 %v5524, %v5520
    %v5569 = vpack.c.b16 %v5529, %v5525
    %v5570 = vpack.c.b16 %v5530, %v5526
    %v5571 = vpack.c.b16 %v5531, %v5527
    %v5572 = vpack.c.b16 %v5532, %v5528
    %v5573 = vpack.c.b16 %v5537, %v5533
    %v5574 = vpack.c.b16 %v5538, %v5534
    %v5575 = vpack.c.b16 %v5539, %v5535
    %v5576 = vpack.c.b16 %v5540, %v5536
    %v5577 = vpack.c.b16 %v5545, %v5541
    %v5578 = vpack.c.b16 %v5546, %v5542
    %v5579 = vpack.c.b16 %v5547, %v5543
    %v5580 = vpack.c.b16 %v5548, %v5544
    %5613 = vmatpush.bf16.msra.mxu0 %v5577
    %5614 = vmatpush.bf16.msra.mxu0 %v5573
    %5615 = vmatpush.bf16.msra.mxu0 %v5569
    %5616 = vmatpush.bf16.msra.mxu0 %v5565
    %5617 = vmatpush.bf16.msra.mxu0 %v5561
    %5618 = vmatpush.bf16.msra.mxu0 %v5557
    %5619 = vmatpush.bf16.msra.mxu0 %v5553
    %5620 = vmatpush.bf16.msra.mxu0 %v5549
    %5621 = vmatmul.bf16.gmra.mxu0 %v5420
    %v5622 = vpop.f32.mrf.mxu0
    %v5623 = vadd.f32 0.0, %v5622
    %v5624 = vpop.f32.mrf.mxu0
    %v5625 = vadd.f32 0.0, %v5624
    %5626 = vdwg.mxu0
    %5627 = vmatpush.bf16.msra.mxu0 %v5578
    %5628 = vmatpush.bf16.msra.mxu0 %v5574
    %5629 = vmatpush.bf16.msra.mxu0 %v5570
    %5630 = vmatpush.bf16.msra.mxu0 %v5566
    %5631 = vmatpush.bf16.msra.mxu0 %v5562
    %5632 = vmatpush.bf16.msra.mxu0 %v5558
    %5633 = vmatpush.bf16.msra.mxu0 %v5554
    %5634 = vmatpush.bf16.msra.mxu0 %v5550
    %5635 = vmatmul.bf16.gmra.mxu0 %v5420
    %v5636 = vpop.f32.mrf.mxu0
    %v5637 = vadd.f32 0.0, %v5636
    %v5638 = vpop.f32.mrf.mxu0
    %v5639 = vadd.f32 0.0, %v5638
    %5640 = vdwg.mxu0
    %5641 = vmatpush.bf16.msra.mxu0 %v5579
    %5642 = vmatpush.bf16.msra.mxu0 %v5575
    %5643 = vmatpush.bf16.msra.mxu0 %v5571
    %5644 = vmatpush.bf16.msra.mxu0 %v5567
    %5645 = vmatpush.bf16.msra.mxu0 %v5563
    %5646 = vmatpush.bf16.msra.mxu0 %v5559
    %5647 = vmatpush.bf16.msra.mxu0 %v5555
    %5648 = vmatpush.bf16.msra.mxu0 %v5551
    %5649 = vmatmul.bf16.gmra.mxu0 %v5420
    %v5650 = vpop.f32.mrf.mxu0
    %v5651 = vadd.f32 0.0, %v5650
    %v5652 = vpop.f32.mrf.mxu0
    %v5653 = vadd.f32 0.0, %v5652
    %5654 = vdwg.mxu0
    %5655 = vmatpush.bf16.msra.mxu0 %v5580
    %5656 = vmatpush.bf16.msra.mxu0 %v5576
    %5657 = vmatpush.bf16.msra.mxu0 %v5572
    %5658 = vmatpush.bf16.msra.mxu0 %v5568
    %5659 = vmatpush.bf16.msra.mxu0 %v5564
    %5660 = vmatpush.bf16.msra.mxu0 %v5560
    %5661 = vmatpush.bf16.msra.mxu0 %v5556
    %5662 = vmatpush.bf16.msra.mxu0 %v5552
    %5663 = vmatmul.bf16.gmra.mxu0 %v5420
    %v5664 = vpop.f32.mrf.mxu0
    %v5665 = vadd.f32 0.0, %v5664
    %v5666 = vpop.f32.mrf.mxu0
    %v5667 = vadd.f32 0.0, %v5666
    %5668 = vdwg.mxu0
    %v5671 = vunpack.c.l.b16 %v5382
    %v5672 = vunpack.c.l.b16 %v5383
    %v5673 = vpack.c.b16 %v5672, %v5671
    %v5707 = vunpack.c.l.b16 %v5388
    %v5708 = vunpack.c.h.b16 %v5388
    %v5709 = vunpack.c.l.b16 %v5389
    %v5710 = vunpack.c.h.b16 %v5389
    %v5711 = vunpack.c.l.b16 %v5390
    %v5712 = vunpack.c.h.b16 %v5390
    %v5713 = vunpack.c.l.b16 %v5391
    %v5714 = vunpack.c.h.b16 %v5391
    %v5715 = vunpack.c.l.b16 %v5392
    %v5716 = vunpack.c.h.b16 %v5392
    %v5717 = vunpack.c.l.b16 %v5393
    %v5718 = vunpack.c.h.b16 %v5393
    %v5719 = vunpack.c.l.b16 %v5394
    %v5720 = vunpack.c.h.b16 %v5394
    %v5721 = vunpack.c.l.b16 %v5395
    %v5722 = vunpack.c.h.b16 %v5395
    %v5723 = vunpack.c.l.b16 %v5396
    %v5724 = vunpack.c.h.b16 %v5396
    %v5725 = vunpack.c.l.b16 %v5397
    %v5726 = vunpack.c.h.b16 %v5397
    %v5727 = vunpack.c.l.b16 %v5398
    %v5728 = vunpack.c.h.b16 %v5398
    %v5729 = vunpack.c.l.b16 %v5399
    %v5730 = vunpack.c.h.b16 %v5399
    %v5731 = vunpack.c.l.b16 %v5400
    %v5732 = vunpack.c.h.b16 %v5400
    %v5733 = vunpack.c.l.b16 %v5401
    %v5734 = vunpack.c.h.b16 %v5401
    %v5735 = vunpack.c.l.b16 %v5402
    %v5736 = vunpack.c.h.b16 %v5402
    %v5737 = vunpack.c.l.b16 %v5403
    %v5738 = vunpack.c.h.b16 %v5403
    %v5739 = vunpack.c.l.b16 %v5404
    %v5740 = vunpack.c.h.b16 %v5404
    %v5741 = vunpack.c.l.b16 %v5405
    %v5742 = vunpack.c.h.b16 %v5405
    %v5743 = vunpack.c.l.b16 %v5406
    %v5744 = vunpack.c.h.b16 %v5406
    %v5745 = vunpack.c.l.b16 %v5407
    %v5746 = vunpack.c.h.b16 %v5407
    %v5747 = vunpack.c.l.b16 %v5408
    %v5748 = vunpack.c.h.b16 %v5408
    %v5749 = vunpack.c.l.b16 %v5409
    %v5750 = vunpack.c.h.b16 %v5409
    %v5751 = vunpack.c.l.b16 %v5410
    %v5752 = vunpack.c.h.b16 %v5410
    %v5753 = vunpack.c.l.b16 %v5411
    %v5754 = vunpack.c.h.b16 %v5411
    %v5755 = vunpack.c.l.b16 %v5412
    %v5756 = vunpack.c.h.b16 %v5412
    %v5757 = vunpack.c.l.b16 %v5413
    %v5758 = vunpack.c.h.b16 %v5413
    %v5759 = vunpack.c.l.b16 %v5414
    %v5760 = vunpack.c.h.b16 %v5414
    %v5761 = vunpack.c.l.b16 %v5415
    %v5762 = vunpack.c.h.b16 %v5415
    %v5763 = vunpack.c.l.b16 %v5416
    %v5764 = vunpack.c.h.b16 %v5416
    %v5765 = vunpack.c.l.b16 %v5417
    %v5766 = vunpack.c.h.b16 %v5417
    %v5767 = vunpack.c.l.b16 %v5418
    %v5768 = vunpack.c.h.b16 %v5418
    %v5769 = vunpack.c.l.b16 %v5419
    %v5770 = vunpack.c.h.b16 %v5419
    %v5771 = vpack.c.b16 %v5711, %v5707
    %v5772 = vpack.c.b16 %v5712, %v5708
    %v5773 = vpack.c.b16 %v5713, %v5709
    %v5774 = vpack.c.b16 %v5714, %v5710
    %v5775 = vpack.c.b16 %v5719, %v5715
    %v5776 = vpack.c.b16 %v5720, %v5716
    %v5777 = vpack.c.b16 %v5721, %v5717
    %v5778 = vpack.c.b16 %v5722, %v5718
    %v5779 = vpack.c.b16 %v5727, %v5723
    %v5780 = vpack.c.b16 %v5728, %v5724
    %v5781 = vpack.c.b16 %v5729, %v5725
    %v5782 = vpack.c.b16 %v5730, %v5726
    %v5783 = vpack.c.b16 %v5735, %v5731
    %v5784 = vpack.c.b16 %v5736, %v5732
    %v5785 = vpack.c.b16 %v5737, %v5733
    %v5786 = vpack.c.b16 %v5738, %v5734
    %v5787 = vpack.c.b16 %v5743, %v5739
    %v5788 = vpack.c.b16 %v5744, %v5740
    %v5789 = vpack.c.b16 %v5745, %v5741
    %v5790 = vpack.c.b16 %v5746, %v5742
    %v5791 = vpack.c.b16 %v5751, %v5747
    %v5792 = vpack.c.b16 %v5752, %v5748
    %v5793 = vpack.c.b16 %v5753, %v5749
    %v5794 = vpack.c.b16 %v5754, %v5750
    %v5795 = vpack.c.b16 %v5759, %v5755
    %v5796 = vpack.c.b16 %v5760, %v5756
    %v5797 = vpack.c.b16 %v5761, %v5757
    %v5798 = vpack.c.b16 %v5762, %v5758
    %v5799 = vpack.c.b16 %v5767, %v5763
    %v5800 = vpack.c.b16 %v5768, %v5764
    %v5801 = vpack.c.b16 %v5769, %v5765
    %v5802 = vpack.c.b16 %v5770, %v5766
    %5835 = vmatpush.bf16.msra.mxu0 %v5799
    %5836 = vmatpush.bf16.msra.mxu0 %v5795
    %5837 = vmatpush.bf16.msra.mxu0 %v5791
    %5838 = vmatpush.bf16.msra.mxu0 %v5787
    %5839 = vmatpush.bf16.msra.mxu0 %v5783
    %5840 = vmatpush.bf16.msra.mxu0 %v5779
    %5841 = vmatpush.bf16.msra.mxu0 %v5775
    %5842 = vmatpush.bf16.msra.mxu0 %v5771
    %5843 = vmatmul.bf16.gmra.mxu0 %v5673
    %v5844 = vpop.f32.mrf.mxu0
    %v5845 = vadd.f32 %v5623, %v5844
    %v5846 = vpop.f32.mrf.mxu0
    %v5847 = vadd.f32 %v5625, %v5846
    %5848 = vdwg.mxu0
    %5849 = vmatpush.bf16.msra.mxu0 %v5800
    %5850 = vmatpush.bf16.msra.mxu0 %v5796
    %5851 = vmatpush.bf16.msra.mxu0 %v5792
    %5852 = vmatpush.bf16.msra.mxu0 %v5788
    %5853 = vmatpush.bf16.msra.mxu0 %v5784
    %5854 = vmatpush.bf16.msra.mxu0 %v5780
    %5855 = vmatpush.bf16.msra.mxu0 %v5776
    %5856 = vmatpush.bf16.msra.mxu0 %v5772
    %5857 = vmatmul.bf16.gmra.mxu0 %v5673
    %v5858 = vpop.f32.mrf.mxu0
    %v5859 = vadd.f32 %v5637, %v5858
    %v5860 = vpop.f32.mrf.mxu0
    %v5861 = vadd.f32 %v5639, %v5860
    %5862 = vdwg.mxu0
    %5863 = vmatpush.bf16.msra.mxu0 %v5801
    %5864 = vmatpush.bf16.msra.mxu0 %v5797
    %5865 = vmatpush.bf16.msra.mxu0 %v5793
    %5866 = vmatpush.bf16.msra.mxu0 %v5789
    %5867 = vmatpush.bf16.msra.mxu0 %v5785
    %5868 = vmatpush.bf16.msra.mxu0 %v5781
    %5869 = vmatpush.bf16.msra.mxu0 %v5777
    %5870 = vmatpush.bf16.msra.mxu0 %v5773
    %5871 = vmatmul.bf16.gmra.mxu0 %v5673
    %v5872 = vpop.f32.mrf.mxu0
    %v5873 = vadd.f32 %v5651, %v5872
    %v5874 = vpop.f32.mrf.mxu0
    %v5875 = vadd.f32 %v5653, %v5874
    %5876 = vdwg.mxu0
    %5877 = vmatpush.bf16.msra.mxu0 %v5802
    %5878 = vmatpush.bf16.msra.mxu0 %v5798
    %5879 = vmatpush.bf16.msra.mxu0 %v5794
    %5880 = vmatpush.bf16.msra.mxu0 %v5790
    %5881 = vmatpush.bf16.msra.mxu0 %v5786
    %5882 = vmatpush.bf16.msra.mxu0 %v5782
    %5883 = vmatpush.bf16.msra.mxu0 %v5778
    %5884 = vmatpush.bf16.msra.mxu0 %v5774
    %5885 = vmatmul.bf16.gmra.mxu0 %v5673
    %v5886 = vpop.f32.mrf.mxu0
    %v5887 = vadd.f32 %v5665, %v5886
    %v5888 = vpop.f32.mrf.mxu0
    %v5889 = vadd.f32 %v5667, %v5888
    %5890 = vdwg.mxu0
    %v5891 = vld [vmem:[#allocation12] sm:$0xf]
    %v5893 = vperm.slane %v5891, 0
    %v5894 = vperm.slane %v5891, 1
    %v5895 = vperm.slane %v5891, 2
    %v5896 = vperm.slane %v5891, 3
    %v5901 = vadd.f32 %v5845, %v5893
    %v5902 = vadd.f32 %v5859, %v5894
    %v5903 = vadd.f32 %v5873, %v5895
    %v5904 = vadd.f32 %v5887, %v5896
    %v5905 = vadd.f32 %v5847, %v5893
    %v5906 = vadd.f32 %v5861, %v5894
    %v5907 = vadd.f32 %v5875, %v5895
    %v5908 = vadd.f32 %v5889, %v5896
    %v5909 = vxor.u32 %v5901, 2147483648
    %v5910 = vxor.u32 %v5905, 2147483648
    %v5911 = vmul.f32 %v5909, 1.442695
    %v5912 = vpow.pop %v5911
    %v5913 = vmul.f32 %v5910, 1.442695
    %v5914 = vpow.pop %v5913
    %v5915 = vadd.f32 %v5912, 1.0
    %v5916 = vadd.f32 %v5914, 1.0
    %v5917 = vrcp.pop %v5915
    %v5918 = vmul.f32 %v5915, %v5917
    %v5919 = vsub.f32 1.0, %v5918
    %v5920 = vmul.f32 %v5917, %v5919
    %v5921 = vadd.f32 %v5917, %v5920
    %vm5922 = vweird.f32 %v5915
    %vm5923 = vweird.f32 %v5917
    %vm5924 = vmor %vm5922, %vm5923
    %v5925 = vsel %vm5924, %v5917, %v5921
    %v5926 = vand.u32 2147483647, %v5915
    %vm5927 = vcmp.eq.f32.partialorder %v5926, 8.507059e+37
    %v5928 = vand.u32 %v5915, 2147483648
    %v5929 = vor.u32 1.1754944e-38, %v5928
    %v5930 = vsel %vm5927, %v5929, %v5925
    %v5931 = vmul.f32 1.0, %v5930
    %v5932 = vrcp.pop %v5916
    %v5933 = vmul.f32 %v5916, %v5932
    %v5934 = vsub.f32 1.0, %v5933
    %v5935 = vmul.f32 %v5932, %v5934
    %v5936 = vadd.f32 %v5932, %v5935
    %vm5937 = vweird.f32 %v5916
    %vm5938 = vweird.f32 %v5932
    %vm5939 = vmor %vm5937, %vm5938
    %v5940 = vsel %vm5939, %v5932, %v5936
    %v5941 = vand.u32 2147483647, %v5916
    %vm5942 = vcmp.eq.f32.partialorder %v5941, 8.507059e+37
    %v5943 = vand.u32 %v5916, 2147483648
    %v5944 = vor.u32 1.1754944e-38, %v5943
    %v5945 = vsel %vm5942, %v5944, %v5940
    %v5946 = vmul.f32 1.0, %v5945
    %v5947 = vxor.u32 %v5902, 2147483648
    %v5948 = vxor.u32 %v5906, 2147483648
    %v5949 = vmul.f32 %v5947, 1.442695
    %v5950 = vpow.pop %v5949
    %v5951 = vmul.f32 %v5948, 1.442695
    %v5952 = vpow.pop %v5951
    %v5953 = vadd.f32 %v5950, 1.0
    %v5954 = vadd.f32 %v5952, 1.0
    %v5955 = vrcp.pop %v5953
    %v5956 = vmul.f32 %v5953, %v5955
    %v5957 = vsub.f32 1.0, %v5956
    %v5958 = vmul.f32 %v5955, %v5957
    %v5959 = vadd.f32 %v5955, %v5958
    %vm5960 = vweird.f32 %v5953
    %vm5961 = vweird.f32 %v5955
    %vm5962 = vmor %vm5960, %vm5961
    %v5963 = vsel %vm5962, %v5955, %v5959
    %v5964 = vand.u32 2147483647, %v5953
    %vm5965 = vcmp.eq.f32.partialorder %v5964, 8.507059e+37
    %v5966 = vand.u32 %v5953, 2147483648
    %v5967 = vor.u32 1.1754944e-38, %v5966
    %v5968 = vsel %vm5965, %v5967, %v5963
    %v5969 = vmul.f32 1.0, %v5968
    %v5970 = vrcp.pop %v5954
    %v5971 = vmul.f32 %v5954, %v5970
    %v5972 = vsub.f32 1.0, %v5971
    %v5973 = vmul.f32 %v5970, %v5972
    %v5974 = vadd.f32 %v5970, %v5973
    %vm5975 = vweird.f32 %v5954
    %vm5976 = vweird.f32 %v5970
    %vm5977 = vmor %vm5975, %vm5976
    %v5978 = vsel %vm5977, %v5970, %v5974
    %v5979 = vand.u32 2147483647, %v5954
    %vm5980 = vcmp.eq.f32.partialorder %v5979, 8.507059e+37
    %v5981 = vand.u32 %v5954, 2147483648
    %v5982 = vor.u32 1.1754944e-38, %v5981
    %v5983 = vsel %vm5980, %v5982, %v5978
    %v5984 = vmul.f32 1.0, %v5983
    %v5985 = vtanh.pop %v5903
    %v5986 = vtanh.pop %v5907
    %v5987 = vxor.u32 %v5904, 2147483648
    %v5988 = vxor.u32 %v5908, 2147483648
    %v5989 = vmul.f32 %v5987, 1.442695
    %v5990 = vpow.pop %v5989
    %v5991 = vmul.f32 %v5988, 1.442695
    %v5992 = vpow.pop %v5991
    %v5993 = vadd.f32 %v5990, 1.0
    %v5994 = vadd.f32 %v5992, 1.0
    %v5995 = vrcp.pop %v5993
    %v5996 = vmul.f32 %v5993, %v5995
    %v5997 = vsub.f32 1.0, %v5996
    %v5998 = vmul.f32 %v5995, %v5997
    %v5999 = vadd.f32 %v5995, %v5998
    %vm6000 = vweird.f32 %v5993
    %vm6001 = vweird.f32 %v5995
    %vm6002 = vmor %vm6000, %vm6001
    %v6003 = vsel %vm6002, %v5995, %v5999
    %v6004 = vand.u32 2147483647, %v5993
    %vm6005 = vcmp.eq.f32.partialorder %v6004, 8.507059e+37
    %v6006 = vand.u32 %v5993, 2147483648
    %v6007 = vor.u32 1.1754944e-38, %v6006
    %v6008 = vsel %vm6005, %v6007, %v6003
    %v6009 = vmul.f32 1.0, %v6008
    %v6010 = vrcp.pop %v5994
    %v6011 = vmul.f32 %v5994, %v6010
    %v6012 = vsub.f32 1.0, %v6011
    %v6013 = vmul.f32 %v6010, %v6012
    %v6014 = vadd.f32 %v6010, %v6013
    %vm6015 = vweird.f32 %v5994
    %vm6016 = vweird.f32 %v6010
    %vm6017 = vmor %vm6015, %vm6016
    %v6018 = vsel %vm6017, %v6010, %v6014
    %v6019 = vand.u32 2147483647, %v5994
    %vm6020 = vcmp.eq.f32.partialorder %v6019, 8.507059e+37
    %v6021 = vand.u32 %v5994, 2147483648
    %v6022 = vor.u32 1.1754944e-38, %v6021
    %v6023 = vsel %vm6020, %v6022, %v6018
    %v6024 = vmul.f32 1.0, %v6023
    %v6025 = vmul.f32 %v5969, %v5386
    %v6026 = vmul.f32 %v5984, %v5387
    %v6027 = vmul.f32 %v5931, %v5985
    %v6028 = vmul.f32 %v5946, %v5986
    %v6029 = vadd.f32 %v6025, %v6027
    %v6030 = vadd.f32 %v6026, %v6028
    %v6031 = vtanh.pop %v6029
    %v6032 = vtanh.pop %v6030
    %v6033 = vmul.f32 %v6009, %v6031
    %v6034 = vmul.f32 %v6024, %v6032
    %6035 = vst [vmem:[#allocation2] sm:$0xff] %v6033
    %6036 = vst [vmem:[#allocation2 + $0x8] sm:$0xff] %v6034
    %6037 = vst [vmem:[#allocation3] sm:$0xff] %v6029
    %6038 = vst [vmem:[#allocation3 + $0x8] sm:$0xff] %v6030
    %v6039 = vpack.c.bf16 %v6034, %v6033
    %v6040 = vld [vmem:[#allocation4] sm:$0xff]
    %v6041 = vld [vmem:[#allocation4 + $0x8] sm:$0xff]
    %v6042 = vld [vmem:[#allocation5] sm:$0xff]
    %v6043 = vld [vmem:[#allocation5 + $0x8] sm:$0xff]
    %v6044 = vld [vmem:[#allocation14] sm:$0xff]
    %v6045 = vld [vmem:[#allocation14 + $0x8] sm:$0xff]
    %v6046 = vld [vmem:[#allocation14 + $0x10] sm:$0xff]
    %v6047 = vld [vmem:[#allocation14 + $0x18] sm:$0xff]
    %v6048 = vld [vmem:[#allocation14 + $0x20] sm:$0xff]
    %v6049 = vld [vmem:[#allocation14 + $0x28] sm:$0xff]
    %v6050 = vld [vmem:[#allocation14 + $0x30] sm:$0xff]
    %v6051 = vld [vmem:[#allocation14 + $0x38] sm:$0xff]
    %v6052 = vld [vmem:[#allocation14 + $0x40] sm:$0xff]
    %v6053 = vld [vmem:[#allocation14 + $0x48] sm:$0xff]
    %v6054 = vld [vmem:[#allocation14 + $0x50] sm:$0xff]
    %v6055 = vld [vmem:[#allocation14 + $0x58] sm:$0xff]
    %v6056 = vld [vmem:[#allocation14 + $0x60] sm:$0xff]
    %v6057 = vld [vmem:[#allocation14 + $0x68] sm:$0xff]
    %v6058 = vld [vmem:[#allocation14 + $0x70] sm:$0xff]
    %v6059 = vld [vmem:[#allocation14 + $0x78] sm:$0xff]
    %v6060 = vld [vmem:[#allocation14 + $0x80] sm:$0xff]
    %v6061 = vld [vmem:[#allocation14 + $0x88] sm:$0xff]
    %v6062 = vld [vmem:[#allocation14 + $0x90] sm:$0xff]
    %v6063 = vld [vmem:[#allocation14 + $0x98] sm:$0xff]
    %v6064 = vld [vmem:[#allocation14 + $0xa0] sm:$0xff]
    %v6065 = vld [vmem:[#allocation14 + $0xa8] sm:$0xff]
    %v6066 = vld [vmem:[#allocation14 + $0xb0] sm:$0xff]
    %v6067 = vld [vmem:[#allocation14 + $0xb8] sm:$0xff]
    %v6068 = vld [vmem:[#allocation14 + $0xc0] sm:$0xff]
    %v6069 = vld [vmem:[#allocation14 + $0xc8] sm:$0xff]
    %v6070 = vld [vmem:[#allocation14 + $0xd0] sm:$0xff]
    %v6071 = vld [vmem:[#allocation14 + $0xd8] sm:$0xff]
    %v6072 = vld [vmem:[#allocation14 + $0xe0] sm:$0xff]
    %v6073 = vld [vmem:[#allocation14 + $0xe8] sm:$0xff]
    %v6074 = vld [vmem:[#allocation14 + $0xf0] sm:$0xff]
    %v6075 = vld [vmem:[#allocation14 + $0xf8] sm:$0xff]
    %v6076 = vpack.c.bf16 %v6041, %v6040
    %v6077 = vld [vmem:[#allocation15] sm:$0xff]
    %v6078 = vld [vmem:[#allocation15 + $0x8] sm:$0xff]
    %v6079 = vld [vmem:[#allocation15 + $0x10] sm:$0xff]
    %v6080 = vld [vmem:[#allocation15 + $0x18] sm:$0xff]
    %v6081 = vld [vmem:[#allocation15 + $0x20] sm:$0xff]
    %v6082 = vld [vmem:[#allocation15 + $0x28] sm:$0xff]
    %v6083 = vld [vmem:[#allocation15 + $0x30] sm:$0xff]
    %v6084 = vld [vmem:[#allocation15 + $0x38] sm:$0xff]
    %v6085 = vld [vmem:[#allocation15 + $0x40] sm:$0xff]
    %v6086 = vld [vmem:[#allocation15 + $0x48] sm:$0xff]
    %v6087 = vld [vmem:[#allocation15 + $0x50] sm:$0xff]
    %v6088 = vld [vmem:[#allocation15 + $0x58] sm:$0xff]
    %v6089 = vld [vmem:[#allocation15 + $0x60] sm:$0xff]
    %v6090 = vld [vmem:[#allocation15 + $0x68] sm:$0xff]
    %v6091 = vld [vmem:[#allocation15 + $0x70] sm:$0xff]
    %v6092 = vld [vmem:[#allocation15 + $0x78] sm:$0xff]
    %v6093 = vld [vmem:[#allocation15 + $0x80] sm:$0xff]
    %v6094 = vld [vmem:[#allocation15 + $0x88] sm:$0xff]
    %v6095 = vld [vmem:[#allocation15 + $0x90] sm:$0xff]
    %v6096 = vld [vmem:[#allocation15 + $0x98] sm:$0xff]
    %v6097 = vld [vmem:[#allocation15 + $0xa0] sm:$0xff]
    %v6098 = vld [vmem:[#allocation15 + $0xa8] sm:$0xff]
    %v6099 = vld [vmem:[#allocation15 + $0xb0] sm:$0xff]
    %v6100 = vld [vmem:[#allocation15 + $0xb8] sm:$0xff]
    %v6101 = vld [vmem:[#allocation15 + $0xc0] sm:$0xff]
    %v6102 = vld [vmem:[#allocation15 + $0xc8] sm:$0xff]
    %v6103 = vld [vmem:[#allocation15 + $0xd0] sm:$0xff]
    %v6104 = vld [vmem:[#allocation15 + $0xd8] sm:$0xff]
    %v6105 = vld [vmem:[#allocation15 + $0xe0] sm:$0xff]
    %v6106 = vld [vmem:[#allocation15 + $0xe8] sm:$0xff]
    %v6107 = vld [vmem:[#allocation15 + $0xf0] sm:$0xff]
    %v6108 = vld [vmem:[#allocation15 + $0xf8] sm:$0xff]
    %v6141 = vunpack.c.l.b16 %v6077
    %v6142 = vunpack.c.h.b16 %v6077
    %v6143 = vunpack.c.l.b16 %v6078
    %v6144 = vunpack.c.h.b16 %v6078
    %v6145 = vunpack.c.l.b16 %v6079
    %v6146 = vunpack.c.h.b16 %v6079
    %v6147 = vunpack.c.l.b16 %v6080
    %v6148 = vunpack.c.h.b16 %v6080
    %v6149 = vunpack.c.l.b16 %v6081
    %v6150 = vunpack.c.h.b16 %v6081
    %v6151 = vunpack.c.l.b16 %v6082
    %v6152 = vunpack.c.h.b16 %v6082
    %v6153 = vunpack.c.l.b16 %v6083
    %v6154 = vunpack.c.h.b16 %v6083
    %v6155 = vunpack.c.l.b16 %v6084
    %v6156 = vunpack.c.h.b16 %v6084
    %v6157 = vunpack.c.l.b16 %v6085
    %v6158 = vunpack.c.h.b16 %v6085
    %v6159 = vunpack.c.l.b16 %v6086
    %v6160 = vunpack.c.h.b16 %v6086
    %v6161 = vunpack.c.l.b16 %v6087
    %v6162 = vunpack.c.h.b16 %v6087
    %v6163 = vunpack.c.l.b16 %v6088
    %v6164 = vunpack.c.h.b16 %v6088
    %v6165 = vunpack.c.l.b16 %v6089
    %v6166 = vunpack.c.h.b16 %v6089
    %v6167 = vunpack.c.l.b16 %v6090
    %v6168 = vunpack.c.h.b16 %v6090
    %v6169 = vunpack.c.l.b16 %v6091
    %v6170 = vunpack.c.h.b16 %v6091
    %v6171 = vunpack.c.l.b16 %v6092
    %v6172 = vunpack.c.h.b16 %v6092
    %v6173 = vunpack.c.l.b16 %v6093
    %v6174 = vunpack.c.h.b16 %v6093
    %v6175 = vunpack.c.l.b16 %v6094
    %v6176 = vunpack.c.h.b16 %v6094
    %v6177 = vunpack.c.l.b16 %v6095
    %v6178 = vunpack.c.h.b16 %v6095
    %v6179 = vunpack.c.l.b16 %v6096
    %v6180 = vunpack.c.h.b16 %v6096
    %v6181 = vunpack.c.l.b16 %v6097
    %v6182 = vunpack.c.h.b16 %v6097
    %v6183 = vunpack.c.l.b16 %v6098
    %v6184 = vunpack.c.h.b16 %v6098
    %v6185 = vunpack.c.l.b16 %v6099
    %v6186 = vunpack.c.h.b16 %v6099
    %v6187 = vunpack.c.l.b16 %v6100
    %v6188 = vunpack.c.h.b16 %v6100
    %v6189 = vunpack.c.l.b16 %v6101
    %v6190 = vunpack.c.h.b16 %v6101
    %v6191 = vunpack.c.l.b16 %v6102
    %v6192 = vunpack.c.h.b16 %v6102
    %v6193 = vunpack.c.l.b16 %v6103
    %v6194 = vunpack.c.h.b16 %v6103
    %v6195 = vunpack.c.l.b16 %v6104
    %v6196 = vunpack.c.h.b16 %v6104
    %v6197 = vunpack.c.l.b16 %v6105
    %v6198 = vunpack.c.h.b16 %v6105
    %v6199 = vunpack.c.l.b16 %v6106
    %v6200 = vunpack.c.h.b16 %v6106
    %v6201 = vunpack.c.l.b16 %v6107
    %v6202 = vunpack.c.h.b16 %v6107
    %v6203 = vunpack.c.l.b16 %v6108
    %v6204 = vunpack.c.h.b16 %v6108
    %v6205 = vpack.c.b16 %v6145, %v6141
    %v6206 = vpack.c.b16 %v6146, %v6142
    %v6207 = vpack.c.b16 %v6147, %v6143
    %v6208 = vpack.c.b16 %v6148, %v6144
    %v6209 = vpack.c.b16 %v6153, %v6149
    %v6210 = vpack.c.b16 %v6154, %v6150
    %v6211 = vpack.c.b16 %v6155, %v6151
    %v6212 = vpack.c.b16 %v6156, %v6152
    %v6213 = vpack.c.b16 %v6161, %v6157
    %v6214 = vpack.c.b16 %v6162, %v6158
    %v6215 = vpack.c.b16 %v6163, %v6159
    %v6216 = vpack.c.b16 %v6164, %v6160
    %v6217 = vpack.c.b16 %v6169, %v6165
    %v6218 = vpack.c.b16 %v6170, %v6166
    %v6219 = vpack.c.b16 %v6171, %v6167
    %v6220 = vpack.c.b16 %v6172, %v6168
    %v6221 = vpack.c.b16 %v6177, %v6173
    %v6222 = vpack.c.b16 %v6178, %v6174
    %v6223 = vpack.c.b16 %v6179, %v6175
    %v6224 = vpack.c.b16 %v6180, %v6176
    %v6225 = vpack.c.b16 %v6185, %v6181
    %v6226 = vpack.c.b16 %v6186, %v6182
    %v6227 = vpack.c.b16 %v6187, %v6183
    %v6228 = vpack.c.b16 %v6188, %v6184
    %v6229 = vpack.c.b16 %v6193, %v6189
    %v6230 = vpack.c.b16 %v6194, %v6190
    %v6231 = vpack.c.b16 %v6195, %v6191
    %v6232 = vpack.c.b16 %v6196, %v6192
    %v6233 = vpack.c.b16 %v6201, %v6197
    %v6234 = vpack.c.b16 %v6202, %v6198
    %v6235 = vpack.c.b16 %v6203, %v6199
    %v6236 = vpack.c.b16 %v6204, %v6200
    %6269 = vmatpush.bf16.msra.mxu0 %v6233
    %6270 = vmatpush.bf16.msra.mxu0 %v6229
    %6271 = vmatpush.bf16.msra.mxu0 %v6225
    %6272 = vmatpush.bf16.msra.mxu0 %v6221
    %6273 = vmatpush.bf16.msra.mxu0 %v6217
    %6274 = vmatpush.bf16.msra.mxu0 %v6213
    %6275 = vmatpush.bf16.msra.mxu0 %v6209
    %6276 = vmatpush.bf16.msra.mxu0 %v6205
    %6277 = vmatmul.bf16.gmra.mxu0 %v6076
    %v6278 = vpop.f32.mrf.mxu0
    %v6279 = vadd.f32 0.0, %v6278
    %v6280 = vpop.f32.mrf.mxu0
    %v6281 = vadd.f32 0.0, %v6280
    %6282 = vdwg.mxu0
    %6283 = vmatpush.bf16.msra.mxu0 %v6234
    %6284 = vmatpush.bf16.msra.mxu0 %v6230
    %6285 = vmatpush.bf16.msra.mxu0 %v6226
    %6286 = vmatpush.bf16.msra.mxu0 %v6222
    %6287 = vmatpush.bf16.msra.mxu0 %v6218
    %6288 = vmatpush.bf16.msra.mxu0 %v6214
    %6289 = vmatpush.bf16.msra.mxu0 %v6210
    %6290 = vmatpush.bf16.msra.mxu0 %v6206
    %6291 = vmatmul.bf16.gmra.mxu0 %v6076
    %v6292 = vpop.f32.mrf.mxu0
    %v6293 = vadd.f32 0.0, %v6292
    %v6294 = vpop.f32.mrf.mxu0
    %v6295 = vadd.f32 0.0, %v6294
    %6296 = vdwg.mxu0
    %6297 = vmatpush.bf16.msra.mxu0 %v6235
    %6298 = vmatpush.bf16.msra.mxu0 %v6231
    %6299 = vmatpush.bf16.msra.mxu0 %v6227
    %6300 = vmatpush.bf16.msra.mxu0 %v6223
    %6301 = vmatpush.bf16.msra.mxu0 %v6219
    %6302 = vmatpush.bf16.msra.mxu0 %v6215
    %6303 = vmatpush.bf16.msra.mxu0 %v6211
    %6304 = vmatpush.bf16.msra.mxu0 %v6207
    %6305 = vmatmul.bf16.gmra.mxu0 %v6076
    %v6306 = vpop.f32.mrf.mxu0
    %v6307 = vadd.f32 0.0, %v6306
    %v6308 = vpop.f32.mrf.mxu0
    %v6309 = vadd.f32 0.0, %v6308
    %6310 = vdwg.mxu0
    %6311 = vmatpush.bf16.msra.mxu0 %v6236
    %6312 = vmatpush.bf16.msra.mxu0 %v6232
    %6313 = vmatpush.bf16.msra.mxu0 %v6228
    %6314 = vmatpush.bf16.msra.mxu0 %v6224
    %6315 = vmatpush.bf16.msra.mxu0 %v6220
    %6316 = vmatpush.bf16.msra.mxu0 %v6216
    %6317 = vmatpush.bf16.msra.mxu0 %v6212
    %6318 = vmatpush.bf16.msra.mxu0 %v6208
    %6319 = vmatmul.bf16.gmra.mxu0 %v6076
    %v6320 = vpop.f32.mrf.mxu0
    %v6321 = vadd.f32 0.0, %v6320
    %v6322 = vpop.f32.mrf.mxu0
    %v6323 = vadd.f32 0.0, %v6322
    %6324 = vdwg.mxu0
    %v6357 = vunpack.c.l.b16 %v6044
    %v6358 = vunpack.c.h.b16 %v6044
    %v6359 = vunpack.c.l.b16 %v6045
    %v6360 = vunpack.c.h.b16 %v6045
    %v6361 = vunpack.c.l.b16 %v6046
    %v6362 = vunpack.c.h.b16 %v6046
    %v6363 = vunpack.c.l.b16 %v6047
    %v6364 = vunpack.c.h.b16 %v6047
    %v6365 = vunpack.c.l.b16 %v6048
    %v6366 = vunpack.c.h.b16 %v6048
    %v6367 = vunpack.c.l.b16 %v6049
    %v6368 = vunpack.c.h.b16 %v6049
    %v6369 = vunpack.c.l.b16 %v6050
    %v6370 = vunpack.c.h.b16 %v6050
    %v6371 = vunpack.c.l.b16 %v6051
    %v6372 = vunpack.c.h.b16 %v6051
    %v6373 = vunpack.c.l.b16 %v6052
    %v6374 = vunpack.c.h.b16 %v6052
    %v6375 = vunpack.c.l.b16 %v6053
    %v6376 = vunpack.c.h.b16 %v6053
    %v6377 = vunpack.c.l.b16 %v6054
    %v6378 = vunpack.c.h.b16 %v6054
    %v6379 = vunpack.c.l.b16 %v6055
    %v6380 = vunpack.c.h.b16 %v6055
    %v6381 = vunpack.c.l.b16 %v6056
    %v6382 = vunpack.c.h.b16 %v6056
    %v6383 = vunpack.c.l.b16 %v6057
    %v6384 = vunpack.c.h.b16 %v6057
    %v6385 = vunpack.c.l.b16 %v6058
    %v6386 = vunpack.c.h.b16 %v6058
    %v6387 = vunpack.c.l.b16 %v6059
    %v6388 = vunpack.c.h.b16 %v6059
    %v6389 = vunpack.c.l.b16 %v6060
    %v6390 = vunpack.c.h.b16 %v6060
    %v6391 = vunpack.c.l.b16 %v6061
    %v6392 = vunpack.c.h.b16 %v6061
    %v6393 = vunpack.c.l.b16 %v6062
    %v6394 = vunpack.c.h.b16 %v6062
    %v6395 = vunpack.c.l.b16 %v6063
    %v6396 = vunpack.c.h.b16 %v6063
    %v6397 = vunpack.c.l.b16 %v6064
    %v6398 = vunpack.c.h.b16 %v6064
    %v6399 = vunpack.c.l.b16 %v6065
    %v6400 = vunpack.c.h.b16 %v6065
    %v6401 = vunpack.c.l.b16 %v6066
    %v6402 = vunpack.c.h.b16 %v6066
    %v6403 = vunpack.c.l.b16 %v6067
    %v6404 = vunpack.c.h.b16 %v6067
    %v6405 = vunpack.c.l.b16 %v6068
    %v6406 = vunpack.c.h.b16 %v6068
    %v6407 = vunpack.c.l.b16 %v6069
    %v6408 = vunpack.c.h.b16 %v6069
    %v6409 = vunpack.c.l.b16 %v6070
    %v6410 = vunpack.c.h.b16 %v6070
    %v6411 = vunpack.c.l.b16 %v6071
    %v6412 = vunpack.c.h.b16 %v6071
    %v6413 = vunpack.c.l.b16 %v6072
    %v6414 = vunpack.c.h.b16 %v6072
    %v6415 = vunpack.c.l.b16 %v6073
    %v6416 = vunpack.c.h.b16 %v6073
    %v6417 = vunpack.c.l.b16 %v6074
    %v6418 = vunpack.c.h.b16 %v6074
    %v6419 = vunpack.c.l.b16 %v6075
    %v6420 = vunpack.c.h.b16 %v6075
    %v6421 = vpack.c.b16 %v6361, %v6357
    %v6422 = vpack.c.b16 %v6362, %v6358
    %v6423 = vpack.c.b16 %v6363, %v6359
    %v6424 = vpack.c.b16 %v6364, %v6360
    %v6425 = vpack.c.b16 %v6369, %v6365
    %v6426 = vpack.c.b16 %v6370, %v6366
    %v6427 = vpack.c.b16 %v6371, %v6367
    %v6428 = vpack.c.b16 %v6372, %v6368
    %v6429 = vpack.c.b16 %v6377, %v6373
    %v6430 = vpack.c.b16 %v6378, %v6374
    %v6431 = vpack.c.b16 %v6379, %v6375
    %v6432 = vpack.c.b16 %v6380, %v6376
    %v6433 = vpack.c.b16 %v6385, %v6381
    %v6434 = vpack.c.b16 %v6386, %v6382
    %v6435 = vpack.c.b16 %v6387, %v6383
    %v6436 = vpack.c.b16 %v6388, %v6384
    %v6437 = vpack.c.b16 %v6393, %v6389
    %v6438 = vpack.c.b16 %v6394, %v6390
    %v6439 = vpack.c.b16 %v6395, %v6391
    %v6440 = vpack.c.b16 %v6396, %v6392
    %v6441 = vpack.c.b16 %v6401, %v6397
    %v6442 = vpack.c.b16 %v6402, %v6398
    %v6443 = vpack.c.b16 %v6403, %v6399
    %v6444 = vpack.c.b16 %v6404, %v6400
    %v6445 = vpack.c.b16 %v6409, %v6405
    %v6446 = vpack.c.b16 %v6410, %v6406
    %v6447 = vpack.c.b16 %v6411, %v6407
    %v6448 = vpack.c.b16 %v6412, %v6408
    %v6449 = vpack.c.b16 %v6417, %v6413
    %v6450 = vpack.c.b16 %v6418, %v6414
    %v6451 = vpack.c.b16 %v6419, %v6415
    %v6452 = vpack.c.b16 %v6420, %v6416
    %6485 = vmatpush.bf16.msra.mxu0 %v6449
    %6486 = vmatpush.bf16.msra.mxu0 %v6445
    %6487 = vmatpush.bf16.msra.mxu0 %v6441
    %6488 = vmatpush.bf16.msra.mxu0 %v6437
    %6489 = vmatpush.bf16.msra.mxu0 %v6433
    %6490 = vmatpush.bf16.msra.mxu0 %v6429
    %6491 = vmatpush.bf16.msra.mxu0 %v6425
    %6492 = vmatpush.bf16.msra.mxu0 %v6421
    %6493 = vmatmul.bf16.gmra.mxu0 %v6039
    %v6494 = vpop.f32.mrf.mxu0
    %v6495 = vadd.f32 %v6279, %v6494
    %v6496 = vpop.f32.mrf.mxu0
    %v6497 = vadd.f32 %v6281, %v6496
    %6498 = vdwg.mxu0
    %6499 = vmatpush.bf16.msra.mxu0 %v6450
    %6500 = vmatpush.bf16.msra.mxu0 %v6446
    %6501 = vmatpush.bf16.msra.mxu0 %v6442
    %6502 = vmatpush.bf16.msra.mxu0 %v6438
    %6503 = vmatpush.bf16.msra.mxu0 %v6434
    %6504 = vmatpush.bf16.msra.mxu0 %v6430
    %6505 = vmatpush.bf16.msra.mxu0 %v6426
    %6506 = vmatpush.bf16.msra.mxu0 %v6422
    %6507 = vmatmul.bf16.gmra.mxu0 %v6039
    %v6508 = vpop.f32.mrf.mxu0
    %v6509 = vadd.f32 %v6293, %v6508
    %v6510 = vpop.f32.mrf.mxu0
    %v6511 = vadd.f32 %v6295, %v6510
    %6512 = vdwg.mxu0
    %6513 = vmatpush.bf16.msra.mxu0 %v6451
    %6514 = vmatpush.bf16.msra.mxu0 %v6447
    %6515 = vmatpush.bf16.msra.mxu0 %v6443
    %6516 = vmatpush.bf16.msra.mxu0 %v6439
    %6517 = vmatpush.bf16.msra.mxu0 %v6435
    %6518 = vmatpush.bf16.msra.mxu0 %v6431
    %6519 = vmatpush.bf16.msra.mxu0 %v6427
    %6520 = vmatpush.bf16.msra.mxu0 %v6423
    %6521 = vmatmul.bf16.gmra.mxu0 %v6039
    %v6522 = vpop.f32.mrf.mxu0
    %v6523 = vadd.f32 %v6307, %v6522
    %v6524 = vpop.f32.mrf.mxu0
    %v6525 = vadd.f32 %v6309, %v6524
    %6526 = vdwg.mxu0
    %6527 = vmatpush.bf16.msra.mxu0 %v6452
    %6528 = vmatpush.bf16.msra.mxu0 %v6448
    %6529 = vmatpush.bf16.msra.mxu0 %v6444
    %6530 = vmatpush.bf16.msra.mxu0 %v6440
    %6531 = vmatpush.bf16.msra.mxu0 %v6436
    %6532 = vmatpush.bf16.msra.mxu0 %v6432
    %6533 = vmatpush.bf16.msra.mxu0 %v6428
    %6534 = vmatpush.bf16.msra.mxu0 %v6424
    %6535 = vmatmul.bf16.gmra.mxu0 %v6039
    %v6536 = vpop.f32.mrf.mxu0
    %v6537 = vadd.f32 %v6321, %v6536
    %v6538 = vpop.f32.mrf.mxu0
    %v6539 = vadd.f32 %v6323, %v6538
    %6540 = vdwg.mxu0
    %v6541 = vld [vmem:[%s6] sm:$0xf]
    %v6543 = vperm.slane %v6541, 0
    %v6544 = vperm.slane %v6541, 1
    %v6545 = vperm.slane %v6541, 2
    %v6546 = vperm.slane %v6541, 3
    %v6551 = vadd.f32 %v6495, %v6543
    %v6552 = vadd.f32 %v6509, %v6544
    %v6553 = vadd.f32 %v6523, %v6545
    %v6554 = vadd.f32 %v6537, %v6546
    %v6555 = vadd.f32 %v6497, %v6543
    %v6556 = vadd.f32 %v6511, %v6544
    %v6557 = vadd.f32 %v6525, %v6545
    %v6558 = vadd.f32 %v6539, %v6546
    %v6559 = vxor.u32 %v6551, 2147483648
    %v6560 = vxor.u32 %v6555, 2147483648
    %v6561 = vmul.f32 %v6559, 1.442695
    %v6562 = vpow.pop %v6561
    %v6563 = vmul.f32 %v6560, 1.442695
    %v6564 = vpow.pop %v6563
    %v6565 = vadd.f32 %v6562, 1.0
    %v6566 = vadd.f32 %v6564, 1.0
    %v6567 = vrcp.pop %v6565
    %v6568 = vmul.f32 %v6565, %v6567
    %v6569 = vsub.f32 1.0, %v6568
    %v6570 = vmul.f32 %v6567, %v6569
    %v6571 = vadd.f32 %v6567, %v6570
    %vm6572 = vweird.f32 %v6565
    %vm6573 = vweird.f32 %v6567
    %vm6574 = vmor %vm6572, %vm6573
    %v6575 = vsel %vm6574, %v6567, %v6571
    %v6576 = vand.u32 2147483647, %v6565
    %vm6577 = vcmp.eq.f32.partialorder %v6576, 8.507059e+37
    %v6578 = vand.u32 %v6565, 2147483648
    %v6579 = vor.u32 1.1754944e-38, %v6578
    %v6580 = vsel %vm6577, %v6579, %v6575
    %v6581 = vmul.f32 1.0, %v6580
    %v6582 = vrcp.pop %v6566
    %v6583 = vmul.f32 %v6566, %v6582
    %v6584 = vsub.f32 1.0, %v6583
    %v6585 = vmul.f32 %v6582, %v6584
    %v6586 = vadd.f32 %v6582, %v6585
    %vm6587 = vweird.f32 %v6566
    %vm6588 = vweird.f32 %v6582
    %vm6589 = vmor %vm6587, %vm6588
    %v6590 = vsel %vm6589, %v6582, %v6586
    %v6591 = vand.u32 2147483647, %v6566
    %vm6592 = vcmp.eq.f32.partialorder %v6591, 8.507059e+37
    %v6593 = vand.u32 %v6566, 2147483648
    %v6594 = vor.u32 1.1754944e-38, %v6593
    %v6595 = vsel %vm6592, %v6594, %v6590
    %v6596 = vmul.f32 1.0, %v6595
    %v6597 = vxor.u32 %v6552, 2147483648
    %v6598 = vxor.u32 %v6556, 2147483648
    %v6599 = vmul.f32 %v6597, 1.442695
    %v6600 = vpow.pop %v6599
    %v6601 = vmul.f32 %v6598, 1.442695
    %v6602 = vpow.pop %v6601
    %v6603 = vadd.f32 %v6600, 1.0
    %v6604 = vadd.f32 %v6602, 1.0
    %v6605 = vrcp.pop %v6603
    %v6606 = vmul.f32 %v6603, %v6605
    %v6607 = vsub.f32 1.0, %v6606
    %v6608 = vmul.f32 %v6605, %v6607
    %v6609 = vadd.f32 %v6605, %v6608
    %vm6610 = vweird.f32 %v6603
    %vm6611 = vweird.f32 %v6605
    %vm6612 = vmor %vm6610, %vm6611
    %v6613 = vsel %vm6612, %v6605, %v6609
    %v6614 = vand.u32 2147483647, %v6603
    %vm6615 = vcmp.eq.f32.partialorder %v6614, 8.507059e+37
    %v6616 = vand.u32 %v6603, 2147483648
    %v6617 = vor.u32 1.1754944e-38, %v6616
    %v6618 = vsel %vm6615, %v6617, %v6613
    %v6619 = vmul.f32 1.0, %v6618
    %v6620 = vrcp.pop %v6604
    %v6621 = vmul.f32 %v6604, %v6620
    %v6622 = vsub.f32 1.0, %v6621
    %v6623 = vmul.f32 %v6620, %v6622
    %v6624 = vadd.f32 %v6620, %v6623
    %vm6625 = vweird.f32 %v6604
    %vm6626 = vweird.f32 %v6620
    %vm6627 = vmor %vm6625, %vm6626
    %v6628 = vsel %vm6627, %v6620, %v6624
    %v6629 = vand.u32 2147483647, %v6604
    %vm6630 = vcmp.eq.f32.partialorder %v6629, 8.507059e+37
    %v6631 = vand.u32 %v6604, 2147483648
    %v6632 = vor.u32 1.1754944e-38, %v6631
    %v6633 = vsel %vm6630, %v6632, %v6628
    %v6634 = vmul.f32 1.0, %v6633
    %v6635 = vtanh.pop %v6553
    %v6636 = vtanh.pop %v6557
    %v6637 = vxor.u32 %v6554, 2147483648
    %v6638 = vxor.u32 %v6558, 2147483648
    %v6639 = vmul.f32 %v6637, 1.442695
    %v6640 = vpow.pop %v6639
    %v6641 = vmul.f32 %v6638, 1.442695
    %v6642 = vpow.pop %v6641
    %v6643 = vadd.f32 %v6640, 1.0
    %v6644 = vadd.f32 %v6642, 1.0
    %v6645 = vrcp.pop %v6643
    %v6646 = vmul.f32 %v6643, %v6645
    %v6647 = vsub.f32 1.0, %v6646
    %v6648 = vmul.f32 %v6645, %v6647
    %v6649 = vadd.f32 %v6645, %v6648
    %vm6650 = vweird.f32 %v6643
    %vm6651 = vweird.f32 %v6645
    %vm6652 = vmor %vm6650, %vm6651
    %v6653 = vsel %vm6652, %v6645, %v6649
    %v6654 = vand.u32 2147483647, %v6643
    %vm6655 = vcmp.eq.f32.partialorder %v6654, 8.507059e+37
    %v6656 = vand.u32 %v6643, 2147483648
    %v6657 = vor.u32 1.1754944e-38, %v6656
    %v6658 = vsel %vm6655, %v6657, %v6653
    %v6659 = vmul.f32 1.0, %v6658
    %v6660 = vrcp.pop %v6644
    %v6661 = vmul.f32 %v6644, %v6660
    %v6662 = vsub.f32 1.0, %v6661
    %v6663 = vmul.f32 %v6660, %v6662
    %v6664 = vadd.f32 %v6660, %v6663
    %vm6665 = vweird.f32 %v6644
    %vm6666 = vweird.f32 %v6660
    %vm6667 = vmor %vm6665, %vm6666
    %v6668 = vsel %vm6667, %v6660, %v6664
    %v6669 = vand.u32 2147483647, %v6644
    %vm6670 = vcmp.eq.f32.partialorder %v6669, 8.507059e+37
    %v6671 = vand.u32 %v6644, 2147483648
    %v6672 = vor.u32 1.1754944e-38, %v6671
    %v6673 = vsel %vm6670, %v6672, %v6668
    %v6674 = vmul.f32 1.0, %v6673
    %v6675 = vmul.f32 %v6619, %v6042
    %v6676 = vmul.f32 %v6634, %v6043
    %v6677 = vmul.f32 %v6581, %v6635
    %v6678 = vmul.f32 %v6596, %v6636
    %v6679 = vadd.f32 %v6675, %v6677
    %v6680 = vadd.f32 %v6676, %v6678
    %v6681 = vtanh.pop %v6679
    %v6682 = vtanh.pop %v6680
    %v6683 = vmul.f32 %v6659, %v6681
    %v6684 = vmul.f32 %v6674, %v6682
    %6685 = vst [vmem:[#allocation4] sm:$0xff] %v6683
    %6686 = vst [vmem:[#allocation4 + $0x8] sm:$0xff] %v6684
    %6687 = vst [vmem:[#allocation5] sm:$0xff] %v6679
    %6688 = vst [vmem:[#allocation5 + $0x8] sm:$0xff] %v6680
    %v6689 = vpack.c.bf16 %v6683, %v6683
    %v6690 = vpack.c.bf16 %v6684, %v6684
    %s6691 = scalar_lea.vmem [#allocation17], 32
    %6692 = vst [vmem:[%s6691] sm:$0xf] %v6689
    %6693 = vst [vmem:[%s6691 + $0x4] sm:$0xf] %v6690
    %s6694 = scalar_lea.vmem [#allocation6], 40
    %v6695 = vld [vmem:[%s6694] sm:$0xf]
    %v6696 = vld [vmem:[%s6694 + $0x4] sm:$0xf]
    %v6697 = vld [vmem:[#allocation2] sm:$0xff]
    %v6698 = vld [vmem:[#allocation2 + $0x8] sm:$0xff]
    %v6699 = vld [vmem:[#allocation3] sm:$0xff]
    %v6700 = vld [vmem:[#allocation3 + $0x8] sm:$0xff]
    %v6701 = vld [vmem:[#allocation9] sm:$0xff]
    %v6702 = vld [vmem:[#allocation9 + $0x8] sm:$0xff]
    %v6703 = vld [vmem:[#allocation9 + $0x10] sm:$0xff]
    %v6704 = vld [vmem:[#allocation9 + $0x18] sm:$0xff]
    %v6705 = vld [vmem:[#allocation9 + $0x20] sm:$0xff]
    %v6706 = vld [vmem:[#allocation9 + $0x28] sm:$0xff]
    %v6707 = vld [vmem:[#allocation9 + $0x30] sm:$0xff]
    %v6708 = vld [vmem:[#allocation9 + $0x38] sm:$0xff]
    %v6709 = vld [vmem:[#allocation9 + $0x40] sm:$0xff]
    %v6710 = vld [vmem:[#allocation9 + $0x48] sm:$0xff]
    %v6711 = vld [vmem:[#allocation9 + $0x50] sm:$0xff]
    %v6712 = vld [vmem:[#allocation9 + $0x58] sm:$0xff]
    %v6713 = vld [vmem:[#allocation9 + $0x60] sm:$0xff]
    %v6714 = vld [vmem:[#allocation9 + $0x68] sm:$0xff]
    %v6715 = vld [vmem:[#allocation9 + $0x70] sm:$0xff]
    %v6716 = vld [vmem:[#allocation9 + $0x78] sm:$0xff]
    %v6717 = vld [vmem:[#allocation9 + $0x80] sm:$0xff]
    %v6718 = vld [vmem:[#allocation9 + $0x88] sm:$0xff]
    %v6719 = vld [vmem:[#allocation9 + $0x90] sm:$0xff]
    %v6720 = vld [vmem:[#allocation9 + $0x98] sm:$0xff]
    %v6721 = vld [vmem:[#allocation9 + $0xa0] sm:$0xff]
    %v6722 = vld [vmem:[#allocation9 + $0xa8] sm:$0xff]
    %v6723 = vld [vmem:[#allocation9 + $0xb0] sm:$0xff]
    %v6724 = vld [vmem:[#allocation9 + $0xb8] sm:$0xff]
    %v6725 = vld [vmem:[#allocation9 + $0xc0] sm:$0xff]
    %v6726 = vld [vmem:[#allocation9 + $0xc8] sm:$0xff]
    %v6727 = vld [vmem:[#allocation9 + $0xd0] sm:$0xff]
    %v6728 = vld [vmem:[#allocation9 + $0xd8] sm:$0xff]
    %v6729 = vld [vmem:[#allocation9 + $0xe0] sm:$0xff]
    %v6730 = vld [vmem:[#allocation9 + $0xe8] sm:$0xff]
    %v6731 = vld [vmem:[#allocation9 + $0xf0] sm:$0xff]
    %v6732 = vld [vmem:[#allocation9 + $0xf8] sm:$0xff]
    %v6733 = vpack.c.bf16 %v6698, %v6697
    %v6734 = vld [vmem:[#allocation11] sm:$0xff]
    %v6735 = vld [vmem:[#allocation11 + $0x8] sm:$0xff]
    %v6736 = vld [vmem:[#allocation11 + $0x10] sm:$0xff]
    %v6737 = vld [vmem:[#allocation11 + $0x18] sm:$0xff]
    %v6738 = vld [vmem:[#allocation11 + $0x20] sm:$0xff]
    %v6739 = vld [vmem:[#allocation11 + $0x28] sm:$0xff]
    %v6740 = vld [vmem:[#allocation11 + $0x30] sm:$0xff]
    %v6741 = vld [vmem:[#allocation11 + $0x38] sm:$0xff]
    %v6742 = vld [vmem:[#allocation11 + $0x40] sm:$0xff]
    %v6743 = vld [vmem:[#allocation11 + $0x48] sm:$0xff]
    %v6744 = vld [vmem:[#allocation11 + $0x50] sm:$0xff]
    %v6745 = vld [vmem:[#allocation11 + $0x58] sm:$0xff]
    %v6746 = vld [vmem:[#allocation11 + $0x60] sm:$0xff]
    %v6747 = vld [vmem:[#allocation11 + $0x68] sm:$0xff]
    %v6748 = vld [vmem:[#allocation11 + $0x70] sm:$0xff]
    %v6749 = vld [vmem:[#allocation11 + $0x78] sm:$0xff]
    %v6750 = vld [vmem:[#allocation11 + $0x80] sm:$0xff]
    %v6751 = vld [vmem:[#allocation11 + $0x88] sm:$0xff]
    %v6752 = vld [vmem:[#allocation11 + $0x90] sm:$0xff]
    %v6753 = vld [vmem:[#allocation11 + $0x98] sm:$0xff]
    %v6754 = vld [vmem:[#allocation11 + $0xa0] sm:$0xff]
    %v6755 = vld [vmem:[#allocation11 + $0xa8] sm:$0xff]
    %v6756 = vld [vmem:[#allocation11 + $0xb0] sm:$0xff]
    %v6757 = vld [vmem:[#allocation11 + $0xb8] sm:$0xff]
    %v6758 = vld [vmem:[#allocation11 + $0xc0] sm:$0xff]
    %v6759 = vld [vmem:[#allocation11 + $0xc8] sm:$0xff]
    %v6760 = vld [vmem:[#allocation11 + $0xd0] sm:$0xff]
    %v6761 = vld [vmem:[#allocation11 + $0xd8] sm:$0xff]
    %v6762 = vld [vmem:[#allocation11 + $0xe0] sm:$0xff]
    %v6763 = vld [vmem:[#allocation11 + $0xe8] sm:$0xff]
    %v6764 = vld [vmem:[#allocation11 + $0xf0] sm:$0xff]
    %v6765 = vld [vmem:[#allocation11 + $0xf8] sm:$0xff]
    %v6798 = vunpack.c.l.b16 %v6734
    %v6799 = vunpack.c.h.b16 %v6734
    %v6800 = vunpack.c.l.b16 %v6735
    %v6801 = vunpack.c.h.b16 %v6735
    %v6802 = vunpack.c.l.b16 %v6736
    %v6803 = vunpack.c.h.b16 %v6736
    %v6804 = vunpack.c.l.b16 %v6737
    %v6805 = vunpack.c.h.b16 %v6737
    %v6806 = vunpack.c.l.b16 %v6738
    %v6807 = vunpack.c.h.b16 %v6738
    %v6808 = vunpack.c.l.b16 %v6739
    %v6809 = vunpack.c.h.b16 %v6739
    %v6810 = vunpack.c.l.b16 %v6740
    %v6811 = vunpack.c.h.b16 %v6740
    %v6812 = vunpack.c.l.b16 %v6741
    %v6813 = vunpack.c.h.b16 %v6741
    %v6814 = vunpack.c.l.b16 %v6742
    %v6815 = vunpack.c.h.b16 %v6742
    %v6816 = vunpack.c.l.b16 %v6743
    %v6817 = vunpack.c.h.b16 %v6743
    %v6818 = vunpack.c.l.b16 %v6744
    %v6819 = vunpack.c.h.b16 %v6744
    %v6820 = vunpack.c.l.b16 %v6745
    %v6821 = vunpack.c.h.b16 %v6745
    %v6822 = vunpack.c.l.b16 %v6746
    %v6823 = vunpack.c.h.b16 %v6746
    %v6824 = vunpack.c.l.b16 %v6747
    %v6825 = vunpack.c.h.b16 %v6747
    %v6826 = vunpack.c.l.b16 %v6748
    %v6827 = vunpack.c.h.b16 %v6748
    %v6828 = vunpack.c.l.b16 %v6749
    %v6829 = vunpack.c.h.b16 %v6749
    %v6830 = vunpack.c.l.b16 %v6750
    %v6831 = vunpack.c.h.b16 %v6750
    %v6832 = vunpack.c.l.b16 %v6751
    %v6833 = vunpack.c.h.b16 %v6751
    %v6834 = vunpack.c.l.b16 %v6752
    %v6835 = vunpack.c.h.b16 %v6752
    %v6836 = vunpack.c.l.b16 %v6753
    %v6837 = vunpack.c.h.b16 %v6753
    %v6838 = vunpack.c.l.b16 %v6754
    %v6839 = vunpack.c.h.b16 %v6754
    %v6840 = vunpack.c.l.b16 %v6755
    %v6841 = vunpack.c.h.b16 %v6755
    %v6842 = vunpack.c.l.b16 %v6756
    %v6843 = vunpack.c.h.b16 %v6756
    %v6844 = vunpack.c.l.b16 %v6757
    %v6845 = vunpack.c.h.b16 %v6757
    %v6846 = vunpack.c.l.b16 %v6758
    %v6847 = vunpack.c.h.b16 %v6758
    %v6848 = vunpack.c.l.b16 %v6759
    %v6849 = vunpack.c.h.b16 %v6759
    %v6850 = vunpack.c.l.b16 %v6760
    %v6851 = vunpack.c.h.b16 %v6760
    %v6852 = vunpack.c.l.b16 %v6761
    %v6853 = vunpack.c.h.b16 %v6761
    %v6854 = vunpack.c.l.b16 %v6762
    %v6855 = vunpack.c.h.b16 %v6762
    %v6856 = vunpack.c.l.b16 %v6763
    %v6857 = vunpack.c.h.b16 %v6763
    %v6858 = vunpack.c.l.b16 %v6764
    %v6859 = vunpack.c.h.b16 %v6764
    %v6860 = vunpack.c.l.b16 %v6765
    %v6861 = vunpack.c.h.b16 %v6765
    %v6862 = vpack.c.b16 %v6802, %v6798
    %v6863 = vpack.c.b16 %v6803, %v6799
    %v6864 = vpack.c.b16 %v6804, %v6800
    %v6865 = vpack.c.b16 %v6805, %v6801
    %v6866 = vpack.c.b16 %v6810, %v6806
    %v6867 = vpack.c.b16 %v6811, %v6807
    %v6868 = vpack.c.b16 %v6812, %v6808
    %v6869 = vpack.c.b16 %v6813, %v6809
    %v6870 = vpack.c.b16 %v6818, %v6814
    %v6871 = vpack.c.b16 %v6819, %v6815
    %v6872 = vpack.c.b16 %v6820, %v6816
    %v6873 = vpack.c.b16 %v6821, %v6817
    %v6874 = vpack.c.b16 %v6826, %v6822
    %v6875 = vpack.c.b16 %v6827, %v6823
    %v6876 = vpack.c.b16 %v6828, %v6824
    %v6877 = vpack.c.b16 %v6829, %v6825
    %v6878 = vpack.c.b16 %v6834, %v6830
    %v6879 = vpack.c.b16 %v6835, %v6831
    %v6880 = vpack.c.b16 %v6836, %v6832
    %v6881 = vpack.c.b16 %v6837, %v6833
    %v6882 = vpack.c.b16 %v6842, %v6838
    %v6883 = vpack.c.b16 %v6843, %v6839
    %v6884 = vpack.c.b16 %v6844, %v6840
    %v6885 = vpack.c.b16 %v6845, %v6841
    %v6886 = vpack.c.b16 %v6850, %v6846
    %v6887 = vpack.c.b16 %v6851, %v6847
    %v6888 = vpack.c.b16 %v6852, %v6848
    %v6889 = vpack.c.b16 %v6853, %v6849
    %v6890 = vpack.c.b16 %v6858, %v6854
    %v6891 = vpack.c.b16 %v6859, %v6855
    %v6892 = vpack.c.b16 %v6860, %v6856
    %v6893 = vpack.c.b16 %v6861, %v6857
    %6926 = vmatpush.bf16.msra.mxu0 %v6890
    %6927 = vmatpush.bf16.msra.mxu0 %v6886
    %6928 = vmatpush.bf16.msra.mxu0 %v6882
    %6929 = vmatpush.bf16.msra.mxu0 %v6878
    %6930 = vmatpush.bf16.msra.mxu0 %v6874
    %6931 = vmatpush.bf16.msra.mxu0 %v6870
    %6932 = vmatpush.bf16.msra.mxu0 %v6866
    %6933 = vmatpush.bf16.msra.mxu0 %v6862
    %6934 = vmatmul.bf16.gmra.mxu0 %v6733
    %v6935 = vpop.f32.mrf.mxu0
    %v6936 = vadd.f32 0.0, %v6935
    %v6937 = vpop.f32.mrf.mxu0
    %v6938 = vadd.f32 0.0, %v6937
    %6939 = vdwg.mxu0
    %6940 = vmatpush.bf16.msra.mxu0 %v6891
    %6941 = vmatpush.bf16.msra.mxu0 %v6887
    %6942 = vmatpush.bf16.msra.mxu0 %v6883
    %6943 = vmatpush.bf16.msra.mxu0 %v6879
    %6944 = vmatpush.bf16.msra.mxu0 %v6875
    %6945 = vmatpush.bf16.msra.mxu0 %v6871
    %6946 = vmatpush.bf16.msra.mxu0 %v6867
    %6947 = vmatpush.bf16.msra.mxu0 %v6863
    %6948 = vmatmul.bf16.gmra.mxu0 %v6733
    %v6949 = vpop.f32.mrf.mxu0
    %v6950 = vadd.f32 0.0, %v6949
    %v6951 = vpop.f32.mrf.mxu0
    %v6952 = vadd.f32 0.0, %v6951
    %6953 = vdwg.mxu0
    %6954 = vmatpush.bf16.msra.mxu0 %v6892
    %6955 = vmatpush.bf16.msra.mxu0 %v6888
    %6956 = vmatpush.bf16.msra.mxu0 %v6884
    %6957 = vmatpush.bf16.msra.mxu0 %v6880
    %6958 = vmatpush.bf16.msra.mxu0 %v6876
    %6959 = vmatpush.bf16.msra.mxu0 %v6872
    %6960 = vmatpush.bf16.msra.mxu0 %v6868
    %6961 = vmatpush.bf16.msra.mxu0 %v6864
    %6962 = vmatmul.bf16.gmra.mxu0 %v6733
    %v6963 = vpop.f32.mrf.mxu0
    %v6964 = vadd.f32 0.0, %v6963
    %v6965 = vpop.f32.mrf.mxu0
    %v6966 = vadd.f32 0.0, %v6965
    %6967 = vdwg.mxu0
    %6968 = vmatpush.bf16.msra.mxu0 %v6893
    %6969 = vmatpush.bf16.msra.mxu0 %v6889
    %6970 = vmatpush.bf16.msra.mxu0 %v6885
    %6971 = vmatpush.bf16.msra.mxu0 %v6881
    %6972 = vmatpush.bf16.msra.mxu0 %v6877
    %6973 = vmatpush.bf16.msra.mxu0 %v6873
    %6974 = vmatpush.bf16.msra.mxu0 %v6869
    %6975 = vmatpush.bf16.msra.mxu0 %v6865
    %6976 = vmatmul.bf16.gmra.mxu0 %v6733
    %v6977 = vpop.f32.mrf.mxu0
    %v6978 = vadd.f32 0.0, %v6977
    %v6979 = vpop.f32.mrf.mxu0
    %v6980 = vadd.f32 0.0, %v6979
    %6981 = vdwg.mxu0
    %v6984 = vunpack.c.l.b16 %v6695
    %v6985 = vunpack.c.l.b16 %v6696
    %v6986 = vpack.c.b16 %v6985, %v6984
    %v7020 = vunpack.c.l.b16 %v6701
    %v7021 = vunpack.c.h.b16 %v6701
    %v7022 = vunpack.c.l.b16 %v6702
    %v7023 = vunpack.c.h.b16 %v6702
    %v7024 = vunpack.c.l.b16 %v6703
    %v7025 = vunpack.c.h.b16 %v6703
    %v7026 = vunpack.c.l.b16 %v6704
    %v7027 = vunpack.c.h.b16 %v6704
    %v7028 = vunpack.c.l.b16 %v6705
    %v7029 = vunpack.c.h.b16 %v6705
    %v7030 = vunpack.c.l.b16 %v6706
    %v7031 = vunpack.c.h.b16 %v6706
    %v7032 = vunpack.c.l.b16 %v6707
    %v7033 = vunpack.c.h.b16 %v6707
    %v7034 = vunpack.c.l.b16 %v6708
    %v7035 = vunpack.c.h.b16 %v6708
    %v7036 = vunpack.c.l.b16 %v6709
    %v7037 = vunpack.c.h.b16 %v6709
    %v7038 = vunpack.c.l.b16 %v6710
    %v7039 = vunpack.c.h.b16 %v6710
    %v7040 = vunpack.c.l.b16 %v6711
    %v7041 = vunpack.c.h.b16 %v6711
    %v7042 = vunpack.c.l.b16 %v6712
    %v7043 = vunpack.c.h.b16 %v6712
    %v7044 = vunpack.c.l.b16 %v6713
    %v7045 = vunpack.c.h.b16 %v6713
    %v7046 = vunpack.c.l.b16 %v6714
    %v7047 = vunpack.c.h.b16 %v6714
    %v7048 = vunpack.c.l.b16 %v6715
    %v7049 = vunpack.c.h.b16 %v6715
    %v7050 = vunpack.c.l.b16 %v6716
    %v7051 = vunpack.c.h.b16 %v6716
    %v7052 = vunpack.c.l.b16 %v6717
    %v7053 = vunpack.c.h.b16 %v6717
    %v7054 = vunpack.c.l.b16 %v6718
    %v7055 = vunpack.c.h.b16 %v6718
    %v7056 = vunpack.c.l.b16 %v6719
    %v7057 = vunpack.c.h.b16 %v6719
    %v7058 = vunpack.c.l.b16 %v6720
    %v7059 = vunpack.c.h.b16 %v6720
    %v7060 = vunpack.c.l.b16 %v6721
    %v7061 = vunpack.c.h.b16 %v6721
    %v7062 = vunpack.c.l.b16 %v6722
    %v7063 = vunpack.c.h.b16 %v6722
    %v7064 = vunpack.c.l.b16 %v6723
    %v7065 = vunpack.c.h.b16 %v6723
    %v7066 = vunpack.c.l.b16 %v6724
    %v7067 = vunpack.c.h.b16 %v6724
    %v7068 = vunpack.c.l.b16 %v6725
    %v7069 = vunpack.c.h.b16 %v6725
    %v7070 = vunpack.c.l.b16 %v6726
    %v7071 = vunpack.c.h.b16 %v6726
    %v7072 = vunpack.c.l.b16 %v6727
    %v7073 = vunpack.c.h.b16 %v6727
    %v7074 = vunpack.c.l.b16 %v6728
    %v7075 = vunpack.c.h.b16 %v6728
    %v7076 = vunpack.c.l.b16 %v6729
    %v7077 = vunpack.c.h.b16 %v6729
    %v7078 = vunpack.c.l.b16 %v6730
    %v7079 = vunpack.c.h.b16 %v6730
    %v7080 = vunpack.c.l.b16 %v6731
    %v7081 = vunpack.c.h.b16 %v6731
    %v7082 = vunpack.c.l.b16 %v6732
    %v7083 = vunpack.c.h.b16 %v6732
    %v7084 = vpack.c.b16 %v7024, %v7020
    %v7085 = vpack.c.b16 %v7025, %v7021
    %v7086 = vpack.c.b16 %v7026, %v7022
    %v7087 = vpack.c.b16 %v7027, %v7023
    %v7088 = vpack.c.b16 %v7032, %v7028
    %v7089 = vpack.c.b16 %v7033, %v7029
    %v7090 = vpack.c.b16 %v7034, %v7030
    %v7091 = vpack.c.b16 %v7035, %v7031
    %v7092 = vpack.c.b16 %v7040, %v7036
    %v7093 = vpack.c.b16 %v7041, %v7037
    %v7094 = vpack.c.b16 %v7042, %v7038
    %v7095 = vpack.c.b16 %v7043, %v7039
    %v7096 = vpack.c.b16 %v7048, %v7044
    %v7097 = vpack.c.b16 %v7049, %v7045
    %v7098 = vpack.c.b16 %v7050, %v7046
    %v7099 = vpack.c.b16 %v7051, %v7047
    %v7100 = vpack.c.b16 %v7056, %v7052
    %v7101 = vpack.c.b16 %v7057, %v7053
    %v7102 = vpack.c.b16 %v7058, %v7054
    %v7103 = vpack.c.b16 %v7059, %v7055
    %v7104 = vpack.c.b16 %v7064, %v7060
    %v7105 = vpack.c.b16 %v7065, %v7061
    %v7106 = vpack.c.b16 %v7066, %v7062
    %v7107 = vpack.c.b16 %v7067, %v7063
    %v7108 = vpack.c.b16 %v7072, %v7068
    %v7109 = vpack.c.b16 %v7073, %v7069
    %v7110 = vpack.c.b16 %v7074, %v7070
    %v7111 = vpack.c.b16 %v7075, %v7071
    %v7112 = vpack.c.b16 %v7080, %v7076
    %v7113 = vpack.c.b16 %v7081, %v7077
    %v7114 = vpack.c.b16 %v7082, %v7078
    %v7115 = vpack.c.b16 %v7083, %v7079
    %7148 = vmatpush.bf16.msra.mxu0 %v7112
    %7149 = vmatpush.bf16.msra.mxu0 %v7108
    %7150 = vmatpush.bf16.msra.mxu0 %v7104
    %7151 = vmatpush.bf16.msra.mxu0 %v7100
    %7152 = vmatpush.bf16.msra.mxu0 %v7096
    %7153 = vmatpush.bf16.msra.mxu0 %v7092
    %7154 = vmatpush.bf16.msra.mxu0 %v7088
    %7155 = vmatpush.bf16.msra.mxu0 %v7084
    %7156 = vmatmul.bf16.gmra.mxu0 %v6986
    %v7157 = vpop.f32.mrf.mxu0
    %v7158 = vadd.f32 %v6936, %v7157
    %v7159 = vpop.f32.mrf.mxu0
    %v7160 = vadd.f32 %v6938, %v7159
    %7161 = vdwg.mxu0
    %7162 = vmatpush.bf16.msra.mxu0 %v7113
    %7163 = vmatpush.bf16.msra.mxu0 %v7109
    %7164 = vmatpush.bf16.msra.mxu0 %v7105
    %7165 = vmatpush.bf16.msra.mxu0 %v7101
    %7166 = vmatpush.bf16.msra.mxu0 %v7097
    %7167 = vmatpush.bf16.msra.mxu0 %v7093
    %7168 = vmatpush.bf16.msra.mxu0 %v7089
    %7169 = vmatpush.bf16.msra.mxu0 %v7085
    %7170 = vmatmul.bf16.gmra.mxu0 %v6986
    %v7171 = vpop.f32.mrf.mxu0
    %v7172 = vadd.f32 %v6950, %v7171
    %v7173 = vpop.f32.mrf.mxu0
    %v7174 = vadd.f32 %v6952, %v7173
    %7175 = vdwg.mxu0
    %7176 = vmatpush.bf16.msra.mxu0 %v7114
    %7177 = vmatpush.bf16.msra.mxu0 %v7110
    %7178 = vmatpush.bf16.msra.mxu0 %v7106
    %7179 = vmatpush.bf16.msra.mxu0 %v7102
    %7180 = vmatpush.bf16.msra.mxu0 %v7098
    %7181 = vmatpush.bf16.msra.mxu0 %v7094
    %7182 = vmatpush.bf16.msra.mxu0 %v7090
    %7183 = vmatpush.bf16.msra.mxu0 %v7086
    %7184 = vmatmul.bf16.gmra.mxu0 %v6986
    %v7185 = vpop.f32.mrf.mxu0
    %v7186 = vadd.f32 %v6964, %v7185
    %v7187 = vpop.f32.mrf.mxu0
    %v7188 = vadd.f32 %v6966, %v7187
    %7189 = vdwg.mxu0
    %7190 = vmatpush.bf16.msra.mxu0 %v7115
    %7191 = vmatpush.bf16.msra.mxu0 %v7111
    %7192 = vmatpush.bf16.msra.mxu0 %v7107
    %7193 = vmatpush.bf16.msra.mxu0 %v7103
    %7194 = vmatpush.bf16.msra.mxu0 %v7099
    %7195 = vmatpush.bf16.msra.mxu0 %v7095
    %7196 = vmatpush.bf16.msra.mxu0 %v7091
    %7197 = vmatpush.bf16.msra.mxu0 %v7087
    %7198 = vmatmul.bf16.gmra.mxu0 %v6986
    %v7199 = vpop.f32.mrf.mxu0
    %v7200 = vadd.f32 %v6978, %v7199
    %v7201 = vpop.f32.mrf.mxu0
    %v7202 = vadd.f32 %v6980, %v7201
    %7203 = vdwg.mxu0
    %v7204 = vld [vmem:[#allocation12] sm:$0xf]
    %v7206 = vperm.slane %v7204, 0
    %v7207 = vperm.slane %v7204, 1
    %v7208 = vperm.slane %v7204, 2
    %v7209 = vperm.slane %v7204, 3
    %v7214 = vadd.f32 %v7158, %v7206
    %v7215 = vadd.f32 %v7172, %v7207
    %v7216 = vadd.f32 %v7186, %v7208
    %v7217 = vadd.f32 %v7200, %v7209
    %v7218 = vadd.f32 %v7160, %v7206
    %v7219 = vadd.f32 %v7174, %v7207
    %v7220 = vadd.f32 %v7188, %v7208
    %v7221 = vadd.f32 %v7202, %v7209
    %v7222 = vxor.u32 %v7214, 2147483648
    %v7223 = vxor.u32 %v7218, 2147483648
    %v7224 = vmul.f32 %v7222, 1.442695
    %v7225 = vpow.pop %v7224
    %v7226 = vmul.f32 %v7223, 1.442695
    %v7227 = vpow.pop %v7226
    %v7228 = vadd.f32 %v7225, 1.0
    %v7229 = vadd.f32 %v7227, 1.0
    %v7230 = vrcp.pop %v7228
    %v7231 = vmul.f32 %v7228, %v7230
    %v7232 = vsub.f32 1.0, %v7231
    %v7233 = vmul.f32 %v7230, %v7232
    %v7234 = vadd.f32 %v7230, %v7233
    %vm7235 = vweird.f32 %v7228
    %vm7236 = vweird.f32 %v7230
    %vm7237 = vmor %vm7235, %vm7236
    %v7238 = vsel %vm7237, %v7230, %v7234
    %v7239 = vand.u32 2147483647, %v7228
    %vm7240 = vcmp.eq.f32.partialorder %v7239, 8.507059e+37
    %v7241 = vand.u32 %v7228, 2147483648
    %v7242 = vor.u32 1.1754944e-38, %v7241
    %v7243 = vsel %vm7240, %v7242, %v7238
    %v7244 = vmul.f32 1.0, %v7243
    %v7245 = vrcp.pop %v7229
    %v7246 = vmul.f32 %v7229, %v7245
    %v7247 = vsub.f32 1.0, %v7246
    %v7248 = vmul.f32 %v7245, %v7247
    %v7249 = vadd.f32 %v7245, %v7248
    %vm7250 = vweird.f32 %v7229
    %vm7251 = vweird.f32 %v7245
    %vm7252 = vmor %vm7250, %vm7251
    %v7253 = vsel %vm7252, %v7245, %v7249
    %v7254 = vand.u32 2147483647, %v7229
    %vm7255 = vcmp.eq.f32.partialorder %v7254, 8.507059e+37
    %v7256 = vand.u32 %v7229, 2147483648
    %v7257 = vor.u32 1.1754944e-38, %v7256
    %v7258 = vsel %vm7255, %v7257, %v7253
    %v7259 = vmul.f32 1.0, %v7258
    %v7260 = vxor.u32 %v7215, 2147483648
    %v7261 = vxor.u32 %v7219, 2147483648
    %v7262 = vmul.f32 %v7260, 1.442695
    %v7263 = vpow.pop %v7262
    %v7264 = vmul.f32 %v7261, 1.442695
    %v7265 = vpow.pop %v7264
    %v7266 = vadd.f32 %v7263, 1.0
    %v7267 = vadd.f32 %v7265, 1.0
    %v7268 = vrcp.pop %v7266
    %v7269 = vmul.f32 %v7266, %v7268
    %v7270 = vsub.f32 1.0, %v7269
    %v7271 = vmul.f32 %v7268, %v7270
    %v7272 = vadd.f32 %v7268, %v7271
    %vm7273 = vweird.f32 %v7266
    %vm7274 = vweird.f32 %v7268
    %vm7275 = vmor %vm7273, %vm7274
    %v7276 = vsel %vm7275, %v7268, %v7272
    %v7277 = vand.u32 2147483647, %v7266
    %vm7278 = vcmp.eq.f32.partialorder %v7277, 8.507059e+37
    %v7279 = vand.u32 %v7266, 2147483648
    %v7280 = vor.u32 1.1754944e-38, %v7279
    %v7281 = vsel %vm7278, %v7280, %v7276
    %v7282 = vmul.f32 1.0, %v7281
    %v7283 = vrcp.pop %v7267
    %v7284 = vmul.f32 %v7267, %v7283
    %v7285 = vsub.f32 1.0, %v7284
    %v7286 = vmul.f32 %v7283, %v7285
    %v7287 = vadd.f32 %v7283, %v7286
    %vm7288 = vweird.f32 %v7267
    %vm7289 = vweird.f32 %v7283
    %vm7290 = vmor %vm7288, %vm7289
    %v7291 = vsel %vm7290, %v7283, %v7287
    %v7292 = vand.u32 2147483647, %v7267
    %vm7293 = vcmp.eq.f32.partialorder %v7292, 8.507059e+37
    %v7294 = vand.u32 %v7267, 2147483648
    %v7295 = vor.u32 1.1754944e-38, %v7294
    %v7296 = vsel %vm7293, %v7295, %v7291
    %v7297 = vmul.f32 1.0, %v7296
    %v7298 = vtanh.pop %v7216
    %v7299 = vtanh.pop %v7220
    %v7300 = vxor.u32 %v7217, 2147483648
    %v7301 = vxor.u32 %v7221, 2147483648
    %v7302 = vmul.f32 %v7300, 1.442695
    %v7303 = vpow.pop %v7302
    %v7304 = vmul.f32 %v7301, 1.442695
    %v7305 = vpow.pop %v7304
    %v7306 = vadd.f32 %v7303, 1.0
    %v7307 = vadd.f32 %v7305, 1.0
    %v7308 = vrcp.pop %v7306
    %v7309 = vmul.f32 %v7306, %v7308
    %v7310 = vsub.f32 1.0, %v7309
    %v7311 = vmul.f32 %v7308, %v7310
    %v7312 = vadd.f32 %v7308, %v7311
    %vm7313 = vweird.f32 %v7306
    %vm7314 = vweird.f32 %v7308
    %vm7315 = vmor %vm7313, %vm7314
    %v7316 = vsel %vm7315, %v7308, %v7312
    %v7317 = vand.u32 2147483647, %v7306
    %vm7318 = vcmp.eq.f32.partialorder %v7317, 8.507059e+37
    %v7319 = vand.u32 %v7306, 2147483648
    %v7320 = vor.u32 1.1754944e-38, %v7319
    %v7321 = vsel %vm7318, %v7320, %v7316
    %v7322 = vmul.f32 1.0, %v7321
    %v7323 = vrcp.pop %v7307
    %v7324 = vmul.f32 %v7307, %v7323
    %v7325 = vsub.f32 1.0, %v7324
    %v7326 = vmul.f32 %v7323, %v7325
    %v7327 = vadd.f32 %v7323, %v7326
    %vm7328 = vweird.f32 %v7307
    %vm7329 = vweird.f32 %v7323
    %vm7330 = vmor %vm7328, %vm7329
    %v7331 = vsel %vm7330, %v7323, %v7327
    %v7332 = vand.u32 2147483647, %v7307
    %vm7333 = vcmp.eq.f32.partialorder %v7332, 8.507059e+37
    %v7334 = vand.u32 %v7307, 2147483648
    %v7335 = vor.u32 1.1754944e-38, %v7334
    %v7336 = vsel %vm7333, %v7335, %v7331
    %v7337 = vmul.f32 1.0, %v7336
    %v7338 = vmul.f32 %v7282, %v6699
    %v7339 = vmul.f32 %v7297, %v6700
    %v7340 = vmul.f32 %v7244, %v7298
    %v7341 = vmul.f32 %v7259, %v7299
    %v7342 = vadd.f32 %v7338, %v7340
    %v7343 = vadd.f32 %v7339, %v7341
    %v7344 = vtanh.pop %v7342
    %v7345 = vtanh.pop %v7343
    %v7346 = vmul.f32 %v7322, %v7344
    %v7347 = vmul.f32 %v7337, %v7345
    %7348 = vst [vmem:[#allocation2] sm:$0xff] %v7346
    %7349 = vst [vmem:[#allocation2 + $0x8] sm:$0xff] %v7347
    %7350 = vst [vmem:[#allocation3] sm:$0xff] %v7342
    %7351 = vst [vmem:[#allocation3 + $0x8] sm:$0xff] %v7343
    %v7352 = vpack.c.bf16 %v7347, %v7346
    %v7353 = vld [vmem:[#allocation4] sm:$0xff]
    %v7354 = vld [vmem:[#allocation4 + $0x8] sm:$0xff]
    %v7355 = vld [vmem:[#allocation5] sm:$0xff]
    %v7356 = vld [vmem:[#allocation5 + $0x8] sm:$0xff]
    %v7357 = vld [vmem:[#allocation14] sm:$0xff]
    %v7358 = vld [vmem:[#allocation14 + $0x8] sm:$0xff]
    %v7359 = vld [vmem:[#allocation14 + $0x10] sm:$0xff]
    %v7360 = vld [vmem:[#allocation14 + $0x18] sm:$0xff]
    %v7361 = vld [vmem:[#allocation14 + $0x20] sm:$0xff]
    %v7362 = vld [vmem:[#allocation14 + $0x28] sm:$0xff]
    %v7363 = vld [vmem:[#allocation14 + $0x30] sm:$0xff]
    %v7364 = vld [vmem:[#allocation14 + $0x38] sm:$0xff]
    %v7365 = vld [vmem:[#allocation14 + $0x40] sm:$0xff]
    %v7366 = vld [vmem:[#allocation14 + $0x48] sm:$0xff]
    %v7367 = vld [vmem:[#allocation14 + $0x50] sm:$0xff]
    %v7368 = vld [vmem:[#allocation14 + $0x58] sm:$0xff]
    %v7369 = vld [vmem:[#allocation14 + $0x60] sm:$0xff]
    %v7370 = vld [vmem:[#allocation14 + $0x68] sm:$0xff]
    %v7371 = vld [vmem:[#allocation14 + $0x70] sm:$0xff]
    %v7372 = vld [vmem:[#allocation14 + $0x78] sm:$0xff]
    %v7373 = vld [vmem:[#allocation14 + $0x80] sm:$0xff]
    %v7374 = vld [vmem:[#allocation14 + $0x88] sm:$0xff]
    %v7375 = vld [vmem:[#allocation14 + $0x90] sm:$0xff]
    %v7376 = vld [vmem:[#allocation14 + $0x98] sm:$0xff]
    %v7377 = vld [vmem:[#allocation14 + $0xa0] sm:$0xff]
    %v7378 = vld [vmem:[#allocation14 + $0xa8] sm:$0xff]
    %v7379 = vld [vmem:[#allocation14 + $0xb0] sm:$0xff]
    %v7380 = vld [vmem:[#allocation14 + $0xb8] sm:$0xff]
    %v7381 = vld [vmem:[#allocation14 + $0xc0] sm:$0xff]
    %v7382 = vld [vmem:[#allocation14 + $0xc8] sm:$0xff]
    %v7383 = vld [vmem:[#allocation14 + $0xd0] sm:$0xff]
    %v7384 = vld [vmem:[#allocation14 + $0xd8] sm:$0xff]
    %v7385 = vld [vmem:[#allocation14 + $0xe0] sm:$0xff]
    %v7386 = vld [vmem:[#allocation14 + $0xe8] sm:$0xff]
    %v7387 = vld [vmem:[#allocation14 + $0xf0] sm:$0xff]
    %v7388 = vld [vmem:[#allocation14 + $0xf8] sm:$0xff]
    %v7389 = vpack.c.bf16 %v7354, %v7353
    %v7390 = vld [vmem:[#allocation15] sm:$0xff]
    %v7391 = vld [vmem:[#allocation15 + $0x8] sm:$0xff]
    %v7392 = vld [vmem:[#allocation15 + $0x10] sm:$0xff]
    %v7393 = vld [vmem:[#allocation15 + $0x18] sm:$0xff]
    %v7394 = vld [vmem:[#allocation15 + $0x20] sm:$0xff]
    %v7395 = vld [vmem:[#allocation15 + $0x28] sm:$0xff]
    %v7396 = vld [vmem:[#allocation15 + $0x30] sm:$0xff]
    %v7397 = vld [vmem:[#allocation15 + $0x38] sm:$0xff]
    %v7398 = vld [vmem:[#allocation15 + $0x40] sm:$0xff]
    %v7399 = vld [vmem:[#allocation15 + $0x48] sm:$0xff]
    %v7400 = vld [vmem:[#allocation15 + $0x50] sm:$0xff]
    %v7401 = vld [vmem:[#allocation15 + $0x58] sm:$0xff]
    %v7402 = vld [vmem:[#allocation15 + $0x60] sm:$0xff]
    %v7403 = vld [vmem:[#allocation15 + $0x68] sm:$0xff]
    %v7404 = vld [vmem:[#allocation15 + $0x70] sm:$0xff]
    %v7405 = vld [vmem:[#allocation15 + $0x78] sm:$0xff]
    %v7406 = vld [vmem:[#allocation15 + $0x80] sm:$0xff]
    %v7407 = vld [vmem:[#allocation15 + $0x88] sm:$0xff]
    %v7408 = vld [vmem:[#allocation15 + $0x90] sm:$0xff]
    %v7409 = vld [vmem:[#allocation15 + $0x98] sm:$0xff]
    %v7410 = vld [vmem:[#allocation15 + $0xa0] sm:$0xff]
    %v7411 = vld [vmem:[#allocation15 + $0xa8] sm:$0xff]
    %v7412 = vld [vmem:[#allocation15 + $0xb0] sm:$0xff]
    %v7413 = vld [vmem:[#allocation15 + $0xb8] sm:$0xff]
    %v7414 = vld [vmem:[#allocation15 + $0xc0] sm:$0xff]
    %v7415 = vld [vmem:[#allocation15 + $0xc8] sm:$0xff]
    %v7416 = vld [vmem:[#allocation15 + $0xd0] sm:$0xff]
    %v7417 = vld [vmem:[#allocation15 + $0xd8] sm:$0xff]
    %v7418 = vld [vmem:[#allocation15 + $0xe0] sm:$0xff]
    %v7419 = vld [vmem:[#allocation15 + $0xe8] sm:$0xff]
    %v7420 = vld [vmem:[#allocation15 + $0xf0] sm:$0xff]
    %v7421 = vld [vmem:[#allocation15 + $0xf8] sm:$0xff]
    %v7454 = vunpack.c.l.b16 %v7390
    %v7455 = vunpack.c.h.b16 %v7390
    %v7456 = vunpack.c.l.b16 %v7391
    %v7457 = vunpack.c.h.b16 %v7391
    %v7458 = vunpack.c.l.b16 %v7392
    %v7459 = vunpack.c.h.b16 %v7392
    %v7460 = vunpack.c.l.b16 %v7393
    %v7461 = vunpack.c.h.b16 %v7393
    %v7462 = vunpack.c.l.b16 %v7394
    %v7463 = vunpack.c.h.b16 %v7394
    %v7464 = vunpack.c.l.b16 %v7395
    %v7465 = vunpack.c.h.b16 %v7395
    %v7466 = vunpack.c.l.b16 %v7396
    %v7467 = vunpack.c.h.b16 %v7396
    %v7468 = vunpack.c.l.b16 %v7397
    %v7469 = vunpack.c.h.b16 %v7397
    %v7470 = vunpack.c.l.b16 %v7398
    %v7471 = vunpack.c.h.b16 %v7398
    %v7472 = vunpack.c.l.b16 %v7399
    %v7473 = vunpack.c.h.b16 %v7399
    %v7474 = vunpack.c.l.b16 %v7400
    %v7475 = vunpack.c.h.b16 %v7400
    %v7476 = vunpack.c.l.b16 %v7401
    %v7477 = vunpack.c.h.b16 %v7401
    %v7478 = vunpack.c.l.b16 %v7402
    %v7479 = vunpack.c.h.b16 %v7402
    %v7480 = vunpack.c.l.b16 %v7403
    %v7481 = vunpack.c.h.b16 %v7403
    %v7482 = vunpack.c.l.b16 %v7404
    %v7483 = vunpack.c.h.b16 %v7404
    %v7484 = vunpack.c.l.b16 %v7405
    %v7485 = vunpack.c.h.b16 %v7405
    %v7486 = vunpack.c.l.b16 %v7406
    %v7487 = vunpack.c.h.b16 %v7406
    %v7488 = vunpack.c.l.b16 %v7407
    %v7489 = vunpack.c.h.b16 %v7407
    %v7490 = vunpack.c.l.b16 %v7408
    %v7491 = vunpack.c.h.b16 %v7408
    %v7492 = vunpack.c.l.b16 %v7409
    %v7493 = vunpack.c.h.b16 %v7409
    %v7494 = vunpack.c.l.b16 %v7410
    %v7495 = vunpack.c.h.b16 %v7410
    %v7496 = vunpack.c.l.b16 %v7411
    %v7497 = vunpack.c.h.b16 %v7411
    %v7498 = vunpack.c.l.b16 %v7412
    %v7499 = vunpack.c.h.b16 %v7412
    %v7500 = vunpack.c.l.b16 %v7413
    %v7501 = vunpack.c.h.b16 %v7413
    %v7502 = vunpack.c.l.b16 %v7414
    %v7503 = vunpack.c.h.b16 %v7414
    %v7504 = vunpack.c.l.b16 %v7415
    %v7505 = vunpack.c.h.b16 %v7415
    %v7506 = vunpack.c.l.b16 %v7416
    %v7507 = vunpack.c.h.b16 %v7416
    %v7508 = vunpack.c.l.b16 %v7417
    %v7509 = vunpack.c.h.b16 %v7417
    %v7510 = vunpack.c.l.b16 %v7418
    %v7511 = vunpack.c.h.b16 %v7418
    %v7512 = vunpack.c.l.b16 %v7419
    %v7513 = vunpack.c.h.b16 %v7419
    %v7514 = vunpack.c.l.b16 %v7420
    %v7515 = vunpack.c.h.b16 %v7420
    %v7516 = vunpack.c.l.b16 %v7421
    %v7517 = vunpack.c.h.b16 %v7421
    %v7518 = vpack.c.b16 %v7458, %v7454
    %v7519 = vpack.c.b16 %v7459, %v7455
    %v7520 = vpack.c.b16 %v7460, %v7456
    %v7521 = vpack.c.b16 %v7461, %v7457
    %v7522 = vpack.c.b16 %v7466, %v7462
    %v7523 = vpack.c.b16 %v7467, %v7463
    %v7524 = vpack.c.b16 %v7468, %v7464
    %v7525 = vpack.c.b16 %v7469, %v7465
    %v7526 = vpack.c.b16 %v7474, %v7470
    %v7527 = vpack.c.b16 %v7475, %v7471
    %v7528 = vpack.c.b16 %v7476, %v7472
    %v7529 = vpack.c.b16 %v7477, %v7473
    %v7530 = vpack.c.b16 %v7482, %v7478
    %v7531 = vpack.c.b16 %v7483, %v7479
    %v7532 = vpack.c.b16 %v7484, %v7480
    %v7533 = vpack.c.b16 %v7485, %v7481
    %v7534 = vpack.c.b16 %v7490, %v7486
    %v7535 = vpack.c.b16 %v7491, %v7487
    %v7536 = vpack.c.b16 %v7492, %v7488
    %v7537 = vpack.c.b16 %v7493, %v7489
    %v7538 = vpack.c.b16 %v7498, %v7494
    %v7539 = vpack.c.b16 %v7499, %v7495
    %v7540 = vpack.c.b16 %v7500, %v7496
    %v7541 = vpack.c.b16 %v7501, %v7497
    %v7542 = vpack.c.b16 %v7506, %v7502
    %v7543 = vpack.c.b16 %v7507, %v7503
    %v7544 = vpack.c.b16 %v7508, %v7504
    %v7545 = vpack.c.b16 %v7509, %v7505
    %v7546 = vpack.c.b16 %v7514, %v7510
    %v7547 = vpack.c.b16 %v7515, %v7511
    %v7548 = vpack.c.b16 %v7516, %v7512
    %v7549 = vpack.c.b16 %v7517, %v7513
    %7582 = vmatpush.bf16.msra.mxu0 %v7546
    %7583 = vmatpush.bf16.msra.mxu0 %v7542
    %7584 = vmatpush.bf16.msra.mxu0 %v7538
    %7585 = vmatpush.bf16.msra.mxu0 %v7534
    %7586 = vmatpush.bf16.msra.mxu0 %v7530
    %7587 = vmatpush.bf16.msra.mxu0 %v7526
    %7588 = vmatpush.bf16.msra.mxu0 %v7522
    %7589 = vmatpush.bf16.msra.mxu0 %v7518
    %7590 = vmatmul.bf16.gmra.mxu0 %v7389
    %v7591 = vpop.f32.mrf.mxu0
    %v7592 = vadd.f32 0.0, %v7591
    %v7593 = vpop.f32.mrf.mxu0
    %v7594 = vadd.f32 0.0, %v7593
    %7595 = vdwg.mxu0
    %7596 = vmatpush.bf16.msra.mxu0 %v7547
    %7597 = vmatpush.bf16.msra.mxu0 %v7543
    %7598 = vmatpush.bf16.msra.mxu0 %v7539
    %7599 = vmatpush.bf16.msra.mxu0 %v7535
    %7600 = vmatpush.bf16.msra.mxu0 %v7531
    %7601 = vmatpush.bf16.msra.mxu0 %v7527
    %7602 = vmatpush.bf16.msra.mxu0 %v7523
    %7603 = vmatpush.bf16.msra.mxu0 %v7519
    %7604 = vmatmul.bf16.gmra.mxu0 %v7389
    %v7605 = vpop.f32.mrf.mxu0
    %v7606 = vadd.f32 0.0, %v7605
    %v7607 = vpop.f32.mrf.mxu0
    %v7608 = vadd.f32 0.0, %v7607
    %7609 = vdwg.mxu0
    %7610 = vmatpush.bf16.msra.mxu0 %v7548
    %7611 = vmatpush.bf16.msra.mxu0 %v7544
    %7612 = vmatpush.bf16.msra.mxu0 %v7540
    %7613 = vmatpush.bf16.msra.mxu0 %v7536
    %7614 = vmatpush.bf16.msra.mxu0 %v7532
    %7615 = vmatpush.bf16.msra.mxu0 %v7528
    %7616 = vmatpush.bf16.msra.mxu0 %v7524
    %7617 = vmatpush.bf16.msra.mxu0 %v7520
    %7618 = vmatmul.bf16.gmra.mxu0 %v7389
    %v7619 = vpop.f32.mrf.mxu0
    %v7620 = vadd.f32 0.0, %v7619
    %v7621 = vpop.f32.mrf.mxu0
    %v7622 = vadd.f32 0.0, %v7621
    %7623 = vdwg.mxu0
    %7624 = vmatpush.bf16.msra.mxu0 %v7549
    %7625 = vmatpush.bf16.msra.mxu0 %v7545
    %7626 = vmatpush.bf16.msra.mxu0 %v7541
    %7627 = vmatpush.bf16.msra.mxu0 %v7537
    %7628 = vmatpush.bf16.msra.mxu0 %v7533
    %7629 = vmatpush.bf16.msra.mxu0 %v7529
    %7630 = vmatpush.bf16.msra.mxu0 %v7525
    %7631 = vmatpush.bf16.msra.mxu0 %v7521
    %7632 = vmatmul.bf16.gmra.mxu0 %v7389
    %v7633 = vpop.f32.mrf.mxu0
    %v7634 = vadd.f32 0.0, %v7633
    %v7635 = vpop.f32.mrf.mxu0
    %v7636 = vadd.f32 0.0, %v7635
    %7637 = vdwg.mxu0
    %v7670 = vunpack.c.l.b16 %v7357
    %v7671 = vunpack.c.h.b16 %v7357
    %v7672 = vunpack.c.l.b16 %v7358
    %v7673 = vunpack.c.h.b16 %v7358
    %v7674 = vunpack.c.l.b16 %v7359
    %v7675 = vunpack.c.h.b16 %v7359
    %v7676 = vunpack.c.l.b16 %v7360
    %v7677 = vunpack.c.h.b16 %v7360
    %v7678 = vunpack.c.l.b16 %v7361
    %v7679 = vunpack.c.h.b16 %v7361
    %v7680 = vunpack.c.l.b16 %v7362
    %v7681 = vunpack.c.h.b16 %v7362
    %v7682 = vunpack.c.l.b16 %v7363
    %v7683 = vunpack.c.h.b16 %v7363
    %v7684 = vunpack.c.l.b16 %v7364
    %v7685 = vunpack.c.h.b16 %v7364
    %v7686 = vunpack.c.l.b16 %v7365
    %v7687 = vunpack.c.h.b16 %v7365
    %v7688 = vunpack.c.l.b16 %v7366
    %v7689 = vunpack.c.h.b16 %v7366
    %v7690 = vunpack.c.l.b16 %v7367
    %v7691 = vunpack.c.h.b16 %v7367
    %v7692 = vunpack.c.l.b16 %v7368
    %v7693 = vunpack.c.h.b16 %v7368
    %v7694 = vunpack.c.l.b16 %v7369
    %v7695 = vunpack.c.h.b16 %v7369
    %v7696 = vunpack.c.l.b16 %v7370
    %v7697 = vunpack.c.h.b16 %v7370
    %v7698 = vunpack.c.l.b16 %v7371
    %v7699 = vunpack.c.h.b16 %v7371
    %v7700 = vunpack.c.l.b16 %v7372
    %v7701 = vunpack.c.h.b16 %v7372
    %v7702 = vunpack.c.l.b16 %v7373
    %v7703 = vunpack.c.h.b16 %v7373
    %v7704 = vunpack.c.l.b16 %v7374
    %v7705 = vunpack.c.h.b16 %v7374
    %v7706 = vunpack.c.l.b16 %v7375
    %v7707 = vunpack.c.h.b16 %v7375
    %v7708 = vunpack.c.l.b16 %v7376
    %v7709 = vunpack.c.h.b16 %v7376
    %v7710 = vunpack.c.l.b16 %v7377
    %v7711 = vunpack.c.h.b16 %v7377
    %v7712 = vunpack.c.l.b16 %v7378
    %v7713 = vunpack.c.h.b16 %v7378
    %v7714 = vunpack.c.l.b16 %v7379
    %v7715 = vunpack.c.h.b16 %v7379
    %v7716 = vunpack.c.l.b16 %v7380
    %v7717 = vunpack.c.h.b16 %v7380
    %v7718 = vunpack.c.l.b16 %v7381
    %v7719 = vunpack.c.h.b16 %v7381
    %v7720 = vunpack.c.l.b16 %v7382
    %v7721 = vunpack.c.h.b16 %v7382
    %v7722 = vunpack.c.l.b16 %v7383
    %v7723 = vunpack.c.h.b16 %v7383
    %v7724 = vunpack.c.l.b16 %v7384
    %v7725 = vunpack.c.h.b16 %v7384
    %v7726 = vunpack.c.l.b16 %v7385
    %v7727 = vunpack.c.h.b16 %v7385
    %v7728 = vunpack.c.l.b16 %v7386
    %v7729 = vunpack.c.h.b16 %v7386
    %v7730 = vunpack.c.l.b16 %v7387
    %v7731 = vunpack.c.h.b16 %v7387
    %v7732 = vunpack.c.l.b16 %v7388
    %v7733 = vunpack.c.h.b16 %v7388
    %v7734 = vpack.c.b16 %v7674, %v7670
    %v7735 = vpack.c.b16 %v7675, %v7671
    %v7736 = vpack.c.b16 %v7676, %v7672
    %v7737 = vpack.c.b16 %v7677, %v7673
    %v7738 = vpack.c.b16 %v7682, %v7678
    %v7739 = vpack.c.b16 %v7683, %v7679
    %v7740 = vpack.c.b16 %v7684, %v7680
    %v7741 = vpack.c.b16 %v7685, %v7681
    %v7742 = vpack.c.b16 %v7690, %v7686
    %v7743 = vpack.c.b16 %v7691, %v7687
    %v7744 = vpack.c.b16 %v7692, %v7688
    %v7745 = vpack.c.b16 %v7693, %v7689
    %v7746 = vpack.c.b16 %v7698, %v7694
    %v7747 = vpack.c.b16 %v7699, %v7695
    %v7748 = vpack.c.b16 %v7700, %v7696
    %v7749 = vpack.c.b16 %v7701, %v7697
    %v7750 = vpack.c.b16 %v7706, %v7702
    %v7751 = vpack.c.b16 %v7707, %v7703
    %v7752 = vpack.c.b16 %v7708, %v7704
    %v7753 = vpack.c.b16 %v7709, %v7705
    %v7754 = vpack.c.b16 %v7714, %v7710
    %v7755 = vpack.c.b16 %v7715, %v7711
    %v7756 = vpack.c.b16 %v7716, %v7712
    %v7757 = vpack.c.b16 %v7717, %v7713
    %v7758 = vpack.c.b16 %v7722, %v7718
    %v7759 = vpack.c.b16 %v7723, %v7719
    %v7760 = vpack.c.b16 %v7724, %v7720
    %v7761 = vpack.c.b16 %v7725, %v7721
    %v7762 = vpack.c.b16 %v7730, %v7726
    %v7763 = vpack.c.b16 %v7731, %v7727
    %v7764 = vpack.c.b16 %v7732, %v7728
    %v7765 = vpack.c.b16 %v7733, %v7729
    %7798 = vmatpush.bf16.msra.mxu0 %v7762
    %7799 = vmatpush.bf16.msra.mxu0 %v7758
    %7800 = vmatpush.bf16.msra.mxu0 %v7754
    %7801 = vmatpush.bf16.msra.mxu0 %v7750
    %7802 = vmatpush.bf16.msra.mxu0 %v7746
    %7803 = vmatpush.bf16.msra.mxu0 %v7742
    %7804 = vmatpush.bf16.msra.mxu0 %v7738
    %7805 = vmatpush.bf16.msra.mxu0 %v7734
    %7806 = vmatmul.bf16.gmra.mxu0 %v7352
    %v7807 = vpop.f32.mrf.mxu0
    %v7808 = vadd.f32 %v7592, %v7807
    %v7809 = vpop.f32.mrf.mxu0
    %v7810 = vadd.f32 %v7594, %v7809
    %7811 = vdwg.mxu0
    %7812 = vmatpush.bf16.msra.mxu0 %v7763
    %7813 = vmatpush.bf16.msra.mxu0 %v7759
    %7814 = vmatpush.bf16.msra.mxu0 %v7755
    %7815 = vmatpush.bf16.msra.mxu0 %v7751
    %7816 = vmatpush.bf16.msra.mxu0 %v7747
    %7817 = vmatpush.bf16.msra.mxu0 %v7743
    %7818 = vmatpush.bf16.msra.mxu0 %v7739
    %7819 = vmatpush.bf16.msra.mxu0 %v7735
    %7820 = vmatmul.bf16.gmra.mxu0 %v7352
    %v7821 = vpop.f32.mrf.mxu0
    %v7822 = vadd.f32 %v7606, %v7821
    %v7823 = vpop.f32.mrf.mxu0
    %v7824 = vadd.f32 %v7608, %v7823
    %7825 = vdwg.mxu0
    %7826 = vmatpush.bf16.msra.mxu0 %v7764
    %7827 = vmatpush.bf16.msra.mxu0 %v7760
    %7828 = vmatpush.bf16.msra.mxu0 %v7756
    %7829 = vmatpush.bf16.msra.mxu0 %v7752
    %7830 = vmatpush.bf16.msra.mxu0 %v7748
    %7831 = vmatpush.bf16.msra.mxu0 %v7744
    %7832 = vmatpush.bf16.msra.mxu0 %v7740
    %7833 = vmatpush.bf16.msra.mxu0 %v7736
    %7834 = vmatmul.bf16.gmra.mxu0 %v7352
    %v7835 = vpop.f32.mrf.mxu0
    %v7836 = vadd.f32 %v7620, %v7835
    %v7837 = vpop.f32.mrf.mxu0
    %v7838 = vadd.f32 %v7622, %v7837
    %7839 = vdwg.mxu0
    %7840 = vmatpush.bf16.msra.mxu0 %v7765
    %7841 = vmatpush.bf16.msra.mxu0 %v7761
    %7842 = vmatpush.bf16.msra.mxu0 %v7757
    %7843 = vmatpush.bf16.msra.mxu0 %v7753
    %7844 = vmatpush.bf16.msra.mxu0 %v7749
    %7845 = vmatpush.bf16.msra.mxu0 %v7745
    %7846 = vmatpush.bf16.msra.mxu0 %v7741
    %7847 = vmatpush.bf16.msra.mxu0 %v7737
    %7848 = vmatmul.bf16.gmra.mxu0 %v7352
    %v7849 = vpop.f32.mrf.mxu0
    %v7850 = vadd.f32 %v7634, %v7849
    %v7851 = vpop.f32.mrf.mxu0
    %v7852 = vadd.f32 %v7636, %v7851
    %7853 = vdwg.mxu0
    %v7854 = vld [vmem:[%s6] sm:$0xf]
    %v7856 = vperm.slane %v7854, 0
    %v7857 = vperm.slane %v7854, 1
    %v7858 = vperm.slane %v7854, 2
    %v7859 = vperm.slane %v7854, 3
    %v7864 = vadd.f32 %v7808, %v7856
    %v7865 = vadd.f32 %v7822, %v7857
    %v7866 = vadd.f32 %v7836, %v7858
    %v7867 = vadd.f32 %v7850, %v7859
    %v7868 = vadd.f32 %v7810, %v7856
    %v7869 = vadd.f32 %v7824, %v7857
    %v7870 = vadd.f32 %v7838, %v7858
    %v7871 = vadd.f32 %v7852, %v7859
    %v7872 = vxor.u32 %v7864, 2147483648
    %v7873 = vxor.u32 %v7868, 2147483648
    %v7874 = vmul.f32 %v7872, 1.442695
    %v7875 = vpow.pop %v7874
    %v7876 = vmul.f32 %v7873, 1.442695
    %v7877 = vpow.pop %v7876
    %v7878 = vadd.f32 %v7875, 1.0
    %v7879 = vadd.f32 %v7877, 1.0
    %v7880 = vrcp.pop %v7878
    %v7881 = vmul.f32 %v7878, %v7880
    %v7882 = vsub.f32 1.0, %v7881
    %v7883 = vmul.f32 %v7880, %v7882
    %v7884 = vadd.f32 %v7880, %v7883
    %vm7885 = vweird.f32 %v7878
    %vm7886 = vweird.f32 %v7880
    %vm7887 = vmor %vm7885, %vm7886
    %v7888 = vsel %vm7887, %v7880, %v7884
    %v7889 = vand.u32 2147483647, %v7878
    %vm7890 = vcmp.eq.f32.partialorder %v7889, 8.507059e+37
    %v7891 = vand.u32 %v7878, 2147483648
    %v7892 = vor.u32 1.1754944e-38, %v7891
    %v7893 = vsel %vm7890, %v7892, %v7888
    %v7894 = vmul.f32 1.0, %v7893
    %v7895 = vrcp.pop %v7879
    %v7896 = vmul.f32 %v7879, %v7895
    %v7897 = vsub.f32 1.0, %v7896
    %v7898 = vmul.f32 %v7895, %v7897
    %v7899 = vadd.f32 %v7895, %v7898
    %vm7900 = vweird.f32 %v7879
    %vm7901 = vweird.f32 %v7895
    %vm7902 = vmor %vm7900, %vm7901
    %v7903 = vsel %vm7902, %v7895, %v7899
    %v7904 = vand.u32 2147483647, %v7879
    %vm7905 = vcmp.eq.f32.partialorder %v7904, 8.507059e+37
    %v7906 = vand.u32 %v7879, 2147483648
    %v7907 = vor.u32 1.1754944e-38, %v7906
    %v7908 = vsel %vm7905, %v7907, %v7903
    %v7909 = vmul.f32 1.0, %v7908
    %v7910 = vxor.u32 %v7865, 2147483648
    %v7911 = vxor.u32 %v7869, 2147483648
    %v7912 = vmul.f32 %v7910, 1.442695
    %v7913 = vpow.pop %v7912
    %v7914 = vmul.f32 %v7911, 1.442695
    %v7915 = vpow.pop %v7914
    %v7916 = vadd.f32 %v7913, 1.0
    %v7917 = vadd.f32 %v7915, 1.0
    %v7918 = vrcp.pop %v7916
    %v7919 = vmul.f32 %v7916, %v7918
    %v7920 = vsub.f32 1.0, %v7919
    %v7921 = vmul.f32 %v7918, %v7920
    %v7922 = vadd.f32 %v7918, %v7921
    %vm7923 = vweird.f32 %v7916
    %vm7924 = vweird.f32 %v7918
    %vm7925 = vmor %vm7923, %vm7924
    %v7926 = vsel %vm7925, %v7918, %v7922
    %v7927 = vand.u32 2147483647, %v7916
    %vm7928 = vcmp.eq.f32.partialorder %v7927, 8.507059e+37
    %v7929 = vand.u32 %v7916, 2147483648
    %v7930 = vor.u32 1.1754944e-38, %v7929
    %v7931 = vsel %vm7928, %v7930, %v7926
    %v7932 = vmul.f32 1.0, %v7931
    %v7933 = vrcp.pop %v7917
    %v7934 = vmul.f32 %v7917, %v7933
    %v7935 = vsub.f32 1.0, %v7934
    %v7936 = vmul.f32 %v7933, %v7935
    %v7937 = vadd.f32 %v7933, %v7936
    %vm7938 = vweird.f32 %v7917
    %vm7939 = vweird.f32 %v7933
    %vm7940 = vmor %vm7938, %vm7939
    %v7941 = vsel %vm7940, %v7933, %v7937
    %v7942 = vand.u32 2147483647, %v7917
    %vm7943 = vcmp.eq.f32.partialorder %v7942, 8.507059e+37
    %v7944 = vand.u32 %v7917, 2147483648
    %v7945 = vor.u32 1.1754944e-38, %v7944
    %v7946 = vsel %vm7943, %v7945, %v7941
    %v7947 = vmul.f32 1.0, %v7946
    %v7948 = vtanh.pop %v7866
    %v7949 = vtanh.pop %v7870
    %v7950 = vxor.u32 %v7867, 2147483648
    %v7951 = vxor.u32 %v7871, 2147483648
    %v7952 = vmul.f32 %v7950, 1.442695
    %v7953 = vpow.pop %v7952
    %v7954 = vmul.f32 %v7951, 1.442695
    %v7955 = vpow.pop %v7954
    %v7956 = vadd.f32 %v7953, 1.0
    %v7957 = vadd.f32 %v7955, 1.0
    %v7958 = vrcp.pop %v7956
    %v7959 = vmul.f32 %v7956, %v7958
    %v7960 = vsub.f32 1.0, %v7959
    %v7961 = vmul.f32 %v7958, %v7960
    %v7962 = vadd.f32 %v7958, %v7961
    %vm7963 = vweird.f32 %v7956
    %vm7964 = vweird.f32 %v7958
    %vm7965 = vmor %vm7963, %vm7964
    %v7966 = vsel %vm7965, %v7958, %v7962
    %v7967 = vand.u32 2147483647, %v7956
    %vm7968 = vcmp.eq.f32.partialorder %v7967, 8.507059e+37
    %v7969 = vand.u32 %v7956, 2147483648
    %v7970 = vor.u32 1.1754944e-38, %v7969
    %v7971 = vsel %vm7968, %v7970, %v7966
    %v7972 = vmul.f32 1.0, %v7971
    %v7973 = vrcp.pop %v7957
    %v7974 = vmul.f32 %v7957, %v7973
    %v7975 = vsub.f32 1.0, %v7974
    %v7976 = vmul.f32 %v7973, %v7975
    %v7977 = vadd.f32 %v7973, %v7976
    %vm7978 = vweird.f32 %v7957
    %vm7979 = vweird.f32 %v7973
    %vm7980 = vmor %vm7978, %vm7979
    %v7981 = vsel %vm7980, %v7973, %v7977
    %v7982 = vand.u32 2147483647, %v7957
    %vm7983 = vcmp.eq.f32.partialorder %v7982, 8.507059e+37
    %v7984 = vand.u32 %v7957, 2147483648
    %v7985 = vor.u32 1.1754944e-38, %v7984
    %v7986 = vsel %vm7983, %v7985, %v7981
    %v7987 = vmul.f32 1.0, %v7986
    %v7988 = vmul.f32 %v7932, %v7355
    %v7989 = vmul.f32 %v7947, %v7356
    %v7990 = vmul.f32 %v7894, %v7948
    %v7991 = vmul.f32 %v7909, %v7949
    %v7992 = vadd.f32 %v7988, %v7990
    %v7993 = vadd.f32 %v7989, %v7991
    %v7994 = vtanh.pop %v7992
    %v7995 = vtanh.pop %v7993
    %v7996 = vmul.f32 %v7972, %v7994
    %v7997 = vmul.f32 %v7987, %v7995
    %7998 = vst [vmem:[#allocation4] sm:$0xff] %v7996
    %7999 = vst [vmem:[#allocation4 + $0x8] sm:$0xff] %v7997
    %8000 = vst [vmem:[#allocation5] sm:$0xff] %v7992
    %8001 = vst [vmem:[#allocation5 + $0x8] sm:$0xff] %v7993
    %v8002 = vpack.c.bf16 %v7996, %v7996
    %v8003 = vpack.c.bf16 %v7997, %v7997
    %s8004 = scalar_lea.vmem [#allocation17], 40
    %8005 = vst [vmem:[%s8004] sm:$0xf] %v8002
    %8006 = vst [vmem:[%s8004 + $0x4] sm:$0xf] %v8003
    %s8007 = scalar_lea.vmem [#allocation6], 48
    %v8008 = vld [vmem:[%s8007] sm:$0xf]
    %v8009 = vld [vmem:[%s8007 + $0x4] sm:$0xf]
    %v8010 = vld [vmem:[#allocation2] sm:$0xff]
    %v8011 = vld [vmem:[#allocation2 + $0x8] sm:$0xff]
    %v8012 = vld [vmem:[#allocation3] sm:$0xff]
    %v8013 = vld [vmem:[#allocation3 + $0x8] sm:$0xff]
    %v8014 = vld [vmem:[#allocation9] sm:$0xff]
    %v8015 = vld [vmem:[#allocation9 + $0x8] sm:$0xff]
    %v8016 = vld [vmem:[#allocation9 + $0x10] sm:$0xff]
    %v8017 = vld [vmem:[#allocation9 + $0x18] sm:$0xff]
    %v8018 = vld [vmem:[#allocation9 + $0x20] sm:$0xff]
    %v8019 = vld [vmem:[#allocation9 + $0x28] sm:$0xff]
    %v8020 = vld [vmem:[#allocation9 + $0x30] sm:$0xff]
    %v8021 = vld [vmem:[#allocation9 + $0x38] sm:$0xff]
    %v8022 = vld [vmem:[#allocation9 + $0x40] sm:$0xff]
    %v8023 = vld [vmem:[#allocation9 + $0x48] sm:$0xff]
    %v8024 = vld [vmem:[#allocation9 + $0x50] sm:$0xff]
    %v8025 = vld [vmem:[#allocation9 + $0x58] sm:$0xff]
    %v8026 = vld [vmem:[#allocation9 + $0x60] sm:$0xff]
    %v8027 = vld [vmem:[#allocation9 + $0x68] sm:$0xff]
    %v8028 = vld [vmem:[#allocation9 + $0x70] sm:$0xff]
    %v8029 = vld [vmem:[#allocation9 + $0x78] sm:$0xff]
    %v8030 = vld [vmem:[#allocation9 + $0x80] sm:$0xff]
    %v8031 = vld [vmem:[#allocation9 + $0x88] sm:$0xff]
    %v8032 = vld [vmem:[#allocation9 + $0x90] sm:$0xff]
    %v8033 = vld [vmem:[#allocation9 + $0x98] sm:$0xff]
    %v8034 = vld [vmem:[#allocation9 + $0xa0] sm:$0xff]
    %v8035 = vld [vmem:[#allocation9 + $0xa8] sm:$0xff]
    %v8036 = vld [vmem:[#allocation9 + $0xb0] sm:$0xff]
    %v8037 = vld [vmem:[#allocation9 + $0xb8] sm:$0xff]
    %v8038 = vld [vmem:[#allocation9 + $0xc0] sm:$0xff]
    %v8039 = vld [vmem:[#allocation9 + $0xc8] sm:$0xff]
    %v8040 = vld [vmem:[#allocation9 + $0xd0] sm:$0xff]
    %v8041 = vld [vmem:[#allocation9 + $0xd8] sm:$0xff]
    %v8042 = vld [vmem:[#allocation9 + $0xe0] sm:$0xff]
    %v8043 = vld [vmem:[#allocation9 + $0xe8] sm:$0xff]
    %v8044 = vld [vmem:[#allocation9 + $0xf0] sm:$0xff]
    %v8045 = vld [vmem:[#allocation9 + $0xf8] sm:$0xff]
    %v8046 = vpack.c.bf16 %v8011, %v8010
    %v8047 = vld [vmem:[#allocation11] sm:$0xff]
    %v8048 = vld [vmem:[#allocation11 + $0x8] sm:$0xff]
    %v8049 = vld [vmem:[#allocation11 + $0x10] sm:$0xff]
    %v8050 = vld [vmem:[#allocation11 + $0x18] sm:$0xff]
    %v8051 = vld [vmem:[#allocation11 + $0x20] sm:$0xff]
    %v8052 = vld [vmem:[#allocation11 + $0x28] sm:$0xff]
    %v8053 = vld [vmem:[#allocation11 + $0x30] sm:$0xff]
    %v8054 = vld [vmem:[#allocation11 + $0x38] sm:$0xff]
    %v8055 = vld [vmem:[#allocation11 + $0x40] sm:$0xff]
    %v8056 = vld [vmem:[#allocation11 + $0x48] sm:$0xff]
    %v8057 = vld [vmem:[#allocation11 + $0x50] sm:$0xff]
    %v8058 = vld [vmem:[#allocation11 + $0x58] sm:$0xff]
    %v8059 = vld [vmem:[#allocation11 + $0x60] sm:$0xff]
    %v8060 = vld [vmem:[#allocation11 + $0x68] sm:$0xff]
    %v8061 = vld [vmem:[#allocation11 + $0x70] sm:$0xff]
    %v8062 = vld [vmem:[#allocation11 + $0x78] sm:$0xff]
    %v8063 = vld [vmem:[#allocation11 + $0x80] sm:$0xff]
    %v8064 = vld [vmem:[#allocation11 + $0x88] sm:$0xff]
    %v8065 = vld [vmem:[#allocation11 + $0x90] sm:$0xff]
    %v8066 = vld [vmem:[#allocation11 + $0x98] sm:$0xff]
    %v8067 = vld [vmem:[#allocation11 + $0xa0] sm:$0xff]
    %v8068 = vld [vmem:[#allocation11 + $0xa8] sm:$0xff]
    %v8069 = vld [vmem:[#allocation11 + $0xb0] sm:$0xff]
    %v8070 = vld [vmem:[#allocation11 + $0xb8] sm:$0xff]
    %v8071 = vld [vmem:[#allocation11 + $0xc0] sm:$0xff]
    %v8072 = vld [vmem:[#allocation11 + $0xc8] sm:$0xff]
    %v8073 = vld [vmem:[#allocation11 + $0xd0] sm:$0xff]
    %v8074 = vld [vmem:[#allocation11 + $0xd8] sm:$0xff]
    %v8075 = vld [vmem:[#allocation11 + $0xe0] sm:$0xff]
    %v8076 = vld [vmem:[#allocation11 + $0xe8] sm:$0xff]
    %v8077 = vld [vmem:[#allocation11 + $0xf0] sm:$0xff]
    %v8078 = vld [vmem:[#allocation11 + $0xf8] sm:$0xff]
    %v8111 = vunpack.c.l.b16 %v8047
    %v8112 = vunpack.c.h.b16 %v8047
    %v8113 = vunpack.c.l.b16 %v8048
    %v8114 = vunpack.c.h.b16 %v8048
    %v8115 = vunpack.c.l.b16 %v8049
    %v8116 = vunpack.c.h.b16 %v8049
    %v8117 = vunpack.c.l.b16 %v8050
    %v8118 = vunpack.c.h.b16 %v8050
    %v8119 = vunpack.c.l.b16 %v8051
    %v8120 = vunpack.c.h.b16 %v8051
    %v8121 = vunpack.c.l.b16 %v8052
    %v8122 = vunpack.c.h.b16 %v8052
    %v8123 = vunpack.c.l.b16 %v8053
    %v8124 = vunpack.c.h.b16 %v8053
    %v8125 = vunpack.c.l.b16 %v8054
    %v8126 = vunpack.c.h.b16 %v8054
    %v8127 = vunpack.c.l.b16 %v8055
    %v8128 = vunpack.c.h.b16 %v8055
    %v8129 = vunpack.c.l.b16 %v8056
    %v8130 = vunpack.c.h.b16 %v8056
    %v8131 = vunpack.c.l.b16 %v8057
    %v8132 = vunpack.c.h.b16 %v8057
    %v8133 = vunpack.c.l.b16 %v8058
    %v8134 = vunpack.c.h.b16 %v8058
    %v8135 = vunpack.c.l.b16 %v8059
    %v8136 = vunpack.c.h.b16 %v8059
    %v8137 = vunpack.c.l.b16 %v8060
    %v8138 = vunpack.c.h.b16 %v8060
    %v8139 = vunpack.c.l.b16 %v8061
    %v8140 = vunpack.c.h.b16 %v8061
    %v8141 = vunpack.c.l.b16 %v8062
    %v8142 = vunpack.c.h.b16 %v8062
    %v8143 = vunpack.c.l.b16 %v8063
    %v8144 = vunpack.c.h.b16 %v8063
    %v8145 = vunpack.c.l.b16 %v8064
    %v8146 = vunpack.c.h.b16 %v8064
    %v8147 = vunpack.c.l.b16 %v8065
    %v8148 = vunpack.c.h.b16 %v8065
    %v8149 = vunpack.c.l.b16 %v8066
    %v8150 = vunpack.c.h.b16 %v8066
    %v8151 = vunpack.c.l.b16 %v8067
    %v8152 = vunpack.c.h.b16 %v8067
    %v8153 = vunpack.c.l.b16 %v8068
    %v8154 = vunpack.c.h.b16 %v8068
    %v8155 = vunpack.c.l.b16 %v8069
    %v8156 = vunpack.c.h.b16 %v8069
    %v8157 = vunpack.c.l.b16 %v8070
    %v8158 = vunpack.c.h.b16 %v8070
    %v8159 = vunpack.c.l.b16 %v8071
    %v8160 = vunpack.c.h.b16 %v8071
    %v8161 = vunpack.c.l.b16 %v8072
    %v8162 = vunpack.c.h.b16 %v8072
    %v8163 = vunpack.c.l.b16 %v8073
    %v8164 = vunpack.c.h.b16 %v8073
    %v8165 = vunpack.c.l.b16 %v8074
    %v8166 = vunpack.c.h.b16 %v8074
    %v8167 = vunpack.c.l.b16 %v8075
    %v8168 = vunpack.c.h.b16 %v8075
    %v8169 = vunpack.c.l.b16 %v8076
    %v8170 = vunpack.c.h.b16 %v8076
    %v8171 = vunpack.c.l.b16 %v8077
    %v8172 = vunpack.c.h.b16 %v8077
    %v8173 = vunpack.c.l.b16 %v8078
    %v8174 = vunpack.c.h.b16 %v8078
    %v8175 = vpack.c.b16 %v8115, %v8111
    %v8176 = vpack.c.b16 %v8116, %v8112
    %v8177 = vpack.c.b16 %v8117, %v8113
    %v8178 = vpack.c.b16 %v8118, %v8114
    %v8179 = vpack.c.b16 %v8123, %v8119
    %v8180 = vpack.c.b16 %v8124, %v8120
    %v8181 = vpack.c.b16 %v8125, %v8121
    %v8182 = vpack.c.b16 %v8126, %v8122
    %v8183 = vpack.c.b16 %v8131, %v8127
    %v8184 = vpack.c.b16 %v8132, %v8128
    %v8185 = vpack.c.b16 %v8133, %v8129
    %v8186 = vpack.c.b16 %v8134, %v8130
    %v8187 = vpack.c.b16 %v8139, %v8135
    %v8188 = vpack.c.b16 %v8140, %v8136
    %v8189 = vpack.c.b16 %v8141, %v8137
    %v8190 = vpack.c.b16 %v8142, %v8138
    %v8191 = vpack.c.b16 %v8147, %v8143
    %v8192 = vpack.c.b16 %v8148, %v8144
    %v8193 = vpack.c.b16 %v8149, %v8145
    %v8194 = vpack.c.b16 %v8150, %v8146
    %v8195 = vpack.c.b16 %v8155, %v8151
    %v8196 = vpack.c.b16 %v8156, %v8152
    %v8197 = vpack.c.b16 %v8157, %v8153
    %v8198 = vpack.c.b16 %v8158, %v8154
    %v8199 = vpack.c.b16 %v8163, %v8159
    %v8200 = vpack.c.b16 %v8164, %v8160
    %v8201 = vpack.c.b16 %v8165, %v8161
    %v8202 = vpack.c.b16 %v8166, %v8162
    %v8203 = vpack.c.b16 %v8171, %v8167
    %v8204 = vpack.c.b16 %v8172, %v8168
    %v8205 = vpack.c.b16 %v8173, %v8169
    %v8206 = vpack.c.b16 %v8174, %v8170
    %8239 = vmatpush.bf16.msra.mxu0 %v8203
    %8240 = vmatpush.bf16.msra.mxu0 %v8199
    %8241 = vmatpush.bf16.msra.mxu0 %v8195
    %8242 = vmatpush.bf16.msra.mxu0 %v8191
    %8243 = vmatpush.bf16.msra.mxu0 %v8187
    %8244 = vmatpush.bf16.msra.mxu0 %v8183
    %8245 = vmatpush.bf16.msra.mxu0 %v8179
    %8246 = vmatpush.bf16.msra.mxu0 %v8175
    %8247 = vmatmul.bf16.gmra.mxu0 %v8046
    %v8248 = vpop.f32.mrf.mxu0
    %v8249 = vadd.f32 0.0, %v8248
    %v8250 = vpop.f32.mrf.mxu0
    %v8251 = vadd.f32 0.0, %v8250
    %8252 = vdwg.mxu0
    %8253 = vmatpush.bf16.msra.mxu0 %v8204
    %8254 = vmatpush.bf16.msra.mxu0 %v8200
    %8255 = vmatpush.bf16.msra.mxu0 %v8196
    %8256 = vmatpush.bf16.msra.mxu0 %v8192
    %8257 = vmatpush.bf16.msra.mxu0 %v8188
    %8258 = vmatpush.bf16.msra.mxu0 %v8184
    %8259 = vmatpush.bf16.msra.mxu0 %v8180
    %8260 = vmatpush.bf16.msra.mxu0 %v8176
    %8261 = vmatmul.bf16.gmra.mxu0 %v8046
    %v8262 = vpop.f32.mrf.mxu0
    %v8263 = vadd.f32 0.0, %v8262
    %v8264 = vpop.f32.mrf.mxu0
    %v8265 = vadd.f32 0.0, %v8264
    %8266 = vdwg.mxu0
    %8267 = vmatpush.bf16.msra.mxu0 %v8205
    %8268 = vmatpush.bf16.msra.mxu0 %v8201
    %8269 = vmatpush.bf16.msra.mxu0 %v8197
    %8270 = vmatpush.bf16.msra.mxu0 %v8193
    %8271 = vmatpush.bf16.msra.mxu0 %v8189
    %8272 = vmatpush.bf16.msra.mxu0 %v8185
    %8273 = vmatpush.bf16.msra.mxu0 %v8181
    %8274 = vmatpush.bf16.msra.mxu0 %v8177
    %8275 = vmatmul.bf16.gmra.mxu0 %v8046
    %v8276 = vpop.f32.mrf.mxu0
    %v8277 = vadd.f32 0.0, %v8276
    %v8278 = vpop.f32.mrf.mxu0
    %v8279 = vadd.f32 0.0, %v8278
    %8280 = vdwg.mxu0
    %8281 = vmatpush.bf16.msra.mxu0 %v8206
    %8282 = vmatpush.bf16.msra.mxu0 %v8202
    %8283 = vmatpush.bf16.msra.mxu0 %v8198
    %8284 = vmatpush.bf16.msra.mxu0 %v8194
    %8285 = vmatpush.bf16.msra.mxu0 %v8190
    %8286 = vmatpush.bf16.msra.mxu0 %v8186
    %8287 = vmatpush.bf16.msra.mxu0 %v8182
    %8288 = vmatpush.bf16.msra.mxu0 %v8178
    %8289 = vmatmul.bf16.gmra.mxu0 %v8046
    %v8290 = vpop.f32.mrf.mxu0
    %v8291 = vadd.f32 0.0, %v8290
    %v8292 = vpop.f32.mrf.mxu0
    %v8293 = vadd.f32 0.0, %v8292
    %8294 = vdwg.mxu0
    %v8297 = vunpack.c.l.b16 %v8008
    %v8298 = vunpack.c.l.b16 %v8009
    %v8299 = vpack.c.b16 %v8298, %v8297
    %v8333 = vunpack.c.l.b16 %v8014
    %v8334 = vunpack.c.h.b16 %v8014
    %v8335 = vunpack.c.l.b16 %v8015
    %v8336 = vunpack.c.h.b16 %v8015
    %v8337 = vunpack.c.l.b16 %v8016
    %v8338 = vunpack.c.h.b16 %v8016
    %v8339 = vunpack.c.l.b16 %v8017
    %v8340 = vunpack.c.h.b16 %v8017
    %v8341 = vunpack.c.l.b16 %v8018
    %v8342 = vunpack.c.h.b16 %v8018
    %v8343 = vunpack.c.l.b16 %v8019
    %v8344 = vunpack.c.h.b16 %v8019
    %v8345 = vunpack.c.l.b16 %v8020
    %v8346 = vunpack.c.h.b16 %v8020
    %v8347 = vunpack.c.l.b16 %v8021
    %v8348 = vunpack.c.h.b16 %v8021
    %v8349 = vunpack.c.l.b16 %v8022
    %v8350 = vunpack.c.h.b16 %v8022
    %v8351 = vunpack.c.l.b16 %v8023
    %v8352 = vunpack.c.h.b16 %v8023
    %v8353 = vunpack.c.l.b16 %v8024
    %v8354 = vunpack.c.h.b16 %v8024
    %v8355 = vunpack.c.l.b16 %v8025
    %v8356 = vunpack.c.h.b16 %v8025
    %v8357 = vunpack.c.l.b16 %v8026
    %v8358 = vunpack.c.h.b16 %v8026
    %v8359 = vunpack.c.l.b16 %v8027
    %v8360 = vunpack.c.h.b16 %v8027
    %v8361 = vunpack.c.l.b16 %v8028
    %v8362 = vunpack.c.h.b16 %v8028
    %v8363 = vunpack.c.l.b16 %v8029
    %v8364 = vunpack.c.h.b16 %v8029
    %v8365 = vunpack.c.l.b16 %v8030
    %v8366 = vunpack.c.h.b16 %v8030
    %v8367 = vunpack.c.l.b16 %v8031
    %v8368 = vunpack.c.h.b16 %v8031
    %v8369 = vunpack.c.l.b16 %v8032
    %v8370 = vunpack.c.h.b16 %v8032
    %v8371 = vunpack.c.l.b16 %v8033
    %v8372 = vunpack.c.h.b16 %v8033
    %v8373 = vunpack.c.l.b16 %v8034
    %v8374 = vunpack.c.h.b16 %v8034
    %v8375 = vunpack.c.l.b16 %v8035
    %v8376 = vunpack.c.h.b16 %v8035
    %v8377 = vunpack.c.l.b16 %v8036
    %v8378 = vunpack.c.h.b16 %v8036
    %v8379 = vunpack.c.l.b16 %v8037
    %v8380 = vunpack.c.h.b16 %v8037
    %v8381 = vunpack.c.l.b16 %v8038
    %v8382 = vunpack.c.h.b16 %v8038
    %v8383 = vunpack.c.l.b16 %v8039
    %v8384 = vunpack.c.h.b16 %v8039
    %v8385 = vunpack.c.l.b16 %v8040
    %v8386 = vunpack.c.h.b16 %v8040
    %v8387 = vunpack.c.l.b16 %v8041
    %v8388 = vunpack.c.h.b16 %v8041
    %v8389 = vunpack.c.l.b16 %v8042
    %v8390 = vunpack.c.h.b16 %v8042
    %v8391 = vunpack.c.l.b16 %v8043
    %v8392 = vunpack.c.h.b16 %v8043
    %v8393 = vunpack.c.l.b16 %v8044
    %v8394 = vunpack.c.h.b16 %v8044
    %v8395 = vunpack.c.l.b16 %v8045
    %v8396 = vunpack.c.h.b16 %v8045
    %v8397 = vpack.c.b16 %v8337, %v8333
    %v8398 = vpack.c.b16 %v8338, %v8334
    %v8399 = vpack.c.b16 %v8339, %v8335
    %v8400 = vpack.c.b16 %v8340, %v8336
    %v8401 = vpack.c.b16 %v8345, %v8341
    %v8402 = vpack.c.b16 %v8346, %v8342
    %v8403 = vpack.c.b16 %v8347, %v8343
    %v8404 = vpack.c.b16 %v8348, %v8344
    %v8405 = vpack.c.b16 %v8353, %v8349
    %v8406 = vpack.c.b16 %v8354, %v8350
    %v8407 = vpack.c.b16 %v8355, %v8351
    %v8408 = vpack.c.b16 %v8356, %v8352
    %v8409 = vpack.c.b16 %v8361, %v8357
    %v8410 = vpack.c.b16 %v8362, %v8358
    %v8411 = vpack.c.b16 %v8363, %v8359
    %v8412 = vpack.c.b16 %v8364, %v8360
    %v8413 = vpack.c.b16 %v8369, %v8365
    %v8414 = vpack.c.b16 %v8370, %v8366
    %v8415 = vpack.c.b16 %v8371, %v8367
    %v8416 = vpack.c.b16 %v8372, %v8368
    %v8417 = vpack.c.b16 %v8377, %v8373
    %v8418 = vpack.c.b16 %v8378, %v8374
    %v8419 = vpack.c.b16 %v8379, %v8375
    %v8420 = vpack.c.b16 %v8380, %v8376
    %v8421 = vpack.c.b16 %v8385, %v8381
    %v8422 = vpack.c.b16 %v8386, %v8382
    %v8423 = vpack.c.b16 %v8387, %v8383
    %v8424 = vpack.c.b16 %v8388, %v8384
    %v8425 = vpack.c.b16 %v8393, %v8389
    %v8426 = vpack.c.b16 %v8394, %v8390
    %v8427 = vpack.c.b16 %v8395, %v8391
    %v8428 = vpack.c.b16 %v8396, %v8392
    %8461 = vmatpush.bf16.msra.mxu0 %v8425
    %8462 = vmatpush.bf16.msra.mxu0 %v8421
    %8463 = vmatpush.bf16.msra.mxu0 %v8417
    %8464 = vmatpush.bf16.msra.mxu0 %v8413
    %8465 = vmatpush.bf16.msra.mxu0 %v8409
    %8466 = vmatpush.bf16.msra.mxu0 %v8405
    %8467 = vmatpush.bf16.msra.mxu0 %v8401
    %8468 = vmatpush.bf16.msra.mxu0 %v8397
    %8469 = vmatmul.bf16.gmra.mxu0 %v8299
    %v8470 = vpop.f32.mrf.mxu0
    %v8471 = vadd.f32 %v8249, %v8470
    %v8472 = vpop.f32.mrf.mxu0
    %v8473 = vadd.f32 %v8251, %v8472
    %8474 = vdwg.mxu0
    %8475 = vmatpush.bf16.msra.mxu0 %v8426
    %8476 = vmatpush.bf16.msra.mxu0 %v8422
    %8477 = vmatpush.bf16.msra.mxu0 %v8418
    %8478 = vmatpush.bf16.msra.mxu0 %v8414
    %8479 = vmatpush.bf16.msra.mxu0 %v8410
    %8480 = vmatpush.bf16.msra.mxu0 %v8406
    %8481 = vmatpush.bf16.msra.mxu0 %v8402
    %8482 = vmatpush.bf16.msra.mxu0 %v8398
    %8483 = vmatmul.bf16.gmra.mxu0 %v8299
    %v8484 = vpop.f32.mrf.mxu0
    %v8485 = vadd.f32 %v8263, %v8484
    %v8486 = vpop.f32.mrf.mxu0
    %v8487 = vadd.f32 %v8265, %v8486
    %8488 = vdwg.mxu0
    %8489 = vmatpush.bf16.msra.mxu0 %v8427
    %8490 = vmatpush.bf16.msra.mxu0 %v8423
    %8491 = vmatpush.bf16.msra.mxu0 %v8419
    %8492 = vmatpush.bf16.msra.mxu0 %v8415
    %8493 = vmatpush.bf16.msra.mxu0 %v8411
    %8494 = vmatpush.bf16.msra.mxu0 %v8407
    %8495 = vmatpush.bf16.msra.mxu0 %v8403
    %8496 = vmatpush.bf16.msra.mxu0 %v8399
    %8497 = vmatmul.bf16.gmra.mxu0 %v8299
    %v8498 = vpop.f32.mrf.mxu0
    %v8499 = vadd.f32 %v8277, %v8498
    %v8500 = vpop.f32.mrf.mxu0
    %v8501 = vadd.f32 %v8279, %v8500
    %8502 = vdwg.mxu0
    %8503 = vmatpush.bf16.msra.mxu0 %v8428
    %8504 = vmatpush.bf16.msra.mxu0 %v8424
    %8505 = vmatpush.bf16.msra.mxu0 %v8420
    %8506 = vmatpush.bf16.msra.mxu0 %v8416
    %8507 = vmatpush.bf16.msra.mxu0 %v8412
    %8508 = vmatpush.bf16.msra.mxu0 %v8408
    %8509 = vmatpush.bf16.msra.mxu0 %v8404
    %8510 = vmatpush.bf16.msra.mxu0 %v8400
    %8511 = vmatmul.bf16.gmra.mxu0 %v8299
    %v8512 = vpop.f32.mrf.mxu0
    %v8513 = vadd.f32 %v8291, %v8512
    %v8514 = vpop.f32.mrf.mxu0
    %v8515 = vadd.f32 %v8293, %v8514
    %8516 = vdwg.mxu0
    %v8517 = vld [vmem:[#allocation12] sm:$0xf]
    %v8519 = vperm.slane %v8517, 0
    %v8520 = vperm.slane %v8517, 1
    %v8521 = vperm.slane %v8517, 2
    %v8522 = vperm.slane %v8517, 3
    %v8527 = vadd.f32 %v8471, %v8519
    %v8528 = vadd.f32 %v8485, %v8520
    %v8529 = vadd.f32 %v8499, %v8521
    %v8530 = vadd.f32 %v8513, %v8522
    %v8531 = vadd.f32 %v8473, %v8519
    %v8532 = vadd.f32 %v8487, %v8520
    %v8533 = vadd.f32 %v8501, %v8521
    %v8534 = vadd.f32 %v8515, %v8522
    %v8535 = vxor.u32 %v8527, 2147483648
    %v8536 = vxor.u32 %v8531, 2147483648
    %v8537 = vmul.f32 %v8535, 1.442695
    %v8538 = vpow.pop %v8537
    %v8539 = vmul.f32 %v8536, 1.442695
    %v8540 = vpow.pop %v8539
    %v8541 = vadd.f32 %v8538, 1.0
    %v8542 = vadd.f32 %v8540, 1.0
    %v8543 = vrcp.pop %v8541
    %v8544 = vmul.f32 %v8541, %v8543
    %v8545 = vsub.f32 1.0, %v8544
    %v8546 = vmul.f32 %v8543, %v8545
    %v8547 = vadd.f32 %v8543, %v8546
    %vm8548 = vweird.f32 %v8541
    %vm8549 = vweird.f32 %v8543
    %vm8550 = vmor %vm8548, %vm8549
    %v8551 = vsel %vm8550, %v8543, %v8547
    %v8552 = vand.u32 2147483647, %v8541
    %vm8553 = vcmp.eq.f32.partialorder %v8552, 8.507059e+37
    %v8554 = vand.u32 %v8541, 2147483648
    %v8555 = vor.u32 1.1754944e-38, %v8554
    %v8556 = vsel %vm8553, %v8555, %v8551
    %v8557 = vmul.f32 1.0, %v8556
    %v8558 = vrcp.pop %v8542
    %v8559 = vmul.f32 %v8542, %v8558
    %v8560 = vsub.f32 1.0, %v8559
    %v8561 = vmul.f32 %v8558, %v8560
    %v8562 = vadd.f32 %v8558, %v8561
    %vm8563 = vweird.f32 %v8542
    %vm8564 = vweird.f32 %v8558
    %vm8565 = vmor %vm8563, %vm8564
    %v8566 = vsel %vm8565, %v8558, %v8562
    %v8567 = vand.u32 2147483647, %v8542
    %vm8568 = vcmp.eq.f32.partialorder %v8567, 8.507059e+37
    %v8569 = vand.u32 %v8542, 2147483648
    %v8570 = vor.u32 1.1754944e-38, %v8569
    %v8571 = vsel %vm8568, %v8570, %v8566
    %v8572 = vmul.f32 1.0, %v8571
    %v8573 = vxor.u32 %v8528, 2147483648
    %v8574 = vxor.u32 %v8532, 2147483648
    %v8575 = vmul.f32 %v8573, 1.442695
    %v8576 = vpow.pop %v8575
    %v8577 = vmul.f32 %v8574, 1.442695
    %v8578 = vpow.pop %v8577
    %v8579 = vadd.f32 %v8576, 1.0
    %v8580 = vadd.f32 %v8578, 1.0
    %v8581 = vrcp.pop %v8579
    %v8582 = vmul.f32 %v8579, %v8581
    %v8583 = vsub.f32 1.0, %v8582
    %v8584 = vmul.f32 %v8581, %v8583
    %v8585 = vadd.f32 %v8581, %v8584
    %vm8586 = vweird.f32 %v8579
    %vm8587 = vweird.f32 %v8581
    %vm8588 = vmor %vm8586, %vm8587
    %v8589 = vsel %vm8588, %v8581, %v8585
    %v8590 = vand.u32 2147483647, %v8579
    %vm8591 = vcmp.eq.f32.partialorder %v8590, 8.507059e+37
    %v8592 = vand.u32 %v8579, 2147483648
    %v8593 = vor.u32 1.1754944e-38, %v8592
    %v8594 = vsel %vm8591, %v8593, %v8589
    %v8595 = vmul.f32 1.0, %v8594
    %v8596 = vrcp.pop %v8580
    %v8597 = vmul.f32 %v8580, %v8596
    %v8598 = vsub.f32 1.0, %v8597
    %v8599 = vmul.f32 %v8596, %v8598
    %v8600 = vadd.f32 %v8596, %v8599
    %vm8601 = vweird.f32 %v8580
    %vm8602 = vweird.f32 %v8596
    %vm8603 = vmor %vm8601, %vm8602
    %v8604 = vsel %vm8603, %v8596, %v8600
    %v8605 = vand.u32 2147483647, %v8580
    %vm8606 = vcmp.eq.f32.partialorder %v8605, 8.507059e+37
    %v8607 = vand.u32 %v8580, 2147483648
    %v8608 = vor.u32 1.1754944e-38, %v8607
    %v8609 = vsel %vm8606, %v8608, %v8604
    %v8610 = vmul.f32 1.0, %v8609
    %v8611 = vtanh.pop %v8529
    %v8612 = vtanh.pop %v8533
    %v8613 = vxor.u32 %v8530, 2147483648
    %v8614 = vxor.u32 %v8534, 2147483648
    %v8615 = vmul.f32 %v8613, 1.442695
    %v8616 = vpow.pop %v8615
    %v8617 = vmul.f32 %v8614, 1.442695
    %v8618 = vpow.pop %v8617
    %v8619 = vadd.f32 %v8616, 1.0
    %v8620 = vadd.f32 %v8618, 1.0
    %v8621 = vrcp.pop %v8619
    %v8622 = vmul.f32 %v8619, %v8621
    %v8623 = vsub.f32 1.0, %v8622
    %v8624 = vmul.f32 %v8621, %v8623
    %v8625 = vadd.f32 %v8621, %v8624
    %vm8626 = vweird.f32 %v8619
    %vm8627 = vweird.f32 %v8621
    %vm8628 = vmor %vm8626, %vm8627
    %v8629 = vsel %vm8628, %v8621, %v8625
    %v8630 = vand.u32 2147483647, %v8619
    %vm8631 = vcmp.eq.f32.partialorder %v8630, 8.507059e+37
    %v8632 = vand.u32 %v8619, 2147483648
    %v8633 = vor.u32 1.1754944e-38, %v8632
    %v8634 = vsel %vm8631, %v8633, %v8629
    %v8635 = vmul.f32 1.0, %v8634
    %v8636 = vrcp.pop %v8620
    %v8637 = vmul.f32 %v8620, %v8636
    %v8638 = vsub.f32 1.0, %v8637
    %v8639 = vmul.f32 %v8636, %v8638
    %v8640 = vadd.f32 %v8636, %v8639
    %vm8641 = vweird.f32 %v8620
    %vm8642 = vweird.f32 %v8636
    %vm8643 = vmor %vm8641, %vm8642
    %v8644 = vsel %vm8643, %v8636, %v8640
    %v8645 = vand.u32 2147483647, %v8620
    %vm8646 = vcmp.eq.f32.partialorder %v8645, 8.507059e+37
    %v8647 = vand.u32 %v8620, 2147483648
    %v8648 = vor.u32 1.1754944e-38, %v8647
    %v8649 = vsel %vm8646, %v8648, %v8644
    %v8650 = vmul.f32 1.0, %v8649
    %v8651 = vmul.f32 %v8595, %v8012
    %v8652 = vmul.f32 %v8610, %v8013
    %v8653 = vmul.f32 %v8557, %v8611
    %v8654 = vmul.f32 %v8572, %v8612
    %v8655 = vadd.f32 %v8651, %v8653
    %v8656 = vadd.f32 %v8652, %v8654
    %v8657 = vtanh.pop %v8655
    %v8658 = vtanh.pop %v8656
    %v8659 = vmul.f32 %v8635, %v8657
    %v8660 = vmul.f32 %v8650, %v8658
    %8661 = vst [vmem:[#allocation2] sm:$0xff] %v8659
    %8662 = vst [vmem:[#allocation2 + $0x8] sm:$0xff] %v8660
    %8663 = vst [vmem:[#allocation3] sm:$0xff] %v8655
    %8664 = vst [vmem:[#allocation3 + $0x8] sm:$0xff] %v8656
    %v8665 = vpack.c.bf16 %v8660, %v8659
    %v8666 = vld [vmem:[#allocation4] sm:$0xff]
    %v8667 = vld [vmem:[#allocation4 + $0x8] sm:$0xff]
    %v8668 = vld [vmem:[#allocation5] sm:$0xff]
    %v8669 = vld [vmem:[#allocation5 + $0x8] sm:$0xff]
    %v8670 = vld [vmem:[#allocation14] sm:$0xff]
    %v8671 = vld [vmem:[#allocation14 + $0x8] sm:$0xff]
    %v8672 = vld [vmem:[#allocation14 + $0x10] sm:$0xff]
    %v8673 = vld [vmem:[#allocation14 + $0x18] sm:$0xff]
    %v8674 = vld [vmem:[#allocation14 + $0x20] sm:$0xff]
    %v8675 = vld [vmem:[#allocation14 + $0x28] sm:$0xff]
    %v8676 = vld [vmem:[#allocation14 + $0x30] sm:$0xff]
    %v8677 = vld [vmem:[#allocation14 + $0x38] sm:$0xff]
    %v8678 = vld [vmem:[#allocation14 + $0x40] sm:$0xff]
    %v8679 = vld [vmem:[#allocation14 + $0x48] sm:$0xff]
    %v8680 = vld [vmem:[#allocation14 + $0x50] sm:$0xff]
    %v8681 = vld [vmem:[#allocation14 + $0x58] sm:$0xff]
    %v8682 = vld [vmem:[#allocation14 + $0x60] sm:$0xff]
    %v8683 = vld [vmem:[#allocation14 + $0x68] sm:$0xff]
    %v8684 = vld [vmem:[#allocation14 + $0x70] sm:$0xff]
    %v8685 = vld [vmem:[#allocation14 + $0x78] sm:$0xff]
    %v8686 = vld [vmem:[#allocation14 + $0x80] sm:$0xff]
    %v8687 = vld [vmem:[#allocation14 + $0x88] sm:$0xff]
    %v8688 = vld [vmem:[#allocation14 + $0x90] sm:$0xff]
    %v8689 = vld [vmem:[#allocation14 + $0x98] sm:$0xff]
    %v8690 = vld [vmem:[#allocation14 + $0xa0] sm:$0xff]
    %v8691 = vld [vmem:[#allocation14 + $0xa8] sm:$0xff]
    %v8692 = vld [vmem:[#allocation14 + $0xb0] sm:$0xff]
    %v8693 = vld [vmem:[#allocation14 + $0xb8] sm:$0xff]
    %v8694 = vld [vmem:[#allocation14 + $0xc0] sm:$0xff]
    %v8695 = vld [vmem:[#allocation14 + $0xc8] sm:$0xff]
    %v8696 = vld [vmem:[#allocation14 + $0xd0] sm:$0xff]
    %v8697 = vld [vmem:[#allocation14 + $0xd8] sm:$0xff]
    %v8698 = vld [vmem:[#allocation14 + $0xe0] sm:$0xff]
    %v8699 = vld [vmem:[#allocation14 + $0xe8] sm:$0xff]
    %v8700 = vld [vmem:[#allocation14 + $0xf0] sm:$0xff]
    %v8701 = vld [vmem:[#allocation14 + $0xf8] sm:$0xff]
    %v8702 = vpack.c.bf16 %v8667, %v8666
    %v8703 = vld [vmem:[#allocation15] sm:$0xff]
    %v8704 = vld [vmem:[#allocation15 + $0x8] sm:$0xff]
    %v8705 = vld [vmem:[#allocation15 + $0x10] sm:$0xff]
    %v8706 = vld [vmem:[#allocation15 + $0x18] sm:$0xff]
    %v8707 = vld [vmem:[#allocation15 + $0x20] sm:$0xff]
    %v8708 = vld [vmem:[#allocation15 + $0x28] sm:$0xff]
    %v8709 = vld [vmem:[#allocation15 + $0x30] sm:$0xff]
    %v8710 = vld [vmem:[#allocation15 + $0x38] sm:$0xff]
    %v8711 = vld [vmem:[#allocation15 + $0x40] sm:$0xff]
    %v8712 = vld [vmem:[#allocation15 + $0x48] sm:$0xff]
    %v8713 = vld [vmem:[#allocation15 + $0x50] sm:$0xff]
    %v8714 = vld [vmem:[#allocation15 + $0x58] sm:$0xff]
    %v8715 = vld [vmem:[#allocation15 + $0x60] sm:$0xff]
    %v8716 = vld [vmem:[#allocation15 + $0x68] sm:$0xff]
    %v8717 = vld [vmem:[#allocation15 + $0x70] sm:$0xff]
    %v8718 = vld [vmem:[#allocation15 + $0x78] sm:$0xff]
    %v8719 = vld [vmem:[#allocation15 + $0x80] sm:$0xff]
    %v8720 = vld [vmem:[#allocation15 + $0x88] sm:$0xff]
    %v8721 = vld [vmem:[#allocation15 + $0x90] sm:$0xff]
    %v8722 = vld [vmem:[#allocation15 + $0x98] sm:$0xff]
    %v8723 = vld [vmem:[#allocation15 + $0xa0] sm:$0xff]
    %v8724 = vld [vmem:[#allocation15 + $0xa8] sm:$0xff]
    %v8725 = vld [vmem:[#allocation15 + $0xb0] sm:$0xff]
    %v8726 = vld [vmem:[#allocation15 + $0xb8] sm:$0xff]
    %v8727 = vld [vmem:[#allocation15 + $0xc0] sm:$0xff]
    %v8728 = vld [vmem:[#allocation15 + $0xc8] sm:$0xff]
    %v8729 = vld [vmem:[#allocation15 + $0xd0] sm:$0xff]
    %v8730 = vld [vmem:[#allocation15 + $0xd8] sm:$0xff]
    %v8731 = vld [vmem:[#allocation15 + $0xe0] sm:$0xff]
    %v8732 = vld [vmem:[#allocation15 + $0xe8] sm:$0xff]
    %v8733 = vld [vmem:[#allocation15 + $0xf0] sm:$0xff]
    %v8734 = vld [vmem:[#allocation15 + $0xf8] sm:$0xff]
    %v8767 = vunpack.c.l.b16 %v8703
    %v8768 = vunpack.c.h.b16 %v8703
    %v8769 = vunpack.c.l.b16 %v8704
    %v8770 = vunpack.c.h.b16 %v8704
    %v8771 = vunpack.c.l.b16 %v8705
    %v8772 = vunpack.c.h.b16 %v8705
    %v8773 = vunpack.c.l.b16 %v8706
    %v8774 = vunpack.c.h.b16 %v8706
    %v8775 = vunpack.c.l.b16 %v8707
    %v8776 = vunpack.c.h.b16 %v8707
    %v8777 = vunpack.c.l.b16 %v8708
    %v8778 = vunpack.c.h.b16 %v8708
    %v8779 = vunpack.c.l.b16 %v8709
    %v8780 = vunpack.c.h.b16 %v8709
    %v8781 = vunpack.c.l.b16 %v8710
    %v8782 = vunpack.c.h.b16 %v8710
    %v8783 = vunpack.c.l.b16 %v8711
    %v8784 = vunpack.c.h.b16 %v8711
    %v8785 = vunpack.c.l.b16 %v8712
    %v8786 = vunpack.c.h.b16 %v8712
    %v8787 = vunpack.c.l.b16 %v8713
    %v8788 = vunpack.c.h.b16 %v8713
    %v8789 = vunpack.c.l.b16 %v8714
    %v8790 = vunpack.c.h.b16 %v8714
    %v8791 = vunpack.c.l.b16 %v8715
    %v8792 = vunpack.c.h.b16 %v8715
    %v8793 = vunpack.c.l.b16 %v8716
    %v8794 = vunpack.c.h.b16 %v8716
    %v8795 = vunpack.c.l.b16 %v8717
    %v8796 = vunpack.c.h.b16 %v8717
    %v8797 = vunpack.c.l.b16 %v8718
    %v8798 = vunpack.c.h.b16 %v8718
    %v8799 = vunpack.c.l.b16 %v8719
    %v8800 = vunpack.c.h.b16 %v8719
    %v8801 = vunpack.c.l.b16 %v8720
    %v8802 = vunpack.c.h.b16 %v8720
    %v8803 = vunpack.c.l.b16 %v8721
    %v8804 = vunpack.c.h.b16 %v8721
    %v8805 = vunpack.c.l.b16 %v8722
    %v8806 = vunpack.c.h.b16 %v8722
    %v8807 = vunpack.c.l.b16 %v8723
    %v8808 = vunpack.c.h.b16 %v8723
    %v8809 = vunpack.c.l.b16 %v8724
    %v8810 = vunpack.c.h.b16 %v8724
    %v8811 = vunpack.c.l.b16 %v8725
    %v8812 = vunpack.c.h.b16 %v8725
    %v8813 = vunpack.c.l.b16 %v8726
    %v8814 = vunpack.c.h.b16 %v8726
    %v8815 = vunpack.c.l.b16 %v8727
    %v8816 = vunpack.c.h.b16 %v8727
    %v8817 = vunpack.c.l.b16 %v8728
    %v8818 = vunpack.c.h.b16 %v8728
    %v8819 = vunpack.c.l.b16 %v8729
    %v8820 = vunpack.c.h.b16 %v8729
    %v8821 = vunpack.c.l.b16 %v8730
    %v8822 = vunpack.c.h.b16 %v8730
    %v8823 = vunpack.c.l.b16 %v8731
    %v8824 = vunpack.c.h.b16 %v8731
    %v8825 = vunpack.c.l.b16 %v8732
    %v8826 = vunpack.c.h.b16 %v8732
    %v8827 = vunpack.c.l.b16 %v8733
    %v8828 = vunpack.c.h.b16 %v8733
    %v8829 = vunpack.c.l.b16 %v8734
    %v8830 = vunpack.c.h.b16 %v8734
    %v8831 = vpack.c.b16 %v8771, %v8767
    %v8832 = vpack.c.b16 %v8772, %v8768
    %v8833 = vpack.c.b16 %v8773, %v8769
    %v8834 = vpack.c.b16 %v8774, %v8770
    %v8835 = vpack.c.b16 %v8779, %v8775
    %v8836 = vpack.c.b16 %v8780, %v8776
    %v8837 = vpack.c.b16 %v8781, %v8777
    %v8838 = vpack.c.b16 %v8782, %v8778
    %v8839 = vpack.c.b16 %v8787, %v8783
    %v8840 = vpack.c.b16 %v8788, %v8784
    %v8841 = vpack.c.b16 %v8789, %v8785
    %v8842 = vpack.c.b16 %v8790, %v8786
    %v8843 = vpack.c.b16 %v8795, %v8791
    %v8844 = vpack.c.b16 %v8796, %v8792
    %v8845 = vpack.c.b16 %v8797, %v8793
    %v8846 = vpack.c.b16 %v8798, %v8794
    %v8847 = vpack.c.b16 %v8803, %v8799
    %v8848 = vpack.c.b16 %v8804, %v8800
    %v8849 = vpack.c.b16 %v8805, %v8801
    %v8850 = vpack.c.b16 %v8806, %v8802
    %v8851 = vpack.c.b16 %v8811, %v8807
    %v8852 = vpack.c.b16 %v8812, %v8808
    %v8853 = vpack.c.b16 %v8813, %v8809
    %v8854 = vpack.c.b16 %v8814, %v8810
    %v8855 = vpack.c.b16 %v8819, %v8815
    %v8856 = vpack.c.b16 %v8820, %v8816
    %v8857 = vpack.c.b16 %v8821, %v8817
    %v8858 = vpack.c.b16 %v8822, %v8818
    %v8859 = vpack.c.b16 %v8827, %v8823
    %v8860 = vpack.c.b16 %v8828, %v8824
    %v8861 = vpack.c.b16 %v8829, %v8825
    %v8862 = vpack.c.b16 %v8830, %v8826
    %8895 = vmatpush.bf16.msra.mxu0 %v8859
    %8896 = vmatpush.bf16.msra.mxu0 %v8855
    %8897 = vmatpush.bf16.msra.mxu0 %v8851
    %8898 = vmatpush.bf16.msra.mxu0 %v8847
    %8899 = vmatpush.bf16.msra.mxu0 %v8843
    %8900 = vmatpush.bf16.msra.mxu0 %v8839
    %8901 = vmatpush.bf16.msra.mxu0 %v8835
    %8902 = vmatpush.bf16.msra.mxu0 %v8831
    %8903 = vmatmul.bf16.gmra.mxu0 %v8702
    %v8904 = vpop.f32.mrf.mxu0
    %v8905 = vadd.f32 0.0, %v8904
    %v8906 = vpop.f32.mrf.mxu0
    %v8907 = vadd.f32 0.0, %v8906
    %8908 = vdwg.mxu0
    %8909 = vmatpush.bf16.msra.mxu0 %v8860
    %8910 = vmatpush.bf16.msra.mxu0 %v8856
    %8911 = vmatpush.bf16.msra.mxu0 %v8852
    %8912 = vmatpush.bf16.msra.mxu0 %v8848
    %8913 = vmatpush.bf16.msra.mxu0 %v8844
    %8914 = vmatpush.bf16.msra.mxu0 %v8840
    %8915 = vmatpush.bf16.msra.mxu0 %v8836
    %8916 = vmatpush.bf16.msra.mxu0 %v8832
    %8917 = vmatmul.bf16.gmra.mxu0 %v8702
    %v8918 = vpop.f32.mrf.mxu0
    %v8919 = vadd.f32 0.0, %v8918
    %v8920 = vpop.f32.mrf.mxu0
    %v8921 = vadd.f32 0.0, %v8920
    %8922 = vdwg.mxu0
    %8923 = vmatpush.bf16.msra.mxu0 %v8861
    %8924 = vmatpush.bf16.msra.mxu0 %v8857
    %8925 = vmatpush.bf16.msra.mxu0 %v8853
    %8926 = vmatpush.bf16.msra.mxu0 %v8849
    %8927 = vmatpush.bf16.msra.mxu0 %v8845
    %8928 = vmatpush.bf16.msra.mxu0 %v8841
    %8929 = vmatpush.bf16.msra.mxu0 %v8837
    %8930 = vmatpush.bf16.msra.mxu0 %v8833
    %8931 = vmatmul.bf16.gmra.mxu0 %v8702
    %v8932 = vpop.f32.mrf.mxu0
    %v8933 = vadd.f32 0.0, %v8932
    %v8934 = vpop.f32.mrf.mxu0
    %v8935 = vadd.f32 0.0, %v8934
    %8936 = vdwg.mxu0
    %8937 = vmatpush.bf16.msra.mxu0 %v8862
    %8938 = vmatpush.bf16.msra.mxu0 %v8858
    %8939 = vmatpush.bf16.msra.mxu0 %v8854
    %8940 = vmatpush.bf16.msra.mxu0 %v8850
    %8941 = vmatpush.bf16.msra.mxu0 %v8846
    %8942 = vmatpush.bf16.msra.mxu0 %v8842
    %8943 = vmatpush.bf16.msra.mxu0 %v8838
    %8944 = vmatpush.bf16.msra.mxu0 %v8834
    %8945 = vmatmul.bf16.gmra.mxu0 %v8702
    %v8946 = vpop.f32.mrf.mxu0
    %v8947 = vadd.f32 0.0, %v8946
    %v8948 = vpop.f32.mrf.mxu0
    %v8949 = vadd.f32 0.0, %v8948
    %8950 = vdwg.mxu0
    %v8983 = vunpack.c.l.b16 %v8670
    %v8984 = vunpack.c.h.b16 %v8670
    %v8985 = vunpack.c.l.b16 %v8671
    %v8986 = vunpack.c.h.b16 %v8671
    %v8987 = vunpack.c.l.b16 %v8672
    %v8988 = vunpack.c.h.b16 %v8672
    %v8989 = vunpack.c.l.b16 %v8673
    %v8990 = vunpack.c.h.b16 %v8673
    %v8991 = vunpack.c.l.b16 %v8674
    %v8992 = vunpack.c.h.b16 %v8674
    %v8993 = vunpack.c.l.b16 %v8675
    %v8994 = vunpack.c.h.b16 %v8675
    %v8995 = vunpack.c.l.b16 %v8676
    %v8996 = vunpack.c.h.b16 %v8676
    %v8997 = vunpack.c.l.b16 %v8677
    %v8998 = vunpack.c.h.b16 %v8677
    %v8999 = vunpack.c.l.b16 %v8678
    %v9000 = vunpack.c.h.b16 %v8678
    %v9001 = vunpack.c.l.b16 %v8679
    %v9002 = vunpack.c.h.b16 %v8679
    %v9003 = vunpack.c.l.b16 %v8680
    %v9004 = vunpack.c.h.b16 %v8680
    %v9005 = vunpack.c.l.b16 %v8681
    %v9006 = vunpack.c.h.b16 %v8681
    %v9007 = vunpack.c.l.b16 %v8682
    %v9008 = vunpack.c.h.b16 %v8682
    %v9009 = vunpack.c.l.b16 %v8683
    %v9010 = vunpack.c.h.b16 %v8683
    %v9011 = vunpack.c.l.b16 %v8684
    %v9012 = vunpack.c.h.b16 %v8684
    %v9013 = vunpack.c.l.b16 %v8685
    %v9014 = vunpack.c.h.b16 %v8685
    %v9015 = vunpack.c.l.b16 %v8686
    %v9016 = vunpack.c.h.b16 %v8686
    %v9017 = vunpack.c.l.b16 %v8687
    %v9018 = vunpack.c.h.b16 %v8687
    %v9019 = vunpack.c.l.b16 %v8688
    %v9020 = vunpack.c.h.b16 %v8688
    %v9021 = vunpack.c.l.b16 %v8689
    %v9022 = vunpack.c.h.b16 %v8689
    %v9023 = vunpack.c.l.b16 %v8690
    %v9024 = vunpack.c.h.b16 %v8690
    %v9025 = vunpack.c.l.b16 %v8691
    %v9026 = vunpack.c.h.b16 %v8691
    %v9027 = vunpack.c.l.b16 %v8692
    %v9028 = vunpack.c.h.b16 %v8692
    %v9029 = vunpack.c.l.b16 %v8693
    %v9030 = vunpack.c.h.b16 %v8693
    %v9031 = vunpack.c.l.b16 %v8694
    %v9032 = vunpack.c.h.b16 %v8694
    %v9033 = vunpack.c.l.b16 %v8695
    %v9034 = vunpack.c.h.b16 %v8695
    %v9035 = vunpack.c.l.b16 %v8696
    %v9036 = vunpack.c.h.b16 %v8696
    %v9037 = vunpack.c.l.b16 %v8697
    %v9038 = vunpack.c.h.b16 %v8697
    %v9039 = vunpack.c.l.b16 %v8698
    %v9040 = vunpack.c.h.b16 %v8698
    %v9041 = vunpack.c.l.b16 %v8699
    %v9042 = vunpack.c.h.b16 %v8699
    %v9043 = vunpack.c.l.b16 %v8700
    %v9044 = vunpack.c.h.b16 %v8700
    %v9045 = vunpack.c.l.b16 %v8701
    %v9046 = vunpack.c.h.b16 %v8701
    %v9047 = vpack.c.b16 %v8987, %v8983
    %v9048 = vpack.c.b16 %v8988, %v8984
    %v9049 = vpack.c.b16 %v8989, %v8985
    %v9050 = vpack.c.b16 %v8990, %v8986
    %v9051 = vpack.c.b16 %v8995, %v8991
    %v9052 = vpack.c.b16 %v8996, %v8992
    %v9053 = vpack.c.b16 %v8997, %v8993
    %v9054 = vpack.c.b16 %v8998, %v8994
    %v9055 = vpack.c.b16 %v9003, %v8999
    %v9056 = vpack.c.b16 %v9004, %v9000
    %v9057 = vpack.c.b16 %v9005, %v9001
    %v9058 = vpack.c.b16 %v9006, %v9002
    %v9059 = vpack.c.b16 %v9011, %v9007
    %v9060 = vpack.c.b16 %v9012, %v9008
    %v9061 = vpack.c.b16 %v9013, %v9009
    %v9062 = vpack.c.b16 %v9014, %v9010
    %v9063 = vpack.c.b16 %v9019, %v9015
    %v9064 = vpack.c.b16 %v9020, %v9016
    %v9065 = vpack.c.b16 %v9021, %v9017
    %v9066 = vpack.c.b16 %v9022, %v9018
    %v9067 = vpack.c.b16 %v9027, %v9023
    %v9068 = vpack.c.b16 %v9028, %v9024
    %v9069 = vpack.c.b16 %v9029, %v9025
    %v9070 = vpack.c.b16 %v9030, %v9026
    %v9071 = vpack.c.b16 %v9035, %v9031
    %v9072 = vpack.c.b16 %v9036, %v9032
    %v9073 = vpack.c.b16 %v9037, %v9033
    %v9074 = vpack.c.b16 %v9038, %v9034
    %v9075 = vpack.c.b16 %v9043, %v9039
    %v9076 = vpack.c.b16 %v9044, %v9040
    %v9077 = vpack.c.b16 %v9045, %v9041
    %v9078 = vpack.c.b16 %v9046, %v9042
    %9111 = vmatpush.bf16.msra.mxu0 %v9075
    %9112 = vmatpush.bf16.msra.mxu0 %v9071
    %9113 = vmatpush.bf16.msra.mxu0 %v9067
    %9114 = vmatpush.bf16.msra.mxu0 %v9063
    %9115 = vmatpush.bf16.msra.mxu0 %v9059
    %9116 = vmatpush.bf16.msra.mxu0 %v9055
    %9117 = vmatpush.bf16.msra.mxu0 %v9051
    %9118 = vmatpush.bf16.msra.mxu0 %v9047
    %9119 = vmatmul.bf16.gmra.mxu0 %v8665
    %v9120 = vpop.f32.mrf.mxu0
    %v9121 = vadd.f32 %v8905, %v9120
    %v9122 = vpop.f32.mrf.mxu0
    %v9123 = vadd.f32 %v8907, %v9122
    %9124 = vdwg.mxu0
    %9125 = vmatpush.bf16.msra.mxu0 %v9076
    %9126 = vmatpush.bf16.msra.mxu0 %v9072
    %9127 = vmatpush.bf16.msra.mxu0 %v9068
    %9128 = vmatpush.bf16.msra.mxu0 %v9064
    %9129 = vmatpush.bf16.msra.mxu0 %v9060
    %9130 = vmatpush.bf16.msra.mxu0 %v9056
    %9131 = vmatpush.bf16.msra.mxu0 %v9052
    %9132 = vmatpush.bf16.msra.mxu0 %v9048
    %9133 = vmatmul.bf16.gmra.mxu0 %v8665
    %v9134 = vpop.f32.mrf.mxu0
    %v9135 = vadd.f32 %v8919, %v9134
    %v9136 = vpop.f32.mrf.mxu0
    %v9137 = vadd.f32 %v8921, %v9136
    %9138 = vdwg.mxu0
    %9139 = vmatpush.bf16.msra.mxu0 %v9077
    %9140 = vmatpush.bf16.msra.mxu0 %v9073
    %9141 = vmatpush.bf16.msra.mxu0 %v9069
    %9142 = vmatpush.bf16.msra.mxu0 %v9065
    %9143 = vmatpush.bf16.msra.mxu0 %v9061
    %9144 = vmatpush.bf16.msra.mxu0 %v9057
    %9145 = vmatpush.bf16.msra.mxu0 %v9053
    %9146 = vmatpush.bf16.msra.mxu0 %v9049
    %9147 = vmatmul.bf16.gmra.mxu0 %v8665
    %v9148 = vpop.f32.mrf.mxu0
    %v9149 = vadd.f32 %v8933, %v9148
    %v9150 = vpop.f32.mrf.mxu0
    %v9151 = vadd.f32 %v8935, %v9150
    %9152 = vdwg.mxu0
    %9153 = vmatpush.bf16.msra.mxu0 %v9078
    %9154 = vmatpush.bf16.msra.mxu0 %v9074
    %9155 = vmatpush.bf16.msra.mxu0 %v9070
    %9156 = vmatpush.bf16.msra.mxu0 %v9066
    %9157 = vmatpush.bf16.msra.mxu0 %v9062
    %9158 = vmatpush.bf16.msra.mxu0 %v9058
    %9159 = vmatpush.bf16.msra.mxu0 %v9054
    %9160 = vmatpush.bf16.msra.mxu0 %v9050
    %9161 = vmatmul.bf16.gmra.mxu0 %v8665
    %v9162 = vpop.f32.mrf.mxu0
    %v9163 = vadd.f32 %v8947, %v9162
    %v9164 = vpop.f32.mrf.mxu0
    %v9165 = vadd.f32 %v8949, %v9164
    %9166 = vdwg.mxu0
    %v9167 = vld [vmem:[%s6] sm:$0xf]
    %v9169 = vperm.slane %v9167, 0
    %v9170 = vperm.slane %v9167, 1
    %v9171 = vperm.slane %v9167, 2
    %v9172 = vperm.slane %v9167, 3
    %v9177 = vadd.f32 %v9121, %v9169
    %v9178 = vadd.f32 %v9135, %v9170
    %v9179 = vadd.f32 %v9149, %v9171
    %v9180 = vadd.f32 %v9163, %v9172
    %v9181 = vadd.f32 %v9123, %v9169
    %v9182 = vadd.f32 %v9137, %v9170
    %v9183 = vadd.f32 %v9151, %v9171
    %v9184 = vadd.f32 %v9165, %v9172
    %v9185 = vxor.u32 %v9177, 2147483648
    %v9186 = vxor.u32 %v9181, 2147483648
    %v9187 = vmul.f32 %v9185, 1.442695
    %v9188 = vpow.pop %v9187
    %v9189 = vmul.f32 %v9186, 1.442695
    %v9190 = vpow.pop %v9189
    %v9191 = vadd.f32 %v9188, 1.0
    %v9192 = vadd.f32 %v9190, 1.0
    %v9193 = vrcp.pop %v9191
    %v9194 = vmul.f32 %v9191, %v9193
    %v9195 = vsub.f32 1.0, %v9194
    %v9196 = vmul.f32 %v9193, %v9195
    %v9197 = vadd.f32 %v9193, %v9196
    %vm9198 = vweird.f32 %v9191
    %vm9199 = vweird.f32 %v9193
    %vm9200 = vmor %vm9198, %vm9199
    %v9201 = vsel %vm9200, %v9193, %v9197
    %v9202 = vand.u32 2147483647, %v9191
    %vm9203 = vcmp.eq.f32.partialorder %v9202, 8.507059e+37
    %v9204 = vand.u32 %v9191, 2147483648
    %v9205 = vor.u32 1.1754944e-38, %v9204
    %v9206 = vsel %vm9203, %v9205, %v9201
    %v9207 = vmul.f32 1.0, %v9206
    %v9208 = vrcp.pop %v9192
    %v9209 = vmul.f32 %v9192, %v9208
    %v9210 = vsub.f32 1.0, %v9209
    %v9211 = vmul.f32 %v9208, %v9210
    %v9212 = vadd.f32 %v9208, %v9211
    %vm9213 = vweird.f32 %v9192
    %vm9214 = vweird.f32 %v9208
    %vm9215 = vmor %vm9213, %vm9214
    %v9216 = vsel %vm9215, %v9208, %v9212
    %v9217 = vand.u32 2147483647, %v9192
    %vm9218 = vcmp.eq.f32.partialorder %v9217, 8.507059e+37
    %v9219 = vand.u32 %v9192, 2147483648
    %v9220 = vor.u32 1.1754944e-38, %v9219
    %v9221 = vsel %vm9218, %v9220, %v9216
    %v9222 = vmul.f32 1.0, %v9221
    %v9223 = vxor.u32 %v9178, 2147483648
    %v9224 = vxor.u32 %v9182, 2147483648
    %v9225 = vmul.f32 %v9223, 1.442695
    %v9226 = vpow.pop %v9225
    %v9227 = vmul.f32 %v9224, 1.442695
    %v9228 = vpow.pop %v9227
    %v9229 = vadd.f32 %v9226, 1.0
    %v9230 = vadd.f32 %v9228, 1.0
    %v9231 = vrcp.pop %v9229
    %v9232 = vmul.f32 %v9229, %v9231
    %v9233 = vsub.f32 1.0, %v9232
    %v9234 = vmul.f32 %v9231, %v9233
    %v9235 = vadd.f32 %v9231, %v9234
    %vm9236 = vweird.f32 %v9229
    %vm9237 = vweird.f32 %v9231
    %vm9238 = vmor %vm9236, %vm9237
    %v9239 = vsel %vm9238, %v9231, %v9235
    %v9240 = vand.u32 2147483647, %v9229
    %vm9241 = vcmp.eq.f32.partialorder %v9240, 8.507059e+37
    %v9242 = vand.u32 %v9229, 2147483648
    %v9243 = vor.u32 1.1754944e-38, %v9242
    %v9244 = vsel %vm9241, %v9243, %v9239
    %v9245 = vmul.f32 1.0, %v9244
    %v9246 = vrcp.pop %v9230
    %v9247 = vmul.f32 %v9230, %v9246
    %v9248 = vsub.f32 1.0, %v9247
    %v9249 = vmul.f32 %v9246, %v9248
    %v9250 = vadd.f32 %v9246, %v9249
    %vm9251 = vweird.f32 %v9230
    %vm9252 = vweird.f32 %v9246
    %vm9253 = vmor %vm9251, %vm9252
    %v9254 = vsel %vm9253, %v9246, %v9250
    %v9255 = vand.u32 2147483647, %v9230
    %vm9256 = vcmp.eq.f32.partialorder %v9255, 8.507059e+37
    %v9257 = vand.u32 %v9230, 2147483648
    %v9258 = vor.u32 1.1754944e-38, %v9257
    %v9259 = vsel %vm9256, %v9258, %v9254
    %v9260 = vmul.f32 1.0, %v9259
    %v9261 = vtanh.pop %v9179
    %v9262 = vtanh.pop %v9183
    %v9263 = vxor.u32 %v9180, 2147483648
    %v9264 = vxor.u32 %v9184, 2147483648
    %v9265 = vmul.f32 %v9263, 1.442695
    %v9266 = vpow.pop %v9265
    %v9267 = vmul.f32 %v9264, 1.442695
    %v9268 = vpow.pop %v9267
    %v9269 = vadd.f32 %v9266, 1.0
    %v9270 = vadd.f32 %v9268, 1.0
    %v9271 = vrcp.pop %v9269
    %v9272 = vmul.f32 %v9269, %v9271
    %v9273 = vsub.f32 1.0, %v9272
    %v9274 = vmul.f32 %v9271, %v9273
    %v9275 = vadd.f32 %v9271, %v9274
    %vm9276 = vweird.f32 %v9269
    %vm9277 = vweird.f32 %v9271
    %vm9278 = vmor %vm9276, %vm9277
    %v9279 = vsel %vm9278, %v9271, %v9275
    %v9280 = vand.u32 2147483647, %v9269
    %vm9281 = vcmp.eq.f32.partialorder %v9280, 8.507059e+37
    %v9282 = vand.u32 %v9269, 2147483648
    %v9283 = vor.u32 1.1754944e-38, %v9282
    %v9284 = vsel %vm9281, %v9283, %v9279
    %v9285 = vmul.f32 1.0, %v9284
    %v9286 = vrcp.pop %v9270
    %v9287 = vmul.f32 %v9270, %v9286
    %v9288 = vsub.f32 1.0, %v9287
    %v9289 = vmul.f32 %v9286, %v9288
    %v9290 = vadd.f32 %v9286, %v9289
    %vm9291 = vweird.f32 %v9270
    %vm9292 = vweird.f32 %v9286
    %vm9293 = vmor %vm9291, %vm9292
    %v9294 = vsel %vm9293, %v9286, %v9290
    %v9295 = vand.u32 2147483647, %v9270
    %vm9296 = vcmp.eq.f32.partialorder %v9295, 8.507059e+37
    %v9297 = vand.u32 %v9270, 2147483648
    %v9298 = vor.u32 1.1754944e-38, %v9297
    %v9299 = vsel %vm9296, %v9298, %v9294
    %v9300 = vmul.f32 1.0, %v9299
    %v9301 = vmul.f32 %v9245, %v8668
    %v9302 = vmul.f32 %v9260, %v8669
    %v9303 = vmul.f32 %v9207, %v9261
    %v9304 = vmul.f32 %v9222, %v9262
    %v9305 = vadd.f32 %v9301, %v9303
    %v9306 = vadd.f32 %v9302, %v9304
    %v9307 = vtanh.pop %v9305
    %v9308 = vtanh.pop %v9306
    %v9309 = vmul.f32 %v9285, %v9307
    %v9310 = vmul.f32 %v9300, %v9308
    %9311 = vst [vmem:[#allocation4] sm:$0xff] %v9309
    %9312 = vst [vmem:[#allocation4 + $0x8] sm:$0xff] %v9310
    %9313 = vst [vmem:[#allocation5] sm:$0xff] %v9305
    %9314 = vst [vmem:[#allocation5 + $0x8] sm:$0xff] %v9306
    %v9315 = vpack.c.bf16 %v9309, %v9309
    %v9316 = vpack.c.bf16 %v9310, %v9310
    %s9317 = scalar_lea.vmem [#allocation17], 48
    %9318 = vst [vmem:[%s9317] sm:$0xf] %v9315
    %9319 = vst [vmem:[%s9317 + $0x4] sm:$0xf] %v9316
    %s9320 = scalar_lea.vmem [#allocation6], 56
    %v9321 = vld [vmem:[%s9320] sm:$0xf]
    %v9322 = vld [vmem:[%s9320 + $0x4] sm:$0xf]
    %v9323 = vld [vmem:[#allocation2] sm:$0xff]
    %v9324 = vld [vmem:[#allocation2 + $0x8] sm:$0xff]
    %v9325 = vld [vmem:[#allocation3] sm:$0xff]
    %v9326 = vld [vmem:[#allocation3 + $0x8] sm:$0xff]
    %v9327 = vld [vmem:[#allocation9] sm:$0xff]
    %v9328 = vld [vmem:[#allocation9 + $0x8] sm:$0xff]
    %v9329 = vld [vmem:[#allocation9 + $0x10] sm:$0xff]
    %v9330 = vld [vmem:[#allocation9 + $0x18] sm:$0xff]
    %v9331 = vld [vmem:[#allocation9 + $0x20] sm:$0xff]
    %v9332 = vld [vmem:[#allocation9 + $0x28] sm:$0xff]
    %v9333 = vld [vmem:[#allocation9 + $0x30] sm:$0xff]
    %v9334 = vld [vmem:[#allocation9 + $0x38] sm:$0xff]
    %v9335 = vld [vmem:[#allocation9 + $0x40] sm:$0xff]
    %v9336 = vld [vmem:[#allocation9 + $0x48] sm:$0xff]
    %v9337 = vld [vmem:[#allocation9 + $0x50] sm:$0xff]
    %v9338 = vld [vmem:[#allocation9 + $0x58] sm:$0xff]
    %v9339 = vld [vmem:[#allocation9 + $0x60] sm:$0xff]
    %v9340 = vld [vmem:[#allocation9 + $0x68] sm:$0xff]
    %v9341 = vld [vmem:[#allocation9 + $0x70] sm:$0xff]
    %v9342 = vld [vmem:[#allocation9 + $0x78] sm:$0xff]
    %v9343 = vld [vmem:[#allocation9 + $0x80] sm:$0xff]
    %v9344 = vld [vmem:[#allocation9 + $0x88] sm:$0xff]
    %v9345 = vld [vmem:[#allocation9 + $0x90] sm:$0xff]
    %v9346 = vld [vmem:[#allocation9 + $0x98] sm:$0xff]
    %v9347 = vld [vmem:[#allocation9 + $0xa0] sm:$0xff]
    %v9348 = vld [vmem:[#allocation9 + $0xa8] sm:$0xff]
    %v9349 = vld [vmem:[#allocation9 + $0xb0] sm:$0xff]
    %v9350 = vld [vmem:[#allocation9 + $0xb8] sm:$0xff]
    %v9351 = vld [vmem:[#allocation9 + $0xc0] sm:$0xff]
    %v9352 = vld [vmem:[#allocation9 + $0xc8] sm:$0xff]
    %v9353 = vld [vmem:[#allocation9 + $0xd0] sm:$0xff]
    %v9354 = vld [vmem:[#allocation9 + $0xd8] sm:$0xff]
    %v9355 = vld [vmem:[#allocation9 + $0xe0] sm:$0xff]
    %v9356 = vld [vmem:[#allocation9 + $0xe8] sm:$0xff]
    %v9357 = vld [vmem:[#allocation9 + $0xf0] sm:$0xff]
    %v9358 = vld [vmem:[#allocation9 + $0xf8] sm:$0xff]
    %v9359 = vpack.c.bf16 %v9324, %v9323
    %v9360 = vld [vmem:[#allocation11] sm:$0xff]
    %v9361 = vld [vmem:[#allocation11 + $0x8] sm:$0xff]
    %v9362 = vld [vmem:[#allocation11 + $0x10] sm:$0xff]
    %v9363 = vld [vmem:[#allocation11 + $0x18] sm:$0xff]
    %v9364 = vld [vmem:[#allocation11 + $0x20] sm:$0xff]
    %v9365 = vld [vmem:[#allocation11 + $0x28] sm:$0xff]
    %v9366 = vld [vmem:[#allocation11 + $0x30] sm:$0xff]
    %v9367 = vld [vmem:[#allocation11 + $0x38] sm:$0xff]
    %v9368 = vld [vmem:[#allocation11 + $0x40] sm:$0xff]
    %v9369 = vld [vmem:[#allocation11 + $0x48] sm:$0xff]
    %v9370 = vld [vmem:[#allocation11 + $0x50] sm:$0xff]
    %v9371 = vld [vmem:[#allocation11 + $0x58] sm:$0xff]
    %v9372 = vld [vmem:[#allocation11 + $0x60] sm:$0xff]
    %v9373 = vld [vmem:[#allocation11 + $0x68] sm:$0xff]
    %v9374 = vld [vmem:[#allocation11 + $0x70] sm:$0xff]
    %v9375 = vld [vmem:[#allocation11 + $0x78] sm:$0xff]
    %v9376 = vld [vmem:[#allocation11 + $0x80] sm:$0xff]
    %v9377 = vld [vmem:[#allocation11 + $0x88] sm:$0xff]
    %v9378 = vld [vmem:[#allocation11 + $0x90] sm:$0xff]
    %v9379 = vld [vmem:[#allocation11 + $0x98] sm:$0xff]
    %v9380 = vld [vmem:[#allocation11 + $0xa0] sm:$0xff]
    %v9381 = vld [vmem:[#allocation11 + $0xa8] sm:$0xff]
    %v9382 = vld [vmem:[#allocation11 + $0xb0] sm:$0xff]
    %v9383 = vld [vmem:[#allocation11 + $0xb8] sm:$0xff]
    %v9384 = vld [vmem:[#allocation11 + $0xc0] sm:$0xff]
    %v9385 = vld [vmem:[#allocation11 + $0xc8] sm:$0xff]
    %v9386 = vld [vmem:[#allocation11 + $0xd0] sm:$0xff]
    %v9387 = vld [vmem:[#allocation11 + $0xd8] sm:$0xff]
    %v9388 = vld [vmem:[#allocation11 + $0xe0] sm:$0xff]
    %v9389 = vld [vmem:[#allocation11 + $0xe8] sm:$0xff]
    %v9390 = vld [vmem:[#allocation11 + $0xf0] sm:$0xff]
    %v9391 = vld [vmem:[#allocation11 + $0xf8] sm:$0xff]
    %v9424 = vunpack.c.l.b16 %v9360
    %v9425 = vunpack.c.h.b16 %v9360
    %v9426 = vunpack.c.l.b16 %v9361
    %v9427 = vunpack.c.h.b16 %v9361
    %v9428 = vunpack.c.l.b16 %v9362
    %v9429 = vunpack.c.h.b16 %v9362
    %v9430 = vunpack.c.l.b16 %v9363
    %v9431 = vunpack.c.h.b16 %v9363
    %v9432 = vunpack.c.l.b16 %v9364
    %v9433 = vunpack.c.h.b16 %v9364
    %v9434 = vunpack.c.l.b16 %v9365
    %v9435 = vunpack.c.h.b16 %v9365
    %v9436 = vunpack.c.l.b16 %v9366
    %v9437 = vunpack.c.h.b16 %v9366
    %v9438 = vunpack.c.l.b16 %v9367
    %v9439 = vunpack.c.h.b16 %v9367
    %v9440 = vunpack.c.l.b16 %v9368
    %v9441 = vunpack.c.h.b16 %v9368
    %v9442 = vunpack.c.l.b16 %v9369
    %v9443 = vunpack.c.h.b16 %v9369
    %v9444 = vunpack.c.l.b16 %v9370
    %v9445 = vunpack.c.h.b16 %v9370
    %v9446 = vunpack.c.l.b16 %v9371
    %v9447 = vunpack.c.h.b16 %v9371
    %v9448 = vunpack.c.l.b16 %v9372
    %v9449 = vunpack.c.h.b16 %v9372
    %v9450 = vunpack.c.l.b16 %v9373
    %v9451 = vunpack.c.h.b16 %v9373
    %v9452 = vunpack.c.l.b16 %v9374
    %v9453 = vunpack.c.h.b16 %v9374
    %v9454 = vunpack.c.l.b16 %v9375
    %v9455 = vunpack.c.h.b16 %v9375
    %v9456 = vunpack.c.l.b16 %v9376
    %v9457 = vunpack.c.h.b16 %v9376
    %v9458 = vunpack.c.l.b16 %v9377
    %v9459 = vunpack.c.h.b16 %v9377
    %v9460 = vunpack.c.l.b16 %v9378
    %v9461 = vunpack.c.h.b16 %v9378
    %v9462 = vunpack.c.l.b16 %v9379
    %v9463 = vunpack.c.h.b16 %v9379
    %v9464 = vunpack.c.l.b16 %v9380
    %v9465 = vunpack.c.h.b16 %v9380
    %v9466 = vunpack.c.l.b16 %v9381
    %v9467 = vunpack.c.h.b16 %v9381
    %v9468 = vunpack.c.l.b16 %v9382
    %v9469 = vunpack.c.h.b16 %v9382
    %v9470 = vunpack.c.l.b16 %v9383
    %v9471 = vunpack.c.h.b16 %v9383
    %v9472 = vunpack.c.l.b16 %v9384
    %v9473 = vunpack.c.h.b16 %v9384
    %v9474 = vunpack.c.l.b16 %v9385
    %v9475 = vunpack.c.h.b16 %v9385
    %v9476 = vunpack.c.l.b16 %v9386
    %v9477 = vunpack.c.h.b16 %v9386
    %v9478 = vunpack.c.l.b16 %v9387
    %v9479 = vunpack.c.h.b16 %v9387
    %v9480 = vunpack.c.l.b16 %v9388
    %v9481 = vunpack.c.h.b16 %v9388
    %v9482 = vunpack.c.l.b16 %v9389
    %v9483 = vunpack.c.h.b16 %v9389
    %v9484 = vunpack.c.l.b16 %v9390
    %v9485 = vunpack.c.h.b16 %v9390
    %v9486 = vunpack.c.l.b16 %v9391
    %v9487 = vunpack.c.h.b16 %v9391
    %v9488 = vpack.c.b16 %v9428, %v9424
    %v9489 = vpack.c.b16 %v9429, %v9425
    %v9490 = vpack.c.b16 %v9430, %v9426
    %v9491 = vpack.c.b16 %v9431, %v9427
    %v9492 = vpack.c.b16 %v9436, %v9432
    %v9493 = vpack.c.b16 %v9437, %v9433
    %v9494 = vpack.c.b16 %v9438, %v9434
    %v9495 = vpack.c.b16 %v9439, %v9435
    %v9496 = vpack.c.b16 %v9444, %v9440
    %v9497 = vpack.c.b16 %v9445, %v9441
    %v9498 = vpack.c.b16 %v9446, %v9442
    %v9499 = vpack.c.b16 %v9447, %v9443
    %v9500 = vpack.c.b16 %v9452, %v9448
    %v9501 = vpack.c.b16 %v9453, %v9449
    %v9502 = vpack.c.b16 %v9454, %v9450
    %v9503 = vpack.c.b16 %v9455, %v9451
    %v9504 = vpack.c.b16 %v9460, %v9456
    %v9505 = vpack.c.b16 %v9461, %v9457
    %v9506 = vpack.c.b16 %v9462, %v9458
    %v9507 = vpack.c.b16 %v9463, %v9459
    %v9508 = vpack.c.b16 %v9468, %v9464
    %v9509 = vpack.c.b16 %v9469, %v9465
    %v9510 = vpack.c.b16 %v9470, %v9466
    %v9511 = vpack.c.b16 %v9471, %v9467
    %v9512 = vpack.c.b16 %v9476, %v9472
    %v9513 = vpack.c.b16 %v9477, %v9473
    %v9514 = vpack.c.b16 %v9478, %v9474
    %v9515 = vpack.c.b16 %v9479, %v9475
    %v9516 = vpack.c.b16 %v9484, %v9480
    %v9517 = vpack.c.b16 %v9485, %v9481
    %v9518 = vpack.c.b16 %v9486, %v9482
    %v9519 = vpack.c.b16 %v9487, %v9483
    %9552 = vmatpush.bf16.msra.mxu0 %v9516
    %9553 = vmatpush.bf16.msra.mxu0 %v9512
    %9554 = vmatpush.bf16.msra.mxu0 %v9508
    %9555 = vmatpush.bf16.msra.mxu0 %v9504
    %9556 = vmatpush.bf16.msra.mxu0 %v9500
    %9557 = vmatpush.bf16.msra.mxu0 %v9496
    %9558 = vmatpush.bf16.msra.mxu0 %v9492
    %9559 = vmatpush.bf16.msra.mxu0 %v9488
    %9560 = vmatmul.bf16.gmra.mxu0 %v9359
    %v9561 = vpop.f32.mrf.mxu0
    %v9562 = vadd.f32 0.0, %v9561
    %v9563 = vpop.f32.mrf.mxu0
    %v9564 = vadd.f32 0.0, %v9563
    %9565 = vdwg.mxu0
    %9566 = vmatpush.bf16.msra.mxu0 %v9517
    %9567 = vmatpush.bf16.msra.mxu0 %v9513
    %9568 = vmatpush.bf16.msra.mxu0 %v9509
    %9569 = vmatpush.bf16.msra.mxu0 %v9505
    %9570 = vmatpush.bf16.msra.mxu0 %v9501
    %9571 = vmatpush.bf16.msra.mxu0 %v9497
    %9572 = vmatpush.bf16.msra.mxu0 %v9493
    %9573 = vmatpush.bf16.msra.mxu0 %v9489
    %9574 = vmatmul.bf16.gmra.mxu0 %v9359
    %v9575 = vpop.f32.mrf.mxu0
    %v9576 = vadd.f32 0.0, %v9575
    %v9577 = vpop.f32.mrf.mxu0
    %v9578 = vadd.f32 0.0, %v9577
    %9579 = vdwg.mxu0
    %9580 = vmatpush.bf16.msra.mxu0 %v9518
    %9581 = vmatpush.bf16.msra.mxu0 %v9514
    %9582 = vmatpush.bf16.msra.mxu0 %v9510
    %9583 = vmatpush.bf16.msra.mxu0 %v9506
    %9584 = vmatpush.bf16.msra.mxu0 %v9502
    %9585 = vmatpush.bf16.msra.mxu0 %v9498
    %9586 = vmatpush.bf16.msra.mxu0 %v9494
    %9587 = vmatpush.bf16.msra.mxu0 %v9490
    %9588 = vmatmul.bf16.gmra.mxu0 %v9359
    %v9589 = vpop.f32.mrf.mxu0
    %v9590 = vadd.f32 0.0, %v9589
    %v9591 = vpop.f32.mrf.mxu0
    %v9592 = vadd.f32 0.0, %v9591
    %9593 = vdwg.mxu0
    %9594 = vmatpush.bf16.msra.mxu0 %v9519
    %9595 = vmatpush.bf16.msra.mxu0 %v9515
    %9596 = vmatpush.bf16.msra.mxu0 %v9511
    %9597 = vmatpush.bf16.msra.mxu0 %v9507
    %9598 = vmatpush.bf16.msra.mxu0 %v9503
    %9599 = vmatpush.bf16.msra.mxu0 %v9499
    %9600 = vmatpush.bf16.msra.mxu0 %v9495
    %9601 = vmatpush.bf16.msra.mxu0 %v9491
    %9602 = vmatmul.bf16.gmra.mxu0 %v9359
    %v9603 = vpop.f32.mrf.mxu0
    %v9604 = vadd.f32 0.0, %v9603
    %v9605 = vpop.f32.mrf.mxu0
    %v9606 = vadd.f32 0.0, %v9605
    %9607 = vdwg.mxu0
    %v9610 = vunpack.c.l.b16 %v9321
    %v9611 = vunpack.c.l.b16 %v9322
    %v9612 = vpack.c.b16 %v9611, %v9610
    %v9646 = vunpack.c.l.b16 %v9327
    %v9647 = vunpack.c.h.b16 %v9327
    %v9648 = vunpack.c.l.b16 %v9328
    %v9649 = vunpack.c.h.b16 %v9328
    %v9650 = vunpack.c.l.b16 %v9329
    %v9651 = vunpack.c.h.b16 %v9329
    %v9652 = vunpack.c.l.b16 %v9330
    %v9653 = vunpack.c.h.b16 %v9330
    %v9654 = vunpack.c.l.b16 %v9331
    %v9655 = vunpack.c.h.b16 %v9331
    %v9656 = vunpack.c.l.b16 %v9332
    %v9657 = vunpack.c.h.b16 %v9332
    %v9658 = vunpack.c.l.b16 %v9333
    %v9659 = vunpack.c.h.b16 %v9333
    %v9660 = vunpack.c.l.b16 %v9334
    %v9661 = vunpack.c.h.b16 %v9334
    %v9662 = vunpack.c.l.b16 %v9335
    %v9663 = vunpack.c.h.b16 %v9335
    %v9664 = vunpack.c.l.b16 %v9336
    %v9665 = vunpack.c.h.b16 %v9336
    %v9666 = vunpack.c.l.b16 %v9337
    %v9667 = vunpack.c.h.b16 %v9337
    %v9668 = vunpack.c.l.b16 %v9338
    %v9669 = vunpack.c.h.b16 %v9338
    %v9670 = vunpack.c.l.b16 %v9339
    %v9671 = vunpack.c.h.b16 %v9339
    %v9672 = vunpack.c.l.b16 %v9340
    %v9673 = vunpack.c.h.b16 %v9340
    %v9674 = vunpack.c.l.b16 %v9341
    %v9675 = vunpack.c.h.b16 %v9341
    %v9676 = vunpack.c.l.b16 %v9342
    %v9677 = vunpack.c.h.b16 %v9342
    %v9678 = vunpack.c.l.b16 %v9343
    %v9679 = vunpack.c.h.b16 %v9343
    %v9680 = vunpack.c.l.b16 %v9344
    %v9681 = vunpack.c.h.b16 %v9344
    %v9682 = vunpack.c.l.b16 %v9345
    %v9683 = vunpack.c.h.b16 %v9345
    %v9684 = vunpack.c.l.b16 %v9346
    %v9685 = vunpack.c.h.b16 %v9346
    %v9686 = vunpack.c.l.b16 %v9347
    %v9687 = vunpack.c.h.b16 %v9347
    %v9688 = vunpack.c.l.b16 %v9348
    %v9689 = vunpack.c.h.b16 %v9348
    %v9690 = vunpack.c.l.b16 %v9349
    %v9691 = vunpack.c.h.b16 %v9349
    %v9692 = vunpack.c.l.b16 %v9350
    %v9693 = vunpack.c.h.b16 %v9350
    %v9694 = vunpack.c.l.b16 %v9351
    %v9695 = vunpack.c.h.b16 %v9351
    %v9696 = vunpack.c.l.b16 %v9352
    %v9697 = vunpack.c.h.b16 %v9352
    %v9698 = vunpack.c.l.b16 %v9353
    %v9699 = vunpack.c.h.b16 %v9353
    %v9700 = vunpack.c.l.b16 %v9354
    %v9701 = vunpack.c.h.b16 %v9354
    %v9702 = vunpack.c.l.b16 %v9355
    %v9703 = vunpack.c.h.b16 %v9355
    %v9704 = vunpack.c.l.b16 %v9356
    %v9705 = vunpack.c.h.b16 %v9356
    %v9706 = vunpack.c.l.b16 %v9357
    %v9707 = vunpack.c.h.b16 %v9357
    %v9708 = vunpack.c.l.b16 %v9358
    %v9709 = vunpack.c.h.b16 %v9358
    %v9710 = vpack.c.b16 %v9650, %v9646
    %v9711 = vpack.c.b16 %v9651, %v9647
    %v9712 = vpack.c.b16 %v9652, %v9648
    %v9713 = vpack.c.b16 %v9653, %v9649
    %v9714 = vpack.c.b16 %v9658, %v9654
    %v9715 = vpack.c.b16 %v9659, %v9655
    %v9716 = vpack.c.b16 %v9660, %v9656
    %v9717 = vpack.c.b16 %v9661, %v9657
    %v9718 = vpack.c.b16 %v9666, %v9662
    %v9719 = vpack.c.b16 %v9667, %v9663
    %v9720 = vpack.c.b16 %v9668, %v9664
    %v9721 = vpack.c.b16 %v9669, %v9665
    %v9722 = vpack.c.b16 %v9674, %v9670
    %v9723 = vpack.c.b16 %v9675, %v9671
    %v9724 = vpack.c.b16 %v9676, %v9672
    %v9725 = vpack.c.b16 %v9677, %v9673
    %v9726 = vpack.c.b16 %v9682, %v9678
    %v9727 = vpack.c.b16 %v9683, %v9679
    %v9728 = vpack.c.b16 %v9684, %v9680
    %v9729 = vpack.c.b16 %v9685, %v9681
    %v9730 = vpack.c.b16 %v9690, %v9686
    %v9731 = vpack.c.b16 %v9691, %v9687
    %v9732 = vpack.c.b16 %v9692, %v9688
    %v9733 = vpack.c.b16 %v9693, %v9689
    %v9734 = vpack.c.b16 %v9698, %v9694
    %v9735 = vpack.c.b16 %v9699, %v9695
    %v9736 = vpack.c.b16 %v9700, %v9696
    %v9737 = vpack.c.b16 %v9701, %v9697
    %v9738 = vpack.c.b16 %v9706, %v9702
    %v9739 = vpack.c.b16 %v9707, %v9703
    %v9740 = vpack.c.b16 %v9708, %v9704
    %v9741 = vpack.c.b16 %v9709, %v9705
    %9774 = vmatpush.bf16.msra.mxu0 %v9738
    %9775 = vmatpush.bf16.msra.mxu0 %v9734
    %9776 = vmatpush.bf16.msra.mxu0 %v9730
    %9777 = vmatpush.bf16.msra.mxu0 %v9726
    %9778 = vmatpush.bf16.msra.mxu0 %v9722
    %9779 = vmatpush.bf16.msra.mxu0 %v9718
    %9780 = vmatpush.bf16.msra.mxu0 %v9714
    %9781 = vmatpush.bf16.msra.mxu0 %v9710
    %9782 = vmatmul.bf16.gmra.mxu0 %v9612
    %v9783 = vpop.f32.mrf.mxu0
    %v9784 = vadd.f32 %v9562, %v9783
    %v9785 = vpop.f32.mrf.mxu0
    %v9786 = vadd.f32 %v9564, %v9785
    %9787 = vdwg.mxu0
    %9788 = vmatpush.bf16.msra.mxu0 %v9739
    %9789 = vmatpush.bf16.msra.mxu0 %v9735
    %9790 = vmatpush.bf16.msra.mxu0 %v9731
    %9791 = vmatpush.bf16.msra.mxu0 %v9727
    %9792 = vmatpush.bf16.msra.mxu0 %v9723
    %9793 = vmatpush.bf16.msra.mxu0 %v9719
    %9794 = vmatpush.bf16.msra.mxu0 %v9715
    %9795 = vmatpush.bf16.msra.mxu0 %v9711
    %9796 = vmatmul.bf16.gmra.mxu0 %v9612
    %v9797 = vpop.f32.mrf.mxu0
    %v9798 = vadd.f32 %v9576, %v9797
    %v9799 = vpop.f32.mrf.mxu0
    %v9800 = vadd.f32 %v9578, %v9799
    %9801 = vdwg.mxu0
    %9802 = vmatpush.bf16.msra.mxu0 %v9740
    %9803 = vmatpush.bf16.msra.mxu0 %v9736
    %9804 = vmatpush.bf16.msra.mxu0 %v9732
    %9805 = vmatpush.bf16.msra.mxu0 %v9728
    %9806 = vmatpush.bf16.msra.mxu0 %v9724
    %9807 = vmatpush.bf16.msra.mxu0 %v9720
    %9808 = vmatpush.bf16.msra.mxu0 %v9716
    %9809 = vmatpush.bf16.msra.mxu0 %v9712
    %9810 = vmatmul.bf16.gmra.mxu0 %v9612
    %v9811 = vpop.f32.mrf.mxu0
    %v9812 = vadd.f32 %v9590, %v9811
    %v9813 = vpop.f32.mrf.mxu0
    %v9814 = vadd.f32 %v9592, %v9813
    %9815 = vdwg.mxu0
    %9816 = vmatpush.bf16.msra.mxu0 %v9741
    %9817 = vmatpush.bf16.msra.mxu0 %v9737
    %9818 = vmatpush.bf16.msra.mxu0 %v9733
    %9819 = vmatpush.bf16.msra.mxu0 %v9729
    %9820 = vmatpush.bf16.msra.mxu0 %v9725
    %9821 = vmatpush.bf16.msra.mxu0 %v9721
    %9822 = vmatpush.bf16.msra.mxu0 %v9717
    %9823 = vmatpush.bf16.msra.mxu0 %v9713
    %9824 = vmatmul.bf16.gmra.mxu0 %v9612
    %v9825 = vpop.f32.mrf.mxu0
    %v9826 = vadd.f32 %v9604, %v9825
    %v9827 = vpop.f32.mrf.mxu0
    %v9828 = vadd.f32 %v9606, %v9827
    %9829 = vdwg.mxu0
    %v9830 = vld [vmem:[#allocation12] sm:$0xf]
    %v9832 = vperm.slane %v9830, 0
    %v9833 = vperm.slane %v9830, 1
    %v9834 = vperm.slane %v9830, 2
    %v9835 = vperm.slane %v9830, 3
    %v9840 = vadd.f32 %v9784, %v9832
    %v9841 = vadd.f32 %v9798, %v9833
    %v9842 = vadd.f32 %v9812, %v9834
    %v9843 = vadd.f32 %v9826, %v9835
    %v9844 = vadd.f32 %v9786, %v9832
    %v9845 = vadd.f32 %v9800, %v9833
    %v9846 = vadd.f32 %v9814, %v9834
    %v9847 = vadd.f32 %v9828, %v9835
    %v9848 = vxor.u32 %v9840, 2147483648
    %v9849 = vxor.u32 %v9844, 2147483648
    %v9850 = vmul.f32 %v9848, 1.442695
    %v9851 = vpow.pop %v9850
    %v9852 = vmul.f32 %v9849, 1.442695
    %v9853 = vpow.pop %v9852
    %v9854 = vadd.f32 %v9851, 1.0
    %v9855 = vadd.f32 %v9853, 1.0
    %v9856 = vrcp.pop %v9854
    %v9857 = vmul.f32 %v9854, %v9856
    %v9858 = vsub.f32 1.0, %v9857
    %v9859 = vmul.f32 %v9856, %v9858
    %v9860 = vadd.f32 %v9856, %v9859
    %vm9861 = vweird.f32 %v9854
    %vm9862 = vweird.f32 %v9856
    %vm9863 = vmor %vm9861, %vm9862
    %v9864 = vsel %vm9863, %v9856, %v9860
    %v9865 = vand.u32 2147483647, %v9854
    %vm9866 = vcmp.eq.f32.partialorder %v9865, 8.507059e+37
    %v9867 = vand.u32 %v9854, 2147483648
    %v9868 = vor.u32 1.1754944e-38, %v9867
    %v9869 = vsel %vm9866, %v9868, %v9864
    %v9870 = vmul.f32 1.0, %v9869
    %v9871 = vrcp.pop %v9855
    %v9872 = vmul.f32 %v9855, %v9871
    %v9873 = vsub.f32 1.0, %v9872
    %v9874 = vmul.f32 %v9871, %v9873
    %v9875 = vadd.f32 %v9871, %v9874
    %vm9876 = vweird.f32 %v9855
    %vm9877 = vweird.f32 %v9871
    %vm9878 = vmor %vm9876, %vm9877
    %v9879 = vsel %vm9878, %v9871, %v9875
    %v9880 = vand.u32 2147483647, %v9855
    %vm9881 = vcmp.eq.f32.partialorder %v9880, 8.507059e+37
    %v9882 = vand.u32 %v9855, 2147483648
    %v9883 = vor.u32 1.1754944e-38, %v9882
    %v9884 = vsel %vm9881, %v9883, %v9879
    %v9885 = vmul.f32 1.0, %v9884
    %v9886 = vxor.u32 %v9841, 2147483648
    %v9887 = vxor.u32 %v9845, 2147483648
    %v9888 = vmul.f32 %v9886, 1.442695
    %v9889 = vpow.pop %v9888
    %v9890 = vmul.f32 %v9887, 1.442695
    %v9891 = vpow.pop %v9890
    %v9892 = vadd.f32 %v9889, 1.0
    %v9893 = vadd.f32 %v9891, 1.0
    %v9894 = vrcp.pop %v9892
    %v9895 = vmul.f32 %v9892, %v9894
    %v9896 = vsub.f32 1.0, %v9895
    %v9897 = vmul.f32 %v9894, %v9896
    %v9898 = vadd.f32 %v9894, %v9897
    %vm9899 = vweird.f32 %v9892
    %vm9900 = vweird.f32 %v9894
    %vm9901 = vmor %vm9899, %vm9900
    %v9902 = vsel %vm9901, %v9894, %v9898
    %v9903 = vand.u32 2147483647, %v9892
    %vm9904 = vcmp.eq.f32.partialorder %v9903, 8.507059e+37
    %v9905 = vand.u32 %v9892, 2147483648
    %v9906 = vor.u32 1.1754944e-38, %v9905
    %v9907 = vsel %vm9904, %v9906, %v9902
    %v9908 = vmul.f32 1.0, %v9907
    %v9909 = vrcp.pop %v9893
    %v9910 = vmul.f32 %v9893, %v9909
    %v9911 = vsub.f32 1.0, %v9910
    %v9912 = vmul.f32 %v9909, %v9911
    %v9913 = vadd.f32 %v9909, %v9912
    %vm9914 = vweird.f32 %v9893
    %vm9915 = vweird.f32 %v9909
    %vm9916 = vmor %vm9914, %vm9915
    %v9917 = vsel %vm9916, %v9909, %v9913
    %v9918 = vand.u32 2147483647, %v9893
    %vm9919 = vcmp.eq.f32.partialorder %v9918, 8.507059e+37
    %v9920 = vand.u32 %v9893, 2147483648
    %v9921 = vor.u32 1.1754944e-38, %v9920
    %v9922 = vsel %vm9919, %v9921, %v9917
    %v9923 = vmul.f32 1.0, %v9922
    %v9924 = vtanh.pop %v9842
    %v9925 = vtanh.pop %v9846
    %v9926 = vxor.u32 %v9843, 2147483648
    %v9927 = vxor.u32 %v9847, 2147483648
    %v9928 = vmul.f32 %v9926, 1.442695
    %v9929 = vpow.pop %v9928
    %v9930 = vmul.f32 %v9927, 1.442695
    %v9931 = vpow.pop %v9930
    %v9932 = vadd.f32 %v9929, 1.0
    %v9933 = vadd.f32 %v9931, 1.0
    %v9934 = vrcp.pop %v9932
    %v9935 = vmul.f32 %v9932, %v9934
    %v9936 = vsub.f32 1.0, %v9935
    %v9937 = vmul.f32 %v9934, %v9936
    %v9938 = vadd.f32 %v9934, %v9937
    %vm9939 = vweird.f32 %v9932
    %vm9940 = vweird.f32 %v9934
    %vm9941 = vmor %vm9939, %vm9940
    %v9942 = vsel %vm9941, %v9934, %v9938
    %v9943 = vand.u32 2147483647, %v9932
    %vm9944 = vcmp.eq.f32.partialorder %v9943, 8.507059e+37
    %v9945 = vand.u32 %v9932, 2147483648
    %v9946 = vor.u32 1.1754944e-38, %v9945
    %v9947 = vsel %vm9944, %v9946, %v9942
    %v9948 = vmul.f32 1.0, %v9947
    %v9949 = vrcp.pop %v9933
    %v9950 = vmul.f32 %v9933, %v9949
    %v9951 = vsub.f32 1.0, %v9950
    %v9952 = vmul.f32 %v9949, %v9951
    %v9953 = vadd.f32 %v9949, %v9952
    %vm9954 = vweird.f32 %v9933
    %vm9955 = vweird.f32 %v9949
    %vm9956 = vmor %vm9954, %vm9955
    %v9957 = vsel %vm9956, %v9949, %v9953
    %v9958 = vand.u32 2147483647, %v9933
    %vm9959 = vcmp.eq.f32.partialorder %v9958, 8.507059e+37
    %v9960 = vand.u32 %v9933, 2147483648
    %v9961 = vor.u32 1.1754944e-38, %v9960
    %v9962 = vsel %vm9959, %v9961, %v9957
    %v9963 = vmul.f32 1.0, %v9962
    %v9964 = vmul.f32 %v9908, %v9325
    %v9965 = vmul.f32 %v9923, %v9326
    %v9966 = vmul.f32 %v9870, %v9924
    %v9967 = vmul.f32 %v9885, %v9925
    %v9968 = vadd.f32 %v9964, %v9966
    %v9969 = vadd.f32 %v9965, %v9967
    %v9970 = vtanh.pop %v9968
    %v9971 = vtanh.pop %v9969
    %v9972 = vmul.f32 %v9948, %v9970
    %v9973 = vmul.f32 %v9963, %v9971
    %9974 = vst [vmem:[#allocation2] sm:$0xff] %v9972
    %9975 = vst [vmem:[#allocation2 + $0x8] sm:$0xff] %v9973
    %9976 = vst [vmem:[#allocation3] sm:$0xff] %v9968
    %9977 = vst [vmem:[#allocation3 + $0x8] sm:$0xff] %v9969
    %v9978 = vpack.c.bf16 %v9973, %v9972
    %v9979 = vld [vmem:[#allocation4] sm:$0xff]
    %v9980 = vld [vmem:[#allocation4 + $0x8] sm:$0xff]
    %v9981 = vld [vmem:[#allocation5] sm:$0xff]
    %v9982 = vld [vmem:[#allocation5 + $0x8] sm:$0xff]
    %v9983 = vld [vmem:[#allocation14] sm:$0xff]
    %v9984 = vld [vmem:[#allocation14 + $0x8] sm:$0xff]
    %v9985 = vld [vmem:[#allocation14 + $0x10] sm:$0xff]
    %v9986 = vld [vmem:[#allocation14 + $0x18] sm:$0xff]
    %v9987 = vld [vmem:[#allocation14 + $0x20] sm:$0xff]
    %v9988 = vld [vmem:[#allocation14 + $0x28] sm:$0xff]
    %v9989 = vld [vmem:[#allocation14 + $0x30] sm:$0xff]
    %v9990 = vld [vmem:[#allocation14 + $0x38] sm:$0xff]
    %v9991 = vld [vmem:[#allocation14 + $0x40] sm:$0xff]
    %v9992 = vld [vmem:[#allocation14 + $0x48] sm:$0xff]
    %v9993 = vld [vmem:[#allocation14 + $0x50] sm:$0xff]
    %v9994 = vld [vmem:[#allocation14 + $0x58] sm:$0xff]
    %v9995 = vld [vmem:[#allocation14 + $0x60] sm:$0xff]
    %v9996 = vld [vmem:[#allocation14 + $0x68] sm:$0xff]
    %v9997 = vld [vmem:[#allocation14 + $0x70] sm:$0xff]
    %v9998 = vld [vmem:[#allocation14 + $0x78] sm:$0xff]
    %v9999 = vld [vmem:[#allocation14 + $0x80] sm:$0xff]
    %v10000 = vld [vmem:[#allocation14 + $0x88] sm:$0xff]
    %v10001 = vld [vmem:[#allocation14 + $0x90] sm:$0xff]
    %v10002 = vld [vmem:[#allocation14 + $0x98] sm:$0xff]
    %v10003 = vld [vmem:[#allocation14 + $0xa0] sm:$0xff]
    %v10004 = vld [vmem:[#allocation14 + $0xa8] sm:$0xff]
    %v10005 = vld [vmem:[#allocation14 + $0xb0] sm:$0xff]
    %v10006 = vld [vmem:[#allocation14 + $0xb8] sm:$0xff]
    %v10007 = vld [vmem:[#allocation14 + $0xc0] sm:$0xff]
    %v10008 = vld [vmem:[#allocation14 + $0xc8] sm:$0xff]
    %v10009 = vld [vmem:[#allocation14 + $0xd0] sm:$0xff]
    %v10010 = vld [vmem:[#allocation14 + $0xd8] sm:$0xff]
    %v10011 = vld [vmem:[#allocation14 + $0xe0] sm:$0xff]
    %v10012 = vld [vmem:[#allocation14 + $0xe8] sm:$0xff]
    %v10013 = vld [vmem:[#allocation14 + $0xf0] sm:$0xff]
    %v10014 = vld [vmem:[#allocation14 + $0xf8] sm:$0xff]
    %v10015 = vpack.c.bf16 %v9980, %v9979
    %v10016 = vld [vmem:[#allocation15] sm:$0xff]
    %v10017 = vld [vmem:[#allocation15 + $0x8] sm:$0xff]
    %v10018 = vld [vmem:[#allocation15 + $0x10] sm:$0xff]
    %v10019 = vld [vmem:[#allocation15 + $0x18] sm:$0xff]
    %v10020 = vld [vmem:[#allocation15 + $0x20] sm:$0xff]
    %v10021 = vld [vmem:[#allocation15 + $0x28] sm:$0xff]
    %v10022 = vld [vmem:[#allocation15 + $0x30] sm:$0xff]
    %v10023 = vld [vmem:[#allocation15 + $0x38] sm:$0xff]
    %v10024 = vld [vmem:[#allocation15 + $0x40] sm:$0xff]
    %v10025 = vld [vmem:[#allocation15 + $0x48] sm:$0xff]
    %v10026 = vld [vmem:[#allocation15 + $0x50] sm:$0xff]
    %v10027 = vld [vmem:[#allocation15 + $0x58] sm:$0xff]
    %v10028 = vld [vmem:[#allocation15 + $0x60] sm:$0xff]
    %v10029 = vld [vmem:[#allocation15 + $0x68] sm:$0xff]
    %v10030 = vld [vmem:[#allocation15 + $0x70] sm:$0xff]
    %v10031 = vld [vmem:[#allocation15 + $0x78] sm:$0xff]
    %v10032 = vld [vmem:[#allocation15 + $0x80] sm:$0xff]
    %v10033 = vld [vmem:[#allocation15 + $0x88] sm:$0xff]
    %v10034 = vld [vmem:[#allocation15 + $0x90] sm:$0xff]
    %v10035 = vld [vmem:[#allocation15 + $0x98] sm:$0xff]
    %v10036 = vld [vmem:[#allocation15 + $0xa0] sm:$0xff]
    %v10037 = vld [vmem:[#allocation15 + $0xa8] sm:$0xff]
    %v10038 = vld [vmem:[#allocation15 + $0xb0] sm:$0xff]
    %v10039 = vld [vmem:[#allocation15 + $0xb8] sm:$0xff]
    %v10040 = vld [vmem:[#allocation15 + $0xc0] sm:$0xff]
    %v10041 = vld [vmem:[#allocation15 + $0xc8] sm:$0xff]
    %v10042 = vld [vmem:[#allocation15 + $0xd0] sm:$0xff]
    %v10043 = vld [vmem:[#allocation15 + $0xd8] sm:$0xff]
    %v10044 = vld [vmem:[#allocation15 + $0xe0] sm:$0xff]
    %v10045 = vld [vmem:[#allocation15 + $0xe8] sm:$0xff]
    %v10046 = vld [vmem:[#allocation15 + $0xf0] sm:$0xff]
    %v10047 = vld [vmem:[#allocation15 + $0xf8] sm:$0xff]
    %v10080 = vunpack.c.l.b16 %v10016
    %v10081 = vunpack.c.h.b16 %v10016
    %v10082 = vunpack.c.l.b16 %v10017
    %v10083 = vunpack.c.h.b16 %v10017
    %v10084 = vunpack.c.l.b16 %v10018
    %v10085 = vunpack.c.h.b16 %v10018
    %v10086 = vunpack.c.l.b16 %v10019
    %v10087 = vunpack.c.h.b16 %v10019
    %v10088 = vunpack.c.l.b16 %v10020
    %v10089 = vunpack.c.h.b16 %v10020
    %v10090 = vunpack.c.l.b16 %v10021
    %v10091 = vunpack.c.h.b16 %v10021
    %v10092 = vunpack.c.l.b16 %v10022
    %v10093 = vunpack.c.h.b16 %v10022
    %v10094 = vunpack.c.l.b16 %v10023
    %v10095 = vunpack.c.h.b16 %v10023
    %v10096 = vunpack.c.l.b16 %v10024
    %v10097 = vunpack.c.h.b16 %v10024
    %v10098 = vunpack.c.l.b16 %v10025
    %v10099 = vunpack.c.h.b16 %v10025
    %v10100 = vunpack.c.l.b16 %v10026
    %v10101 = vunpack.c.h.b16 %v10026
    %v10102 = vunpack.c.l.b16 %v10027
    %v10103 = vunpack.c.h.b16 %v10027
    %v10104 = vunpack.c.l.b16 %v10028
    %v10105 = vunpack.c.h.b16 %v10028
    %v10106 = vunpack.c.l.b16 %v10029
    %v10107 = vunpack.c.h.b16 %v10029
    %v10108 = vunpack.c.l.b16 %v10030
    %v10109 = vunpack.c.h.b16 %v10030
    %v10110 = vunpack.c.l.b16 %v10031
    %v10111 = vunpack.c.h.b16 %v10031
    %v10112 = vunpack.c.l.b16 %v10032
    %v10113 = vunpack.c.h.b16 %v10032
    %v10114 = vunpack.c.l.b16 %v10033
    %v10115 = vunpack.c.h.b16 %v10033
    %v10116 = vunpack.c.l.b16 %v10034
    %v10117 = vunpack.c.h.b16 %v10034
    %v10118 = vunpack.c.l.b16 %v10035
    %v10119 = vunpack.c.h.b16 %v10035
    %v10120 = vunpack.c.l.b16 %v10036
    %v10121 = vunpack.c.h.b16 %v10036
    %v10122 = vunpack.c.l.b16 %v10037
    %v10123 = vunpack.c.h.b16 %v10037
    %v10124 = vunpack.c.l.b16 %v10038
    %v10125 = vunpack.c.h.b16 %v10038
    %v10126 = vunpack.c.l.b16 %v10039
    %v10127 = vunpack.c.h.b16 %v10039
    %v10128 = vunpack.c.l.b16 %v10040
    %v10129 = vunpack.c.h.b16 %v10040
    %v10130 = vunpack.c.l.b16 %v10041
    %v10131 = vunpack.c.h.b16 %v10041
    %v10132 = vunpack.c.l.b16 %v10042
    %v10133 = vunpack.c.h.b16 %v10042
    %v10134 = vunpack.c.l.b16 %v10043
    %v10135 = vunpack.c.h.b16 %v10043
    %v10136 = vunpack.c.l.b16 %v10044
    %v10137 = vunpack.c.h.b16 %v10044
    %v10138 = vunpack.c.l.b16 %v10045
    %v10139 = vunpack.c.h.b16 %v10045
    %v10140 = vunpack.c.l.b16 %v10046
    %v10141 = vunpack.c.h.b16 %v10046
    %v10142 = vunpack.c.l.b16 %v10047
    %v10143 = vunpack.c.h.b16 %v10047
    %v10144 = vpack.c.b16 %v10084, %v10080
    %v10145 = vpack.c.b16 %v10085, %v10081
    %v10146 = vpack.c.b16 %v10086, %v10082
    %v10147 = vpack.c.b16 %v10087, %v10083
    %v10148 = vpack.c.b16 %v10092, %v10088
    %v10149 = vpack.c.b16 %v10093, %v10089
    %v10150 = vpack.c.b16 %v10094, %v10090
    %v10151 = vpack.c.b16 %v10095, %v10091
    %v10152 = vpack.c.b16 %v10100, %v10096
    %v10153 = vpack.c.b16 %v10101, %v10097
    %v10154 = vpack.c.b16 %v10102, %v10098
    %v10155 = vpack.c.b16 %v10103, %v10099
    %v10156 = vpack.c.b16 %v10108, %v10104
    %v10157 = vpack.c.b16 %v10109, %v10105
    %v10158 = vpack.c.b16 %v10110, %v10106
    %v10159 = vpack.c.b16 %v10111, %v10107
    %v10160 = vpack.c.b16 %v10116, %v10112
    %v10161 = vpack.c.b16 %v10117, %v10113
    %v10162 = vpack.c.b16 %v10118, %v10114
    %v10163 = vpack.c.b16 %v10119, %v10115
    %v10164 = vpack.c.b16 %v10124, %v10120
    %v10165 = vpack.c.b16 %v10125, %v10121
    %v10166 = vpack.c.b16 %v10126, %v10122
    %v10167 = vpack.c.b16 %v10127, %v10123
    %v10168 = vpack.c.b16 %v10132, %v10128
    %v10169 = vpack.c.b16 %v10133, %v10129
    %v10170 = vpack.c.b16 %v10134, %v10130
    %v10171 = vpack.c.b16 %v10135, %v10131
    %v10172 = vpack.c.b16 %v10140, %v10136
    %v10173 = vpack.c.b16 %v10141, %v10137
    %v10174 = vpack.c.b16 %v10142, %v10138
    %v10175 = vpack.c.b16 %v10143, %v10139
    %10208 = vmatpush.bf16.msra.mxu0 %v10172
    %10209 = vmatpush.bf16.msra.mxu0 %v10168
    %10210 = vmatpush.bf16.msra.mxu0 %v10164
    %10211 = vmatpush.bf16.msra.mxu0 %v10160
    %10212 = vmatpush.bf16.msra.mxu0 %v10156
    %10213 = vmatpush.bf16.msra.mxu0 %v10152
    %10214 = vmatpush.bf16.msra.mxu0 %v10148
    %10215 = vmatpush.bf16.msra.mxu0 %v10144
    %10216 = vmatmul.bf16.gmra.mxu0 %v10015
    %v10217 = vpop.f32.mrf.mxu0
    %v10218 = vadd.f32 0.0, %v10217
    %v10219 = vpop.f32.mrf.mxu0
    %v10220 = vadd.f32 0.0, %v10219
    %10221 = vdwg.mxu0
    %10222 = vmatpush.bf16.msra.mxu0 %v10173
    %10223 = vmatpush.bf16.msra.mxu0 %v10169
    %10224 = vmatpush.bf16.msra.mxu0 %v10165
    %10225 = vmatpush.bf16.msra.mxu0 %v10161
    %10226 = vmatpush.bf16.msra.mxu0 %v10157
    %10227 = vmatpush.bf16.msra.mxu0 %v10153
    %10228 = vmatpush.bf16.msra.mxu0 %v10149
    %10229 = vmatpush.bf16.msra.mxu0 %v10145
    %10230 = vmatmul.bf16.gmra.mxu0 %v10015
    %v10231 = vpop.f32.mrf.mxu0
    %v10232 = vadd.f32 0.0, %v10231
    %v10233 = vpop.f32.mrf.mxu0
    %v10234 = vadd.f32 0.0, %v10233
    %10235 = vdwg.mxu0
    %10236 = vmatpush.bf16.msra.mxu0 %v10174
    %10237 = vmatpush.bf16.msra.mxu0 %v10170
    %10238 = vmatpush.bf16.msra.mxu0 %v10166
    %10239 = vmatpush.bf16.msra.mxu0 %v10162
    %10240 = vmatpush.bf16.msra.mxu0 %v10158
    %10241 = vmatpush.bf16.msra.mxu0 %v10154
    %10242 = vmatpush.bf16.msra.mxu0 %v10150
    %10243 = vmatpush.bf16.msra.mxu0 %v10146
    %10244 = vmatmul.bf16.gmra.mxu0 %v10015
    %v10245 = vpop.f32.mrf.mxu0
    %v10246 = vadd.f32 0.0, %v10245
    %v10247 = vpop.f32.mrf.mxu0
    %v10248 = vadd.f32 0.0, %v10247
    %10249 = vdwg.mxu0
    %10250 = vmatpush.bf16.msra.mxu0 %v10175
    %10251 = vmatpush.bf16.msra.mxu0 %v10171
    %10252 = vmatpush.bf16.msra.mxu0 %v10167
    %10253 = vmatpush.bf16.msra.mxu0 %v10163
    %10254 = vmatpush.bf16.msra.mxu0 %v10159
    %10255 = vmatpush.bf16.msra.mxu0 %v10155
    %10256 = vmatpush.bf16.msra.mxu0 %v10151
    %10257 = vmatpush.bf16.msra.mxu0 %v10147
    %10258 = vmatmul.bf16.gmra.mxu0 %v10015
    %v10259 = vpop.f32.mrf.mxu0
    %v10260 = vadd.f32 0.0, %v10259
    %v10261 = vpop.f32.mrf.mxu0
    %v10262 = vadd.f32 0.0, %v10261
    %10263 = vdwg.mxu0
    %v10296 = vunpack.c.l.b16 %v9983
    %v10297 = vunpack.c.h.b16 %v9983
    %v10298 = vunpack.c.l.b16 %v9984
    %v10299 = vunpack.c.h.b16 %v9984
    %v10300 = vunpack.c.l.b16 %v9985
    %v10301 = vunpack.c.h.b16 %v9985
    %v10302 = vunpack.c.l.b16 %v9986
    %v10303 = vunpack.c.h.b16 %v9986
    %v10304 = vunpack.c.l.b16 %v9987
    %v10305 = vunpack.c.h.b16 %v9987
    %v10306 = vunpack.c.l.b16 %v9988
    %v10307 = vunpack.c.h.b16 %v9988
    %v10308 = vunpack.c.l.b16 %v9989
    %v10309 = vunpack.c.h.b16 %v9989
    %v10310 = vunpack.c.l.b16 %v9990
    %v10311 = vunpack.c.h.b16 %v9990
    %v10312 = vunpack.c.l.b16 %v9991
    %v10313 = vunpack.c.h.b16 %v9991
    %v10314 = vunpack.c.l.b16 %v9992
    %v10315 = vunpack.c.h.b16 %v9992
    %v10316 = vunpack.c.l.b16 %v9993
    %v10317 = vunpack.c.h.b16 %v9993
    %v10318 = vunpack.c.l.b16 %v9994
    %v10319 = vunpack.c.h.b16 %v9994
    %v10320 = vunpack.c.l.b16 %v9995
    %v10321 = vunpack.c.h.b16 %v9995
    %v10322 = vunpack.c.l.b16 %v9996
    %v10323 = vunpack.c.h.b16 %v9996
    %v10324 = vunpack.c.l.b16 %v9997
    %v10325 = vunpack.c.h.b16 %v9997
    %v10326 = vunpack.c.l.b16 %v9998
    %v10327 = vunpack.c.h.b16 %v9998
    %v10328 = vunpack.c.l.b16 %v9999
    %v10329 = vunpack.c.h.b16 %v9999
    %v10330 = vunpack.c.l.b16 %v10000
    %v10331 = vunpack.c.h.b16 %v10000
    %v10332 = vunpack.c.l.b16 %v10001
    %v10333 = vunpack.c.h.b16 %v10001
    %v10334 = vunpack.c.l.b16 %v10002
    %v10335 = vunpack.c.h.b16 %v10002
    %v10336 = vunpack.c.l.b16 %v10003
    %v10337 = vunpack.c.h.b16 %v10003
    %v10338 = vunpack.c.l.b16 %v10004
    %v10339 = vunpack.c.h.b16 %v10004
    %v10340 = vunpack.c.l.b16 %v10005
    %v10341 = vunpack.c.h.b16 %v10005
    %v10342 = vunpack.c.l.b16 %v10006
    %v10343 = vunpack.c.h.b16 %v10006
    %v10344 = vunpack.c.l.b16 %v10007
    %v10345 = vunpack.c.h.b16 %v10007
    %v10346 = vunpack.c.l.b16 %v10008
    %v10347 = vunpack.c.h.b16 %v10008
    %v10348 = vunpack.c.l.b16 %v10009
    %v10349 = vunpack.c.h.b16 %v10009
    %v10350 = vunpack.c.l.b16 %v10010
    %v10351 = vunpack.c.h.b16 %v10010
    %v10352 = vunpack.c.l.b16 %v10011
    %v10353 = vunpack.c.h.b16 %v10011
    %v10354 = vunpack.c.l.b16 %v10012
    %v10355 = vunpack.c.h.b16 %v10012
    %v10356 = vunpack.c.l.b16 %v10013
    %v10357 = vunpack.c.h.b16 %v10013
    %v10358 = vunpack.c.l.b16 %v10014
    %v10359 = vunpack.c.h.b16 %v10014
    %v10360 = vpack.c.b16 %v10300, %v10296
    %v10361 = vpack.c.b16 %v10301, %v10297
    %v10362 = vpack.c.b16 %v10302, %v10298
    %v10363 = vpack.c.b16 %v10303, %v10299
    %v10364 = vpack.c.b16 %v10308, %v10304
    %v10365 = vpack.c.b16 %v10309, %v10305
    %v10366 = vpack.c.b16 %v10310, %v10306
    %v10367 = vpack.c.b16 %v10311, %v10307
    %v10368 = vpack.c.b16 %v10316, %v10312
    %v10369 = vpack.c.b16 %v10317, %v10313
    %v10370 = vpack.c.b16 %v10318, %v10314
    %v10371 = vpack.c.b16 %v10319, %v10315
    %v10372 = vpack.c.b16 %v10324, %v10320
    %v10373 = vpack.c.b16 %v10325, %v10321
    %v10374 = vpack.c.b16 %v10326, %v10322
    %v10375 = vpack.c.b16 %v10327, %v10323
    %v10376 = vpack.c.b16 %v10332, %v10328
    %v10377 = vpack.c.b16 %v10333, %v10329
    %v10378 = vpack.c.b16 %v10334, %v10330
    %v10379 = vpack.c.b16 %v10335, %v10331
    %v10380 = vpack.c.b16 %v10340, %v10336
    %v10381 = vpack.c.b16 %v10341, %v10337
    %v10382 = vpack.c.b16 %v10342, %v10338
    %v10383 = vpack.c.b16 %v10343, %v10339
    %v10384 = vpack.c.b16 %v10348, %v10344
    %v10385 = vpack.c.b16 %v10349, %v10345
    %v10386 = vpack.c.b16 %v10350, %v10346
    %v10387 = vpack.c.b16 %v10351, %v10347
    %v10388 = vpack.c.b16 %v10356, %v10352
    %v10389 = vpack.c.b16 %v10357, %v10353
    %v10390 = vpack.c.b16 %v10358, %v10354
    %v10391 = vpack.c.b16 %v10359, %v10355
    %10424 = vmatpush.bf16.msra.mxu0 %v10388
    %10425 = vmatpush.bf16.msra.mxu0 %v10384
    %10426 = vmatpush.bf16.msra.mxu0 %v10380
    %10427 = vmatpush.bf16.msra.mxu0 %v10376
    %10428 = vmatpush.bf16.msra.mxu0 %v10372
    %10429 = vmatpush.bf16.msra.mxu0 %v10368
    %10430 = vmatpush.bf16.msra.mxu0 %v10364
    %10431 = vmatpush.bf16.msra.mxu0 %v10360
    %10432 = vmatmul.bf16.gmra.mxu0 %v9978
    %v10433 = vpop.f32.mrf.mxu0
    %v10434 = vadd.f32 %v10218, %v10433
    %v10435 = vpop.f32.mrf.mxu0
    %v10436 = vadd.f32 %v10220, %v10435
    %10437 = vdwg.mxu0
    %10438 = vmatpush.bf16.msra.mxu0 %v10389
    %10439 = vmatpush.bf16.msra.mxu0 %v10385
    %10440 = vmatpush.bf16.msra.mxu0 %v10381
    %10441 = vmatpush.bf16.msra.mxu0 %v10377
    %10442 = vmatpush.bf16.msra.mxu0 %v10373
    %10443 = vmatpush.bf16.msra.mxu0 %v10369
    %10444 = vmatpush.bf16.msra.mxu0 %v10365
    %10445 = vmatpush.bf16.msra.mxu0 %v10361
    %10446 = vmatmul.bf16.gmra.mxu0 %v9978
    %v10447 = vpop.f32.mrf.mxu0
    %v10448 = vadd.f32 %v10232, %v10447
    %v10449 = vpop.f32.mrf.mxu0
    %v10450 = vadd.f32 %v10234, %v10449
    %10451 = vdwg.mxu0
    %10452 = vmatpush.bf16.msra.mxu0 %v10390
    %10453 = vmatpush.bf16.msra.mxu0 %v10386
    %10454 = vmatpush.bf16.msra.mxu0 %v10382
    %10455 = vmatpush.bf16.msra.mxu0 %v10378
    %10456 = vmatpush.bf16.msra.mxu0 %v10374
    %10457 = vmatpush.bf16.msra.mxu0 %v10370
    %10458 = vmatpush.bf16.msra.mxu0 %v10366
    %10459 = vmatpush.bf16.msra.mxu0 %v10362
    %10460 = vmatmul.bf16.gmra.mxu0 %v9978
    %v10461 = vpop.f32.mrf.mxu0
    %v10462 = vadd.f32 %v10246, %v10461
    %v10463 = vpop.f32.mrf.mxu0
    %v10464 = vadd.f32 %v10248, %v10463
    %10465 = vdwg.mxu0
    %10466 = vmatpush.bf16.msra.mxu0 %v10391
    %10467 = vmatpush.bf16.msra.mxu0 %v10387
    %10468 = vmatpush.bf16.msra.mxu0 %v10383
    %10469 = vmatpush.bf16.msra.mxu0 %v10379
    %10470 = vmatpush.bf16.msra.mxu0 %v10375
    %10471 = vmatpush.bf16.msra.mxu0 %v10371
    %10472 = vmatpush.bf16.msra.mxu0 %v10367
    %10473 = vmatpush.bf16.msra.mxu0 %v10363
    %10474 = vmatmul.bf16.gmra.mxu0 %v9978
    %v10475 = vpop.f32.mrf.mxu0
    %v10476 = vadd.f32 %v10260, %v10475
    %v10477 = vpop.f32.mrf.mxu0
    %v10478 = vadd.f32 %v10262, %v10477
    %10479 = vdwg.mxu0
    %v10480 = vld [vmem:[%s6] sm:$0xf]
    %v10482 = vperm.slane %v10480, 0
    %v10483 = vperm.slane %v10480, 1
    %v10484 = vperm.slane %v10480, 2
    %v10485 = vperm.slane %v10480, 3
    %v10490 = vadd.f32 %v10434, %v10482
    %v10491 = vadd.f32 %v10448, %v10483
    %v10492 = vadd.f32 %v10462, %v10484
    %v10493 = vadd.f32 %v10476, %v10485
    %v10494 = vadd.f32 %v10436, %v10482
    %v10495 = vadd.f32 %v10450, %v10483
    %v10496 = vadd.f32 %v10464, %v10484
    %v10497 = vadd.f32 %v10478, %v10485
    %v10498 = vxor.u32 %v10490, 2147483648
    %v10499 = vxor.u32 %v10494, 2147483648
    %v10500 = vmul.f32 %v10498, 1.442695
    %v10501 = vpow.pop %v10500
    %v10502 = vmul.f32 %v10499, 1.442695
    %v10503 = vpow.pop %v10502
    %v10504 = vadd.f32 %v10501, 1.0
    %v10505 = vadd.f32 %v10503, 1.0
    %v10506 = vrcp.pop %v10504
    %v10507 = vmul.f32 %v10504, %v10506
    %v10508 = vsub.f32 1.0, %v10507
    %v10509 = vmul.f32 %v10506, %v10508
    %v10510 = vadd.f32 %v10506, %v10509
    %vm10511 = vweird.f32 %v10504
    %vm10512 = vweird.f32 %v10506
    %vm10513 = vmor %vm10511, %vm10512
    %v10514 = vsel %vm10513, %v10506, %v10510
    %v10515 = vand.u32 2147483647, %v10504
    %vm10516 = vcmp.eq.f32.partialorder %v10515, 8.507059e+37
    %v10517 = vand.u32 %v10504, 2147483648
    %v10518 = vor.u32 1.1754944e-38, %v10517
    %v10519 = vsel %vm10516, %v10518, %v10514
    %v10520 = vmul.f32 1.0, %v10519
    %v10521 = vrcp.pop %v10505
    %v10522 = vmul.f32 %v10505, %v10521
    %v10523 = vsub.f32 1.0, %v10522
    %v10524 = vmul.f32 %v10521, %v10523
    %v10525 = vadd.f32 %v10521, %v10524
    %vm10526 = vweird.f32 %v10505
    %vm10527 = vweird.f32 %v10521
    %vm10528 = vmor %vm10526, %vm10527
    %v10529 = vsel %vm10528, %v10521, %v10525
    %v10530 = vand.u32 2147483647, %v10505
    %vm10531 = vcmp.eq.f32.partialorder %v10530, 8.507059e+37
    %v10532 = vand.u32 %v10505, 2147483648
    %v10533 = vor.u32 1.1754944e-38, %v10532
    %v10534 = vsel %vm10531, %v10533, %v10529
    %v10535 = vmul.f32 1.0, %v10534
    %v10536 = vxor.u32 %v10491, 2147483648
    %v10537 = vxor.u32 %v10495, 2147483648
    %v10538 = vmul.f32 %v10536, 1.442695
    %v10539 = vpow.pop %v10538
    %v10540 = vmul.f32 %v10537, 1.442695
    %v10541 = vpow.pop %v10540
    %v10542 = vadd.f32 %v10539, 1.0
    %v10543 = vadd.f32 %v10541, 1.0
    %v10544 = vrcp.pop %v10542
    %v10545 = vmul.f32 %v10542, %v10544
    %v10546 = vsub.f32 1.0, %v10545
    %v10547 = vmul.f32 %v10544, %v10546
    %v10548 = vadd.f32 %v10544, %v10547
    %vm10549 = vweird.f32 %v10542
    %vm10550 = vweird.f32 %v10544
    %vm10551 = vmor %vm10549, %vm10550
    %v10552 = vsel %vm10551, %v10544, %v10548
    %v10553 = vand.u32 2147483647, %v10542
    %vm10554 = vcmp.eq.f32.partialorder %v10553, 8.507059e+37
    %v10555 = vand.u32 %v10542, 2147483648
    %v10556 = vor.u32 1.1754944e-38, %v10555
    %v10557 = vsel %vm10554, %v10556, %v10552
    %v10558 = vmul.f32 1.0, %v10557
    %v10559 = vrcp.pop %v10543
    %v10560 = vmul.f32 %v10543, %v10559
    %v10561 = vsub.f32 1.0, %v10560
    %v10562 = vmul.f32 %v10559, %v10561
    %v10563 = vadd.f32 %v10559, %v10562
    %vm10564 = vweird.f32 %v10543
    %vm10565 = vweird.f32 %v10559
    %vm10566 = vmor %vm10564, %vm10565
    %v10567 = vsel %vm10566, %v10559, %v10563
    %v10568 = vand.u32 2147483647, %v10543
    %vm10569 = vcmp.eq.f32.partialorder %v10568, 8.507059e+37
    %v10570 = vand.u32 %v10543, 2147483648
    %v10571 = vor.u32 1.1754944e-38, %v10570
    %v10572 = vsel %vm10569, %v10571, %v10567
    %v10573 = vmul.f32 1.0, %v10572
    %v10574 = vtanh.pop %v10492
    %v10575 = vtanh.pop %v10496
    %v10576 = vxor.u32 %v10493, 2147483648
    %v10577 = vxor.u32 %v10497, 2147483648
    %v10578 = vmul.f32 %v10576, 1.442695
    %v10579 = vpow.pop %v10578
    %v10580 = vmul.f32 %v10577, 1.442695
    %v10581 = vpow.pop %v10580
    %v10582 = vadd.f32 %v10579, 1.0
    %v10583 = vadd.f32 %v10581, 1.0
    %v10584 = vrcp.pop %v10582
    %v10585 = vmul.f32 %v10582, %v10584
    %v10586 = vsub.f32 1.0, %v10585
    %v10587 = vmul.f32 %v10584, %v10586
    %v10588 = vadd.f32 %v10584, %v10587
    %vm10589 = vweird.f32 %v10582
    %vm10590 = vweird.f32 %v10584
    %vm10591 = vmor %vm10589, %vm10590
    %v10592 = vsel %vm10591, %v10584, %v10588
    %v10593 = vand.u32 2147483647, %v10582
    %vm10594 = vcmp.eq.f32.partialorder %v10593, 8.507059e+37
    %v10595 = vand.u32 %v10582, 2147483648
    %v10596 = vor.u32 1.1754944e-38, %v10595
    %v10597 = vsel %vm10594, %v10596, %v10592
    %v10598 = vmul.f32 1.0, %v10597
    %v10599 = vrcp.pop %v10583
    %v10600 = vmul.f32 %v10583, %v10599
    %v10601 = vsub.f32 1.0, %v10600
    %v10602 = vmul.f32 %v10599, %v10601
    %v10603 = vadd.f32 %v10599, %v10602
    %vm10604 = vweird.f32 %v10583
    %vm10605 = vweird.f32 %v10599
    %vm10606 = vmor %vm10604, %vm10605
    %v10607 = vsel %vm10606, %v10599, %v10603
    %v10608 = vand.u32 2147483647, %v10583
    %vm10609 = vcmp.eq.f32.partialorder %v10608, 8.507059e+37
    %v10610 = vand.u32 %v10583, 2147483648
    %v10611 = vor.u32 1.1754944e-38, %v10610
    %v10612 = vsel %vm10609, %v10611, %v10607
    %v10613 = vmul.f32 1.0, %v10612
    %v10614 = vmul.f32 %v10558, %v9981
    %v10615 = vmul.f32 %v10573, %v9982
    %v10616 = vmul.f32 %v10520, %v10574
    %v10617 = vmul.f32 %v10535, %v10575
    %v10618 = vadd.f32 %v10614, %v10616
    %v10619 = vadd.f32 %v10615, %v10617
    %v10620 = vtanh.pop %v10618
    %v10621 = vtanh.pop %v10619
    %v10622 = vmul.f32 %v10598, %v10620
    %v10623 = vmul.f32 %v10613, %v10621
    %10624 = vst [vmem:[#allocation4] sm:$0xff] %v10622
    %10625 = vst [vmem:[#allocation4 + $0x8] sm:$0xff] %v10623
    %10626 = vst [vmem:[#allocation5] sm:$0xff] %v10618
    %10627 = vst [vmem:[#allocation5 + $0x8] sm:$0xff] %v10619
    %v10628 = vpack.c.bf16 %v10622, %v10622
    %v10629 = vpack.c.bf16 %v10623, %v10623
    %s10630 = scalar_lea.vmem [#allocation17], 56
    %10631 = vst [vmem:[%s10630] sm:$0xf] %v10628
    %10632 = vst [vmem:[%s10630 + $0x4] sm:$0xf] %v10629
    // Predicated region
    $region58: #{tpu_custom_call.1} parent=1 // pred_check
      _
    $region59: #{tpu_custom_call.1} parent=1 // pred_check_branch
      %10634 = sbr.rel (0) target = $region61
    $region60: #{tpu_custom_call.1} parent=1 // pred_region
      %10636 = vsyncadd [#allocation8], 0
      %s10637 = sshll.u32 [#allocation17], 4
      %s10638 = int_to_ptr.vmem [resolvable:$true] %s10637
      %s10639 = sshll.u32 %s7, 4
      %s10640 = int_to_ptr.hbm [resolvable:$true] %s10639
      %10645 = dma.vmem_to_hbm [thread:$0]  %s10638, 1024, %s10640, [#allocation8], 64, 64, 4
    $region61: #{tpu_custom_call.1} parent=1 // pred_fallthru
      _
    // Predicated region
    $region62: #{tpu_custom_call.1} parent=1 // pred_check
      _
    $region63: #{tpu_custom_call.1} parent=1 // pred_check_branch
      %10647 = sbr.rel (0) target = $region65
    $region64: #{tpu_custom_call.1} parent=1 // pred_region
      %10649 = dma.done [#allocation8], 1024
    $region65: #{tpu_custom_call.1} parent=1 // pred_fallthru
      _
    %10650 = vsyncpa [#allocation7], 1
    %10651 = vsyncpa [#allocation10], 1
    %10652 = vsyncpa [#allocation13], 1
    %10653 = vsyncpa [#allocation16], 1
    %10654 = vsyncpa [#allocation8], 1

</llo_original>
